<compile_context>
chip_gen: v6e
topology: v6e:2x2x1
jax: 0.10.0
libtpu: 0.0.40
codegen_flags: <defaults>
</compile_context>

<pallas_src>
import functools

import jax
import jax.numpy as jnp
from jax.experimental import pallas as pl
from jax.experimental.pallas import tpu as pltpu

AE_LATENT_DIM = 16
IMG_SIZE = 28


# ----------------------------------------------------------------------------
# small helpers
# ----------------------------------------------------------------------------
def _whole(shape):
    """BlockSpec that maps the entire array into VMEM (used with grid=(1,))."""
    zeros = (0,) * len(shape)
    return pl.BlockSpec(shape, lambda i: zeros)


def _bytes(*arrays):
    return int(sum(int(a.size) * a.dtype.itemsize for a in arrays))


def _im2col_nhwc(x, kh, kw, stride, pad_lo, pad_hi):
    """x: (B, H, W, C) -> (B, OH, OW, kh*kw*C), k index = (ki*kw + kj)*C + c."""
    B, H, W, C = x.shape
    xp = jnp.pad(x, ((0, 0), (pad_lo, pad_hi), (pad_lo, pad_hi), (0, 0)))
    Hp, Wp = H + pad_lo + pad_hi, W + pad_lo + pad_hi
    oh = (Hp - kh) // stride + 1
    ow = (Wp - kw) // stride + 1
    taps = []
    for ki in range(kh):
        for kj in range(kw):
            taps.append(xp[:, ki:ki + stride * oh:stride,
                           kj:kj + stride * ow:stride, :])
    return jnp.concatenate(taps, axis=-1), oh, ow


# ----------------------------------------------------------------------------
# Pallas kernel 1: fused GEMM + bias + ReLU (used for conv1 and convT3)
# ----------------------------------------------------------------------------
def _gemm_bias_relu_kernel(x_ref, w_ref, b_ref, o_ref):
    acc = jnp.dot(x_ref[...], w_ref[...], preferred_element_type=jnp.float32)
    acc = jnp.maximum(acc + b_ref[...], 0.0)
    o_ref[...] = acc.astype(o_ref.dtype)


def gemm_bias_relu(x, w, b):
    """x: (M,K) bf16, w: (K,N) bf16, b: (1,N) f32 -> relu(x@w+b) as (M,N) bf16."""
    M, K = x.shape
    N = w.shape[1]
    return pl.pallas_call(
        _gemm_bias_relu_kernel,
        out_shape=jax.ShapeDtypeStruct((M, N), jnp.bfloat16),
        grid=(1,),
        in_specs=[_whole(x.shape), _whole(w.shape), _whole(b.shape)],
        out_specs=_whole((M, N)),
        compiler_params=pltpu.CompilerParams(dimension_semantics=("arbitrary",)),
        cost_estimate=pl.CostEstimate(flops=2 * M * K * N, transcendentals=0,
                                      bytes_accessed=_bytes(x, w, b) + M * N * 2),
    )(x, w, b)


# ----------------------------------------------------------------------------
# Pallas kernel 2: fused bottleneck
#   conv2(3x3,s2)+ReLU -> conv3(7x7 full-map GEMM)+ReLU -> Linear(64,64)
#   -> Linear(64,latent) -> Linear(latent,64)+ReLU -> convT(64,32,7x7 on 1x1)+ReLU
# All weights + activations stay resident in VMEM / registers.
# ----------------------------------------------------------------------------
def _bottleneck_kernel(p2_ref, w2_ref, b2_ref, w3_ref, b3_ref, w4_ref, b4_ref,
                       w5_ref, b5_ref, wd1_ref, bd1_ref, wd2_ref, bd2_ref, o_ref):
    f32, bf16 = jnp.float32, jnp.bfloat16
    npos = p2_ref.shape[0]          # out2*out2 spatial positions
    B = o_ref.shape[0]

    w2 = w2_ref[...]
    b2 = b2_ref[...]
    # conv2 per spatial position, immediately contracted into conv3 (7x7 == full GEMM)
    acc3 = jnp.zeros((B, w3_ref.shape[2]), f32)
    for r in range(npos):                                   # static unroll
        h2 = jnp.dot(p2_ref[r], w2, preferred_element_type=f32) + b2
        h2 = jnp.maximum(h2, 0.0).astype(bf16)              # ReLU after conv2
        acc3 = acc3 + jnp.dot(h2, w3_ref[r], preferred_element_type=f32)
    h3 = jnp.maximum(acc3 + b3_ref[...], 0.0).astype(bf16)  # ReLU after conv3

    # Flatten -> Linear(64,64) -> Linear(64,latent)
    h4 = jnp.dot(h3, w4_ref[...], preferred_element_type=f32) + b4_ref[...]
    z = jnp.dot(h4.astype(bf16), w5_ref[...], preferred_element_type=f32) + b5_ref[...]

    # Linear(latent,64) + ReLU
    hd1 = jnp.dot(z.astype(bf16), wd1_ref[...], preferred_element_type=f32) + bd1_ref[...]
    hd1 = jnp.maximum(hd1, 0.0).astype(bf16)

    # ConvTranspose(64->32, k=out2) on a 1x1 map == plain GEMM to NHWC-flat, + ReLU
    d2 = jnp.dot(hd1, wd2_ref[...], preferred_element_type=f32) + bd2_ref[...]
    o_ref[...] = jnp.maximum(d2, 0.0).astype(o_ref.dtype)


def bottleneck(p2, w2, b2, w3, b3, w4, b4, w5, b5, wd1, bd1, wd2, bd2):
    npos, B, K2 = p2.shape
    N_out = wd2.shape[1]
    args = (p2, w2, b2, w3, b3, w4, b4, w5, b5, wd1, bd1, wd2, bd2)
    flops = 2 * B * (npos * (K2 * w2.shape[1] + w3.shape[1] * w3.shape[2])
                     + w4.shape[0] * w4.shape[1] + w5.shape[0] * w5.shape[1]
                     + wd1.shape[0] * wd1.shape[1] + wd2.shape[0] * wd2.shape[1])
    return pl.pallas_call(
        _bottleneck_kernel,
        out_shape=jax.ShapeDtypeStruct((B, N_out), jnp.bfloat16),
        grid=(1,),
        in_specs=[_whole(a.shape) for a in args],
        out_specs=_whole((B, N_out)),
        compiler_params=pltpu.CompilerParams(dimension_semantics=("arbitrary",)),
        cost_estimate=pl.CostEstimate(flops=flops, transcendentals=0,
                                      bytes_accessed=_bytes(*args) + B * N_out * 2),
    )(*args)


# ----------------------------------------------------------------------------
# Pallas kernel 3: final OC==1 transposed conv, lane-dense + fused sigmoid
#   out(1, B*H*W) = w_row(1, K) @ patches^T(K, B*H*W)
# ----------------------------------------------------------------------------
def _final_sigmoid_kernel(pT_ref, w_ref, b_ref, o_ref):
    acc = jnp.dot(w_ref[...], pT_ref[...], preferred_element_type=jnp.float32)
    acc = acc + b_ref[...]
    # sigmoid: exp on EUP + approx reciprocal (clamped to guarantee [0, 1])
    y = pl.reciprocal(1.0 + jnp.exp(-acc), approx=True)
    o_ref[...] = jnp.clip(y, 0.0, 1.0).astype(o_ref.dtype)


def final_sigmoid(pT, w_row, b):
    K, M = pT.shape
    return pl.pallas_call(
        _final_sigmoid_kernel,
        out_shape=jax.ShapeDtypeStruct((1, M), jnp.float32),
        grid=(1,),
        in_specs=[_whole(pT.shape), _whole(w_row.shape), _whole(b.shape)],
        out_specs=_whole((1, M)),
        compiler_params=pltpu.CompilerParams(dimension_semantics=("arbitrary",)),
        cost_estimate=pl.CostEstimate(flops=2 * K * M, transcendentals=M,
                                      bytes_accessed=_bytes(pT, w_row, b) + M * 4),
    )(pT, w_row, b)


# ----------------------------------------------------------------------------
# Deterministic parameter initialization (PyTorch-style uniform(-1/sqrt(fan_in)))
# in the original torch layouts.
# ----------------------------------------------------------------------------
def _unif(key, shape, bound):
    return jax.random.uniform(key, shape, jnp.float32, -bound, bound)


def init_params(key, latent_dim=AE_LATENT_DIM, img_size=IMG_SIZE):
    out1 = (img_size - 1) // 2 + 1
    out2 = (out1 - 1) // 2 + 1
    ks = jax.random.split(key, 18)
    p = {"out1": out1, "out2": out2, "img_size": img_size}

    def conv(kw_, kb_, oc, ic, kh, kwid):
        bnd = 1.0 / (ic * kh * kwid) ** 0.5
        return _unif(kw_, (oc, ic, kh, kwid), bnd), _unif(kb_, (oc,), bnd)

    def convt(kw_, kb_, ic, oc, kh, kwid):
        bnd = 1.0 / (oc * kh * kwid) ** 0.5
        return _unif(kw_, (ic, oc, kh, kwid), bnd), _unif(kb_, (oc,), bnd)

    def lin(kw_, kb_, o, i):
        bnd = 1.0 / i ** 0.5
        return _unif(kw_, (o, i), bnd), _unif(kb_, (o,), bnd)

    p["e1_w"], p["e1_b"] = conv(ks[0], ks[1], 16, 1, 3, 3)
    p["e2_w"], p["e2_b"] = conv(ks[2], ks[3], 32, 16, 3, 3)
    p["e3_w"], p["e3_b"] = conv(ks[4], ks[5], 64, 32, out2, out2)
    p["e4_w"], p["e4_b"] = lin(ks[6], ks[7], 64, 64)
    p["e5_w"], p["e5_b"] = lin(ks[8], ks[9], latent_dim, 64)
    p["d1_w"], p["d1_b"] = lin(ks[10], ks[11], 64, latent_dim)
    p["d2_w"], p["d2_b"] = convt(ks[12], ks[13], 64, 32, out2, out2)
    p["d3_w"], p["d3_b"] = convt(ks[14], ks[15], 32, 16, 3, 3)
    p["d4_w"], p["d4_b"] = convt(ks[16], ks[17], 16, 1, 3, 3)
    return p


def prepare_params(p):
    """Convert torch-layout f32 params to GEMM-ready bf16 weights / f32 biases."""
    bf = jnp.bfloat16
    out2 = p["out2"]

    def conv_w(w):                       # (OC, IC, KH, KW) -> (KH*KW*IC, OC)
        oc, ic, kh, kw = w.shape
        return w.transpose(2, 3, 1, 0).reshape(kh * kw * ic, oc).astype(bf)

    def convT_w(w):                      # (IC, OC, KH, KW) -> conv-equivalent matrix
        wc = jnp.flip(w, axis=(2, 3)).transpose(1, 0, 2, 3)   # (OC, IC, KH, KW)
        return conv_w(wc)

    def bias(b):
        return b.reshape(1, -1).astype(jnp.float32)

    q = {"out1": p["out1"], "out2": out2, "img_size": p["img_size"]}
    q["w1"], q["b1"] = conv_w(p["e1_w"]), bias(p["e1_b"])
    q["w2"], q["b2"] = conv_w(p["e2_w"]), bias(p["e2_b"])
    # conv3 (full-map GEMM): (out2*out2, IC, OC) slabs, r = i*out2 + j
    oc3, ic3 = p["e3_w"].shape[0], p["e3_w"].shape[1]
    q["w3"] = p["e3_w"].transpose(2, 3, 1, 0).reshape(out2 * out2, ic3, oc3).astype(bf)
    q["b3"] = bias(p["e3_b"])
    q["w4"], q["b4"] = p["e4_w"].T.astype(bf), bias(p["e4_b"])
    q["w5"], q["b5"] = p["e5_w"].T.astype(bf), bias(p["e5_b"])
    q["wd1"], q["bd1"] = p["d1_w"].T.astype(bf), bias(p["d1_b"])
    # convT(64->32, k=out2) on 1x1 input == GEMM to NHWC-flat (B, out2*out2*32)
    ic2, oc2 = p["d2_w"].shape[0], p["d2_w"].shape[1]
    q["wd2"] = p["d2_w"].transpose(0, 2, 3, 1).reshape(ic2, out2 * out2 * oc2).astype(bf)
    q["bd2"] = jnp.tile(p["d2_b"], out2 * out2).reshape(1, -1).astype(jnp.float32)
    q["wd3"], q["bd3"] = convT_w(p["d3_w"]), bias(p["d3_b"])
    # final convT (OC==1): keep weight as a single lane-dense row (1, KH*KW*IC)
    q["wd4"] = convT_w(p["d4_w"]).T
    q["bd4"] = p["d4_b"].reshape(1, 1).astype(jnp.float32)
    return q


# ----------------------------------------------------------------------------
# Forward pass (matches PyTorch Autoencoder.forward)
# ----------------------------------------------------------------------------
def autoencoder_forward(q, x):
    B = x.shape[0]
    img, out1, out2 = q["img_size"], q["out1"], q["out2"]
    bf = jnp.bfloat16

    # ----------------------------------------------------------- encoder front
    xh = x.reshape(B, img, img, 1).astype(bf)              # NCHW->NHWC free (C==1)
    p1, oh1, ow1 = _im2col_nhwc(xh, 3, 3, 2, 1, 1)         # (B, out1, out1, 9)
    h1 = gemm_bias_relu(p1.reshape(B * oh1 * ow1, p1.shape[-1]), q["w1"], q["b1"])

    h1i = h1.reshape(B, out1, out1, 16)
    p2, oh2, ow2 = _im2col_nhwc(h1i, 3, 3, 2, 1, 1)        # (B, out2, out2, 144)
    p2 = p2.transpose(1, 2, 0, 3).reshape(oh2 * ow2, B, p2.shape[-1])  # position-major

    # -------------------------------------- fused bottleneck (e2..e5, d1, d2)
    d2_out = bottleneck(p2, q["w2"], q["b2"], q["w3"], q["b3"], q["w4"], q["b4"],
                        q["w5"], q["b5"], q["wd1"], q["bd1"], q["wd2"], q["bd2"])
    # d2_out is NHWC-flat: (B, out2*out2*32)

    # ------------------------------------------------------------ decoder tail
    d2i = d2_out.reshape(B, out2, out2, 32)
    hu3 = 2 * out2 - 1
    up3 = jnp.zeros((B, hu3, hu3, 32), d2_out.dtype).at[:, ::2, ::2, :].set(d2i)
    op3 = out1 - (2 * out2 - 1)                            # output_padding of d3
    p3, oh3, ow3 = _im2col_nhwc(up3, 3, 3, 1, 1, 1 + op3)  # (B, out1, out1, 288)
    h3 = gemm_bias_relu(p3.reshape(B * oh3 * ow3, p3.shape[-1]), q["wd3"], q["bd3"])

    h3i = h3.reshape(B, out1, out1, 16)
    hu4 = 2 * out1 - 1
    up4 = jnp.zeros((B, hu4, hu4, 16), h3.dtype).at[:, ::2, ::2, :].set(h3i)
    op4 = img - (2 * out1 - 1)                             # output_padding of d4
    p4, oh4, ow4 = _im2col_nhwc(up4, 3, 3, 1, 1, 1 + op4)  # (B, img, img, 144)
    p4T = p4.transpose(3, 0, 1, 2).reshape(p4.shape[-1], B * oh4 * ow4)  # K-major
    y = final_sigmoid(p4T, q["wd4"], q["bd4"])             # (1, B*img*img) f32
    return y.reshape(B, 1, img, img)                       # no transpose needed (C==1)


# ----------------------------------------------------------------------------
if __name__ == "__main__":
    params = init_params(jax.random.PRNGKey(42))
    prep = prepare_params(params)

    batch = 2
    x = jax.random.uniform(jax.random.PRNGKey(0), (batch, 1, IMG_SIZE, IMG_SIZE),
                           jnp.float32)                    # values in [0, 1)

    fwd = jax.jit(functools.partial(autoencoder_forward, prep))
    y = jax.block_until_ready(fwd(x))

    assert y.shape == (batch, 1, IMG_SIZE, IMG_SIZE), y.shape
    assert bool(jnp.all((y >= 0.0) & (y <= 1.0))), "sigmoid output out of range"
    assert bool(jnp.all(jnp.isfinite(y))), "non-finite output"
    print("KERNEL_OK")
</pallas_src>

<mosaic_0001>
module attributes {stable_mosaic.version = 11 : i64} {
  func.func @_gemm_bias_relu_kernel(%arg0: i32, %arg1: memref<392x9xbf16, #tpu.memory_space<vmem>>, %arg2: memref<9x16xbf16, #tpu.memory_space<vmem>>, %arg3: memref<1x16xf32, #tpu.memory_space<vmem>>, %arg4: memref<392x16xbf16, #tpu.memory_space<vmem>>) attributes {dimension_semantics = [#tpu.dimension_semantics<arbitrary>], iteration_bounds = array<i64: 1>, scalar_prefetch = 0 : i64, scratch_operands = 0 : i64, tpu.core_type = #tpu.core_type<tc>, window_params = [{pipeline_mode = #tpu.pipeline_mode<synchronous>, transform_indices = @transform_0, window_bounds = array<i64: 392, 9>}, {pipeline_mode = #tpu.pipeline_mode<synchronous>, transform_indices = @transform_1, window_bounds = array<i64: 9, 16>}, {pipeline_mode = #tpu.pipeline_mode<synchronous>, transform_indices = @transform_2, window_bounds = array<i64: 1, 16>}, {pipeline_mode = #tpu.pipeline_mode<synchronous>, transform_indices = @transform_3, window_bounds = array<i64: 392, 16>}]} {
    %c0 = arith.constant 0 : index
    %c0_0 = arith.constant 0 : index
    %0 = vector.load %arg1[%c0, %c0_0] : memref<392x9xbf16, #tpu.memory_space<vmem>>, vector<392x9xbf16>
    %c0_1 = arith.constant 0 : index
    %c0_2 = arith.constant 0 : index
    %1 = vector.load %arg2[%c0_1, %c0_2] : memref<9x16xbf16, #tpu.memory_space<vmem>>, vector<9x16xbf16>
    %cst = arith.constant dense<0.000000e+00> : vector<392x16xf32>
    %2 = tpu.matmul %0, %1, %cst {dimension_numbers = #tpu.dot_dimension_numbers<[1], [0], [0], [1], [0, 0, 1, 1], [], []>} : vector<392x9xbf16>, vector<9x16xbf16>, vector<392x16xf32> -> vector<392x16xf32>
    %c0_3 = arith.constant 0 : index
    %c0_4 = arith.constant 0 : index
    %3 = vector.load %arg3[%c0_3, %c0_4] : memref<1x16xf32, #tpu.memory_space<vmem>>, vector<1x16xf32>
    %4 = vector.broadcast %3 : vector<1x16xf32> to vector<392x16xf32>
    %5 = arith.addf %2, %4 : vector<392x16xf32>
    %cst_5 = arith.constant 0.000000e+00 : f32
    %6 = vector.broadcast %cst_5 : f32 to vector<392x16xf32>
    %7 = arith.maximumf %5, %6 : vector<392x16xf32>
    %8 = arith.truncf %7 : vector<392x16xf32> to vector<392x16xbf16>
    %c0_6 = arith.constant 0 : index
    %c0_7 = arith.constant 0 : index
    %9 = vector.load %arg4[%c0_6, %c0_7] : memref<392x16xbf16, #tpu.memory_space<vmem>>, vector<392x16xbf16>
    tpu.vector_store %arg4[%c0_6, %c0_7], %8 {strides = array<i32>} : memref<392x16xbf16, #tpu.memory_space<vmem>>, vector<392x16xbf16>,
    return
  }
  func.func @transform_0(%arg0: i32) -> (i32, i32) {
    %c0_i32 = arith.constant 0 : i32
    %c0_i32_0 = arith.constant 0 : i32
    %c0_i32_1 = arith.constant 0 : i32
    return %c0_i32, %c0_i32_0 : i32, i32
  }
  func.func @transform_1(%arg0: i32) -> (i32, i32) {
    %c0_i32 = arith.constant 0 : i32
    %c0_i32_0 = arith.constant 0 : i32
    %c0_i32_1 = arith.constant 0 : i32
    return %c0_i32, %c0_i32_0 : i32, i32
  }
  func.func @transform_2(%arg0: i32) -> (i32, i32) {
    %c0_i32 = arith.constant 0 : i32
    %c0_i32_0 = arith.constant 0 : i32
    %c0_i32_1 = arith.constant 0 : i32
    return %c0_i32, %c0_i32_0 : i32, i32
  }
  func.func @transform_3(%arg0: i32) -> (i32, i32) {
    %c0_i32 = arith.constant 0 : i32
    %c0_i32_0 = arith.constant 0 : i32
    %c0_i32_1 = arith.constant 0 : i32
    return %c0_i32, %c0_i32_0 : i32, i32
  }
}

module attributes {stable_mosaic.version = 11 : i64} {
  func.func @_bottleneck_kernel(%arg0: i32, %arg1: memref<49x2x144xbf16, #tpu.memory_space<vmem>>, %arg2: memref<144x32xbf16, #tpu.memory_space<vmem>>, %arg3: memref<1x32xf32, #tpu.memory_space<vmem>>, %arg4: memref<49x32x64xbf16, #tpu.memory_space<vmem>>, %arg5: memref<1x64xf32, #tpu.memory_space<vmem>>, %arg6: memref<64x64xbf16, #tpu.memory_space<vmem>>, %arg7: memref<1x64xf32, #tpu.memory_space<vmem>>, %arg8: memref<64x16xbf16, #tpu.memory_space<vmem>>, %arg9: memref<1x16xf32, #tpu.memory_space<vmem>>, %arg10: memref<16x64xbf16, #tpu.memory_space<vmem>>, %arg11: memref<1x64xf32, #tpu.memory_space<vmem>>, %arg12: memref<64x1568xbf16, #tpu.memory_space<vmem>>, %arg13: memref<1x1568xf32, #tpu.memory_space<vmem>>, %arg14: memref<2x1568xbf16, #tpu.memory_space<vmem>>) attributes {dimension_semantics = [#tpu.dimension_semantics<arbitrary>], iteration_bounds = array<i64: 1>, scalar_prefetch = 0 : i64, scratch_operands = 0 : i64, tpu.core_type = #tpu.core_type<tc>, window_params = [{pipeline_mode = #tpu.pipeline_mode<synchronous>, transform_indices = @transform_0, window_bounds = array<i64: 49, 2, 144>}, {pipeline_mode = #tpu.pipeline_mode<synchronous>, transform_indices = @transform_1, window_bounds = array<i64: 144, 32>}, {pipeline_mode = #tpu.pipeline_mode<synchronous>, transform_indices = @transform_2, window_bounds = array<i64: 1, 32>}, {pipeline_mode = #tpu.pipeline_mode<synchronous>, transform_indices = @transform_3, window_bounds = array<i64: 49, 32, 64>}, {pipeline_mode = #tpu.pipeline_mode<synchronous>, transform_indices = @transform_4, window_bounds = array<i64: 1, 64>}, {pipeline_mode = #tpu.pipeline_mode<synchronous>, transform_indices = @transform_5, window_bounds = array<i64: 64, 64>}, {pipeline_mode = #tpu.pipeline_mode<synchronous>, transform_indices = @transform_6, window_bounds = array<i64: 1, 64>}, {pipeline_mode = #tpu.pipeline_mode<synchronous>, transform_indices = @transform_7, window_bounds = array<i64: 64, 16>}, {pipeline_mode = #tpu.pipeline_mode<synchronous>, transform_indices = @transform_8, window_bounds = array<i64: 1, 16>}, {pipeline_mode = #tpu.pipeline_mode<synchronous>, transform_indices = @transform_9, window_bounds = array<i64: 16, 64>}, {pipeline_mode = #tpu.pipeline_mode<synchronous>, transform_indices = @transform_10, window_bounds = array<i64: 1, 64>}, {pipeline_mode = #tpu.pipeline_mode<synchronous>, transform_indices = @transform_11, window_bounds = array<i64: 64, 1568>}, {pipeline_mode = #tpu.pipeline_mode<synchronous>, transform_indices = @transform_12, window_bounds = array<i64: 1, 1568>}, {pipeline_mode = #tpu.pipeline_mode<synchronous>, transform_indices = @transform_13, window_bounds = array<i64: 2, 1568>}]} {
    %c0 = arith.constant 0 : index
    %c0_0 = arith.constant 0 : index
    %0 = vector.load %arg2[%c0, %c0_0] : memref<144x32xbf16, #tpu.memory_space<vmem>>, vector<144x32xbf16>
    %c0_1 = arith.constant 0 : index
    %c0_2 = arith.constant 0 : index
    %1 = vector.load %arg3[%c0_1, %c0_2] : memref<1x32xf32, #tpu.memory_space<vmem>>, vector<1x32xf32>
    %cst = arith.constant 0.000000e+00 : f32
    %2 = vector.broadcast %cst : f32 to vector<2x64xf32>
    %c0_3 = arith.constant 0 : index
    %c0_4 = arith.constant 0 : index
    %c0_5 = arith.constant 0 : index
    %3 = vector.load %arg1[%c0_3, %c0_4, %c0_5] : memref<49x2x144xbf16, #tpu.memory_space<vmem>>, vector<1x2x144xbf16>
    %4 = vector.shape_cast %3 : vector<1x2x144xbf16> to vector<2x144xbf16>
    %cst_6 = arith.constant dense<0.000000e+00> : vector<2x32xf32>
    %5 = tpu.matmul %4, %0, %cst_6 {dimension_numbers = #tpu.dot_dimension_numbers<[1], [0], [0], [1], [0, 0, 1, 1], [], []>} : vector<2x144xbf16>, vector<144x32xbf16>, vector<2x32xf32> -> vector<2x32xf32>
    %6 = vector.broadcast %1 : vector<1x32xf32> to vector<2x32xf32>
    %7 = arith.addf %5, %6 : vector<2x32xf32>
    %cst_7 = arith.constant 0.000000e+00 : f32
    %8 = vector.broadcast %cst_7 : f32 to vector<2x32xf32>
    %9 = arith.maximumf %7, %8 : vector<2x32xf32>
    %10 = arith.truncf %9 : vector<2x32xf32> to vector<2x32xbf16>
    %c0_8 = arith.constant 0 : index
    %c0_9 = arith.constant 0 : index
    %c0_10 = arith.constant 0 : index
    %11 = vector.load %arg4[%c0_8, %c0_9, %c0_10] : memref<49x32x64xbf16, #tpu.memory_space<vmem>>, vector<1x32x64xbf16>
    %12 = vector.shape_cast %11 : vector<1x32x64xbf16> to vector<32x64xbf16>
    %cst_11 = arith.constant dense<0.000000e+00> : vector<2x64xf32>
    %13 = tpu.matmul %10, %12, %cst_11 {dimension_numbers = #tpu.dot_dimension_numbers<[1], [0], [0], [1], [0, 0, 1, 1], [], []>} : vector<2x32xbf16>, vector<32x64xbf16>, vector<2x64xf32> -> vector<2x64xf32>
    %14 = arith.addf %2, %13 : vector<2x64xf32>
    %c1 = arith.constant 1 : index
    %c0_12 = arith.constant 0 : index
    %c0_13 = arith.constant 0 : index
    %15 = vector.load %arg1[%c1, %c0_12, %c0_13] : memref<49x2x144xbf16, #tpu.memory_space<vmem>>, vector<1x2x144xbf16>
    %16 = vector.shape_cast %15 : vector<1x2x144xbf16> to vector<2x144xbf16>
    %cst_14 = arith.constant dense<0.000000e+00> : vector<2x32xf32>
    %17 = tpu.matmul %16, %0, %cst_14 {dimension_numbers = #tpu.dot_dimension_numbers<[1], [0], [0], [1], [0, 0, 1, 1], [], []>} : vector<2x144xbf16>, vector<144x32xbf16>, vector<2x32xf32> -> vector<2x32xf32>
    %18 = vector.broadcast %1 : vector<1x32xf32> to vector<2x32xf32>
    %19 = arith.addf %17, %18 : vector<2x32xf32>
    %cst_15 = arith.constant 0.000000e+00 : f32
    %20 = vector.broadcast %cst_15 : f32 to vector<2x32xf32>
    %21 = arith.maximumf %19, %20 : vector<2x32xf32>
    %22 = arith.truncf %21 : vector<2x32xf32> to vector<2x32xbf16>
    %c1_16 = arith.constant 1 : index
    %c0_17 = arith.constant 0 : index
    %c0_18 = arith.constant 0 : index
    %23 = vector.load %arg4[%c1_16, %c0_17, %c0_18] : memref<49x32x64xbf16, #tpu.memory_space<vmem>>, vector<1x32x64xbf16>
    %24 = vector.shape_cast %23 : vector<1x32x64xbf16> to vector<32x64xbf16>
    %cst_19 = arith.constant dense<0.000000e+00> : vector<2x64xf32>
    %25 = tpu.matmul %22, %24, %cst_19 {dimension_numbers = #tpu.dot_dimension_numbers<[1], [0], [0], [1], [0, 0, 1, 1], [], []>} : vector<2x32xbf16>, vector<32x64xbf16>, vector<2x64xf32> -> vector<2x64xf32>
    %26 = arith.addf %14, %25 : vector<2x64xf32>
    %c2 = arith.constant 2 : index
    %c0_20 = arith.constant 0 : index
    %c0_21 = arith.constant 0 : index
    %27 = vector.load %arg1[%c2, %c0_20, %c0_21] : memref<49x2x144xbf16, #tpu.memory_space<vmem>>, vector<1x2x144xbf16>
    %28 = vector.shape_cast %27 : vector<1x2x144xbf16> to vector<2x144xbf16>
    %cst_22 = arith.constant dense<0.000000e+00> : vector<2x32xf32>
    %29 = tpu.matmul %28, %0, %cst_22 {dimension_numbers = #tpu.dot_dimension_numbers<[1], [0], [0], [1], [0, 0, 1, 1], [], []>} : vector<2x144xbf16>, vector<144x32xbf16>, vector<2x32xf32> -> vector<2x32xf32>
    %30 = vector.broadcast %1 : vector<1x32xf32> to vector<2x32xf32>
    %31 = arith.addf %29, %30 : vector<2x32xf32>
    %cst_23 = arith.constant 0.000000e+00 : f32
    %32 = vector.broadcast %cst_23 : f32 to vector<2x32xf32>
    %33 = arith.maximumf %31, %32 : vector<2x32xf32>
    %34 = arith.truncf %33 : vector<2x32xf32> to vector<2x32xbf16>
    %c2_24 = arith.constant 2 : index
    %c0_25 = arith.constant 0 : index
    %c0_26 = arith.constant 0 : index
    %35 = vector.load %arg4[%c2_24, %c0_25, %c0_26] : memref<49x32x64xbf16, #tpu.memory_space<vmem>>, vector<1x32x64xbf16>
    %36 = vector.shape_cast %35 : vector<1x32x64xbf16> to vector<32x64xbf16>
    %cst_27 = arith.constant dense<0.000000e+00> : vector<2x64xf32>
    %37 = tpu.matmul %34, %36, %cst_27 {dimension_numbers = #tpu.dot_dimension_numbers<[1], [0], [0], [1], [0, 0, 1, 1], [], []>} : vector<2x32xbf16>, vector<32x64xbf16>, vector<2x64xf32> -> vector<2x64xf32>
    %38 = arith.addf %26, %37 : vector<2x64xf32>
    %c3 = arith.constant 3 : index
    %c0_28 = arith.constant 0 : index
    %c0_29 = arith.constant 0 : index
    %39 = vector.load %arg1[%c3, %c0_28, %c0_29] : memref<49x2x144xbf16, #tpu.memory_space<vmem>>, vector<1x2x144xbf16>
    %40 = vector.shape_cast %39 : vector<1x2x144xbf16> to vector<2x144xbf16>
    %cst_30 = arith.constant dense<0.000000e+00> : vector<2x32xf32>
    %41 = tpu.matmul %40, %0, %cst_30 {dimension_numbers = #tpu.dot_dimension_numbers<[1], [0], [0], [1], [0, 0, 1, 1], [], []>} : vector<2x144xbf16>, vector<144x32xbf16>, vector<2x32xf32> -> vector<2x32xf32>
    %42 = vector.broadcast %1 : vector<1x32xf32> to vector<2x32xf32>
    %43 = arith.addf %41, %42 : vector<2x32xf32>
    %cst_31 = arith.constant 0.000000e+00 : f32
    %44 = vector.broadcast %cst_31 : f32 to vector<2x32xf32>
    %45 = arith.maximumf %43, %44 : vector<2x32xf32>
    %46 = arith.truncf %45 : vector<2x32xf32> to vector<2x32xbf16>
    %c3_32 = arith.constant 3 : index
    %c0_33 = arith.constant 0 : index
    %c0_34 = arith.constant 0 : index
    %47 = vector.load %arg4[%c3_32, %c0_33, %c0_34] : memref<49x32x64xbf16, #tpu.memory_space<vmem>>, vector<1x32x64xbf16>
    %48 = vector.shape_cast %47 : vector<1x32x64xbf16> to vector<32x64xbf16>
    %cst_35 = arith.constant dense<0.000000e+00> : vector<2x64xf32>
    %49 = tpu.matmul %46, %48, %cst_35 {dimension_numbers = #tpu.dot_dimension_numbers<[1], [0], [0], [1], [0, 0, 1, 1], [], []>} : vector<2x32xbf16>, vector<32x64xbf16>, vector<2x64xf32> -> vector<2x64xf32>
    %50 = arith.addf %38, %49 : vector<2x64xf32>
    %c4 = arith.constant 4 : index
    %c0_36 = arith.constant 0 : index
    %c0_37 = arith.constant 0 : index
    %51 = vector.load %arg1[%c4, %c0_36, %c0_37] : memref<49x2x144xbf16, #tpu.memory_space<vmem>>, vector<1x2x144xbf16>
    %52 = vector.shape_cast %51 : vector<1x2x144xbf16> to vector<2x144xbf16>
    %cst_38 = arith.constant dense<0.000000e+00> : vector<2x32xf32>
    %53 = tpu.matmul %52, %0, %cst_38 {dimension_numbers = #tpu.dot_dimension_numbers<[1], [0], [0], [1], [0, 0, 1, 1], [], []>} : vector<2x144xbf16>, vector<144x32xbf16>, vector<2x32xf32> -> vector<2x32xf32>
    %54 = vector.broadcast %1 : vector<1x32xf32> to vector<2x32xf32>
    %55 = arith.addf %53, %54 : vector<2x32xf32>
    %cst_39 = arith.constant 0.000000e+00 : f32
    %56 = vector.broadcast %cst_39 : f32 to vector<2x32xf32>
    %57 = arith.maximumf %55, %56 : vector<2x32xf32>
    %58 = arith.truncf %57 : vector<2x32xf32> to vector<2x32xbf16>
    %c4_40 = arith.constant 4 : index
    %c0_41 = arith.constant 0 : index
    %c0_42 = arith.constant 0 : index
    %59 = vector.load %arg4[%c4_40, %c0_41, %c0_42] : memref<49x32x64xbf16, #tpu.memory_space<vmem>>, vector<1x32x64xbf16>
    %60 = vector.shape_cast %59 : vector<1x32x64xbf16> to vector<32x64xbf16>
    %cst_43 = arith.constant dense<0.000000e+00> : vector<2x64xf32>
    %61 = tpu.matmul %58, %60, %cst_43 {dimension_numbers = #tpu.dot_dimension_numbers<[1], [0], [0], [1], [0, 0, 1, 1], [], []>} : vector<2x32xbf16>, vector<32x64xbf16>, vector<2x64xf32> -> vector<2x64xf32>
    %62 = arith.addf %50, %61 : vector<2x64xf32>
    %c5 = arith.constant 5 : index
    %c0_44 = arith.constant 0 : index
    %c0_45 = arith.constant 0 : index
    %63 = vector.load %arg1[%c5, %c0_44, %c0_45] : memref<49x2x144xbf16, #tpu.memory_space<vmem>>, vector<1x2x144xbf16>
    %64 = vector.shape_cast %63 : vector<1x2x144xbf16> to vector<2x144xbf16>
    %cst_46 = arith.constant dense<0.000000e+00> : vector<2x32xf32>
    %65 = tpu.matmul %64, %0, %cst_46 {dimension_numbers = #tpu.dot_dimension_numbers<[1], [0], [0], [1], [0, 0, 1, 1], [], []>} : vector<2x144xbf16>, vector<144x32xbf16>, vector<2x32xf32> -> vector<2x32xf32>
    %66 = vector.broadcast %1 : vector<1x32xf32> to vector<2x32xf32>
    %67 = arith.addf %65, %66 : vector<2x32xf32>
    %cst_47 = arith.constant 0.000000e+00 : f32
    %68 = vector.broadcast %cst_47 : f32 to vector<2x32xf32>
    %69 = arith.maximumf %67, %68 : vector<2x32xf32>
    %70 = arith.truncf %69 : vector<2x32xf32> to vector<2x32xbf16>
    %c5_48 = arith.constant 5 : index
    %c0_49 = arith.constant 0 : index
    %c0_50 = arith.constant 0 : index
    %71 = vector.load %arg4[%c5_48, %c0_49, %c0_50] : memref<49x32x64xbf16, #tpu.memory_space<vmem>>, vector<1x32x64xbf16>
    %72 = vector.shape_cast %71 : vector<1x32x64xbf16> to vector<32x64xbf16>
    %cst_51 = arith.constant dense<0.000000e+00> : vector<2x64xf32>
    %73 = tpu.matmul %70, %72, %cst_51 {dimension_numbers = #tpu.dot_dimension_numbers<[1], [0], [0], [1], [0, 0, 1, 1], [], []>} : vector<2x32xbf16>, vector<32x64xbf16>, vector<2x64xf32> -> vector<2x64xf32>
    %74 = arith.addf %62, %73 : vector<2x64xf32>
    %c6 = arith.constant 6 : index
    %c0_52 = arith.constant 0 : index
    %c0_53 = arith.constant 0 : index
    %75 = vector.load %arg1[%c6, %c0_52, %c0_53] : memref<49x2x144xbf16, #tpu.memory_space<vmem>>, vector<1x2x144xbf16>
    %76 = vector.shape_cast %75 : vector<1x2x144xbf16> to vector<2x144xbf16>
    %cst_54 = arith.constant dense<0.000000e+00> : vector<2x32xf32>
    %77 = tpu.matmul %76, %0, %cst_54 {dimension_numbers = #tpu.dot_dimension_numbers<[1], [0], [0], [1], [0, 0, 1, 1], [], []>} : vector<2x144xbf16>, vector<144x32xbf16>, vector<2x32xf32> -> vector<2x32xf32>
    %78 = vector.broadcast %1 : vector<1x32xf32> to vector<2x32xf32>
    %79 = arith.addf %77, %78 : vector<2x32xf32>
    %cst_55 = arith.constant 0.000000e+00 : f32
    %80 = vector.broadcast %cst_55 : f32 to vector<2x32xf32>
    %81 = arith.maximumf %79, %80 : vector<2x32xf32>
    %82 = arith.truncf %81 : vector<2x32xf32> to vector<2x32xbf16>
    %c6_56 = arith.constant 6 : index
    %c0_57 = arith.constant 0 : index
    %c0_58 = arith.constant 0 : index
    %83 = vector.load %arg4[%c6_56, %c0_57, %c0_58] : memref<49x32x64xbf16, #tpu.memory_space<vmem>>, vector<1x32x64xbf16>
    %84 = vector.shape_cast %83 : vector<1x32x64xbf16> to vector<32x64xbf16>
    %cst_59 = arith.constant dense<0.000000e+00> : vector<2x64xf32>
    %85 = tpu.matmul %82, %84, %cst_59 {dimension_numbers = #tpu.dot_dimension_numbers<[1], [0], [0], [1], [0, 0, 1, 1], [], []>} : vector<2x32xbf16>, vector<32x64xbf16>, vector<2x64xf32> -> vector<2x64xf32>
    %86 = arith.addf %74, %85 : vector<2x64xf32>
    %c7 = arith.constant 7 : index
    %c0_60 = arith.constant 0 : index
    %c0_61 = arith.constant 0 : index
    %87 = vector.load %arg1[%c7, %c0_60, %c0_61] : memref<49x2x144xbf16, #tpu.memory_space<vmem>>, vector<1x2x144xbf16>
    %88 = vector.shape_cast %87 : vector<1x2x144xbf16> to vector<2x144xbf16>
    %cst_62 = arith.constant dense<0.000000e+00> : vector<2x32xf32>
    %89 = tpu.matmul %88, %0, %cst_62 {dimension_numbers = #tpu.dot_dimension_numbers<[1], [0], [0], [1], [0, 0, 1, 1], [], []>} : vector<2x144xbf16>, vector<144x32xbf16>, vector<2x32xf32> -> vector<2x32xf32>
    %90 = vector.broadcast %1 : vector<1x32xf32> to vector<2x32xf32>
    %91 = arith.addf %89, %90 : vector<2x32xf32>
    %cst_63 = arith.constant 0.000000e+00 : f32
    %92 = vector.broadcast %cst_63 : f32 to vector<2x32xf32>
    %93 = arith.maximumf %91, %92 : vector<2x32xf32>
    %94 = arith.truncf %93 : vector<2x32xf32> to vector<2x32xbf16>
    %c7_64 = arith.constant 7 : index
    %c0_65 = arith.constant 0 : index
    %c0_66 = arith.constant 0 : index
    %95 = vector.load %arg4[%c7_64, %c0_65, %c0_66] : memref<49x32x64xbf16, #tpu.memory_space<vmem>>, vector<1x32x64xbf16>
    %96 = vector.shape_cast %95 : vector<1x32x64xbf16> to vector<32x64xbf16>
    %cst_67 = arith.constant dense<0.000000e+00> : vector<2x64xf32>
    %97 = tpu.matmul %94, %96, %cst_67 {dimension_numbers = #tpu.dot_dimension_numbers<[1], [0], [0], [1], [0, 0, 1, 1], [], []>} : vector<2x32xbf16>, vector<32x64xbf16>, vector<2x64xf32> -> vector<2x64xf32>
    %98 = arith.addf %86, %97 : vector<2x64xf32>
    %c8 = arith.constant 8 : index
    %c0_68 = arith.constant 0 : index
    %c0_69 = arith.constant 0 : index
    %99 = vector.load %arg1[%c8, %c0_68, %c0_69] : memref<49x2x144xbf16, #tpu.memory_space<vmem>>, vector<1x2x144xbf16>
    %100 = vector.shape_cast %99 : vector<1x2x144xbf16> to vector<2x144xbf16>
    %cst_70 = arith.constant dense<0.000000e+00> : vector<2x32xf32>
    %101 = tpu.matmul %100, %0, %cst_70 {dimension_numbers = #tpu.dot_dimension_numbers<[1], [0], [0], [1], [0, 0, 1, 1], [], []>} : vector<2x144xbf16>, vector<144x32xbf16>, vector<2x32xf32> -> vector<2x32xf32>
    %102 = vector.broadcast %1 : vector<1x32xf32> to vector<2x32xf32>
    %103 = arith.addf %101, %102 : vector<2x32xf32>
    %cst_71 = arith.constant 0.000000e+00 : f32
    %104 = vector.broadcast %cst_71 : f32 to vector<2x32xf32>
    %105 = arith.maximumf %103, %104 : vector<2x32xf32>
    %106 = arith.truncf %105 : vector<2x32xf32> to vector<2x32xbf16>
    %c8_72 = arith.constant 8 : index
    %c0_73 = arith.constant 0 : index
    %c0_74 = arith.constant 0 : index
    %107 = vector.load %arg4[%c8_72, %c0_73, %c0_74] : memref<49x32x64xbf16, #tpu.memory_space<vmem>>, vector<1x32x64xbf16>
    %108 = vector.shape_cast %107 : vector<1x32x64xbf16> to vector<32x64xbf16>
    %cst_75 = arith.constant dense<0.000000e+00> : vector<2x64xf32>
    %109 = tpu.matmul %106, %108, %cst_75 {dimension_numbers = #tpu.dot_dimension_numbers<[1], [0], [0], [1], [0, 0, 1, 1], [], []>} : vector<2x32xbf16>, vector<32x64xbf16>, vector<2x64xf32> -> vector<2x64xf32>
    %110 = arith.addf %98, %109 : vector<2x64xf32>
    %c9 = arith.constant 9 : index
    %c0_76 = arith.constant 0 : index
    %c0_77 = arith.constant 0 : index
    %111 = vector.load %arg1[%c9, %c0_76, %c0_77] : memref<49x2x144xbf16, #tpu.memory_space<vmem>>, vector<1x2x144xbf16>
    %112 = vector.shape_cast %111 : vector<1x2x144xbf16> to vector<2x144xbf16>
    %cst_78 = arith.constant dense<0.000000e+00> : vector<2x32xf32>
    %113 = tpu.matmul %112, %0, %cst_78 {dimension_numbers = #tpu.dot_dimension_numbers<[1], [0], [0], [1], [0, 0, 1, 1], [], []>} : vector<2x144xbf16>, vector<144x32xbf16>, vector<2x32xf32> -> vector<2x32xf32>
    %114 = vector.broadcast %1 : vector<1x32xf32> to vector<2x32xf32>
    %115 = arith.addf %113, %114 : vector<2x32xf32>
    %cst_79 = arith.constant 0.000000e+00 : f32
    %116 = vector.broadcast %cst_79 : f32 to vector<2x32xf32>
    %117 = arith.maximumf %115, %116 : vector<2x32xf32>
    %118 = arith.truncf %117 : vector<2x32xf32> to vector<2x32xbf16>
    %c9_80 = arith.constant 9 : index
    %c0_81 = arith.constant 0 : index
    %c0_82 = arith.constant 0 : index
    %119 = vector.load %arg4[%c9_80, %c0_81, %c0_82] : memref<49x32x64xbf16, #tpu.memory_space<vmem>>, vector<1x32x64xbf16>
    %120 = vector.shape_cast %119 : vector<1x32x64xbf16> to vector<32x64xbf16>
    %cst_83 = arith.constant dense<0.000000e+00> : vector<2x64xf32>
    %121 = tpu.matmul %118, %120, %cst_83 {dimension_numbers = #tpu.dot_dimension_numbers<[1], [0], [0], [1], [0, 0, 1, 1], [], []>} : vector<2x32xbf16>, vector<32x64xbf16>, vector<2x64xf32> -> vector<2x64xf32>
    %122 = arith.addf %110, %121 : vector<2x64xf32>
    %c10 = arith.constant 10 : index
    %c0_84 = arith.constant 0 : index
    %c0_85 = arith.constant 0 : index
    %123 = vector.load %arg1[%c10, %c0_84, %c0_85] : memref<49x2x144xbf16, #tpu.memory_space<vmem>>, vector<1x2x144xbf16>
    %124 = vector.shape_cast %123 : vector<1x2x144xbf16> to vector<2x144xbf16>
    %cst_86 = arith.constant dense<0.000000e+00> : vector<2x32xf32>
    %125 = tpu.matmul %124, %0, %cst_86 {dimension_numbers = #tpu.dot_dimension_numbers<[1], [0], [0], [1], [0, 0, 1, 1], [], []>} : vector<2x144xbf16>, vector<144x32xbf16>, vector<2x32xf32> -> vector<2x32xf32>
    %126 = vector.broadcast %1 : vector<1x32xf32> to vector<2x32xf32>
    %127 = arith.addf %125, %126 : vector<2x32xf32>
    %cst_87 = arith.constant 0.000000e+00 : f32
    %128 = vector.broadcast %cst_87 : f32 to vector<2x32xf32>
    %129 = arith.maximumf %127, %128 : vector<2x32xf32>
    %130 = arith.truncf %129 : vector<2x32xf32> to vector<2x32xbf16>
    %c10_88 = arith.constant 10 : index
    %c0_89 = arith.constant 0 : index
    %c0_90 = arith.constant 0 : index
    %131 = vector.load %arg4[%c10_88, %c0_89, %c0_90] : memref<49x32x64xbf16, #tpu.memory_space<vmem>>, vector<1x32x64xbf16>
    %132 = vector.shape_cast %131 : vector<1x32x64xbf16> to vector<32x64xbf16>
    %cst_91 = arith.constant dense<0.000000e+00> : vector<2x64xf32>
    %133 = tpu.matmul %130, %132, %cst_91 {dimension_numbers = #tpu.dot_dimension_numbers<[1], [0], [0], [1], [0, 0, 1, 1], [], []>} : vector<2x32xbf16>, vector<32x64xbf16>, vector<2x64xf32> -> vector<2x64xf32>
    %134 = arith.addf %122, %133 : vector<2x64xf32>
    %c11 = arith.constant 11 : index
    %c0_92 = arith.constant 0 : index
    %c0_93 = arith.constant 0 : index
    %135 = vector.load %arg1[%c11, %c0_92, %c0_93] : memref<49x2x144xbf16, #tpu.memory_space<vmem>>, vector<1x2x144xbf16>
    %136 = vector.shape_cast %135 : vector<1x2x144xbf16> to vector<2x144xbf16>
    %cst_94 = arith.constant dense<0.000000e+00> : vector<2x32xf32>
    %137 = tpu.matmul %136, %0, %cst_94 {dimension_numbers = #tpu.dot_dimension_numbers<[1], [0], [0], [1], [0, 0, 1, 1], [], []>} : vector<2x144xbf16>, vector<144x32xbf16>, vector<2x32xf32> -> vector<2x32xf32>
    %138 = vector.broadcast %1 : vector<1x32xf32> to vector<2x32xf32>
    %139 = arith.addf %137, %138 : vector<2x32xf32>
    %cst_95 = arith.constant 0.000000e+00 : f32
    %140 = vector.broadcast %cst_95 : f32 to vector<2x32xf32>
    %141 = arith.maximumf %139, %140 : vector<2x32xf32>
    %142 = arith.truncf %141 : vector<2x32xf32> to vector<2x32xbf16>
    %c11_96 = arith.constant 11 : index
    %c0_97 = arith.constant 0 : index
    %c0_98 = arith.constant 0 : index
    %143 = vector.load %arg4[%c11_96, %c0_97, %c0_98] : memref<49x32x64xbf16, #tpu.memory_space<vmem>>, vector<1x32x64xbf16>
    %144 = vector.shape_cast %143 : vector<1x32x64xbf16> to vector<32x64xbf16>
    %cst_99 = arith.constant dense<0.000000e+00> : vector<2x64xf32>
    %145 = tpu.matmul %142, %144, %cst_99 {dimension_numbers = #tpu.dot_dimension_numbers<[1], [0], [0], [1], [0, 0, 1, 1], [], []>} : vector<2x32xbf16>, vector<32x64xbf16>, vector<2x64xf32> -> vector<2x64xf32>
    %146 = arith.addf %134, %145 : vector<2x64xf32>
    %c12 = arith.constant 12 : index
    %c0_100 = arith.constant 0 : index
    %c0_101 = arith.constant 0 : index
    %147 = vector.load %arg1[%c12, %c0_100, %c0_101] : memref<49x2x144xbf16, #tpu.memory_space<vmem>>, vector<1x2x144xbf16>
    %148 = vector.shape_cast %147 : vector<1x2x144xbf16> to vector<2x144xbf16>
    %cst_102 = arith.constant dense<0.000000e+00> : vector<2x32xf32>
    %149 = tpu.matmul %148, %0, %cst_102 {dimension_numbers = #tpu.dot_dimension_numbers<[1], [0], [0], [1], [0, 0, 1, 1], [], []>} : vector<2x144xbf16>, vector<144x32xbf16>, vector<2x32xf32> -> vector<2x32xf32>
    %150 = vector.broadcast %1 : vector<1x32xf32> to vector<2x32xf32>
    %151 = arith.addf %149, %150 : vector<2x32xf32>
    %cst_103 = arith.constant 0.000000e+00 : f32
    %152 = vector.broadcast %cst_103 : f32 to vector<2x32xf32>
    %153 = arith.maximumf %151, %152 : vector<2x32xf32>
    %154 = arith.truncf %153 : vector<2x32xf32> to vector<2x32xbf16>
    %c12_104 = arith.constant 12 : index
    %c0_105 = arith.constant 0 : index
    %c0_106 = arith.constant 0 : index
    %155 = vector.load %arg4[%c12_104, %c0_105, %c0_106] : memref<49x32x64xbf16, #tpu.memory_space<vmem>>, vector<1x32x64xbf16>
    %156 = vector.shape_cast %155 : vector<1x32x64xbf16> to vector<32x64xbf16>
    %cst_107 = arith.constant dense<0.000000e+00> : vector<2x64xf32>
    %157 = tpu.matmul %154, %156, %cst_107 {dimension_numbers = #tpu.dot_dimension_numbers<[1], [0], [0], [1], [0, 0, 1, 1], [], []>} : vector<2x32xbf16>, vector<32x64xbf16>, vector<2x64xf32> -> vector<2x64xf32>
    %158 = arith.addf %146, %157 : vector<2x64xf32>
    %c13 = arith.constant 13 : index
    %c0_108 = arith.constant 0 : index
    %c0_109 = arith.constant 0 : index
    %159 = vector.load %arg1[%c13, %c0_108, %c0_109] : memref<49x2x144xbf16, #tpu.memory_space<vmem>>, vector<1x2x144xbf16>
    %160 = vector.shape_cast %159 : vector<1x2x144xbf16> to vector<2x144xbf16>
    %cst_110 = arith.constant dense<0.000000e+00> : vector<2x32xf32>
    %161 = tpu.matmul %160, %0, %cst_110 {dimension_numbers = #tpu.dot_dimension_numbers<[1], [0], [0], [1], [0, 0, 1, 1], [], []>} : vector<2x144xbf16>, vector<144x32xbf16>, vector<2x32xf32> -> vector<2x32xf32>
    %162 = vector.broadcast %1 : vector<1x32xf32> to vector<2x32xf32>
    %163 = arith.addf %161, %162 : vector<2x32xf32>
    %cst_111 = arith.constant 0.000000e+00 : f32
    %164 = vector.broadcast %cst_111 : f32 to vector<2x32xf32>
    %165 = arith.maximumf %163, %164 : vector<2x32xf32>
    %166 = arith.truncf %165 : vector<2x32xf32> to vector<2x32xbf16>
    %c13_112 = arith.constant 13 : index
    %c0_113 = arith.constant 0 : index
    %c0_114 = arith.constant 0 : index
    %167 = vector.load %arg4[%c13_112, %c0_113, %c0_114] : memref<49x32x64xbf16, #tpu.memory_space<vmem>>, vector<1x32x64xbf16>
    %168 = vector.shape_cast %167 : vector<1x32x64xbf16> to vector<32x64xbf16>
    %cst_115 = arith.constant dense<0.000000e+00> : vector<2x64xf32>
    %169 = tpu.matmul %166, %168, %cst_115 {dimension_numbers = #tpu.dot_dimension_numbers<[1], [0], [0], [1], [0, 0, 1, 1], [], []>} : vector<2x32xbf16>, vector<32x64xbf16>, vector<2x64xf32> -> vector<2x64xf32>
    %170 = arith.addf %158, %169 : vector<2x64xf32>
    %c14 = arith.constant 14 : index
    %c0_116 = arith.constant 0 : index
    %c0_117 = arith.constant 0 : index
    %171 = vector.load %arg1[%c14, %c0_116, %c0_117] : memref<49x2x144xbf16, #tpu.memory_space<vmem>>, vector<1x2x144xbf16>
    %172 = vector.shape_cast %171 : vector<1x2x144xbf16> to vector<2x144xbf16>
    %cst_118 = arith.constant dense<0.000000e+00> : vector<2x32xf32>
    %173 = tpu.matmul %172, %0, %cst_118 {dimension_numbers = #tpu.dot_dimension_numbers<[1], [0], [0], [1], [0, 0, 1, 1], [], []>} : vector<2x144xbf16>, vector<144x32xbf16>, vector<2x32xf32> -> vector<2x32xf32>
    %174 = vector.broadcast %1 : vector<1x32xf32> to vector<2x32xf32>
    %175 = arith.addf %173, %174 : vector<2x32xf32>
    %cst_119 = arith.constant 0.000000e+00 : f32
    %176 = vector.broadcast %cst_119 : f32 to vector<2x32xf32>
    %177 = arith.maximumf %175, %176 : vector<2x32xf32>
    %178 = arith.truncf %177 : vector<2x32xf32> to vector<2x32xbf16>
    %c14_120 = arith.constant 14 : index
    %c0_121 = arith.constant 0 : index
    %c0_122 = arith.constant 0 : index
    %179 = vector.load %arg4[%c14_120, %c0_121, %c0_122] : memref<49x32x64xbf16, #tpu.memory_space<vmem>>, vector<1x32x64xbf16>
    %180 = vector.shape_cast %179 : vector<1x32x64xbf16> to vector<32x64xbf16>
    %cst_123 = arith.constant dense<0.000000e+00> : vector<2x64xf32>
    %181 = tpu.matmul %178, %180, %cst_123 {dimension_numbers = #tpu.dot_dimension_numbers<[1], [0], [0], [1], [0, 0, 1, 1], [], []>} : vector<2x32xbf16>, vector<32x64xbf16>, vector<2x64xf32> -> vector<2x64xf32>
    %182 = arith.addf %170, %181 : vector<2x64xf32>
    %c15 = arith.constant 15 : index
    %c0_124 = arith.constant 0 : index
    %c0_125 = arith.constant 0 : index
    %183 = vector.load %arg1[%c15, %c0_124, %c0_125] : memref<49x2x144xbf16, #tpu.memory_space<vmem>>, vector<1x2x144xbf16>
    %184 = vector.shape_cast %183 : vector<1x2x144xbf16> to vector<2x144xbf16>
    %cst_126 = arith.constant dense<0.000000e+00> : vector<2x32xf32>
    %185 = tpu.matmul %184, %0, %cst_126 {dimension_numbers = #tpu.dot_dimension_numbers<[1], [0], [0], [1], [0, 0, 1, 1], [], []>} : vector<2x144xbf16>, vector<144x32xbf16>, vector<2x32xf32> -> vector<2x32xf32>
    %186 = vector.broadcast %1 : vector<1x32xf32> to vector<2x32xf32>
    %187 = arith.addf %185, %186 : vector<2x32xf32>
    %cst_127 = arith.constant 0.000000e+00 : f32
    %188 = vector.broadcast %cst_127 : f32 to vector<2x32xf32>
    %189 = arith.maximumf %187, %188 : vector<2x32xf32>
    %190 = arith.truncf %189 : vector<2x32xf32> to vector<2x32xbf16>
    %c15_128 = arith.constant 15 : index
    %c0_129 = arith.constant 0 : index
    %c0_130 = arith.constant 0 : index
    %191 = vector.load %arg4[%c15_128, %c0_129, %c0_130] : memref<49x32x64xbf16, #tpu.memory_space<vmem>>, vector<1x32x64xbf16>
    %192 = vector.shape_cast %191 : vector<1x32x64xbf16> to vector<32x64xbf16>
    %cst_131 = arith.constant dense<0.000000e+00> : vector<2x64xf32>
    %193 = tpu.matmul %190, %192, %cst_131 {dimension_numbers = #tpu.dot_dimension_numbers<[1], [0], [0], [1], [0, 0, 1, 1], [], []>} : vector<2x32xbf16>, vector<32x64xbf16>, vector<2x64xf32> -> vector<2x64xf32>
    %194 = arith.addf %182, %193 : vector<2x64xf32>
    %c16 = arith.constant 16 : index
    %c0_132 = arith.constant 0 : index
    %c0_133 = arith.constant 0 : index
    %195 = vector.load %arg1[%c16, %c0_132, %c0_133] : memref<49x2x144xbf16, #tpu.memory_space<vmem>>, vector<1x2x144xbf16>
    %196 = vector.shape_cast %195 : vector<1x2x144xbf16> to vector<2x144xbf16>
    %cst_134 = arith.constant dense<0.000000e+00> : vector<2x32xf32>
    %197 = tpu.matmul %196, %0, %cst_134 {dimension_numbers = #tpu.dot_dimension_numbers<[1], [0], [0], [1], [0, 0, 1, 1], [], []>} : vector<2x144xbf16>, vector<144x32xbf16>, vector<2x32xf32> -> vector<2x32xf32>
    %198 = vector.broadcast %1 : vector<1x32xf32> to vector<2x32xf32>
    %199 = arith.addf %197, %198 : vector<2x32xf32>
    %cst_135 = arith.constant 0.000000e+00 : f32
    %200 = vector.broadcast %cst_135 : f32 to vector<2x32xf32>
    %201 = arith.maximumf %199, %200 : vector<2x32xf32>
    %202 = arith.truncf %201 : vector<2x32xf32> to vector<2x32xbf16>
    %c16_136 = arith.constant 16 : index
    %c0_137 = arith.constant 0 : index
    %c0_138 = arith.constant 0 : index
    %203 = vector.load %arg4[%c16_136, %c0_137, %c0_138] : memref<49x32x64xbf16, #tpu.memory_space<vmem>>, vector<1x32x64xbf16>
    %204 = vector.shape_cast %203 : vector<1x32x64xbf16> to vector<32x64xbf16>
    %cst_139 = arith.constant dense<0.000000e+00> : vector<2x64xf32>
    %205 = tpu.matmul %202, %204, %cst_139 {dimension_numbers = #tpu.dot_dimension_numbers<[1], [0], [0], [1], [0, 0, 1, 1], [], []>} : vector<2x32xbf16>, vector<32x64xbf16>, vector<2x64xf32> -> vector<2x64xf32>
    %206 = arith.addf %194, %205 : vector<2x64xf32>
    %c17 = arith.constant 17 : index
    %c0_140 = arith.constant 0 : index
    %c0_141 = arith.constant 0 : index
    %207 = vector.load %arg1[%c17, %c0_140, %c0_141] : memref<49x2x144xbf16, #tpu.memory_space<vmem>>, vector<1x2x144xbf16>
    %208 = vector.shape_cast %207 : vector<1x2x144xbf16> to vector<2x144xbf16>
    %cst_142 = arith.constant dense<0.000000e+00> : vector<2x32xf32>
    %209 = tpu.matmul %208, %0, %cst_142 {dimension_numbers = #tpu.dot_dimension_numbers<[1], [0], [0], [1], [0, 0, 1, 1], [], []>} : vector<2x144xbf16>, vector<144x32xbf16>, vector<2x32xf32> -> vector<2x32xf32>
    %210 = vector.broadcast %1 : vector<1x32xf32> to vector<2x32xf32>
    %211 = arith.addf %209, %210 : vector<2x32xf32>
    %cst_143 = arith.constant 0.000000e+00 : f32
    %212 = vector.broadcast %cst_143 : f32 to vector<2x32xf32>
    %213 = arith.maximumf %211, %212 : vector<2x32xf32>
    %214 = arith.truncf %213 : vector<2x32xf32> to vector<2x32xbf16>
    %c17_144 = arith.constant 17 : index
    %c0_145 = arith.constant 0 : index
    %c0_146 = arith.constant 0 : index
    %215 = vector.load %arg4[%c17_144, %c0_145, %c0_146] : memref<49x32x64xbf16, #tpu.memory_space<vmem>>, vector<1x32x64xbf16>
    %216 = vector.shape_cast %215 : vector<1x32x64xbf16> to vector<32x64xbf16>
    %cst_147 = arith.constant dense<0.000000e+00> : vector<2x64xf32>
    %217 = tpu.matmul %214, %216, %cst_147 {dimension_numbers = #tpu.dot_dimension_numbers<[1], [0], [0], [1], [0, 0, 1, 1], [], []>} : vector<2x32xbf16>, vector<32x64xbf16>, vector<2x64xf32> -> vector<2x64xf32>
    %218 = arith.addf %206, %217 : vector<2x64xf32>
    %c18 = arith.constant 18 : index
    %c0_148 = arith.constant 0 : index
    %c0_149 = arith.constant 0 : index
    %219 = vector.load %arg1[%c18, %c0_148, %c0_149] : memref<49x2x144xbf16, #tpu.memory_space<vmem>>, vector<1x2x144xbf16>
    %220 = vector.shape_cast %219 : vector<1x2x144xbf16> to vector<2x144xbf16>
    %cst_150 = arith.constant dense<0.000000e+00> : vector<2x32xf32>
    %221 = tpu.matmul %220, %0, %cst_150 {dimension_numbers = #tpu.dot_dimension_numbers<[1], [0], [0], [1], [0, 0, 1, 1], [], []>} : vector<2x144xbf16>, vector<144x32xbf16>, vector<2x32xf32> -> vector<2x32xf32>
    %222 = vector.broadcast %1 : vector<1x32xf32> to vector<2x32xf32>
    %223 = arith.addf %221, %222 : vector<2x32xf32>
    %cst_151 = arith.constant 0.000000e+00 : f32
    %224 = vector.broadcast %cst_151 : f32 to vector<2x32xf32>
    %225 = arith.maximumf %223, %224 : vector<2x32xf32>
    %226 = arith.truncf %225 : vector<2x32xf32> to vector<2x32xbf16>
    %c18_152 = arith.constant 18 : index
    %c0_153 = arith.constant 0 : index
    %c0_154 = arith.constant 0 : index
    %227 = vector.load %arg4[%c18_152, %c0_153, %c0_154] : memref<49x32x64xbf16, #tpu.memory_space<vmem>>, vector<1x32x64xbf16>
    %228 = vector.shape_cast %227 : vector<1x32x64xbf16> to vector<32x64xbf16>
    %cst_155 = arith.constant dense<0.000000e+00> : vector<2x64xf32>
    %229 = tpu.matmul %226, %228, %cst_155 {dimension_numbers = #tpu.dot_dimension_numbers<[1], [0], [0], [1], [0, 0, 1, 1], [], []>} : vector<2x32xbf16>, vector<32x64xbf16>, vector<2x64xf32> -> vector<2x64xf32>
    %230 = arith.addf %218, %229 : vector<2x64xf32>
    %c19 = arith.constant 19 : index
    %c0_156 = arith.constant 0 : index
    %c0_157 = arith.constant 0 : index
    %231 = vector.load %arg1[%c19, %c0_156, %c0_157] : memref<49x2x144xbf16, #tpu.memory_space<vmem>>, vector<1x2x144xbf16>
    %232 = vector.shape_cast %231 : vector<1x2x144xbf16> to vector<2x144xbf16>
    %cst_158 = arith.constant dense<0.000000e+00> : vector<2x32xf32>
    %233 = tpu.matmul %232, %0, %cst_158 {dimension_numbers = #tpu.dot_dimension_numbers<[1], [0], [0], [1], [0, 0, 1, 1], [], []>} : vector<2x144xbf16>, vector<144x32xbf16>, vector<2x32xf32> -> vector<2x32xf32>
    %234 = vector.broadcast %1 : vector<1x32xf32> to vector<2x32xf32>
    %235 = arith.addf %233, %234 : vector<2x32xf32>
    %cst_159 = arith.constant 0.000000e+00 : f32
    %236 = vector.broadcast %cst_159 : f32 to vector<2x32xf32>
    %237 = arith.maximumf %235, %236 : vector<2x32xf32>
    %238 = arith.truncf %237 : vector<2x32xf32> to vector<2x32xbf16>
    %c19_160 = arith.constant 19 : index
    %c0_161 = arith.constant 0 : index
    %c0_162 = arith.constant 0 : index
    %239 = vector.load %arg4[%c19_160, %c0_161, %c0_162] : memref<49x32x64xbf16, #tpu.memory_space<vmem>>, vector<1x32x64xbf16>
    %240 = vector.shape_cast %239 : vector<1x32x64xbf16> to vector<32x64xbf16>
    %cst_163 = arith.constant dense<0.000000e+00> : vector<2x64xf32>
    %241 = tpu.matmul %238, %240, %cst_163 {dimension_numbers = #tpu.dot_dimension_numbers<[1], [0], [0], [1], [0, 0, 1, 1], [], []>} : vector<2x32xbf16>, vector<32x64xbf16>, vector<2x64xf32> -> vector<2x64xf32>
    %242 = arith.addf %230, %241 : vector<2x64xf32>
    %c20 = arith.constant 20 : index
    %c0_164 = arith.constant 0 : index
    %c0_165 = arith.constant 0 : index
    %243 = vector.load %arg1[%c20, %c0_164, %c0_165] : memref<49x2x144xbf16, #tpu.memory_space<vmem>>, vector<1x2x144xbf16>
    %244 = vector.shape_cast %243 : vector<1x2x144xbf16> to vector<2x144xbf16>
    %cst_166 = arith.constant dense<0.000000e+00> : vector<2x32xf32>
    %245 = tpu.matmul %244, %0, %cst_166 {dimension_numbers = #tpu.dot_dimension_numbers<[1], [0], [0], [1], [0, 0, 1, 1], [], []>} : vector<2x144xbf16>, vector<144x32xbf16>, vector<2x32xf32> -> vector<2x32xf32>
    %246 = vector.broadcast %1 : vector<1x32xf32> to vector<2x32xf32>
    %247 = arith.addf %245, %246 : vector<2x32xf32>
    %cst_167 = arith.constant 0.000000e+00 : f32
    %248 = vector.broadcast %cst_167 : f32 to vector<2x32xf32>
    %249 = arith.maximumf %247, %248 : vector<2x32xf32>
    %250 = arith.truncf %249 : vector<2x32xf32> to vector<2x32xbf16>
    %c20_168 = arith.constant 20 : index
    %c0_169 = arith.constant 0 : index
    %c0_170 = arith.constant 0 : index
    %251 = vector.load %arg4[%c20_168, %c0_169, %c0_170] : memref<49x32x64xbf16, #tpu.memory_space<vmem>>, vector<1x32x64xbf16>
    %252 = vector.shape_cast %251 : vector<1x32x64xbf16> to vector<32x64xbf16>
    %cst_171 = arith.constant dense<0.000000e+00> : vector<2x64xf32>
    %253 = tpu.matmul %250, %252, %cst_171 {dimension_numbers = #tpu.dot_dimension_numbers<[1], [0], [0], [1], [0, 0, 1, 1], [], []>} : vector<2x32xbf16>, vector<32x64xbf16>, vector<2x64xf32> -> vector<2x64xf32>
    %254 = arith.addf %242, %253 : vector<2x64xf32>
    %c21 = arith.constant 21 : index
    %c0_172 = arith.constant 0 : index
    %c0_173 = arith.constant 0 : index
    %255 = vector.load %arg1[%c21, %c0_172, %c0_173] : memref<49x2x144xbf16, #tpu.memory_space<vmem>>, vector<1x2x144xbf16>
    %256 = vector.shape_cast %255 : vector<1x2x144xbf16> to vector<2x144xbf16>
    %cst_174 = arith.constant dense<0.000000e+00> : vector<2x32xf32>
    %257 = tpu.matmul %256, %0, %cst_174 {dimension_numbers = #tpu.dot_dimension_numbers<[1], [0], [0], [1], [0, 0, 1, 1], [], []>} : vector<2x144xbf16>, vector<144x32xbf16>, vector<2x32xf32> -> vector<2x32xf32>
    %258 = vector.broadcast %1 : vector<1x32xf32> to vector<2x32xf32>
    %259 = arith.addf %257, %258 : vector<2x32xf32>
    %cst_175 = arith.constant 0.000000e+00 : f32
    %260 = vector.broadcast %cst_175 : f32 to vector<2x32xf32>
    %261 = arith.maximumf %259, %260 : vector<2x32xf32>
    %262 = arith.truncf %261 : vector<2x32xf32> to vector<2x32xbf16>
    %c21_176 = arith.constant 21 : index
    %c0_177 = arith.constant 0 : index
    %c0_178 = arith.constant 0 : index
    %263 = vector.load %arg4[%c21_176, %c0_177, %c0_178] : memref<49x32x64xbf16, #tpu.memory_space<vmem>>, vector<1x32x64xbf16>
    %264 = vector.shape_cast %263 : vector<1x32x64xbf16> to vector<32x64xbf16>
    %cst_179 = arith.constant dense<0.000000e+00> : vector<2x64xf32>
    %265 = tpu.matmul %262, %264, %cst_179 {dimension_numbers = #tpu.dot_dimension_numbers<[1], [0], [0], [1], [0, 0, 1, 1], [], []>} : vector<2x32xbf16>, vector<32x64xbf16>, vector<2x64xf32> -> vector<2x64xf32>
    %266 = arith.addf %254, %265 : vector<2x64xf32>
    %c22 = arith.constant 22 : index
    %c0_180 = arith.constant 0 : index
    %c0_181 = arith.constant 0 : index
    %267 = vector.load %arg1[%c22, %c0_180, %c0_181] : memref<49x2x144xbf16, #tpu.memory_space<vmem>>, vector<1x2x144xbf16>
    %268 = vector.shape_cast %267 : vector<1x2x144xbf16> to vector<2x144xbf16>
    %cst_182 = arith.constant dense<0.000000e+00> : vector<2x32xf32>
    %269 = tpu.matmul %268, %0, %cst_182 {dimension_numbers = #tpu.dot_dimension_numbers<[1], [0], [0], [1], [0, 0, 1, 1], [], []>} : vector<2x144xbf16>, vector<144x32xbf16>, vector<2x32xf32> -> vector<2x32xf32>
    %270 = vector.broadcast %1 : vector<1x32xf32> to vector<2x32xf32>
    %271 = arith.addf %269, %270 : vector<2x32xf32>
    %cst_183 = arith.constant 0.000000e+00 : f32
    %272 = vector.broadcast %cst_183 : f32 to vector<2x32xf32>
    %273 = arith.maximumf %271, %272 : vector<2x32xf32>
    %274 = arith.truncf %273 : vector<2x32xf32> to vector<2x32xbf16>
    %c22_184 = arith.constant 22 : index
    %c0_185 = arith.constant 0 : index
    %c0_186 = arith.constant 0 : index
    %275 = vector.load %arg4[%c22_184, %c0_185, %c0_186] : memref<49x32x64xbf16, #tpu.memory_space<vmem>>, vector<1x32x64xbf16>
    %276 = vector.shape_cast %275 : vector<1x32x64xbf16> to vector<32x64xbf16>
    %cst_187 = arith.constant dense<0.000000e+00> : vector<2x64xf32>
    %277 = tpu.matmul %274, %276, %cst_187 {dimension_numbers = #tpu.dot_dimension_numbers<[1], [0], [0], [1], [0, 0, 1, 1], [], []>} : vector<2x32xbf16>, vector<32x64xbf16>, vector<2x64xf32> -> vector<2x64xf32>
    %278 = arith.addf %266, %277 : vector<2x64xf32>
    %c23 = arith.constant 23 : index
    %c0_188 = arith.constant 0 : index
    %c0_189 = arith.constant 0 : index
    %279 = vector.load %arg1[%c23, %c0_188, %c0_189] : memref<49x2x144xbf16, #tpu.memory_space<vmem>>, vector<1x2x144xbf16>
    %280 = vector.shape_cast %279 : vector<1x2x144xbf16> to vector<2x144xbf16>
    %cst_190 = arith.constant dense<0.000000e+00> : vector<2x32xf32>
    %281 = tpu.matmul %280, %0, %cst_190 {dimension_numbers = #tpu.dot_dimension_numbers<[1], [0], [0], [1], [0, 0, 1, 1], [], []>} : vector<2x144xbf16>, vector<144x32xbf16>, vector<2x32xf32> -> vector<2x32xf32>
    %282 = vector.broadcast %1 : vector<1x32xf32> to vector<2x32xf32>
    %283 = arith.addf %281, %282 : vector<2x32xf32>
    %cst_191 = arith.constant 0.000000e+00 : f32
    %284 = vector.broadcast %cst_191 : f32 to vector<2x32xf32>
    %285 = arith.maximumf %283, %284 : vector<2x32xf32>
    %286 = arith.truncf %285 : vector<2x32xf32> to vector<2x32xbf16>
    %c23_192 = arith.constant 23 : index
    %c0_193 = arith.constant 0 : index
    %c0_194 = arith.constant 0 : index
    %287 = vector.load %arg4[%c23_192, %c0_193, %c0_194] : memref<49x32x64xbf16, #tpu.memory_space<vmem>>, vector<1x32x64xbf16>
    %288 = vector.shape_cast %287 : vector<1x32x64xbf16> to vector<32x64xbf16>
    %cst_195 = arith.constant dense<0.000000e+00> : vector<2x64xf32>
    %289 = tpu.matmul %286, %288, %cst_195 {dimension_numbers = #tpu.dot_dimension_numbers<[1], [0], [0], [1], [0, 0, 1, 1], [], []>} : vector<2x32xbf16>, vector<32x64xbf16>, vector<2x64xf32> -> vector<2x64xf32>
    %290 = arith.addf %278, %289 : vector<2x64xf32>
    %c24 = arith.constant 24 : index
    %c0_196 = arith.constant 0 : index
    %c0_197 = arith.constant 0 : index
    %291 = vector.load %arg1[%c24, %c0_196, %c0_197] : memref<49x2x144xbf16, #tpu.memory_space<vmem>>, vector<1x2x144xbf16>
    %292 = vector.shape_cast %291 : vector<1x2x144xbf16> to vector<2x144xbf16>
    %cst_198 = arith.constant dense<0.000000e+00> : vector<2x32xf32>
    %293 = tpu.matmul %292, %0, %cst_198 {dimension_numbers = #tpu.dot_dimension_numbers<[1], [0], [0], [1], [0, 0, 1, 1], [], []>} : vector<2x144xbf16>, vector<144x32xbf16>, vector<2x32xf32> -> vector<2x32xf32>
    %294 = vector.broadcast %1 : vector<1x32xf32> to vector<2x32xf32>
    %295 = arith.addf %293, %294 : vector<2x32xf32>
    %cst_199 = arith.constant 0.000000e+00 : f32
    %296 = vector.broadcast %cst_199 : f32 to vector<2x32xf32>
    %297 = arith.maximumf %295, %296 : vector<2x32xf32>
    %298 = arith.truncf %297 : vector<2x32xf32> to vector<2x32xbf16>
    %c24_200 = arith.constant 24 : index
    %c0_201 = arith.constant 0 : index
    %c0_202 = arith.constant 0 : index
    %299 = vector.load %arg4[%c24_200, %c0_201, %c0_202] : memref<49x32x64xbf16, #tpu.memory_space<vmem>>, vector<1x32x64xbf16>
    %300 = vector.shape_cast %299 : vector<1x32x64xbf16> to vector<32x64xbf16>
    %cst_203 = arith.constant dense<0.000000e+00> : vector<2x64xf32>
    %301 = tpu.matmul %298, %300, %cst_203 {dimension_numbers = #tpu.dot_dimension_numbers<[1], [0], [0], [1], [0, 0, 1, 1], [], []>} : vector<2x32xbf16>, vector<32x64xbf16>, vector<2x64xf32> -> vector<2x64xf32>
    %302 = arith.addf %290, %301 : vector<2x64xf32>
    %c25 = arith.constant 25 : index
    %c0_204 = arith.constant 0 : index
    %c0_205 = arith.constant 0 : index
    %303 = vector.load %arg1[%c25, %c0_204, %c0_205] : memref<49x2x144xbf16, #tpu.memory_space<vmem>>, vector<1x2x144xbf16>
    %304 = vector.shape_cast %303 : vector<1x2x144xbf16> to vector<2x144xbf16>
    %cst_206 = arith.constant dense<0.000000e+00> : vector<2x32xf32>
    %305 = tpu.matmul %304, %0, %cst_206 {dimension_numbers = #tpu.dot_dimension_numbers<[1], [0], [0], [1], [0, 0, 1, 1], [], []>} : vector<2x144xbf16>, vector<144x32xbf16>, vector<2x32xf32> -> vector<2x32xf32>
    %306 = vector.broadcast %1 : vector<1x32xf32> to vector<2x32xf32>
    %307 = arith.addf %305, %306 : vector<2x32xf32>
    %cst_207 = arith.constant 0.000000e+00 : f32
    %308 = vector.broadcast %cst_207 : f32 to vector<2x32xf32>
    %309 = arith.maximumf %307, %308 : vector<2x32xf32>
    %310 = arith.truncf %309 : vector<2x32xf32> to vector<2x32xbf16>
    %c25_208 = arith.constant 25 : index
    %c0_209 = arith.constant 0 : index
    %c0_210 = arith.constant 0 : index
    %311 = vector.load %arg4[%c25_208, %c0_209, %c0_210] : memref<49x32x64xbf16, #tpu.memory_space<vmem>>, vector<1x32x64xbf16>
    %312 = vector.shape_cast %311 : vector<1x32x64xbf16> to vector<32x64xbf16>
    %cst_211 = arith.constant dense<0.000000e+00> : vector<2x64xf32>
    %313 = tpu.matmul %310, %312, %cst_211 {dimension_numbers = #tpu.dot_dimension_numbers<[1], [0], [0], [1], [0, 0, 1, 1], [], []>} : vector<2x32xbf16>, vector<32x64xbf16>, vector<2x64xf32> -> vector<2x64xf32>
    %314 = arith.addf %302, %313 : vector<2x64xf32>
    %c26 = arith.constant 26 : index
    %c0_212 = arith.constant 0 : index
    %c0_213 = arith.constant 0 : index
    %315 = vector.load %arg1[%c26, %c0_212, %c0_213] : memref<49x2x144xbf16, #tpu.memory_space<vmem>>, vector<1x2x144xbf16>
    %316 = vector.shape_cast %315 : vector<1x2x144xbf16> to vector<2x144xbf16>
    %cst_214 = arith.constant dense<0.000000e+00> : vector<2x32xf32>
    %317 = tpu.matmul %316, %0, %cst_214 {dimension_numbers = #tpu.dot_dimension_numbers<[1], [0], [0], [1], [0, 0, 1, 1], [], []>} : vector<2x144xbf16>, vector<144x32xbf16>, vector<2x32xf32> -> vector<2x32xf32>
    %318 = vector.broadcast %1 : vector<1x32xf32> to vector<2x32xf32>
    %319 = arith.addf %317, %318 : vector<2x32xf32>
    %cst_215 = arith.constant 0.000000e+00 : f32
    %320 = vector.broadcast %cst_215 : f32 to vector<2x32xf32>
    %321 = arith.maximumf %319, %320 : vector<2x32xf32>
    %322 = arith.truncf %321 : vector<2x32xf32> to vector<2x32xbf16>
    %c26_216 = arith.constant 26 : index
    %c0_217 = arith.constant 0 : index
    %c0_218 = arith.constant 0 : index
    %323 = vector.load %arg4[%c26_216, %c0_217, %c0_218] : memref<49x32x64xbf16, #tpu.memory_space<vmem>>, vector<1x32x64xbf16>
    %324 = vector.shape_cast %323 : vector<1x32x64xbf16> to vector<32x64xbf16>
    %cst_219 = arith.constant dense<0.000000e+00> : vector<2x64xf32>
    %325 = tpu.matmul %322, %324, %cst_219 {dimension_numbers = #tpu.dot_dimension_numbers<[1], [0], [0], [1], [0, 0, 1, 1], [], []>} : vector<2x32xbf16>, vector<32x64xbf16>, vector<2x64xf32> -> vector<2x64xf32>
    %326 = arith.addf %314, %325 : vector<2x64xf32>
    %c27 = arith.constant 27 : index
    %c0_220 = arith.constant 0 : index
    %c0_221 = arith.constant 0 : index
    %327 = vector.load %arg1[%c27, %c0_220, %c0_221] : memref<49x2x144xbf16, #tpu.memory_space<vmem>>, vector<1x2x144xbf16>
    %328 = vector.shape_cast %327 : vector<1x2x144xbf16> to vector<2x144xbf16>
    %cst_222 = arith.constant dense<0.000000e+00> : vector<2x32xf32>
    %329 = tpu.matmul %328, %0, %cst_222 {dimension_numbers = #tpu.dot_dimension_numbers<[1], [0], [0], [1], [0, 0, 1, 1], [], []>} : vector<2x144xbf16>, vector<144x32xbf16>, vector<2x32xf32> -> vector<2x32xf32>
    %330 = vector.broadcast %1 : vector<1x32xf32> to vector<2x32xf32>
    %331 = arith.addf %329, %330 : vector<2x32xf32>
    %cst_223 = arith.constant 0.000000e+00 : f32
    %332 = vector.broadcast %cst_223 : f32 to vector<2x32xf32>
    %333 = arith.maximumf %331, %332 : vector<2x32xf32>
    %334 = arith.truncf %333 : vector<2x32xf32> to vector<2x32xbf16>
    %c27_224 = arith.constant 27 : index
    %c0_225 = arith.constant 0 : index
    %c0_226 = arith.constant 0 : index
    %335 = vector.load %arg4[%c27_224, %c0_225, %c0_226] : memref<49x32x64xbf16, #tpu.memory_space<vmem>>, vector<1x32x64xbf16>
    %336 = vector.shape_cast %335 : vector<1x32x64xbf16> to vector<32x64xbf16>
    %cst_227 = arith.constant dense<0.000000e+00> : vector<2x64xf32>
    %337 = tpu.matmul %334, %336, %cst_227 {dimension_numbers = #tpu.dot_dimension_numbers<[1], [0], [0], [1], [0, 0, 1, 1], [], []>} : vector<2x32xbf16>, vector<32x64xbf16>, vector<2x64xf32> -> vector<2x64xf32>
    %338 = arith.addf %326, %337 : vector<2x64xf32>
    %c28 = arith.constant 28 : index
    %c0_228 = arith.constant 0 : index
    %c0_229 = arith.constant 0 : index
    %339 = vector.load %arg1[%c28, %c0_228, %c0_229] : memref<49x2x144xbf16, #tpu.memory_space<vmem>>, vector<1x2x144xbf16>
    %340 = vector.shape_cast %339 : vector<1x2x144xbf16> to vector<2x144xbf16>
    %cst_230 = arith.constant dense<0.000000e+00> : vector<2x32xf32>
    %341 = tpu.matmul %340, %0, %cst_230 {dimension_numbers = #tpu.dot_dimension_numbers<[1], [0], [0], [1], [0, 0, 1, 1], [], []>} : vector<2x144xbf16>, vector<144x32xbf16>, vector<2x32xf32> -> vector<2x32xf32>
    %342 = vector.broadcast %1 : vector<1x32xf32> to vector<2x32xf32>
    %343 = arith.addf %341, %342 : vector<2x32xf32>
    %cst_231 = arith.constant 0.000000e+00 : f32
    %344 = vector.broadcast %cst_231 : f32 to vector<2x32xf32>
    %345 = arith.maximumf %343, %344 : vector<2x32xf32>
    %346 = arith.truncf %345 : vector<2x32xf32> to vector<2x32xbf16>
    %c28_232 = arith.constant 28 : index
    %c0_233 = arith.constant 0 : index
    %c0_234 = arith.constant 0 : index
    %347 = vector.load %arg4[%c28_232, %c0_233, %c0_234] : memref<49x32x64xbf16, #tpu.memory_space<vmem>>, vector<1x32x64xbf16>
    %348 = vector.shape_cast %347 : vector<1x32x64xbf16> to vector<32x64xbf16>
    %cst_235 = arith.constant dense<0.000000e+00> : vector<2x64xf32>
    %349 = tpu.matmul %346, %348, %cst_235 {dimension_numbers = #tpu.dot_dimension_numbers<[1], [0], [0], [1], [0, 0, 1, 1], [], []>} : vector<2x32xbf16>, vector<32x64xbf16>, vector<2x64xf32> -> vector<2x64xf32>
    %350 = arith.addf %338, %349 : vector<2x64xf32>
    %c29 = arith.constant 29 : index
    %c0_236 = arith.constant 0 : index
    %c0_237 = arith.constant 0 : index
    %351 = vector.load %arg1[%c29, %c0_236, %c0_237] : memref<49x2x144xbf16, #tpu.memory_space<vmem>>, vector<1x2x144xbf16>
    %352 = vector.shape_cast %351 : vector<1x2x144xbf16> to vector<2x144xbf16>
    %cst_238 = arith.constant dense<0.000000e+00> : vector<2x32xf32>
    %353 = tpu.matmul %352, %0, %cst_238 {dimension_numbers = #tpu.dot_dimension_numbers<[1], [0], [0], [1], [0, 0, 1, 1], [], []>} : vector<2x144xbf16>, vector<144x32xbf16>, vector<2x32xf32> -> vector<2x32xf32>
    %354 = vector.broadcast %1 : vector<1x32xf32> to vector<2x32xf32>
    %355 = arith.addf %353, %354 : vector<2x32xf32>
    %cst_239 = arith.constant 0.000000e+00 : f32
    %356 = vector.broadcast %cst_239 : f32 to vector<2x32xf32>
    %357 = arith.maximumf %355, %356 : vector<2x32xf32>
    %358 = arith.truncf %357 : vector<2x32xf32> to vector<2x32xbf16>
    %c29_240 = arith.constant 29 : index
    %c0_241 = arith.constant 0 : index
    %c0_242 = arith.constant 0 : index
    %359 = vector.load %arg4[%c29_240, %c0_241, %c0_242] : memref<49x32x64xbf16, #tpu.memory_space<vmem>>, vector<1x32x64xbf16>
    %360 = vector.shape_cast %359 : vector<1x32x64xbf16> to vector<32x64xbf16>
    %cst_243 = arith.constant dense<0.000000e+00> : vector<2x64xf32>
    %361 = tpu.matmul %358, %360, %cst_243 {dimension_numbers = #tpu.dot_dimension_numbers<[1], [0], [0], [1], [0, 0, 1, 1], [], []>} : vector<2x32xbf16>, vector<32x64xbf16>, vector<2x64xf32> -> vector<2x64xf32>
    %362 = arith.addf %350, %361 : vector<2x64xf32>
    %c30 = arith.constant 30 : index
    %c0_244 = arith.constant 0 : index
    %c0_245 = arith.constant 0 : index
    %363 = vector.load %arg1[%c30, %c0_244, %c0_245] : memref<49x2x144xbf16, #tpu.memory_space<vmem>>, vector<1x2x144xbf16>
    %364 = vector.shape_cast %363 : vector<1x2x144xbf16> to vector<2x144xbf16>
    %cst_246 = arith.constant dense<0.000000e+00> : vector<2x32xf32>
    %365 = tpu.matmul %364, %0, %cst_246 {dimension_numbers = #tpu.dot_dimension_numbers<[1], [0], [0], [1], [0, 0, 1, 1], [], []>} : vector<2x144xbf16>, vector<144x32xbf16>, vector<2x32xf32> -> vector<2x32xf32>
    %366 = vector.broadcast %1 : vector<1x32xf32> to vector<2x32xf32>
    %367 = arith.addf %365, %366 : vector<2x32xf32>
    %cst_247 = arith.constant 0.000000e+00 : f32
    %368 = vector.broadcast %cst_247 : f32 to vector<2x32xf32>
    %369 = arith.maximumf %367, %368 : vector<2x32xf32>
    %370 = arith.truncf %369 : vector<2x32xf32> to vector<2x32xbf16>
    %c30_248 = arith.constant 30 : index
    %c0_249 = arith.constant 0 : index
    %c0_250 = arith.constant 0 : index
    %371 = vector.load %arg4[%c30_248, %c0_249, %c0_250] : memref<49x32x64xbf16, #tpu.memory_space<vmem>>, vector<1x32x64xbf16>
    %372 = vector.shape_cast %371 : vector<1x32x64xbf16> to vector<32x64xbf16>
    %cst_251 = arith.constant dense<0.000000e+00> : vector<2x64xf32>
    %373 = tpu.matmul %370, %372, %cst_251 {dimension_numbers = #tpu.dot_dimension_numbers<[1], [0], [0], [1], [0, 0, 1, 1], [], []>} : vector<2x32xbf16>, vector<32x64xbf16>, vector<2x64xf32> -> vector<2x64xf32>
    %374 = arith.addf %362, %373 : vector<2x64xf32>
    %c31 = arith.constant 31 : index
    %c0_252 = arith.constant 0 : index
    %c0_253 = arith.constant 0 : index
    %375 = vector.load %arg1[%c31, %c0_252, %c0_253] : memref<49x2x144xbf16, #tpu.memory_space<vmem>>, vector<1x2x144xbf16>
    %376 = vector.shape_cast %375 : vector<1x2x144xbf16> to vector<2x144xbf16>
    %cst_254 = arith.constant dense<0.000000e+00> : vector<2x32xf32>
    %377 = tpu.matmul %376, %0, %cst_254 {dimension_numbers = #tpu.dot_dimension_numbers<[1], [0], [0], [1], [0, 0, 1, 1], [], []>} : vector<2x144xbf16>, vector<144x32xbf16>, vector<2x32xf32> -> vector<2x32xf32>
    %378 = vector.broadcast %1 : vector<1x32xf32> to vector<2x32xf32>
    %379 = arith.addf %377, %378 : vector<2x32xf32>
    %cst_255 = arith.constant 0.000000e+00 : f32
    %380 = vector.broadcast %cst_255 : f32 to vector<2x32xf32>
    %381 = arith.maximumf %379, %380 : vector<2x32xf32>
    %382 = arith.truncf %381 : vector<2x32xf32> to vector<2x32xbf16>
    %c31_256 = arith.constant 31 : index
    %c0_257 = arith.constant 0 : index
    %c0_258 = arith.constant 0 : index
    %383 = vector.load %arg4[%c31_256, %c0_257, %c0_258] : memref<49x32x64xbf16, #tpu.memory_space<vmem>>, vector<1x32x64xbf16>
    %384 = vector.shape_cast %383 : vector<1x32x64xbf16> to vector<32x64xbf16>
    %cst_259 = arith.constant dense<0.000000e+00> : vector<2x64xf32>
    %385 = tpu.matmul %382, %384, %cst_259 {dimension_numbers = #tpu.dot_dimension_numbers<[1], [0], [0], [1], [0, 0, 1, 1], [], []>} : vector<2x32xbf16>, vector<32x64xbf16>, vector<2x64xf32> -> vector<2x64xf32>
    %386 = arith.addf %374, %385 : vector<2x64xf32>
    %c32 = arith.constant 32 : index
    %c0_260 = arith.constant 0 : index
    %c0_261 = arith.constant 0 : index
    %387 = vector.load %arg1[%c32, %c0_260, %c0_261] : memref<49x2x144xbf16, #tpu.memory_space<vmem>>, vector<1x2x144xbf16>
    %388 = vector.shape_cast %387 : vector<1x2x144xbf16> to vector<2x144xbf16>
    %cst_262 = arith.constant dense<0.000000e+00> : vector<2x32xf32>
    %389 = tpu.matmul %388, %0, %cst_262 {dimension_numbers = #tpu.dot_dimension_numbers<[1], [0], [0], [1], [0, 0, 1, 1], [], []>} : vector<2x144xbf16>, vector<144x32xbf16>, vector<2x32xf32> -> vector<2x32xf32>
    %390 = vector.broadcast %1 : vector<1x32xf32> to vector<2x32xf32>
    %391 = arith.addf %389, %390 : vector<2x32xf32>
    %cst_263 = arith.constant 0.000000e+00 : f32
    %392 = vector.broadcast %cst_263 : f32 to vector<2x32xf32>
    %393 = arith.maximumf %391, %392 : vector<2x32xf32>
    %394 = arith.truncf %393 : vector<2x32xf32> to vector<2x32xbf16>
    %c32_264 = arith.constant 32 : index
    %c0_265 = arith.constant 0 : index
    %c0_266 = arith.constant 0 : index
    %395 = vector.load %arg4[%c32_264, %c0_265, %c0_266] : memref<49x32x64xbf16, #tpu.memory_space<vmem>>, vector<1x32x64xbf16>
    %396 = vector.shape_cast %395 : vector<1x32x64xbf16> to vector<32x64xbf16>
    %cst_267 = arith.constant dense<0.000000e+00> : vector<2x64xf32>
    %397 = tpu.matmul %394, %396, %cst_267 {dimension_numbers = #tpu.dot_dimension_numbers<[1], [0], [0], [1], [0, 0, 1, 1], [], []>} : vector<2x32xbf16>, vector<32x64xbf16>, vector<2x64xf32> -> vector<2x64xf32>
    %398 = arith.addf %386, %397 : vector<2x64xf32>
    %c33 = arith.constant 33 : index
    %c0_268 = arith.constant 0 : index
    %c0_269 = arith.constant 0 : index
    %399 = vector.load %arg1[%c33, %c0_268, %c0_269] : memref<49x2x144xbf16, #tpu.memory_space<vmem>>, vector<1x2x144xbf16>
    %400 = vector.shape_cast %399 : vector<1x2x144xbf16> to vector<2x144xbf16>
    %cst_270 = arith.constant dense<0.000000e+00> : vector<2x32xf32>
    %401 = tpu.matmul %400, %0, %cst_270 {dimension_numbers = #tpu.dot_dimension_numbers<[1], [0], [0], [1], [0, 0, 1, 1], [], []>} : vector<2x144xbf16>, vector<144x32xbf16>, vector<2x32xf32> -> vector<2x32xf32>
    %402 = vector.broadcast %1 : vector<1x32xf32> to vector<2x32xf32>
    %403 = arith.addf %401, %402 : vector<2x32xf32>
    %cst_271 = arith.constant 0.000000e+00 : f32
    %404 = vector.broadcast %cst_271 : f32 to vector<2x32xf32>
    %405 = arith.maximumf %403, %404 : vector<2x32xf32>
    %406 = arith.truncf %405 : vector<2x32xf32> to vector<2x32xbf16>
    %c33_272 = arith.constant 33 : index
    %c0_273 = arith.constant 0 : index
    %c0_274 = arith.constant 0 : index
    %407 = vector.load %arg4[%c33_272, %c0_273, %c0_274] : memref<49x32x64xbf16, #tpu.memory_space<vmem>>, vector<1x32x64xbf16>
    %408 = vector.shape_cast %407 : vector<1x32x64xbf16> to vector<32x64xbf16>
    %cst_275 = arith.constant dense<0.000000e+00> : vector<2x64xf32>
    %409 = tpu.matmul %406, %408, %cst_275 {dimension_numbers = #tpu.dot_dimension_numbers<[1], [0], [0], [1], [0, 0, 1, 1], [], []>} : vector<2x32xbf16>, vector<32x64xbf16>, vector<2x64xf32> -> vector<2x64xf32>
    %410 = arith.addf %398, %409 : vector<2x64xf32>
    %c34 = arith.constant 34 : index
    %c0_276 = arith.constant 0 : index
    %c0_277 = arith.constant 0 : index
    %411 = vector.load %arg1[%c34, %c0_276, %c0_277] : memref<49x2x144xbf16, #tpu.memory_space<vmem>>, vector<1x2x144xbf16>
    %412 = vector.shape_cast %411 : vector<1x2x144xbf16> to vector<2x144xbf16>
    %cst_278 = arith.constant dense<0.000000e+00> : vector<2x32xf32>
    %413 = tpu.matmul %412, %0, %cst_278 {dimension_numbers = #tpu.dot_dimension_numbers<[1], [0], [0], [1], [0, 0, 1, 1], [], []>} : vector<2x144xbf16>, vector<144x32xbf16>, vector<2x32xf32> -> vector<2x32xf32>
    %414 = vector.broadcast %1 : vector<1x32xf32> to vector<2x32xf32>
    %415 = arith.addf %413, %414 : vector<2x32xf32>
    %cst_279 = arith.constant 0.000000e+00 : f32
    %416 = vector.broadcast %cst_279 : f32 to vector<2x32xf32>
    %417 = arith.maximumf %415, %416 : vector<2x32xf32>
    %418 = arith.truncf %417 : vector<2x32xf32> to vector<2x32xbf16>
    %c34_280 = arith.constant 34 : index
    %c0_281 = arith.constant 0 : index
    %c0_282 = arith.constant 0 : index
    %419 = vector.load %arg4[%c34_280, %c0_281, %c0_282] : memref<49x32x64xbf16, #tpu.memory_space<vmem>>, vector<1x32x64xbf16>
    %420 = vector.shape_cast %419 : vector<1x32x64xbf16> to vector<32x64xbf16>
    %cst_283 = arith.constant dense<0.000000e+00> : vector<2x64xf32>
    %421 = tpu.matmul %418, %420, %cst_283 {dimension_numbers = #tpu.dot_dimension_numbers<[1], [0], [0], [1], [0, 0, 1, 1], [], []>} : vector<2x32xbf16>, vector<32x64xbf16>, vector<2x64xf32> -> vector<2x64xf32>
    %422 = arith.addf %410, %421 : vector<2x64xf32>
    %c35 = arith.constant 35 : index
    %c0_284 = arith.constant 0 : index
    %c0_285 = arith.constant 0 : index
    %423 = vector.load %arg1[%c35, %c0_284, %c0_285] : memref<49x2x144xbf16, #tpu.memory_space<vmem>>, vector<1x2x144xbf16>
    %424 = vector.shape_cast %423 : vector<1x2x144xbf16> to vector<2x144xbf16>
    %cst_286 = arith.constant dense<0.000000e+00> : vector<2x32xf32>
    %425 = tpu.matmul %424, %0, %cst_286 {dimension_numbers = #tpu.dot_dimension_numbers<[1], [0], [0], [1], [0, 0, 1, 1], [], []>} : vector<2x144xbf16>, vector<144x32xbf16>, vector<2x32xf32> -> vector<2x32xf32>
    %426 = vector.broadcast %1 : vector<1x32xf32> to vector<2x32xf32>
    %427 = arith.addf %425, %426 : vector<2x32xf32>
    %cst_287 = arith.constant 0.000000e+00 : f32
    %428 = vector.broadcast %cst_287 : f32 to vector<2x32xf32>
    %429 = arith.maximumf %427, %428 : vector<2x32xf32>
    %430 = arith.truncf %429 : vector<2x32xf32> to vector<2x32xbf16>
    %c35_288 = arith.constant 35 : index
    %c0_289 = arith.constant 0 : index
    %c0_290 = arith.constant 0 : index
    %431 = vector.load %arg4[%c35_288, %c0_289, %c0_290] : memref<49x32x64xbf16, #tpu.memory_space<vmem>>, vector<1x32x64xbf16>
    %432 = vector.shape_cast %431 : vector<1x32x64xbf16> to vector<32x64xbf16>
    %cst_291 = arith.constant dense<0.000000e+00> : vector<2x64xf32>
    %433 = tpu.matmul %430, %432, %cst_291 {dimension_numbers = #tpu.dot_dimension_numbers<[1], [0], [0], [1], [0, 0, 1, 1], [], []>} : vector<2x32xbf16>, vector<32x64xbf16>, vector<2x64xf32> -> vector<2x64xf32>
    %434 = arith.addf %422, %433 : vector<2x64xf32>
    %c36 = arith.constant 36 : index
    %c0_292 = arith.constant 0 : index
    %c0_293 = arith.constant 0 : index
    %435 = vector.load %arg1[%c36, %c0_292, %c0_293] : memref<49x2x144xbf16, #tpu.memory_space<vmem>>, vector<1x2x144xbf16>
    %436 = vector.shape_cast %435 : vector<1x2x144xbf16> to vector<2x144xbf16>
    %cst_294 = arith.constant dense<0.000000e+00> : vector<2x32xf32>
    %437 = tpu.matmul %436, %0, %cst_294 {dimension_numbers = #tpu.dot_dimension_numbers<[1], [0], [0], [1], [0, 0, 1, 1], [], []>} : vector<2x144xbf16>, vector<144x32xbf16>, vector<2x32xf32> -> vector<2x32xf32>
    %438 = vector.broadcast %1 : vector<1x32xf32> to vector<2x32xf32>
    %439 = arith.addf %437, %438 : vector<2x32xf32>
    %cst_295 = arith.constant 0.000000e+00 : f32
    %440 = vector.broadcast %cst_295 : f32 to vector<2x32xf32>
    %441 = arith.maximumf %439, %440 : vector<2x32xf32>
    %442 = arith.truncf %441 : vector<2x32xf32> to vector<2x32xbf16>
    %c36_296 = arith.constant 36 : index
    %c0_297 = arith.constant 0 : index
    %c0_298 = arith.constant 0 : index
    %443 = vector.load %arg4[%c36_296, %c0_297, %c0_298] : memref<49x32x64xbf16, #tpu.memory_space<vmem>>, vector<1x32x64xbf16>
    %444 = vector.shape_cast %443 : vector<1x32x64xbf16> to vector<32x64xbf16>
    %cst_299 = arith.constant dense<0.000000e+00> : vector<2x64xf32>
    %445 = tpu.matmul %442, %444, %cst_299 {dimension_numbers = #tpu.dot_dimension_numbers<[1], [0], [0], [1], [0, 0, 1, 1], [], []>} : vector<2x32xbf16>, vector<32x64xbf16>, vector<2x64xf32> -> vector<2x64xf32>
    %446 = arith.addf %434, %445 : vector<2x64xf32>
    %c37 = arith.constant 37 : index
    %c0_300 = arith.constant 0 : index
    %c0_301 = arith.constant 0 : index
    %447 = vector.load %arg1[%c37, %c0_300, %c0_301] : memref<49x2x144xbf16, #tpu.memory_space<vmem>>, vector<1x2x144xbf16>
    %448 = vector.shape_cast %447 : vector<1x2x144xbf16> to vector<2x144xbf16>
    %cst_302 = arith.constant dense<0.000000e+00> : vector<2x32xf32>
    %449 = tpu.matmul %448, %0, %cst_302 {dimension_numbers = #tpu.dot_dimension_numbers<[1], [0], [0], [1], [0, 0, 1, 1], [], []>} : vector<2x144xbf16>, vector<144x32xbf16>, vector<2x32xf32> -> vector<2x32xf32>
    %450 = vector.broadcast %1 : vector<1x32xf32> to vector<2x32xf32>
    %451 = arith.addf %449, %450 : vector<2x32xf32>
    %cst_303 = arith.constant 0.000000e+00 : f32
    %452 = vector.broadcast %cst_303 : f32 to vector<2x32xf32>
    %453 = arith.maximumf %451, %452 : vector<2x32xf32>
    %454 = arith.truncf %453 : vector<2x32xf32> to vector<2x32xbf16>
    %c37_304 = arith.constant 37 : index
    %c0_305 = arith.constant 0 : index
    %c0_306 = arith.constant 0 : index
    %455 = vector.load %arg4[%c37_304, %c0_305, %c0_306] : memref<49x32x64xbf16, #tpu.memory_space<vmem>>, vector<1x32x64xbf16>
    %456 = vector.shape_cast %455 : vector<1x32x64xbf16> to vector<32x64xbf16>
    %cst_307 = arith.constant dense<0.000000e+00> : vector<2x64xf32>
    %457 = tpu.matmul %454, %456, %cst_307 {dimension_numbers = #tpu.dot_dimension_numbers<[1], [0], [0], [1], [0, 0, 1, 1], [], []>} : vector<2x32xbf16>, vector<32x64xbf16>, vector<2x64xf32> -> vector<2x64xf32>
    %458 = arith.addf %446, %457 : vector<2x64xf32>
    %c38 = arith.constant 38 : index
    %c0_308 = arith.constant 0 : index
    %c0_309 = arith.constant 0 : index
    %459 = vector.load %arg1[%c38, %c0_308, %c0_309] : memref<49x2x144xbf16, #tpu.memory_space<vmem>>, vector<1x2x144xbf16>
    %460 = vector.shape_cast %459 : vector<1x2x144xbf16> to vector<2x144xbf16>
    %cst_310 = arith.constant dense<0.000000e+00> : vector<2x32xf32>
    %461 = tpu.matmul %460, %0, %cst_310 {dimension_numbers = #tpu.dot_dimension_numbers<[1], [0], [0], [1], [0, 0, 1, 1], [], []>} : vector<2x144xbf16>, vector<144x32xbf16>, vector<2x32xf32> -> vector<2x32xf32>
    %462 = vector.broadcast %1 : vector<1x32xf32> to vector<2x32xf32>
    %463 = arith.addf %461, %462 : vector<2x32xf32>
    %cst_311 = arith.constant 0.000000e+00 : f32
    %464 = vector.broadcast %cst_311 : f32 to vector<2x32xf32>
    %465 = arith.maximumf %463, %464 : vector<2x32xf32>
    %466 = arith.truncf %465 : vector<2x32xf32> to vector<2x32xbf16>
    %c38_312 = arith.constant 38 : index
    %c0_313 = arith.constant 0 : index
    %c0_314 = arith.constant 0 : index
    %467 = vector.load %arg4[%c38_312, %c0_313, %c0_314] : memref<49x32x64xbf16, #tpu.memory_space<vmem>>, vector<1x32x64xbf16>
    %468 = vector.shape_cast %467 : vector<1x32x64xbf16> to vector<32x64xbf16>
    %cst_315 = arith.constant dense<0.000000e+00> : vector<2x64xf32>
    %469 = tpu.matmul %466, %468, %cst_315 {dimension_numbers = #tpu.dot_dimension_numbers<[1], [0], [0], [1], [0, 0, 1, 1], [], []>} : vector<2x32xbf16>, vector<32x64xbf16>, vector<2x64xf32> -> vector<2x64xf32>
    %470 = arith.addf %458, %469 : vector<2x64xf32>
    %c39 = arith.constant 39 : index
    %c0_316 = arith.constant 0 : index
    %c0_317 = arith.constant 0 : index
    %471 = vector.load %arg1[%c39, %c0_316, %c0_317] : memref<49x2x144xbf16, #tpu.memory_space<vmem>>, vector<1x2x144xbf16>
    %472 = vector.shape_cast %471 : vector<1x2x144xbf16> to vector<2x144xbf16>
    %cst_318 = arith.constant dense<0.000000e+00> : vector<2x32xf32>
    %473 = tpu.matmul %472, %0, %cst_318 {dimension_numbers = #tpu.dot_dimension_numbers<[1], [0], [0], [1], [0, 0, 1, 1], [], []>} : vector<2x144xbf16>, vector<144x32xbf16>, vector<2x32xf32> -> vector<2x32xf32>
    %474 = vector.broadcast %1 : vector<1x32xf32> to vector<2x32xf32>
    %475 = arith.addf %473, %474 : vector<2x32xf32>
    %cst_319 = arith.constant 0.000000e+00 : f32
    %476 = vector.broadcast %cst_319 : f32 to vector<2x32xf32>
    %477 = arith.maximumf %475, %476 : vector<2x32xf32>
    %478 = arith.truncf %477 : vector<2x32xf32> to vector<2x32xbf16>
    %c39_320 = arith.constant 39 : index
    %c0_321 = arith.constant 0 : index
    %c0_322 = arith.constant 0 : index
    %479 = vector.load %arg4[%c39_320, %c0_321, %c0_322] : memref<49x32x64xbf16, #tpu.memory_space<vmem>>, vector<1x32x64xbf16>
    %480 = vector.shape_cast %479 : vector<1x32x64xbf16> to vector<32x64xbf16>
    %cst_323 = arith.constant dense<0.000000e+00> : vector<2x64xf32>
    %481 = tpu.matmul %478, %480, %cst_323 {dimension_numbers = #tpu.dot_dimension_numbers<[1], [0], [0], [1], [0, 0, 1, 1], [], []>} : vector<2x32xbf16>, vector<32x64xbf16>, vector<2x64xf32> -> vector<2x64xf32>
    %482 = arith.addf %470, %481 : vector<2x64xf32>
    %c40 = arith.constant 40 : index
    %c0_324 = arith.constant 0 : index
    %c0_325 = arith.constant 0 : index
    %483 = vector.load %arg1[%c40, %c0_324, %c0_325] : memref<49x2x144xbf16, #tpu.memory_space<vmem>>, vector<1x2x144xbf16>
    %484 = vector.shape_cast %483 : vector<1x2x144xbf16> to vector<2x144xbf16>
    %cst_326 = arith.constant dense<0.000000e+00> : vector<2x32xf32>
    %485 = tpu.matmul %484, %0, %cst_326 {dimension_numbers = #tpu.dot_dimension_numbers<[1], [0], [0], [1], [0, 0, 1, 1], [], []>} : vector<2x144xbf16>, vector<144x32xbf16>, vector<2x32xf32> -> vector<2x32xf32>
    %486 = vector.broadcast %1 : vector<1x32xf32> to vector<2x32xf32>
    %487 = arith.addf %485, %486 : vector<2x32xf32>
    %cst_327 = arith.constant 0.000000e+00 : f32
    %488 = vector.broadcast %cst_327 : f32 to vector<2x32xf32>
    %489 = arith.maximumf %487, %488 : vector<2x32xf32>
    %490 = arith.truncf %489 : vector<2x32xf32> to vector<2x32xbf16>
    %c40_328 = arith.constant 40 : index
    %c0_329 = arith.constant 0 : index
    %c0_330 = arith.constant 0 : index
    %491 = vector.load %arg4[%c40_328, %c0_329, %c0_330] : memref<49x32x64xbf16, #tpu.memory_space<vmem>>, vector<1x32x64xbf16>
    %492 = vector.shape_cast %491 : vector<1x32x64xbf16> to vector<32x64xbf16>
    %cst_331 = arith.constant dense<0.000000e+00> : vector<2x64xf32>
    %493 = tpu.matmul %490, %492, %cst_331 {dimension_numbers = #tpu.dot_dimension_numbers<[1], [0], [0], [1], [0, 0, 1, 1], [], []>} : vector<2x32xbf16>, vector<32x64xbf16>, vector<2x64xf32> -> vector<2x64xf32>
    %494 = arith.addf %482, %493 : vector<2x64xf32>
    %c41 = arith.constant 41 : index
    %c0_332 = arith.constant 0 : index
    %c0_333 = arith.constant 0 : index
    %495 = vector.load %arg1[%c41, %c0_332, %c0_333] : memref<49x2x144xbf16, #tpu.memory_space<vmem>>, vector<1x2x144xbf16>
    %496 = vector.shape_cast %495 : vector<1x2x144xbf16> to vector<2x144xbf16>
    %cst_334 = arith.constant dense<0.000000e+00> : vector<2x32xf32>
    %497 = tpu.matmul %496, %0, %cst_334 {dimension_numbers = #tpu.dot_dimension_numbers<[1], [0], [0], [1], [0, 0, 1, 1], [], []>} : vector<2x144xbf16>, vector<144x32xbf16>, vector<2x32xf32> -> vector<2x32xf32>
    %498 = vector.broadcast %1 : vector<1x32xf32> to vector<2x32xf32>
    %499 = arith.addf %497, %498 : vector<2x32xf32>
    %cst_335 = arith.constant 0.000000e+00 : f32
    %500 = vector.broadcast %cst_335 : f32 to vector<2x32xf32>
    %501 = arith.maximumf %499, %500 : vector<2x32xf32>
    %502 = arith.truncf %501 : vector<2x32xf32> to vector<2x32xbf16>
    %c41_336 = arith.constant 41 : index
    %c0_337 = arith.constant 0 : index
    %c0_338 = arith.constant 0 : index
    %503 = vector.load %arg4[%c41_336, %c0_337, %c0_338] : memref<49x32x64xbf16, #tpu.memory_space<vmem>>, vector<1x32x64xbf16>
    %504 = vector.shape_cast %503 : vector<1x32x64xbf16> to vector<32x64xbf16>
    %cst_339 = arith.constant dense<0.000000e+00> : vector<2x64xf32>
    %505 = tpu.matmul %502, %504, %cst_339 {dimension_numbers = #tpu.dot_dimension_numbers<[1], [0], [0], [1], [0, 0, 1, 1], [], []>} : vector<2x32xbf16>, vector<32x64xbf16>, vector<2x64xf32> -> vector<2x64xf32>
    %506 = arith.addf %494, %505 : vector<2x64xf32>
    %c42 = arith.constant 42 : index
    %c0_340 = arith.constant 0 : index
    %c0_341 = arith.constant 0 : index
    %507 = vector.load %arg1[%c42, %c0_340, %c0_341] : memref<49x2x144xbf16, #tpu.memory_space<vmem>>, vector<1x2x144xbf16>
    %508 = vector.shape_cast %507 : vector<1x2x144xbf16> to vector<2x144xbf16>
    %cst_342 = arith.constant dense<0.000000e+00> : vector<2x32xf32>
    %509 = tpu.matmul %508, %0, %cst_342 {dimension_numbers = #tpu.dot_dimension_numbers<[1], [0], [0], [1], [0, 0, 1, 1], [], []>} : vector<2x144xbf16>, vector<144x32xbf16>, vector<2x32xf32> -> vector<2x32xf32>
    %510 = vector.broadcast %1 : vector<1x32xf32> to vector<2x32xf32>
    %511 = arith.addf %509, %510 : vector<2x32xf32>
    %cst_343 = arith.constant 0.000000e+00 : f32
    %512 = vector.broadcast %cst_343 : f32 to vector<2x32xf32>
    %513 = arith.maximumf %511, %512 : vector<2x32xf32>
    %514 = arith.truncf %513 : vector<2x32xf32> to vector<2x32xbf16>
    %c42_344 = arith.constant 42 : index
    %c0_345 = arith.constant 0 : index
    %c0_346 = arith.constant 0 : index
    %515 = vector.load %arg4[%c42_344, %c0_345, %c0_346] : memref<49x32x64xbf16, #tpu.memory_space<vmem>>, vector<1x32x64xbf16>
    %516 = vector.shape_cast %515 : vector<1x32x64xbf16> to vector<32x64xbf16>
    %cst_347 = arith.constant dense<0.000000e+00> : vector<2x64xf32>
    %517 = tpu.matmul %514, %516, %cst_347 {dimension_numbers = #tpu.dot_dimension_numbers<[1], [0], [0], [1], [0, 0, 1, 1], [], []>} : vector<2x32xbf16>, vector<32x64xbf16>, vector<2x64xf32> -> vector<2x64xf32>
    %518 = arith.addf %506, %517 : vector<2x64xf32>
    %c43 = arith.constant 43 : index
    %c0_348 = arith.constant 0 : index
    %c0_349 = arith.constant 0 : index
    %519 = vector.load %arg1[%c43, %c0_348, %c0_349] : memref<49x2x144xbf16, #tpu.memory_space<vmem>>, vector<1x2x144xbf16>
    %520 = vector.shape_cast %519 : vector<1x2x144xbf16> to vector<2x144xbf16>
    %cst_350 = arith.constant dense<0.000000e+00> : vector<2x32xf32>
    %521 = tpu.matmul %520, %0, %cst_350 {dimension_numbers = #tpu.dot_dimension_numbers<[1], [0], [0], [1], [0, 0, 1, 1], [], []>} : vector<2x144xbf16>, vector<144x32xbf16>, vector<2x32xf32> -> vector<2x32xf32>
    %522 = vector.broadcast %1 : vector<1x32xf32> to vector<2x32xf32>
    %523 = arith.addf %521, %522 : vector<2x32xf32>
    %cst_351 = arith.constant 0.000000e+00 : f32
    %524 = vector.broadcast %cst_351 : f32 to vector<2x32xf32>
    %525 = arith.maximumf %523, %524 : vector<2x32xf32>
    %526 = arith.truncf %525 : vector<2x32xf32> to vector<2x32xbf16>
    %c43_352 = arith.constant 43 : index
    %c0_353 = arith.constant 0 : index
    %c0_354 = arith.constant 0 : index
    %527 = vector.load %arg4[%c43_352, %c0_353, %c0_354] : memref<49x32x64xbf16, #tpu.memory_space<vmem>>, vector<1x32x64xbf16>
    %528 = vector.shape_cast %527 : vector<1x32x64xbf16> to vector<32x64xbf16>
    %cst_355 = arith.constant dense<0.000000e+00> : vector<2x64xf32>
    %529 = tpu.matmul %526, %528, %cst_355 {dimension_numbers = #tpu.dot_dimension_numbers<[1], [0], [0], [1], [0, 0, 1, 1], [], []>} : vector<2x32xbf16>, vector<32x64xbf16>, vector<2x64xf32> -> vector<2x64xf32>
    %530 = arith.addf %518, %529 : vector<2x64xf32>
    %c44 = arith.constant 44 : index
    %c0_356 = arith.constant 0 : index
    %c0_357 = arith.constant 0 : index
    %531 = vector.load %arg1[%c44, %c0_356, %c0_357] : memref<49x2x144xbf16, #tpu.memory_space<vmem>>, vector<1x2x144xbf16>
    %532 = vector.shape_cast %531 : vector<1x2x144xbf16> to vector<2x144xbf16>
    %cst_358 = arith.constant dense<0.000000e+00> : vector<2x32xf32>
    %533 = tpu.matmul %532, %0, %cst_358 {dimension_numbers = #tpu.dot_dimension_numbers<[1], [0], [0], [1], [0, 0, 1, 1], [], []>} : vector<2x144xbf16>, vector<144x32xbf16>, vector<2x32xf32> -> vector<2x32xf32>
    %534 = vector.broadcast %1 : vector<1x32xf32> to vector<2x32xf32>
    %535 = arith.addf %533, %534 : vector<2x32xf32>
    %cst_359 = arith.constant 0.000000e+00 : f32
    %536 = vector.broadcast %cst_359 : f32 to vector<2x32xf32>
    %537 = arith.maximumf %535, %536 : vector<2x32xf32>
    %538 = arith.truncf %537 : vector<2x32xf32> to vector<2x32xbf16>
    %c44_360 = arith.constant 44 : index
    %c0_361 = arith.constant 0 : index
    %c0_362 = arith.constant 0 : index
    %539 = vector.load %arg4[%c44_360, %c0_361, %c0_362] : memref<49x32x64xbf16, #tpu.memory_space<vmem>>, vector<1x32x64xbf16>
    %540 = vector.shape_cast %539 : vector<1x32x64xbf16> to vector<32x64xbf16>
    %cst_363 = arith.constant dense<0.000000e+00> : vector<2x64xf32>
    %541 = tpu.matmul %538, %540, %cst_363 {dimension_numbers = #tpu.dot_dimension_numbers<[1], [0], [0], [1], [0, 0, 1, 1], [], []>} : vector<2x32xbf16>, vector<32x64xbf16>, vector<2x64xf32> -> vector<2x64xf32>
    %542 = arith.addf %530, %541 : vector<2x64xf32>
    %c45 = arith.constant 45 : index
    %c0_364 = arith.constant 0 : index
    %c0_365 = arith.constant 0 : index
    %543 = vector.load %arg1[%c45, %c0_364, %c0_365] : memref<49x2x144xbf16, #tpu.memory_space<vmem>>, vector<1x2x144xbf16>
    %544 = vector.shape_cast %543 : vector<1x2x144xbf16> to vector<2x144xbf16>
    %cst_366 = arith.constant dense<0.000000e+00> : vector<2x32xf32>
    %545 = tpu.matmul %544, %0, %cst_366 {dimension_numbers = #tpu.dot_dimension_numbers<[1], [0], [0], [1], [0, 0, 1, 1], [], []>} : vector<2x144xbf16>, vector<144x32xbf16>, vector<2x32xf32> -> vector<2x32xf32>
    %546 = vector.broadcast %1 : vector<1x32xf32> to vector<2x32xf32>
    %547 = arith.addf %545, %546 : vector<2x32xf32>
    %cst_367 = arith.constant 0.000000e+00 : f32
    %548 = vector.broadcast %cst_367 : f32 to vector<2x32xf32>
    %549 = arith.maximumf %547, %548 : vector<2x32xf32>
    %550 = arith.truncf %549 : vector<2x32xf32> to vector<2x32xbf16>
    %c45_368 = arith.constant 45 : index
    %c0_369 = arith.constant 0 : index
    %c0_370 = arith.constant 0 : index
    %551 = vector.load %arg4[%c45_368, %c0_369, %c0_370] : memref<49x32x64xbf16, #tpu.memory_space<vmem>>, vector<1x32x64xbf16>
    %552 = vector.shape_cast %551 : vector<1x32x64xbf16> to vector<32x64xbf16>
    %cst_371 = arith.constant dense<0.000000e+00> : vector<2x64xf32>
    %553 = tpu.matmul %550, %552, %cst_371 {dimension_numbers = #tpu.dot_dimension_numbers<[1], [0], [0], [1], [0, 0, 1, 1], [], []>} : vector<2x32xbf16>, vector<32x64xbf16>, vector<2x64xf32> -> vector<2x64xf32>
    %554 = arith.addf %542, %553 : vector<2x64xf32>
    %c46 = arith.constant 46 : index
    %c0_372 = arith.constant 0 : index
    %c0_373 = arith.constant 0 : index
    %555 = vector.load %arg1[%c46, %c0_372, %c0_373] : memref<49x2x144xbf16, #tpu.memory_space<vmem>>, vector<1x2x144xbf16>
    %556 = vector.shape_cast %555 : vector<1x2x144xbf16> to vector<2x144xbf16>
    %cst_374 = arith.constant dense<0.000000e+00> : vector<2x32xf32>
    %557 = tpu.matmul %556, %0, %cst_374 {dimension_numbers = #tpu.dot_dimension_numbers<[1], [0], [0], [1], [0, 0, 1, 1], [], []>} : vector<2x144xbf16>, vector<144x32xbf16>, vector<2x32xf32> -> vector<2x32xf32>
    %558 = vector.broadcast %1 : vector<1x32xf32> to vector<2x32xf32>
    %559 = arith.addf %557, %558 : vector<2x32xf32>
    %cst_375 = arith.constant 0.000000e+00 : f32
    %560 = vector.broadcast %cst_375 : f32 to vector<2x32xf32>
    %561 = arith.maximumf %559, %560 : vector<2x32xf32>
    %562 = arith.truncf %561 : vector<2x32xf32> to vector<2x32xbf16>
    %c46_376 = arith.constant 46 : index
    %c0_377 = arith.constant 0 : index
    %c0_378 = arith.constant 0 : index
    %563 = vector.load %arg4[%c46_376, %c0_377, %c0_378] : memref<49x32x64xbf16, #tpu.memory_space<vmem>>, vector<1x32x64xbf16>
    %564 = vector.shape_cast %563 : vector<1x32x64xbf16> to vector<32x64xbf16>
    %cst_379 = arith.constant dense<0.000000e+00> : vector<2x64xf32>
    %565 = tpu.matmul %562, %564, %cst_379 {dimension_numbers = #tpu.dot_dimension_numbers<[1], [0], [0], [1], [0, 0, 1, 1], [], []>} : vector<2x32xbf16>, vector<32x64xbf16>, vector<2x64xf32> -> vector<2x64xf32>
    %566 = arith.addf %554, %565 : vector<2x64xf32>
    %c47 = arith.constant 47 : index
    %c0_380 = arith.constant 0 : index
    %c0_381 = arith.constant 0 : index
    %567 = vector.load %arg1[%c47, %c0_380, %c0_381] : memref<49x2x144xbf16, #tpu.memory_space<vmem>>, vector<1x2x144xbf16>
    %568 = vector.shape_cast %567 : vector<1x2x144xbf16> to vector<2x144xbf16>
    %cst_382 = arith.constant dense<0.000000e+00> : vector<2x32xf32>
    %569 = tpu.matmul %568, %0, %cst_382 {dimension_numbers = #tpu.dot_dimension_numbers<[1], [0], [0], [1], [0, 0, 1, 1], [], []>} : vector<2x144xbf16>, vector<144x32xbf16>, vector<2x32xf32> -> vector<2x32xf32>
    %570 = vector.broadcast %1 : vector<1x32xf32> to vector<2x32xf32>
    %571 = arith.addf %569, %570 : vector<2x32xf32>
    %cst_383 = arith.constant 0.000000e+00 : f32
    %572 = vector.broadcast %cst_383 : f32 to vector<2x32xf32>
    %573 = arith.maximumf %571, %572 : vector<2x32xf32>
    %574 = arith.truncf %573 : vector<2x32xf32> to vector<2x32xbf16>
    %c47_384 = arith.constant 47 : index
    %c0_385 = arith.constant 0 : index
    %c0_386 = arith.constant 0 : index
    %575 = vector.load %arg4[%c47_384, %c0_385, %c0_386] : memref<49x32x64xbf16, #tpu.memory_space<vmem>>, vector<1x32x64xbf16>
    %576 = vector.shape_cast %575 : vector<1x32x64xbf16> to vector<32x64xbf16>
    %cst_387 = arith.constant dense<0.000000e+00> : vector<2x64xf32>
    %577 = tpu.matmul %574, %576, %cst_387 {dimension_numbers = #tpu.dot_dimension_numbers<[1], [0], [0], [1], [0, 0, 1, 1], [], []>} : vector<2x32xbf16>, vector<32x64xbf16>, vector<2x64xf32> -> vector<2x64xf32>
    %578 = arith.addf %566, %577 : vector<2x64xf32>
    %c48 = arith.constant 48 : index
    %c0_388 = arith.constant 0 : index
    %c0_389 = arith.constant 0 : index
    %579 = vector.load %arg1[%c48, %c0_388, %c0_389] : memref<49x2x144xbf16, #tpu.memory_space<vmem>>, vector<1x2x144xbf16>
    %580 = vector.shape_cast %579 : vector<1x2x144xbf16> to vector<2x144xbf16>
    %cst_390 = arith.constant dense<0.000000e+00> : vector<2x32xf32>
    %581 = tpu.matmul %580, %0, %cst_390 {dimension_numbers = #tpu.dot_dimension_numbers<[1], [0], [0], [1], [0, 0, 1, 1], [], []>} : vector<2x144xbf16>, vector<144x32xbf16>, vector<2x32xf32> -> vector<2x32xf32>
    %582 = vector.broadcast %1 : vector<1x32xf32> to vector<2x32xf32>
    %583 = arith.addf %581, %582 : vector<2x32xf32>
    %cst_391 = arith.constant 0.000000e+00 : f32
    %584 = vector.broadcast %cst_391 : f32 to vector<2x32xf32>
    %585 = arith.maximumf %583, %584 : vector<2x32xf32>
    %586 = arith.truncf %585 : vector<2x32xf32> to vector<2x32xbf16>
    %c48_392 = arith.constant 48 : index
    %c0_393 = arith.constant 0 : index
    %c0_394 = arith.constant 0 : index
    %587 = vector.load %arg4[%c48_392, %c0_393, %c0_394] : memref<49x32x64xbf16, #tpu.memory_space<vmem>>, vector<1x32x64xbf16>
    %588 = vector.shape_cast %587 : vector<1x32x64xbf16> to vector<32x64xbf16>
    %cst_395 = arith.constant dense<0.000000e+00> : vector<2x64xf32>
    %589 = tpu.matmul %586, %588, %cst_395 {dimension_numbers = #tpu.dot_dimension_numbers<[1], [0], [0], [1], [0, 0, 1, 1], [], []>} : vector<2x32xbf16>, vector<32x64xbf16>, vector<2x64xf32> -> vector<2x64xf32>
    %590 = arith.addf %578, %589 : vector<2x64xf32>
    %c0_396 = arith.constant 0 : index
    %c0_397 = arith.constant 0 : index
    %591 = vector.load %arg5[%c0_396, %c0_397] : memref<1x64xf32, #tpu.memory_space<vmem>>, vector<1x64xf32>
    %592 = vector.broadcast %591 : vector<1x64xf32> to vector<2x64xf32>
    %593 = arith.addf %590, %592 : vector<2x64xf32>
    %cst_398 = arith.constant 0.000000e+00 : f32
    %594 = vector.broadcast %cst_398 : f32 to vector<2x64xf32>
    %595 = arith.maximumf %593, %594 : vector<2x64xf32>
    %596 = arith.truncf %595 : vector<2x64xf32> to vector<2x64xbf16>
    %c0_399 = arith.constant 0 : index
    %c0_400 = arith.constant 0 : index
    %597 = vector.load %arg6[%c0_399, %c0_400] : memref<64x64xbf16, #tpu.memory_space<vmem>>, vector<64x64xbf16>
    %cst_401 = arith.constant dense<0.000000e+00> : vector<2x64xf32>
    %598 = tpu.matmul %596, %597, %cst_401 {dimension_numbers = #tpu.dot_dimension_numbers<[1], [0], [0], [1], [0, 0, 1, 1], [], []>} : vector<2x64xbf16>, vector<64x64xbf16>, vector<2x64xf32> -> vector<2x64xf32>
    %c0_402 = arith.constant 0 : index
    %c0_403 = arith.constant 0 : index
    %599 = vector.load %arg7[%c0_402, %c0_403] : memref<1x64xf32, #tpu.memory_space<vmem>>, vector<1x64xf32>
    %600 = vector.broadcast %599 : vector<1x64xf32> to vector<2x64xf32>
    %601 = arith.addf %598, %600 : vector<2x64xf32>
    %602 = arith.truncf %601 : vector<2x64xf32> to vector<2x64xbf16>
    %c0_404 = arith.constant 0 : index
    %c0_405 = arith.constant 0 : index
    %603 = vector.load %arg8[%c0_404, %c0_405] : memref<64x16xbf16, #tpu.memory_space<vmem>>, vector<64x16xbf16>
    %cst_406 = arith.constant dense<0.000000e+00> : vector<2x16xf32>
    %604 = tpu.matmul %602, %603, %cst_406 {dimension_numbers = #tpu.dot_dimension_numbers<[1], [0], [0], [1], [0, 0, 1, 1], [], []>} : vector<2x64xbf16>, vector<64x16xbf16>, vector<2x16xf32> -> vector<2x16xf32>
    %c0_407 = arith.constant 0 : index
    %c0_408 = arith.constant 0 : index
    %605 = vector.load %arg9[%c0_407, %c0_408] : memref<1x16xf32, #tpu.memory_space<vmem>>, vector<1x16xf32>
    %606 = vector.broadcast %605 : vector<1x16xf32> to vector<2x16xf32>
    %607 = arith.addf %604, %606 : vector<2x16xf32>
    %608 = arith.truncf %607 : vector<2x16xf32> to vector<2x16xbf16>
    %c0_409 = arith.constant 0 : index
    %c0_410 = arith.constant 0 : index
    %609 = vector.load %arg10[%c0_409, %c0_410] : memref<16x64xbf16, #tpu.memory_space<vmem>>, vector<16x64xbf16>
    %cst_411 = arith.constant dense<0.000000e+00> : vector<2x64xf32>
    %610 = tpu.matmul %608, %609, %cst_411 {dimension_numbers = #tpu.dot_dimension_numbers<[1], [0], [0], [1], [0, 0, 1, 1], [], []>} : vector<2x16xbf16>, vector<16x64xbf16>, vector<2x64xf32> -> vector<2x64xf32>
    %c0_412 = arith.constant 0 : index
    %c0_413 = arith.constant 0 : index
    %611 = vector.load %arg11[%c0_412, %c0_413] : memref<1x64xf32, #tpu.memory_space<vmem>>, vector<1x64xf32>
    %612 = vector.broadcast %611 : vector<1x64xf32> to vector<2x64xf32>
    %613 = arith.addf %610, %612 : vector<2x64xf32>
    %cst_414 = arith.constant 0.000000e+00 : f32
    %614 = vector.broadcast %cst_414 : f32 to vector<2x64xf32>
    %615 = arith.maximumf %613, %614 : vector<2x64xf32>
    %616 = arith.truncf %615 : vector<2x64xf32> to vector<2x64xbf16>
    %c0_415 = arith.constant 0 : index
    %c0_416 = arith.constant 0 : index
    %617 = vector.load %arg12[%c0_415, %c0_416] : memref<64x1568xbf16, #tpu.memory_space<vmem>>, vector<64x1568xbf16>
    %cst_417 = arith.constant dense<0.000000e+00> : vector<2x1568xf32>
    %618 = tpu.matmul %616, %617, %cst_417 {dimension_numbers = #tpu.dot_dimension_numbers<[1], [0], [0], [1], [0, 0, 1, 1], [], []>} : vector<2x64xbf16>, vector<64x1568xbf16>, vector<2x1568xf32> -> vector<2x1568xf32>
    %c0_418 = arith.constant 0 : index
    %c0_419 = arith.constant 0 : index
    %619 = vector.load %arg13[%c0_418, %c0_419] : memref<1x1568xf32, #tpu.memory_space<vmem>>, vector<1x1568xf32>
    %620 = vector.broadcast %619 : vector<1x1568xf32> to vector<2x1568xf32>
    %621 = arith.addf %618, %620 : vector<2x1568xf32>
    %cst_420 = arith.constant 0.000000e+00 : f32
    %622 = vector.broadcast %cst_420 : f32 to vector<2x1568xf32>
    %623 = arith.maximumf %621, %622 : vector<2x1568xf32>
    %624 = arith.truncf %623 : vector<2x1568xf32> to vector<2x1568xbf16>
    %c0_421 = arith.constant 0 : index
    %c0_422 = arith.constant 0 : index
    %625 = vector.load %arg14[%c0_421, %c0_422] : memref<2x1568xbf16, #tpu.memory_space<vmem>>, vector<2x1568xbf16>
    tpu.vector_store %arg14[%c0_421, %c0_422], %624 {strides = array<i32>} : memref<2x1568xbf16, #tpu.memory_space<vmem>>, vector<2x1568xbf16>,
    return
  }
  func.func @transform_0(%arg0: i32) -> (i32, i32, i32) {
    %c0_i32 = arith.constant 0 : i32
    %c0_i32_0 = arith.constant 0 : i32
    %c0_i32_1 = arith.constant 0 : i32
    %c0_i32_2 = arith.constant 0 : i32
    return %c0_i32, %c0_i32_0, %c0_i32_1 : i32, i32, i32
  }
  func.func @transform_1(%arg0: i32) -> (i32, i32) {
    %c0_i32 = arith.constant 0 : i32
    %c0_i32_0 = arith.constant 0 : i32
    %c0_i32_1 = arith.constant 0 : i32
    return %c0_i32, %c0_i32_0 : i32, i32
  }
  func.func @transform_2(%arg0: i32) -> (i32, i32) {
    %c0_i32 = arith.constant 0 : i32
    %c0_i32_0 = arith.constant 0 : i32
    %c0_i32_1 = arith.constant 0 : i32
    return %c0_i32, %c0_i32_0 : i32, i32
  }
  func.func @transform_3(%arg0: i32) -> (i32, i32, i32) {
    %c0_i32 = arith.constant 0 : i32
    %c0_i32_0 = arith.constant 0 : i32
    %c0_i32_1 = arith.constant 0 : i32
    %c0_i32_2 = arith.constant 0 : i32
    return %c0_i32, %c0_i32_0, %c0_i32_1 : i32, i32, i32
  }
  func.func @transform_4(%arg0: i32) -> (i32, i32) {
    %c0_i32 = arith.constant 0 : i32
    %c0_i32_0 = arith.constant 0 : i32
    %c0_i32_1 = arith.constant 0 : i32
    return %c0_i32, %c0_i32_0 : i32, i32
  }
  func.func @transform_5(%arg0: i32) -> (i32, i32) {
    %c0_i32 = arith.constant 0 : i32
    %c0_i32_0 = arith.constant 0 : i32
    %c0_i32_1 = arith.constant 0 : i32
    return %c0_i32, %c0_i32_0 : i32, i32
  }
  func.func @transform_6(%arg0: i32) -> (i32, i32) {
    %c0_i32 = arith.constant 0 : i32
    %c0_i32_0 = arith.constant 0 : i32
    %c0_i32_1 = arith.constant 0 : i32
    return %c0_i32, %c0_i32_0 : i32, i32
  }
  func.func @transform_7(%arg0: i32) -> (i32, i32) {
    %c0_i32 = arith.constant 0 : i32
    %c0_i32_0 = arith.constant 0 : i32
    %c0_i32_1 = arith.constant 0 : i32
    return %c0_i32, %c0_i32_0 : i32, i32
  }
  func.func @transform_8(%arg0: i32) -> (i32, i32) {
    %c0_i32 = arith.constant 0 : i32
    %c0_i32_0 = arith.constant 0 : i32
    %c0_i32_1 = arith.constant 0 : i32
    return %c0_i32, %c0_i32_0 : i32, i32
  }
  func.func @transform_9(%arg0: i32) -> (i32, i32) {
    %c0_i32 = arith.constant 0 : i32
    %c0_i32_0 = arith.constant 0 : i32
    %c0_i32_1 = arith.constant 0 : i32
    return %c0_i32, %c0_i32_0 : i32, i32
  }
  func.func @transform_10(%arg0: i32) -> (i32, i32) {
    %c0_i32 = arith.constant 0 : i32
    %c0_i32_0 = arith.constant 0 : i32
    %c0_i32_1 = arith.constant 0 : i32
    return %c0_i32, %c0_i32_0 : i32, i32
  }
  func.func @transform_11(%arg0: i32) -> (i32, i32) {
    %c0_i32 = arith.constant 0 : i32
    %c0_i32_0 = arith.constant 0 : i32
    %c0_i32_1 = arith.constant 0 : i32
    return %c0_i32, %c0_i32_0 : i32, i32
  }
  func.func @transform_12(%arg0: i32) -> (i32, i32) {
    %c0_i32 = arith.constant 0 : i32
    %c0_i32_0 = arith.constant 0 : i32
    %c0_i32_1 = arith.constant 0 : i32
    return %c0_i32, %c0_i32_0 : i32, i32
  }
  func.func @transform_13(%arg0: i32) -> (i32, i32) {
    %c0_i32 = arith.constant 0 : i32
    %c0_i32_0 = arith.constant 0 : i32
    %c0_i32_1 = arith.constant 0 : i32
    return %c0_i32, %c0_i32_0 : i32, i32
  }
}

module attributes {stable_mosaic.version = 11 : i64} {
  func.func @_gemm_bias_relu_kernel(%arg0: i32, %arg1: memref<392x288xbf16, #tpu.memory_space<vmem>>, %arg2: memref<288x16xbf16, #tpu.memory_space<vmem>>, %arg3: memref<1x16xf32, #tpu.memory_space<vmem>>, %arg4: memref<392x16xbf16, #tpu.memory_space<vmem>>) attributes {dimension_semantics = [#tpu.dimension_semantics<arbitrary>], iteration_bounds = array<i64: 1>, scalar_prefetch = 0 : i64, scratch_operands = 0 : i64, tpu.core_type = #tpu.core_type<tc>, window_params = [{pipeline_mode = #tpu.pipeline_mode<synchronous>, transform_indices = @transform_0, window_bounds = array<i64: 392, 288>}, {pipeline_mode = #tpu.pipeline_mode<synchronous>, transform_indices = @transform_1, window_bounds = array<i64: 288, 16>}, {pipeline_mode = #tpu.pipeline_mode<synchronous>, transform_indices = @transform_2, window_bounds = array<i64: 1, 16>}, {pipeline_mode = #tpu.pipeline_mode<synchronous>, transform_indices = @transform_3, window_bounds = array<i64: 392, 16>}]} {
    %c0 = arith.constant 0 : index
    %c0_0 = arith.constant 0 : index
    %0 = vector.load %arg1[%c0, %c0_0] : memref<392x288xbf16, #tpu.memory_space<vmem>>, vector<392x288xbf16>
    %c0_1 = arith.constant 0 : index
    %c0_2 = arith.constant 0 : index
    %1 = vector.load %arg2[%c0_1, %c0_2] : memref<288x16xbf16, #tpu.memory_space<vmem>>, vector<288x16xbf16>
    %cst = arith.constant dense<0.000000e+00> : vector<392x16xf32>
    %2 = tpu.matmul %0, %1, %cst {dimension_numbers = #tpu.dot_dimension_numbers<[1], [0], [0], [1], [0, 0, 1, 1], [], []>} : vector<392x288xbf16>, vector<288x16xbf16>, vector<392x16xf32> -> vector<392x16xf32>
    %c0_3 = arith.constant 0 : index
    %c0_4 = arith.constant 0 : index
    %3 = vector.load %arg3[%c0_3, %c0_4] : memref<1x16xf32, #tpu.memory_space<vmem>>, vector<1x16xf32>
    %4 = vector.broadcast %3 : vector<1x16xf32> to vector<392x16xf32>
    %5 = arith.addf %2, %4 : vector<392x16xf32>
    %cst_5 = arith.constant 0.000000e+00 : f32
    %6 = vector.broadcast %cst_5 : f32 to vector<392x16xf32>
    %7 = arith.maximumf %5, %6 : vector<392x16xf32>
    %8 = arith.truncf %7 : vector<392x16xf32> to vector<392x16xbf16>
    %c0_6 = arith.constant 0 : index
    %c0_7 = arith.constant 0 : index
    %9 = vector.load %arg4[%c0_6, %c0_7] : memref<392x16xbf16, #tpu.memory_space<vmem>>, vector<392x16xbf16>
    tpu.vector_store %arg4[%c0_6, %c0_7], %8 {strides = array<i32>} : memref<392x16xbf16, #tpu.memory_space<vmem>>, vector<392x16xbf16>,
    return
  }
  func.func @transform_0(%arg0: i32) -> (i32, i32) {
    %c0_i32 = arith.constant 0 : i32
    %c0_i32_0 = arith.constant 0 : i32
    %c0_i32_1 = arith.constant 0 : i32
    return %c0_i32, %c0_i32_0 : i32, i32
  }
  func.func @transform_1(%arg0: i32) -> (i32, i32) {
    %c0_i32 = arith.constant 0 : i32
    %c0_i32_0 = arith.constant 0 : i32
    %c0_i32_1 = arith.constant 0 : i32
    return %c0_i32, %c0_i32_0 : i32, i32
  }
  func.func @transform_2(%arg0: i32) -> (i32, i32) {
    %c0_i32 = arith.constant 0 : i32
    %c0_i32_0 = arith.constant 0 : i32
    %c0_i32_1 = arith.constant 0 : i32
    return %c0_i32, %c0_i32_0 : i32, i32
  }
  func.func @transform_3(%arg0: i32) -> (i32, i32) {
    %c0_i32 = arith.constant 0 : i32
    %c0_i32_0 = arith.constant 0 : i32
    %c0_i32_1 = arith.constant 0 : i32
    return %c0_i32, %c0_i32_0 : i32, i32
  }
}

module attributes {stable_mosaic.version = 11 : i64} {
  func.func @_final_sigmoid_kernel(%arg0: i32, %arg1: memref<144x1568xbf16, #tpu.memory_space<vmem>>, %arg2: memref<1x144xbf16, #tpu.memory_space<vmem>>, %arg3: memref<1x1xf32, #tpu.memory_space<vmem>>, %arg4: memref<1x1568xf32, #tpu.memory_space<vmem>>) attributes {dimension_semantics = [#tpu.dimension_semantics<arbitrary>], iteration_bounds = array<i64: 1>, scalar_prefetch = 0 : i64, scratch_operands = 0 : i64, tpu.core_type = #tpu.core_type<tc>, window_params = [{pipeline_mode = #tpu.pipeline_mode<synchronous>, transform_indices = @transform_0, window_bounds = array<i64: 144, 1568>}, {pipeline_mode = #tpu.pipeline_mode<synchronous>, transform_indices = @transform_1, window_bounds = array<i64: 1, 144>}, {pipeline_mode = #tpu.pipeline_mode<synchronous>, transform_indices = @transform_2, window_bounds = array<i64: 1, 1>}, {pipeline_mode = #tpu.pipeline_mode<synchronous>, transform_indices = @transform_3, window_bounds = array<i64: 1, 1568>}]} {
    %c0 = arith.constant 0 : index
    %c0_0 = arith.constant 0 : index
    %0 = vector.load %arg2[%c0, %c0_0] : memref<1x144xbf16, #tpu.memory_space<vmem>>, vector<1x144xbf16>
    %c0_1 = arith.constant 0 : index
    %c0_2 = arith.constant 0 : index
    %1 = vector.load %arg1[%c0_1, %c0_2] : memref<144x1568xbf16, #tpu.memory_space<vmem>>, vector<144x1568xbf16>
    %cst = arith.constant dense<0.000000e+00> : vector<1x1568xf32>
    %2 = tpu.matmul %0, %1, %cst {dimension_numbers = #tpu.dot_dimension_numbers<[1], [0], [0], [1], [0, 0, 1, 1], [], []>} : vector<1x144xbf16>, vector<144x1568xbf16>, vector<1x1568xf32> -> vector<1x1568xf32>
    %c0_3 = arith.constant 0 : index
    %c0_4 = arith.constant 0 : index
    %3 = vector.load %arg3[%c0_3, %c0_4] : memref<1x1xf32, #tpu.memory_space<vmem>>, vector<1x1xf32>
    %4 = vector.broadcast %3 : vector<1x1xf32> to vector<1x1568xf32>
    %5 = arith.addf %2, %4 : vector<1x1568xf32>
    %cst_5 = arith.constant 0.000000e+00 : f32
    %6 = vector.broadcast %cst_5 : f32 to vector<1x1568xf32>
    %7 = arith.subf %6, %5 : vector<1x1568xf32>
    %8 = math.exp %7 : vector<1x1568xf32>
    %cst_6 = arith.constant 1.000000e+00 : f32
    %9 = vector.broadcast %cst_6 : f32 to vector<1x1568xf32>
    %10 = arith.addf %9, %8 : vector<1x1568xf32>
    %11 = tpu.reciprocal %10 {approx = true} : vector<1x1568xf32> -> vector<1x1568xf32>
    %cst_7 = arith.constant 0.000000e+00 : f32
    %cst_8 = arith.constant 1.000000e+00 : f32
    %12 = vector.broadcast %cst_7 : f32 to vector<1x1568xf32>
    %13 = arith.maximumf %12, %11 : vector<1x1568xf32>
    %14 = vector.broadcast %cst_8 : f32 to vector<1x1568xf32>
    %15 = arith.minimumf %14, %13 : vector<1x1568xf32>
    %c0_9 = arith.constant 0 : index
    %c0_10 = arith.constant 0 : index
    %16 = vector.load %arg4[%c0_9, %c0_10] : memref<1x1568xf32, #tpu.memory_space<vmem>>, vector<1x1568xf32>
    tpu.vector_store %arg4[%c0_9, %c0_10], %15 {strides = array<i32>} : memref<1x1568xf32, #tpu.memory_space<vmem>>, vector<1x1568xf32>,
    return
  }
  func.func @transform_0(%arg0: i32) -> (i32, i32) {
    %c0_i32 = arith.constant 0 : i32
    %c0_i32_0 = arith.constant 0 : i32
    %c0_i32_1 = arith.constant 0 : i32
    return %c0_i32, %c0_i32_0 : i32, i32
  }
  func.func @transform_1(%arg0: i32) -> (i32, i32) {
    %c0_i32 = arith.constant 0 : i32
    %c0_i32_0 = arith.constant 0 : i32
    %c0_i32_1 = arith.constant 0 : i32
    return %c0_i32, %c0_i32_0 : i32, i32
  }
  func.func @transform_2(%arg0: i32) -> (i32, i32) {
    %c0_i32 = arith.constant 0 : i32
    %c0_i32_0 = arith.constant 0 : i32
    %c0_i32_1 = arith.constant 0 : i32
    return %c0_i32, %c0_i32_0 : i32, i32
  }
  func.func @transform_3(%arg0: i32) -> (i32, i32) {
    %c0_i32 = arith.constant 0 : i32
    %c0_i32_0 = arith.constant 0 : i32
    %c0_i32_1 = arith.constant 0 : i32
    return %c0_i32, %c0_i32_0 : i32, i32
  }
}

</mosaic_0001>

<llo_original>
// kernel: autoencoder_forward.4
$region0: #{autoencoder_forward.4}
  #allocation0 [shape = 'u32[]', space=smem, size = 0x4, offset = 0x4, fixed_abs, tag = 'smem constant byte address 0x4 - core index']
  #allocation1 [shape = 'u32[144,128]{1,0:T(1,128)}', space=vmem, size = 0x12000, scoped, tag = 'internal scratch']
  %s0 = inlined_call_operand.vmem [shape: bf16[392,9], index: 0, kind: input, shape index: {}]
  %s1 = inlined_call_operand.vmem [shape: bf16[9,16], index: 1, kind: input, shape index: {}]
  %s2 = inlined_call_operand.vmem [shape: f32[1,16], index: 2, kind: input, shape index: {}]
  %s3 = inlined_call_operand.vmem [shape: bf16[392,16], index: 3, kind: output, shape index: {}]
  %s4 = sld [smem:[#allocation0]]
  $region22: #{autoencoder_forward.4} parent=0
    _
  %s6 = ssub.s32 1, %s4
  %s7 = scalar_select 0, %s6, %s4
  // Predicated region
  $region2: #{autoencoder_forward.4} parent=0 // pred_check
    _
  $region3: #{autoencoder_forward.4} parent=0 // pred_check_branch
    %9 = sbr.rel (0) target = $region5
  $region4: #{autoencoder_forward.4} parent=0 // pred_region
    _
  $region5: #{autoencoder_forward.4} parent=0 // pred_fallthru
    _
  // Predicated region
  $region6: #{autoencoder_forward.4} parent=0 // pred_check
    _
  $region7: #{autoencoder_forward.4} parent=0 // pred_check_branch
    %11 = sbr.rel (0) target = $region9
  $region8: #{autoencoder_forward.4} parent=0 // pred_region
    _
  $region9: #{autoencoder_forward.4} parent=0 // pred_fallthru
    _
  // Predicated region
  $region10: #{autoencoder_forward.4} parent=0 // pred_check
    _
  $region11: #{autoencoder_forward.4} parent=0 // pred_check_branch
    %13 = sbr.rel (0) target = $region13
  $region12: #{autoencoder_forward.4} parent=0 // pred_region
    _
  $region13: #{autoencoder_forward.4} parent=0 // pred_fallthru
    _
  %v15 = vld [vmem:[%s0] sm:$0xf]
  %v16 = vld [vmem:[%s0 + $0x4] sm:$0xf]
  %v17 = vld [vmem:[%s0 + $0x8] sm:$0xf]
  %v18 = vld [vmem:[%s0 + $0xc] sm:$0xf]
  %v19 = vld [vmem:[%s0 + $0x10] sm:$0xf]
  %v20 = vld [vmem:[%s0 + $0x14] sm:$0xf]
  %v21 = vld [vmem:[%s0 + $0x18] sm:$0xf]
  %v22 = vld [vmem:[%s0 + $0x1c] sm:$0xf]
  %v23 = vld [vmem:[%s0 + $0x20] sm:$0xf]
  %v24 = vld [vmem:[%s0 + $0x24] sm:$0xf]
  %v25 = vld [vmem:[%s0 + $0x28] sm:$0xf]
  %v26 = vld [vmem:[%s0 + $0x2c] sm:$0xf]
  %v27 = vld [vmem:[%s0 + $0x30] sm:$0xf]
  %v28 = vld [vmem:[%s0 + $0x34] sm:$0xf]
  %v29 = vld [vmem:[%s0 + $0x38] sm:$0xf]
  %v30 = vld [vmem:[%s0 + $0x3c] sm:$0xf]
  %v31 = vld [vmem:[%s0 + $0x40] sm:$0xf]
  %v32 = vld [vmem:[%s0 + $0x44] sm:$0xf]
  %v33 = vld [vmem:[%s0 + $0x48] sm:$0xf]
  %v34 = vld [vmem:[%s0 + $0x4c] sm:$0xf]
  %v35 = vld [vmem:[%s0 + $0x50] sm:$0xf]
  %v36 = vld [vmem:[%s0 + $0x54] sm:$0xf]
  %v37 = vld [vmem:[%s0 + $0x58] sm:$0xf]
  %v38 = vld [vmem:[%s0 + $0x5c] sm:$0xf]
  %v39 = vld [vmem:[%s0 + $0x60] sm:$0xf]
  %v40 = vld [vmem:[%s0 + $0x64] sm:$0xf]
  %v41 = vld [vmem:[%s0 + $0x68] sm:$0xf]
  %v42 = vld [vmem:[%s0 + $0x6c] sm:$0xf]
  %v43 = vld [vmem:[%s0 + $0x70] sm:$0xf]
  %v44 = vld [vmem:[%s0 + $0x74] sm:$0xf]
  %v45 = vld [vmem:[%s0 + $0x78] sm:$0xf]
  %v46 = vld [vmem:[%s0 + $0x7c] sm:$0xf]
  %v47 = vld [vmem:[%s0 + $0x80] sm:$0xf]
  %v48 = vld [vmem:[%s0 + $0x84] sm:$0xf]
  %v49 = vld [vmem:[%s0 + $0x88] sm:$0xf]
  %v50 = vld [vmem:[%s0 + $0x8c] sm:$0xf]
  %v51 = vld [vmem:[%s0 + $0x90] sm:$0xf]
  %v52 = vld [vmem:[%s0 + $0x94] sm:$0xf]
  %v53 = vld [vmem:[%s0 + $0x98] sm:$0xf]
  %v54 = vld [vmem:[%s0 + $0x9c] sm:$0xf]
  %v55 = vld [vmem:[%s0 + $0xa0] sm:$0xf]
  %v56 = vld [vmem:[%s0 + $0xa4] sm:$0xf]
  %v57 = vld [vmem:[%s0 + $0xa8] sm:$0xf]
  %v58 = vld [vmem:[%s0 + $0xac] sm:$0xf]
  %v59 = vld [vmem:[%s0 + $0xb0] sm:$0xf]
  %v60 = vld [vmem:[%s0 + $0xb4] sm:$0xf]
  %v61 = vld [vmem:[%s0 + $0xb8] sm:$0xf]
  %v62 = vld [vmem:[%s0 + $0xbc] sm:$0xf]
  %v63 = vld [vmem:[%s0 + $0xc0] sm:$0xf]
  %v64 = vld [vmem:[%s1] sm:$0xf]
  %v65 = vld [vmem:[%s1 + $0x4] sm:$0x1]
  %v66 = vld [vmem:[%s2] sm:$0x1]
  %v68 = vlaneseq
  %v69 = vshrl.u32 %v68, 7
  %v70 = vsub.s32 0, %v69
  %v71 = vrot.slane %v66, %v70
  %v122 = vunpack.c.l.b16 %v15
  %v123 = vunpack.c.l.b16 %v16
  %v124 = vunpack.c.l.b16 %v17
  %v125 = vunpack.c.l.b16 %v18
  %v126 = vunpack.c.l.b16 %v19
  %v127 = vunpack.c.l.b16 %v20
  %v128 = vunpack.c.l.b16 %v21
  %v129 = vunpack.c.l.b16 %v22
  %v130 = vunpack.c.l.b16 %v23
  %v131 = vunpack.c.l.b16 %v24
  %v132 = vunpack.c.l.b16 %v25
  %v133 = vunpack.c.l.b16 %v26
  %v134 = vunpack.c.l.b16 %v27
  %v135 = vunpack.c.l.b16 %v28
  %v136 = vunpack.c.l.b16 %v29
  %v137 = vunpack.c.l.b16 %v30
  %v138 = vunpack.c.l.b16 %v31
  %v139 = vunpack.c.l.b16 %v32
  %v140 = vunpack.c.l.b16 %v33
  %v141 = vunpack.c.l.b16 %v34
  %v142 = vunpack.c.l.b16 %v35
  %v143 = vunpack.c.l.b16 %v36
  %v144 = vunpack.c.l.b16 %v37
  %v145 = vunpack.c.l.b16 %v38
  %v146 = vunpack.c.l.b16 %v39
  %v147 = vunpack.c.l.b16 %v40
  %v148 = vunpack.c.l.b16 %v41
  %v149 = vunpack.c.l.b16 %v42
  %v150 = vunpack.c.l.b16 %v43
  %v151 = vunpack.c.l.b16 %v44
  %v152 = vunpack.c.l.b16 %v45
  %v153 = vunpack.c.l.b16 %v46
  %v154 = vunpack.c.l.b16 %v47
  %v155 = vunpack.c.l.b16 %v48
  %v156 = vunpack.c.l.b16 %v49
  %v157 = vunpack.c.l.b16 %v50
  %v158 = vunpack.c.l.b16 %v51
  %v159 = vunpack.c.l.b16 %v52
  %v160 = vunpack.c.l.b16 %v53
  %v161 = vunpack.c.l.b16 %v54
  %v162 = vunpack.c.l.b16 %v55
  %v163 = vunpack.c.l.b16 %v56
  %v164 = vunpack.c.l.b16 %v57
  %v165 = vunpack.c.l.b16 %v58
  %v166 = vunpack.c.l.b16 %v59
  %v167 = vunpack.c.l.b16 %v60
  %v168 = vunpack.c.l.b16 %v61
  %v169 = vunpack.c.l.b16 %v62
  %v170 = vunpack.c.l.b16 %v63
  %v171 = vpack.c.b16 %v123, %v122
  %v172 = vpack.c.b16 %v125, %v124
  %v173 = vpack.c.b16 %v127, %v126
  %v174 = vpack.c.b16 %v129, %v128
  %v175 = vpack.c.b16 %v131, %v130
  %v176 = vpack.c.b16 %v133, %v132
  %v177 = vpack.c.b16 %v135, %v134
  %v178 = vpack.c.b16 %v137, %v136
  %v179 = vpack.c.b16 %v139, %v138
  %v180 = vpack.c.b16 %v141, %v140
  %v181 = vpack.c.b16 %v143, %v142
  %v182 = vpack.c.b16 %v145, %v144
  %v183 = vpack.c.b16 %v147, %v146
  %v184 = vpack.c.b16 %v149, %v148
  %v185 = vpack.c.b16 %v151, %v150
  %v186 = vpack.c.b16 %v153, %v152
  %v187 = vpack.c.b16 %v155, %v154
  %v188 = vpack.c.b16 %v157, %v156
  %v189 = vpack.c.b16 %v159, %v158
  %v190 = vpack.c.b16 %v161, %v160
  %v191 = vpack.c.b16 %v163, %v162
  %v192 = vpack.c.b16 %v165, %v164
  %v193 = vpack.c.b16 %v167, %v166
  %v194 = vpack.c.b16 %v169, %v168
  %v195 = vpack.c.b16 %v170, %v170
  %v198 = vunpack.c.l.b16 %v64
  %v199 = vunpack.c.l.b16 %v65
  %v200 = vpack.c.b16 %v199, %v198
  %vm201 = vcmask 72704
  %v203 = vsel %vm201, %v171, 0
  %v206 = vsel %vm201, %v172, 0
  %v209 = vsel %vm201, %v173, 0
  %v212 = vsel %vm201, %v174, 0
  %v215 = vsel %vm201, %v175, 0
  %v218 = vsel %vm201, %v176, 0
  %v221 = vsel %vm201, %v177, 0
  %v224 = vsel %vm201, %v178, 0
  %v227 = vsel %vm201, %v179, 0
  %v230 = vsel %vm201, %v180, 0
  %v233 = vsel %vm201, %v181, 0
  %v236 = vsel %vm201, %v182, 0
  %v239 = vsel %vm201, %v183, 0
  %v242 = vsel %vm201, %v184, 0
  %v245 = vsel %vm201, %v185, 0
  %v248 = vsel %vm201, %v186, 0
  %v251 = vsel %vm201, %v187, 0
  %v254 = vsel %vm201, %v188, 0
  %v257 = vsel %vm201, %v189, 0
  %v260 = vsel %vm201, %v190, 0
  %v263 = vsel %vm201, %v191, 0
  %v266 = vsel %vm201, %v192, 0
  %v269 = vsel %vm201, %v193, 0
  %v272 = vsel %vm201, %v194, 0
  %v275 = vsel %vm201, %v195, 0
  %vm277 = vcmask 1043456
  %vm278 = vcmask 1044480
  %v279 = vsel %vm277, 4294967295, 65535
  %v280 = vsel %vm278, %v279, 0
  %v282 = vand.u32 %v200, %v280
  %284 = vmatprep.subr.bf16.mxu0 0
  %285 = vmatpush1.bf16.msra.mxu0 0
  %286 = vmatprep.subr.bf16.mxu0 0
  %287 = vmatpush1.bf16.msra.mxu0 0
  %288 = vmatprep.subr.bf16.mxu0 0
  %289 = vmatpush1.bf16.msra.mxu0 0
  %290 = vmatprep.subr.bf16.mxu0 0
  %291 = vmatpush1.bf16.msra.mxu0 0
  %292 = vmatprep.subr.bf16.mxu0 0
  %293 = vmatpush1.bf16.msra.mxu0 0
  %294 = vmatprep.subr.bf16.mxu0 0
  %295 = vmatpush1.bf16.msra.mxu0 0
  %296 = vmatprep.subr.bf16.mxu0 0
  %297 = vmatpush1.bf16.msra.mxu0 0
  %298 = vmatprep.subr.bf16.mxu0 0
  %299 = vmatpush1.bf16.msra.mxu0 %v282
  %300 = vmatprep.subr.bf16.mxu0 0
  %301 = vmatpush2.bf16.msra.mxu0 0
  %302 = vmatprep.subr.bf16.mxu0 0
  %303 = vmatpush2.bf16.msra.mxu0 0
  %304 = vmatprep.subr.bf16.mxu0 0
  %305 = vmatpush2.bf16.msra.mxu0 0
  %306 = vmatprep.subr.bf16.mxu0 0
  %307 = vmatpush2.bf16.msra.mxu0 0
  %308 = vmatprep.subr.bf16.mxu0 0
  %309 = vmatpush2.bf16.msra.mxu0 0
  %310 = vmatprep.subr.bf16.mxu0 0
  %311 = vmatpush2.bf16.msra.mxu0 0
  %312 = vmatprep.subr.bf16.mxu0 0
  %313 = vmatpush2.bf16.msra.mxu0 0
  %314 = vmatprep.subr.bf16.mxu0 0
  %315 = vmatpush2.bf16.msra.mxu0 0
  %316 = vmatprep.mubr.bf16.mxu0 0
  %317 = vmatmul.mubr.bf16.gmra.mxu0 %v203
  %v318 = vpop.f32.mrf.mxu0
  %v319 = vadd.f32 %v71, %v318
  %v320 = vpop.f32.mrf.mxu0
  %v321 = vpop.f32.mrf.mxu0
  %v322 = vadd.f32 %v71, %v321
  %v323 = vpop.f32.mrf.mxu0
  %324 = vmatprep.mubr.bf16.mxu0 0
  %325 = vmatmul.mubr.bf16.gmra.mxu0 %v206
  %v326 = vpop.f32.mrf.mxu0
  %v327 = vadd.f32 %v71, %v326
  %v328 = vpop.f32.mrf.mxu0
  %v329 = vpop.f32.mrf.mxu0
  %v330 = vadd.f32 %v71, %v329
  %v331 = vpop.f32.mrf.mxu0
  %332 = vmatprep.mubr.bf16.mxu0 0
  %333 = vmatmul.mubr.bf16.gmra.mxu0 %v209
  %v334 = vpop.f32.mrf.mxu0
  %v335 = vadd.f32 %v71, %v334
  %v336 = vpop.f32.mrf.mxu0
  %v337 = vpop.f32.mrf.mxu0
  %v338 = vadd.f32 %v71, %v337
  %v339 = vpop.f32.mrf.mxu0
  %340 = vmatprep.mubr.bf16.mxu0 0
  %341 = vmatmul.mubr.bf16.gmra.mxu0 %v212
  %v342 = vpop.f32.mrf.mxu0
  %v343 = vadd.f32 %v71, %v342
  %v344 = vpop.f32.mrf.mxu0
  %v345 = vpop.f32.mrf.mxu0
  %v346 = vadd.f32 %v71, %v345
  %v347 = vpop.f32.mrf.mxu0
  %348 = vmatprep.mubr.bf16.mxu0 0
  %349 = vmatmul.mubr.bf16.gmra.mxu0 %v215
  %v350 = vpop.f32.mrf.mxu0
  %v351 = vadd.f32 %v71, %v350
  %v352 = vpop.f32.mrf.mxu0
  %v353 = vpop.f32.mrf.mxu0
  %v354 = vadd.f32 %v71, %v353
  %v355 = vpop.f32.mrf.mxu0
  %356 = vmatprep.mubr.bf16.mxu0 0
  %357 = vmatmul.mubr.bf16.gmra.mxu0 %v218
  %v358 = vpop.f32.mrf.mxu0
  %v359 = vadd.f32 %v71, %v358
  %v360 = vpop.f32.mrf.mxu0
  %v361 = vpop.f32.mrf.mxu0
  %v362 = vadd.f32 %v71, %v361
  %v363 = vpop.f32.mrf.mxu0
  %364 = vmatprep.mubr.bf16.mxu0 0
  %365 = vmatmul.mubr.bf16.gmra.mxu0 %v221
  %v366 = vpop.f32.mrf.mxu0
  %v367 = vadd.f32 %v71, %v366
  %v368 = vpop.f32.mrf.mxu0
  %v369 = vpop.f32.mrf.mxu0
  %v370 = vadd.f32 %v71, %v369
  %v371 = vpop.f32.mrf.mxu0
  %372 = vmatprep.mubr.bf16.mxu0 0
  %373 = vmatmul.mubr.bf16.gmra.mxu0 %v224
  %v374 = vpop.f32.mrf.mxu0
  %v375 = vadd.f32 %v71, %v374
  %v376 = vpop.f32.mrf.mxu0
  %v377 = vpop.f32.mrf.mxu0
  %v378 = vadd.f32 %v71, %v377
  %v379 = vpop.f32.mrf.mxu0
  %380 = vmatprep.mubr.bf16.mxu0 0
  %381 = vmatmul.mubr.bf16.gmra.mxu0 %v227
  %v382 = vpop.f32.mrf.mxu0
  %v383 = vadd.f32 %v71, %v382
  %v384 = vpop.f32.mrf.mxu0
  %v385 = vpop.f32.mrf.mxu0
  %v386 = vadd.f32 %v71, %v385
  %v387 = vpop.f32.mrf.mxu0
  %388 = vmatprep.mubr.bf16.mxu0 0
  %389 = vmatmul.mubr.bf16.gmra.mxu0 %v230
  %v390 = vpop.f32.mrf.mxu0
  %v391 = vadd.f32 %v71, %v390
  %v392 = vpop.f32.mrf.mxu0
  %v393 = vpop.f32.mrf.mxu0
  %v394 = vadd.f32 %v71, %v393
  %v395 = vpop.f32.mrf.mxu0
  %396 = vmatprep.mubr.bf16.mxu0 0
  %397 = vmatmul.mubr.bf16.gmra.mxu0 %v233
  %v398 = vpop.f32.mrf.mxu0
  %v399 = vadd.f32 %v71, %v398
  %v400 = vpop.f32.mrf.mxu0
  %v401 = vpop.f32.mrf.mxu0
  %v402 = vadd.f32 %v71, %v401
  %v403 = vpop.f32.mrf.mxu0
  %404 = vmatprep.mubr.bf16.mxu0 0
  %405 = vmatmul.mubr.bf16.gmra.mxu0 %v236
  %v406 = vpop.f32.mrf.mxu0
  %v407 = vadd.f32 %v71, %v406
  %v408 = vpop.f32.mrf.mxu0
  %v409 = vpop.f32.mrf.mxu0
  %v410 = vadd.f32 %v71, %v409
  %v411 = vpop.f32.mrf.mxu0
  %412 = vmatprep.mubr.bf16.mxu0 0
  %413 = vmatmul.mubr.bf16.gmra.mxu0 %v239
  %v414 = vpop.f32.mrf.mxu0
  %v415 = vadd.f32 %v71, %v414
  %v416 = vpop.f32.mrf.mxu0
  %v417 = vpop.f32.mrf.mxu0
  %v418 = vadd.f32 %v71, %v417
  %v419 = vpop.f32.mrf.mxu0
  %420 = vmatprep.mubr.bf16.mxu0 0
  %421 = vmatmul.mubr.bf16.gmra.mxu0 %v242
  %v422 = vpop.f32.mrf.mxu0
  %v423 = vadd.f32 %v71, %v422
  %v424 = vpop.f32.mrf.mxu0
  %v425 = vpop.f32.mrf.mxu0
  %v426 = vadd.f32 %v71, %v425
  %v427 = vpop.f32.mrf.mxu0
  %428 = vmatprep.mubr.bf16.mxu0 0
  %429 = vmatmul.mubr.bf16.gmra.mxu0 %v245
  %v430 = vpop.f32.mrf.mxu0
  %v431 = vadd.f32 %v71, %v430
  %v432 = vpop.f32.mrf.mxu0
  %v433 = vpop.f32.mrf.mxu0
  %v434 = vadd.f32 %v71, %v433
  %v435 = vpop.f32.mrf.mxu0
  %436 = vmatprep.mubr.bf16.mxu0 0
  %437 = vmatmul.mubr.bf16.gmra.mxu0 %v248
  %v438 = vpop.f32.mrf.mxu0
  %v439 = vadd.f32 %v71, %v438
  %v440 = vpop.f32.mrf.mxu0
  %v441 = vpop.f32.mrf.mxu0
  %v442 = vadd.f32 %v71, %v441
  %v443 = vpop.f32.mrf.mxu0
  %444 = vmatprep.mubr.bf16.mxu0 0
  %445 = vmatmul.mubr.bf16.gmra.mxu0 %v251
  %v446 = vpop.f32.mrf.mxu0
  %v447 = vadd.f32 %v71, %v446
  %v448 = vpop.f32.mrf.mxu0
  %v449 = vpop.f32.mrf.mxu0
  %v450 = vadd.f32 %v71, %v449
  %v451 = vpop.f32.mrf.mxu0
  %452 = vmatprep.mubr.bf16.mxu0 0
  %453 = vmatmul.mubr.bf16.gmra.mxu0 %v254
  %v454 = vpop.f32.mrf.mxu0
  %v455 = vadd.f32 %v71, %v454
  %v456 = vpop.f32.mrf.mxu0
  %v457 = vpop.f32.mrf.mxu0
  %v458 = vadd.f32 %v71, %v457
  %v459 = vpop.f32.mrf.mxu0
  %460 = vmatprep.mubr.bf16.mxu0 0
  %461 = vmatmul.mubr.bf16.gmra.mxu0 %v257
  %v462 = vpop.f32.mrf.mxu0
  %v463 = vadd.f32 %v71, %v462
  %v464 = vpop.f32.mrf.mxu0
  %v465 = vpop.f32.mrf.mxu0
  %v466 = vadd.f32 %v71, %v465
  %v467 = vpop.f32.mrf.mxu0
  %468 = vmatprep.mubr.bf16.mxu0 0
  %469 = vmatmul.mubr.bf16.gmra.mxu0 %v260
  %v470 = vpop.f32.mrf.mxu0
  %v471 = vadd.f32 %v71, %v470
  %v472 = vpop.f32.mrf.mxu0
  %v473 = vpop.f32.mrf.mxu0
  %v474 = vadd.f32 %v71, %v473
  %v475 = vpop.f32.mrf.mxu0
  %476 = vmatprep.mubr.bf16.mxu0 0
  %477 = vmatmul.mubr.bf16.gmra.mxu0 %v263
  %v478 = vpop.f32.mrf.mxu0
  %v479 = vadd.f32 %v71, %v478
  %v480 = vpop.f32.mrf.mxu0
  %v481 = vpop.f32.mrf.mxu0
  %v482 = vadd.f32 %v71, %v481
  %v483 = vpop.f32.mrf.mxu0
  %484 = vmatprep.mubr.bf16.mxu0 0
  %485 = vmatmul.mubr.bf16.gmra.mxu0 %v266
  %v486 = vpop.f32.mrf.mxu0
  %v487 = vadd.f32 %v71, %v486
  %v488 = vpop.f32.mrf.mxu0
  %v489 = vpop.f32.mrf.mxu0
  %v490 = vadd.f32 %v71, %v489
  %v491 = vpop.f32.mrf.mxu0
  %492 = vmatprep.mubr.bf16.mxu0 0
  %493 = vmatmul.mubr.bf16.gmra.mxu0 %v269
  %v494 = vpop.f32.mrf.mxu0
  %v495 = vadd.f32 %v71, %v494
  %v496 = vpop.f32.mrf.mxu0
  %v497 = vpop.f32.mrf.mxu0
  %v498 = vadd.f32 %v71, %v497
  %v499 = vpop.f32.mrf.mxu0
  %500 = vmatprep.mubr.bf16.mxu0 0
  %501 = vmatmul.mubr.bf16.gmra.mxu0 %v272
  %v502 = vpop.f32.mrf.mxu0
  %v503 = vadd.f32 %v71, %v502
  %v504 = vpop.f32.mrf.mxu0
  %v505 = vpop.f32.mrf.mxu0
  %v506 = vadd.f32 %v71, %v505
  %v507 = vpop.f32.mrf.mxu0
  %508 = vmatprep.mubr.bf16.mxu0 0
  %509 = vmatmul.mubr.bf16.gmra.mxu0 %v275
  %v510 = vpop.f32.mrf.mxu0
  %v511 = vadd.f32 %v71, %v510
  %v512 = vpop.f32.mrf.mxu0
  %v513 = vpop.f32.mrf.mxu0
  %v514 = vpop.f32.mrf.mxu0
  %515 = vdwg.mxu0
  %v516 = vmax.f32 %v319, 0.0
  %v517 = vmax.f32 %v322, 0.0
  %v518 = vmax.f32 %v327, 0.0
  %v519 = vmax.f32 %v330, 0.0
  %v520 = vmax.f32 %v335, 0.0
  %v521 = vmax.f32 %v338, 0.0
  %v522 = vmax.f32 %v343, 0.0
  %v523 = vmax.f32 %v346, 0.0
  %v524 = vmax.f32 %v351, 0.0
  %v525 = vmax.f32 %v354, 0.0
  %v526 = vmax.f32 %v359, 0.0
  %v527 = vmax.f32 %v362, 0.0
  %v528 = vmax.f32 %v367, 0.0
  %v529 = vmax.f32 %v370, 0.0
  %v530 = vmax.f32 %v375, 0.0
  %v531 = vmax.f32 %v378, 0.0
  %v532 = vmax.f32 %v383, 0.0
  %v533 = vmax.f32 %v386, 0.0
  %v534 = vmax.f32 %v391, 0.0
  %v535 = vmax.f32 %v394, 0.0
  %v536 = vmax.f32 %v399, 0.0
  %v537 = vmax.f32 %v402, 0.0
  %v538 = vmax.f32 %v407, 0.0
  %v539 = vmax.f32 %v410, 0.0
  %v540 = vmax.f32 %v415, 0.0
  %v541 = vmax.f32 %v418, 0.0
  %v542 = vmax.f32 %v423, 0.0
  %v543 = vmax.f32 %v426, 0.0
  %v544 = vmax.f32 %v431, 0.0
  %v545 = vmax.f32 %v434, 0.0
  %v546 = vmax.f32 %v439, 0.0
  %v547 = vmax.f32 %v442, 0.0
  %v548 = vmax.f32 %v447, 0.0
  %v549 = vmax.f32 %v450, 0.0
  %v550 = vmax.f32 %v455, 0.0
  %v551 = vmax.f32 %v458, 0.0
  %v552 = vmax.f32 %v463, 0.0
  %v553 = vmax.f32 %v466, 0.0
  %v554 = vmax.f32 %v471, 0.0
  %v555 = vmax.f32 %v474, 0.0
  %v556 = vmax.f32 %v479, 0.0
  %v557 = vmax.f32 %v482, 0.0
  %v558 = vmax.f32 %v487, 0.0
  %v559 = vmax.f32 %v490, 0.0
  %v560 = vmax.f32 %v495, 0.0
  %v561 = vmax.f32 %v498, 0.0
  %v562 = vmax.f32 %v503, 0.0
  %v563 = vmax.f32 %v506, 0.0
  %v564 = vmax.f32 %v511, 0.0
  %v565 = vpack.c.bf16 %v517, %v516
  %v566 = vpack.c.bf16 %v519, %v518
  %v567 = vpack.c.bf16 %v521, %v520
  %v568 = vpack.c.bf16 %v523, %v522
  %v569 = vpack.c.bf16 %v525, %v524
  %v570 = vpack.c.bf16 %v527, %v526
  %v571 = vpack.c.bf16 %v529, %v528
  %v572 = vpack.c.bf16 %v531, %v530
  %v573 = vpack.c.bf16 %v533, %v532
  %v574 = vpack.c.bf16 %v535, %v534
  %v575 = vpack.c.bf16 %v537, %v536
  %v576 = vpack.c.bf16 %v539, %v538
  %v577 = vpack.c.bf16 %v541, %v540
  %v578 = vpack.c.bf16 %v543, %v542
  %v579 = vpack.c.bf16 %v545, %v544
  %v580 = vpack.c.bf16 %v547, %v546
  %v581 = vpack.c.bf16 %v549, %v548
  %v582 = vpack.c.bf16 %v551, %v550
  %v583 = vpack.c.bf16 %v553, %v552
  %v584 = vpack.c.bf16 %v555, %v554
  %v585 = vpack.c.bf16 %v557, %v556
  %v586 = vpack.c.bf16 %v559, %v558
  %v587 = vpack.c.bf16 %v561, %v560
  %v588 = vpack.c.bf16 %v563, %v562
  %v589 = vpack.c.bf16 %v564, %v564
  %v615 = vunpack.c.l.b16 %v565
  %v616 = vunpack.c.h.b16 %v565
  %v617 = vunpack.c.l.b16 %v566
  %v618 = vunpack.c.h.b16 %v566
  %v619 = vunpack.c.l.b16 %v567
  %v620 = vunpack.c.h.b16 %v567
  %v621 = vunpack.c.l.b16 %v568
  %v622 = vunpack.c.h.b16 %v568
  %v623 = vunpack.c.l.b16 %v569
  %v624 = vunpack.c.h.b16 %v569
  %v625 = vunpack.c.l.b16 %v570
  %v626 = vunpack.c.h.b16 %v570
  %v627 = vunpack.c.l.b16 %v571
  %v628 = vunpack.c.h.b16 %v571
  %v629 = vunpack.c.l.b16 %v572
  %v630 = vunpack.c.h.b16 %v572
  %v631 = vunpack.c.l.b16 %v573
  %v632 = vunpack.c.h.b16 %v573
  %v633 = vunpack.c.l.b16 %v574
  %v634 = vunpack.c.h.b16 %v574
  %v635 = vunpack.c.l.b16 %v575
  %v636 = vunpack.c.h.b16 %v575
  %v637 = vunpack.c.l.b16 %v576
  %v638 = vunpack.c.h.b16 %v576
  %v639 = vunpack.c.l.b16 %v577
  %v640 = vunpack.c.h.b16 %v577
  %v641 = vunpack.c.l.b16 %v578
  %v642 = vunpack.c.h.b16 %v578
  %v643 = vunpack.c.l.b16 %v579
  %v644 = vunpack.c.h.b16 %v579
  %v645 = vunpack.c.l.b16 %v580
  %v646 = vunpack.c.h.b16 %v580
  %v647 = vunpack.c.l.b16 %v581
  %v648 = vunpack.c.h.b16 %v581
  %v649 = vunpack.c.l.b16 %v582
  %v650 = vunpack.c.h.b16 %v582
  %v651 = vunpack.c.l.b16 %v583
  %v652 = vunpack.c.h.b16 %v583
  %v653 = vunpack.c.l.b16 %v584
  %v654 = vunpack.c.h.b16 %v584
  %v655 = vunpack.c.l.b16 %v585
  %v656 = vunpack.c.h.b16 %v585
  %v657 = vunpack.c.l.b16 %v586
  %v658 = vunpack.c.h.b16 %v586
  %v659 = vunpack.c.l.b16 %v587
  %v660 = vunpack.c.h.b16 %v587
  %v661 = vunpack.c.l.b16 %v588
  %v662 = vunpack.c.h.b16 %v588
  %v663 = vunpack.c.l.b16 %v589
  %v664 = vpack.c.b16 %v615, %v615
  %v665 = vpack.c.b16 %v616, %v616
  %v666 = vpack.c.b16 %v617, %v617
  %v667 = vpack.c.b16 %v618, %v618
  %v668 = vpack.c.b16 %v619, %v619
  %v669 = vpack.c.b16 %v620, %v620
  %v670 = vpack.c.b16 %v621, %v621
  %v671 = vpack.c.b16 %v622, %v622
  %v672 = vpack.c.b16 %v623, %v623
  %v673 = vpack.c.b16 %v624, %v624
  %v674 = vpack.c.b16 %v625, %v625
  %v675 = vpack.c.b16 %v626, %v626
  %v676 = vpack.c.b16 %v627, %v627
  %v677 = vpack.c.b16 %v628, %v628
  %v678 = vpack.c.b16 %v629, %v629
  %v679 = vpack.c.b16 %v630, %v630
  %v680 = vpack.c.b16 %v631, %v631
  %v681 = vpack.c.b16 %v632, %v632
  %v682 = vpack.c.b16 %v633, %v633
  %v683 = vpack.c.b16 %v634, %v634
  %v684 = vpack.c.b16 %v635, %v635
  %v685 = vpack.c.b16 %v636, %v636
  %v686 = vpack.c.b16 %v637, %v637
  %v687 = vpack.c.b16 %v638, %v638
  %v688 = vpack.c.b16 %v639, %v639
  %v689 = vpack.c.b16 %v640, %v640
  %v690 = vpack.c.b16 %v641, %v641
  %v691 = vpack.c.b16 %v642, %v642
  %v692 = vpack.c.b16 %v643, %v643
  %v693 = vpack.c.b16 %v644, %v644
  %v694 = vpack.c.b16 %v645, %v645
  %v695 = vpack.c.b16 %v646, %v646
  %v696 = vpack.c.b16 %v647, %v647
  %v697 = vpack.c.b16 %v648, %v648
  %v698 = vpack.c.b16 %v649, %v649
  %v699 = vpack.c.b16 %v650, %v650
  %v700 = vpack.c.b16 %v651, %v651
  %v701 = vpack.c.b16 %v652, %v652
  %v702 = vpack.c.b16 %v653, %v653
  %v703 = vpack.c.b16 %v654, %v654
  %v704 = vpack.c.b16 %v655, %v655
  %v705 = vpack.c.b16 %v656, %v656
  %v706 = vpack.c.b16 %v657, %v657
  %v707 = vpack.c.b16 %v658, %v658
  %v708 = vpack.c.b16 %v659, %v659
  %v709 = vpack.c.b16 %v660, %v660
  %v710 = vpack.c.b16 %v661, %v661
  %v711 = vpack.c.b16 %v662, %v662
  %v712 = vpack.c.b16 %v663, %v663
  %vm762 = vcmask 125952
  %763 = vst.msk [vmem:[%s3] sm:$0xf] %vm762, %v664
  %764 = vst.msk [vmem:[%s3 + $0x4] sm:$0xf] %vm762, %v665
  %765 = vst.msk [vmem:[%s3 + $0x8] sm:$0xf] %vm762, %v666
  %766 = vst.msk [vmem:[%s3 + $0xc] sm:$0xf] %vm762, %v667
  %767 = vst.msk [vmem:[%s3 + $0x10] sm:$0xf] %vm762, %v668
  %768 = vst.msk [vmem:[%s3 + $0x14] sm:$0xf] %vm762, %v669
  %769 = vst.msk [vmem:[%s3 + $0x18] sm:$0xf] %vm762, %v670
  %770 = vst.msk [vmem:[%s3 + $0x1c] sm:$0xf] %vm762, %v671
  %771 = vst.msk [vmem:[%s3 + $0x20] sm:$0xf] %vm762, %v672
  %772 = vst.msk [vmem:[%s3 + $0x24] sm:$0xf] %vm762, %v673
  %773 = vst.msk [vmem:[%s3 + $0x28] sm:$0xf] %vm762, %v674
  %774 = vst.msk [vmem:[%s3 + $0x2c] sm:$0xf] %vm762, %v675
  %775 = vst.msk [vmem:[%s3 + $0x30] sm:$0xf] %vm762, %v676
  %776 = vst.msk [vmem:[%s3 + $0x34] sm:$0xf] %vm762, %v677
  %777 = vst.msk [vmem:[%s3 + $0x38] sm:$0xf] %vm762, %v678
  %778 = vst.msk [vmem:[%s3 + $0x3c] sm:$0xf] %vm762, %v679
  %779 = vst.msk [vmem:[%s3 + $0x40] sm:$0xf] %vm762, %v680
  %780 = vst.msk [vmem:[%s3 + $0x44] sm:$0xf] %vm762, %v681
  %781 = vst.msk [vmem:[%s3 + $0x48] sm:$0xf] %vm762, %v682
  %782 = vst.msk [vmem:[%s3 + $0x4c] sm:$0xf] %vm762, %v683
  %783 = vst.msk [vmem:[%s3 + $0x50] sm:$0xf] %vm762, %v684
  %784 = vst.msk [vmem:[%s3 + $0x54] sm:$0xf] %vm762, %v685
  %785 = vst.msk [vmem:[%s3 + $0x58] sm:$0xf] %vm762, %v686
  %786 = vst.msk [vmem:[%s3 + $0x5c] sm:$0xf] %vm762, %v687
  %787 = vst.msk [vmem:[%s3 + $0x60] sm:$0xf] %vm762, %v688
  %788 = vst.msk [vmem:[%s3 + $0x64] sm:$0xf] %vm762, %v689
  %789 = vst.msk [vmem:[%s3 + $0x68] sm:$0xf] %vm762, %v690
  %790 = vst.msk [vmem:[%s3 + $0x6c] sm:$0xf] %vm762, %v691
  %791 = vst.msk [vmem:[%s3 + $0x70] sm:$0xf] %vm762, %v692
  %792 = vst.msk [vmem:[%s3 + $0x74] sm:$0xf] %vm762, %v693
  %793 = vst.msk [vmem:[%s3 + $0x78] sm:$0xf] %vm762, %v694
  %794 = vst.msk [vmem:[%s3 + $0x7c] sm:$0xf] %vm762, %v695
  %795 = vst.msk [vmem:[%s3 + $0x80] sm:$0xf] %vm762, %v696
  %796 = vst.msk [vmem:[%s3 + $0x84] sm:$0xf] %vm762, %v697
  %797 = vst.msk [vmem:[%s3 + $0x88] sm:$0xf] %vm762, %v698
  %798 = vst.msk [vmem:[%s3 + $0x8c] sm:$0xf] %vm762, %v699
  %799 = vst.msk [vmem:[%s3 + $0x90] sm:$0xf] %vm762, %v700
  %800 = vst.msk [vmem:[%s3 + $0x94] sm:$0xf] %vm762, %v701
  %801 = vst.msk [vmem:[%s3 + $0x98] sm:$0xf] %vm762, %v702
  %802 = vst.msk [vmem:[%s3 + $0x9c] sm:$0xf] %vm762, %v703
  %803 = vst.msk [vmem:[%s3 + $0xa0] sm:$0xf] %vm762, %v704
  %804 = vst.msk [vmem:[%s3 + $0xa4] sm:$0xf] %vm762, %v705
  %805 = vst.msk [vmem:[%s3 + $0xa8] sm:$0xf] %vm762, %v706
  %806 = vst.msk [vmem:[%s3 + $0xac] sm:$0xf] %vm762, %v707
  %807 = vst.msk [vmem:[%s3 + $0xb0] sm:$0xf] %vm762, %v708
  %808 = vst.msk [vmem:[%s3 + $0xb4] sm:$0xf] %vm762, %v709
  %809 = vst.msk [vmem:[%s3 + $0xb8] sm:$0xf] %vm762, %v710
  %810 = vst.msk [vmem:[%s3 + $0xbc] sm:$0xf] %vm762, %v711
  %811 = vst.msk [vmem:[%s3 + $0xc0] sm:$0xf] %vm762, %v712
  // Predicated region
  $region14: #{autoencoder_forward.4} parent=0 // pred_check
    _
  $region15: #{autoencoder_forward.4} parent=0 // pred_check_branch
    %813 = sbr.rel (0) target = $region17
  $region16: #{autoencoder_forward.4} parent=0 // pred_region
    _
  $region17: #{autoencoder_forward.4} parent=0 // pred_fallthru
    _
  // Predicated region
  $region18: #{autoencoder_forward.4} parent=0 // pred_check
    _
  $region19: #{autoencoder_forward.4} parent=0 // pred_check_branch
    %815 = sbr.rel (0) target = $region21
  $region20: #{autoencoder_forward.4} parent=0 // pred_region
    _
  $region21: #{autoencoder_forward.4} parent=0 // pred_fallthru
    _

// kernel: autoencoder_forward.5
$region0: #{autoencoder_forward.5}
  #allocation0 [shape = 'u32[]', space=smem, size = 0x4, offset = 0x4, fixed_abs, tag = 'smem constant byte address 0x4 - core index']
  #allocation1 [shape = 'u32[144,128]{1,0:T(1,128)}', space=vmem, size = 0x12000, scoped, tag = 'internal scratch']
  %s0 = inlined_call_operand.vmem [shape: bf16[49,2,144], index: 0, kind: input, shape index: {}]
  %s1 = inlined_call_operand.vmem [shape: bf16[144,32], index: 1, kind: input, shape index: {}]
  %s2 = inlined_call_operand.vmem [shape: f32[1,32], index: 2, kind: input, shape index: {}]
  %s3 = inlined_call_operand.vmem [shape: bf16[49,32,64], index: 3, kind: input, shape index: {}]
  %s4 = inlined_call_operand.vmem [shape: f32[1,64], index: 4, kind: input, shape index: {}]
  %s5 = inlined_call_operand.vmem [shape: bf16[64,64], index: 5, kind: input, shape index: {}]
  %s6 = inlined_call_operand.vmem [shape: f32[1,64], index: 6, kind: input, shape index: {}]
  %s7 = inlined_call_operand.vmem [shape: bf16[64,16], index: 7, kind: input, shape index: {}]
  %s8 = inlined_call_operand.vmem [shape: f32[1,16], index: 8, kind: input, shape index: {}]
  %s9 = inlined_call_operand.vmem [shape: bf16[16,64], index: 9, kind: input, shape index: {}]
  %s10 = inlined_call_operand.vmem [shape: f32[1,64], index: 10, kind: input, shape index: {}]
  %s11 = inlined_call_operand.vmem [shape: bf16[64,1568], index: 11, kind: input, shape index: {}]
  %s12 = inlined_call_operand.vmem [shape: f32[1,1568], index: 12, kind: input, shape index: {}]
  %s13 = inlined_call_operand.vmem [shape: bf16[2,1568], index: 13, kind: output, shape index: {}]
  %s14 = sld [smem:[#allocation0]]
  $region62: #{autoencoder_forward.5} parent=0
    _
  %s16 = ssub.s32 1, %s14
  %s17 = scalar_select 0, %s16, %s14
  // Predicated region
  $region2: #{autoencoder_forward.5} parent=0 // pred_check
    _
  $region3: #{autoencoder_forward.5} parent=0 // pred_check_branch
    %19 = sbr.rel (0) target = $region5
  $region4: #{autoencoder_forward.5} parent=0 // pred_region
    _
  $region5: #{autoencoder_forward.5} parent=0 // pred_fallthru
    _
  // Predicated region
  $region6: #{autoencoder_forward.5} parent=0 // pred_check
    _
  $region7: #{autoencoder_forward.5} parent=0 // pred_check_branch
    %21 = sbr.rel (0) target = $region9
  $region8: #{autoencoder_forward.5} parent=0 // pred_region
    _
  $region9: #{autoencoder_forward.5} parent=0 // pred_fallthru
    _
  // Predicated region
  $region10: #{autoencoder_forward.5} parent=0 // pred_check
    _
  $region11: #{autoencoder_forward.5} parent=0 // pred_check_branch
    %23 = sbr.rel (0) target = $region13
  $region12: #{autoencoder_forward.5} parent=0 // pred_region
    _
  $region13: #{autoencoder_forward.5} parent=0 // pred_fallthru
    _
  // Predicated region
  $region14: #{autoencoder_forward.5} parent=0 // pred_check
    _
  $region15: #{autoencoder_forward.5} parent=0 // pred_check_branch
    %25 = sbr.rel (0) target = $region17
  $region16: #{autoencoder_forward.5} parent=0 // pred_region
    _
  $region17: #{autoencoder_forward.5} parent=0 // pred_fallthru
    _
  // Predicated region
  $region18: #{autoencoder_forward.5} parent=0 // pred_check
    _
  $region19: #{autoencoder_forward.5} parent=0 // pred_check_branch
    %27 = sbr.rel (0) target = $region21
  $region20: #{autoencoder_forward.5} parent=0 // pred_region
    _
  $region21: #{autoencoder_forward.5} parent=0 // pred_fallthru
    _
  // Predicated region
  $region22: #{autoencoder_forward.5} parent=0 // pred_check
    _
  $region23: #{autoencoder_forward.5} parent=0 // pred_check_branch
    %29 = sbr.rel (0) target = $region25
  $region24: #{autoencoder_forward.5} parent=0 // pred_region
    _
  $region25: #{autoencoder_forward.5} parent=0 // pred_fallthru
    _
  // Predicated region
  $region26: #{autoencoder_forward.5} parent=0 // pred_check
    _
  $region27: #{autoencoder_forward.5} parent=0 // pred_check_branch
    %31 = sbr.rel (0) target = $region29
  $region28: #{autoencoder_forward.5} parent=0 // pred_region
    _
  $region29: #{autoencoder_forward.5} parent=0 // pred_fallthru
    _
  // Predicated region
  $region30: #{autoencoder_forward.5} parent=0 // pred_check
    _
  $region31: #{autoencoder_forward.5} parent=0 // pred_check_branch
    %33 = sbr.rel (0) target = $region33
  $region32: #{autoencoder_forward.5} parent=0 // pred_region
    _
  $region33: #{autoencoder_forward.5} parent=0 // pred_fallthru
    _
  // Predicated region
  $region34: #{autoencoder_forward.5} parent=0 // pred_check
    _
  $region35: #{autoencoder_forward.5} parent=0 // pred_check_branch
    %35 = sbr.rel (0) target = $region37
  $region36: #{autoencoder_forward.5} parent=0 // pred_region
    _
  $region37: #{autoencoder_forward.5} parent=0 // pred_fallthru
    _
  // Predicated region
  $region38: #{autoencoder_forward.5} parent=0 // pred_check
    _
  $region39: #{autoencoder_forward.5} parent=0 // pred_check_branch
    %37 = sbr.rel (0) target = $region41
  $region40: #{autoencoder_forward.5} parent=0 // pred_region
    _
  $region41: #{autoencoder_forward.5} parent=0 // pred_fallthru
    _
  // Predicated region
  $region42: #{autoencoder_forward.5} parent=0 // pred_check
    _
  $region43: #{autoencoder_forward.5} parent=0 // pred_check_branch
    %39 = sbr.rel (0) target = $region45
  $region44: #{autoencoder_forward.5} parent=0 // pred_region
    _
  $region45: #{autoencoder_forward.5} parent=0 // pred_fallthru
    _
  // Predicated region
  $region46: #{autoencoder_forward.5} parent=0 // pred_check
    _
  $region47: #{autoencoder_forward.5} parent=0 // pred_check_branch
    %41 = sbr.rel (0) target = $region49
  $region48: #{autoencoder_forward.5} parent=0 // pred_region
    _
  $region49: #{autoencoder_forward.5} parent=0 // pred_fallthru
    _
  // Predicated region
  $region50: #{autoencoder_forward.5} parent=0 // pred_check
    _
  $region51: #{autoencoder_forward.5} parent=0 // pred_check_branch
    %43 = sbr.rel (0) target = $region53
  $region52: #{autoencoder_forward.5} parent=0 // pred_region
    _
  $region53: #{autoencoder_forward.5} parent=0 // pred_fallthru
    _
  %v45 = vld [vmem:[%s1] sm:$0xf]
  %v46 = vld [vmem:[%s1 + $0x4] sm:$0xf]
  %v47 = vld [vmem:[%s1 + $0x8] sm:$0xf]
  %v48 = vld [vmem:[%s1 + $0xc] sm:$0xf]
  %v49 = vld [vmem:[%s1 + $0x10] sm:$0xf]
  %v50 = vld [vmem:[%s1 + $0x14] sm:$0xf]
  %v51 = vld [vmem:[%s1 + $0x18] sm:$0xf]
  %v52 = vld [vmem:[%s1 + $0x1c] sm:$0xf]
  %v53 = vld [vmem:[%s1 + $0x20] sm:$0xf]
  %v54 = vld [vmem:[%s1 + $0x24] sm:$0xf]
  %v55 = vld [vmem:[%s1 + $0x28] sm:$0xf]
  %v56 = vld [vmem:[%s1 + $0x2c] sm:$0xf]
  %v57 = vld [vmem:[%s1 + $0x30] sm:$0xf]
  %v58 = vld [vmem:[%s1 + $0x34] sm:$0xf]
  %v59 = vld [vmem:[%s1 + $0x38] sm:$0xf]
  %v60 = vld [vmem:[%s1 + $0x3c] sm:$0xf]
  %v61 = vld [vmem:[%s1 + $0x40] sm:$0xf]
  %v62 = vld [vmem:[%s1 + $0x44] sm:$0xf]
  %v63 = vld [vmem:[%s2] sm:$0x1]
  %v64 = vld [vmem:[%s0] sm:$0x3]
  %v66 = vlaneseq
  %v67 = vshrl.u32 %v66, 7
  %v68 = vsub.s32 0, %v67
  %v69 = vrot.slane %v63, %v68
  %v73 = vunpack.c.l.s4 1966171168
  %v74 = vunpack.c.0.s8 %v73
  %v75 = vlaneseq
  %v76 = vshrl.u32 %v75, 7
  %v77 = vsub.s32 %v74, %v76
  %v78 = vrot.slane %v64, %v77
  %v79 = vcombine.high %v78, %v78
  %v81 = vunpack.c.l.s4 1966171168
  %v82 = vunpack.c.0.s8 %v81
  %v83 = vlaneseq
  %v84 = vshrl.u32 %v83, 7
  %v85 = vsub.s32 %v82, %v84
  %v86 = vrot.slane %v78, %v85
  %v88 = vunpack.c.l.s4 1966171168
  %v89 = vunpack.c.0.s8 %v88
  %v90 = vlaneseq
  %v91 = vshrl.u32 %v90, 7
  %v92 = vsub.s32 %v89, %v91
  %v93 = vrot.slane %v79, %v92
  %v113 = vunpack.c.l.b16 %v45
  %v114 = vunpack.c.l.b16 %v46
  %v115 = vunpack.c.l.b16 %v47
  %v116 = vunpack.c.l.b16 %v48
  %v117 = vunpack.c.l.b16 %v49
  %v118 = vunpack.c.l.b16 %v50
  %v119 = vunpack.c.l.b16 %v51
  %v120 = vunpack.c.l.b16 %v52
  %v121 = vunpack.c.l.b16 %v53
  %v122 = vunpack.c.l.b16 %v54
  %v123 = vunpack.c.l.b16 %v55
  %v124 = vunpack.c.l.b16 %v56
  %v125 = vunpack.c.l.b16 %v57
  %v126 = vunpack.c.l.b16 %v58
  %v127 = vunpack.c.l.b16 %v59
  %v128 = vunpack.c.l.b16 %v60
  %v129 = vunpack.c.l.b16 %v61
  %v130 = vunpack.c.l.b16 %v62
  %v131 = vpack.c.b16 %v114, %v113
  %v132 = vpack.c.b16 %v116, %v115
  %v133 = vpack.c.b16 %v118, %v117
  %v134 = vpack.c.b16 %v120, %v119
  %v135 = vpack.c.b16 %v122, %v121
  %v136 = vpack.c.b16 %v124, %v123
  %v137 = vpack.c.b16 %v126, %v125
  %v138 = vpack.c.b16 %v128, %v127
  %v139 = vpack.c.b16 %v130, %v129
  %vm149 = vcmask 130048
  %v151 = vsel %vm149, %v93, 0
  %153 = vmatprep.subr.bf16.mxu0 0
  %154 = vmatpush1.bf16.msra.mxu0 %v138
  %155 = vmatprep.subr.bf16.mxu0 0
  %156 = vmatpush1.bf16.msra.mxu0 %v137
  %157 = vmatprep.subr.bf16.mxu0 0
  %158 = vmatpush1.bf16.msra.mxu0 %v136
  %159 = vmatprep.subr.bf16.mxu0 0
  %160 = vmatpush1.bf16.msra.mxu0 %v135
  %161 = vmatprep.subr.bf16.mxu0 0
  %162 = vmatpush1.bf16.msra.mxu0 %v134
  %163 = vmatprep.subr.bf16.mxu0 0
  %164 = vmatpush1.bf16.msra.mxu0 %v133
  %165 = vmatprep.subr.bf16.mxu0 0
  %166 = vmatpush1.bf16.msra.mxu0 %v132
  %167 = vmatprep.subr.bf16.mxu0 0
  %168 = vmatpush1.bf16.msra.mxu0 %v131
  %169 = vmatprep.subr.bf16.mxu0 0
  %170 = vmatpush2.bf16.msra.mxu0 0
  %171 = vmatprep.subr.bf16.mxu0 0
  %172 = vmatpush2.bf16.msra.mxu0 0
  %173 = vmatprep.subr.bf16.mxu0 0
  %174 = vmatpush2.bf16.msra.mxu0 0
  %175 = vmatprep.subr.bf16.mxu0 0
  %176 = vmatpush2.bf16.msra.mxu0 0
  %177 = vmatprep.subr.bf16.mxu0 0
  %178 = vmatpush2.bf16.msra.mxu0 0
  %179 = vmatprep.subr.bf16.mxu0 0
  %180 = vmatpush2.bf16.msra.mxu0 0
  %181 = vmatprep.subr.bf16.mxu0 0
  %182 = vmatpush2.bf16.msra.mxu0 0
  %183 = vmatprep.subr.bf16.mxu0 0
  %184 = vmatpush2.bf16.msra.mxu0 %v139
  %185 = vmatprep.mubr.bf16.mxu0 %v151
  %186 = vmatmul.mubr.bf16.gmra.mxu0 %v86
  %v187 = vpop.f32.mrf.mxu0
  %v188 = vadd.f32 %v69, %v187
  %v189 = vpop.f32.mrf.mxu0
  %v190 = vpop.f32.mrf.mxu0
  %v191 = vpop.f32.mrf.mxu0
  %192 = vdwg.mxu0
  %v193 = vmax.f32 %v188, 0.0
  %v194 = vpack.c.bf16 %v193, %v193
  %v195 = vld [vmem:[%s3] sm:$0xf]
  %v196 = vld [vmem:[%s3 + $0x4] sm:$0xf]
  %v197 = vld [vmem:[%s3 + $0x8] sm:$0xf]
  %v198 = vld [vmem:[%s3 + $0xc] sm:$0xf]
  %s199 = scalar_lea.vmem %s0, 2
  %v200 = vld [vmem:[%s199] sm:$0x3]
  %v203 = vunpack.c.l.s4 1966171168
  %v204 = vunpack.c.0.s8 %v203
  %v205 = vlaneseq
  %v206 = vshrl.u32 %v205, 7
  %v207 = vsub.s32 %v204, %v206
  %v208 = vrot.slane %v200, %v207
  %v209 = vcombine.high %v208, %v208
  %v211 = vunpack.c.l.s4 1966171168
  %v212 = vunpack.c.0.s8 %v211
  %v213 = vlaneseq
  %v214 = vshrl.u32 %v213, 7
  %v215 = vsub.s32 %v212, %v214
  %v216 = vrot.slane %v208, %v215
  %v218 = vunpack.c.l.s4 1966171168
  %v219 = vunpack.c.0.s8 %v218
  %v220 = vlaneseq
  %v221 = vshrl.u32 %v220, 7
  %v222 = vsub.s32 %v219, %v221
  %v223 = vrot.slane %v209, %v222
  %v226 = vsel %vm149, %v223, 0
  %228 = vmatprep.subr.bf16.mxu0 0
  %229 = vmatpush1.bf16.msra.mxu0 %v138
  %230 = vmatprep.subr.bf16.mxu0 0
  %231 = vmatpush1.bf16.msra.mxu0 %v137
  %232 = vmatprep.subr.bf16.mxu0 0
  %233 = vmatpush1.bf16.msra.mxu0 %v136
  %234 = vmatprep.subr.bf16.mxu0 0
  %235 = vmatpush1.bf16.msra.mxu0 %v135
  %236 = vmatprep.subr.bf16.mxu0 0
  %237 = vmatpush1.bf16.msra.mxu0 %v134
  %238 = vmatprep.subr.bf16.mxu0 0
  %239 = vmatpush1.bf16.msra.mxu0 %v133
  %240 = vmatprep.subr.bf16.mxu0 0
  %241 = vmatpush1.bf16.msra.mxu0 %v132
  %242 = vmatprep.subr.bf16.mxu0 0
  %243 = vmatpush1.bf16.msra.mxu0 %v131
  %244 = vmatprep.subr.bf16.mxu0 0
  %245 = vmatpush2.bf16.msra.mxu0 0
  %246 = vmatprep.subr.bf16.mxu0 0
  %247 = vmatpush2.bf16.msra.mxu0 0
  %248 = vmatprep.subr.bf16.mxu0 0
  %249 = vmatpush2.bf16.msra.mxu0 0
  %250 = vmatprep.subr.bf16.mxu0 0
  %251 = vmatpush2.bf16.msra.mxu0 0
  %252 = vmatprep.subr.bf16.mxu0 0
  %253 = vmatpush2.bf16.msra.mxu0 0
  %254 = vmatprep.subr.bf16.mxu0 0
  %255 = vmatpush2.bf16.msra.mxu0 0
  %256 = vmatprep.subr.bf16.mxu0 0
  %257 = vmatpush2.bf16.msra.mxu0 0
  %258 = vmatprep.subr.bf16.mxu0 0
  %259 = vmatpush2.bf16.msra.mxu0 %v139
  %260 = vmatprep.mubr.bf16.mxu0 %v226
  %261 = vmatmul.mubr.bf16.gmra.mxu0 %v216
  %v262 = vpop.f32.mrf.mxu0
  %v263 = vadd.f32 %v69, %v262
  %v264 = vpop.f32.mrf.mxu0
  %v265 = vpop.f32.mrf.mxu0
  %v266 = vpop.f32.mrf.mxu0
  %267 = vdwg.mxu0
  %v268 = vmax.f32 %v263, 0.0
  %v269 = vpack.c.bf16 %v268, %v268
  %s270 = scalar_lea.vmem %s3, 16
  %v271 = vld [vmem:[%s270] sm:$0xf]
  %v272 = vld [vmem:[%s270 + $0x4] sm:$0xf]
  %v273 = vld [vmem:[%s270 + $0x8] sm:$0xf]
  %v274 = vld [vmem:[%s270 + $0xc] sm:$0xf]
  %v279 = vunpack.c.l.b16 %v271
  %v280 = vunpack.c.l.b16 %v272
  %v281 = vunpack.c.l.b16 %v273
  %v282 = vunpack.c.l.b16 %v274
  %v283 = vpack.c.b16 %v280, %v279
  %v284 = vpack.c.b16 %v282, %v281
  %vm287 = vcmask 261120
  %v289 = vsel %vm287, %v269, 0
  %291 = vmatprep.subr.bf16.mxu0 0
  %292 = vmatpush1.bf16.msra.mxu0 0
  %293 = vmatprep.subr.bf16.mxu0 0
  %294 = vmatpush1.bf16.msra.mxu0 0
  %295 = vmatprep.subr.bf16.mxu0 0
  %296 = vmatpush1.bf16.msra.mxu0 0
  %297 = vmatprep.subr.bf16.mxu0 0
  %298 = vmatpush1.bf16.msra.mxu0 0
  %299 = vmatprep.subr.bf16.mxu0 0
  %300 = vmatpush1.bf16.msra.mxu0 0
  %301 = vmatprep.subr.bf16.mxu0 0
  %302 = vmatpush1.bf16.msra.mxu0 0
  %303 = vmatprep.subr.bf16.mxu0 0
  %304 = vmatpush1.bf16.msra.mxu0 %v284
  %305 = vmatprep.subr.bf16.mxu0 0
  %306 = vmatpush1.bf16.msra.mxu0 %v283
  %307 = vmatprep.subr.bf16.mxu0 0
  %308 = vmatpush2.bf16.msra.mxu0 0
  %309 = vmatprep.subr.bf16.mxu0 0
  %310 = vmatpush2.bf16.msra.mxu0 0
  %311 = vmatprep.subr.bf16.mxu0 0
  %312 = vmatpush2.bf16.msra.mxu0 0
  %313 = vmatprep.subr.bf16.mxu0 0
  %314 = vmatpush2.bf16.msra.mxu0 0
  %315 = vmatprep.subr.bf16.mxu0 0
  %316 = vmatpush2.bf16.msra.mxu0 0
  %317 = vmatprep.subr.bf16.mxu0 0
  %318 = vmatpush2.bf16.msra.mxu0 0
  %319 = vmatprep.subr.bf16.mxu0 0
  %320 = vmatpush2.bf16.msra.mxu0 0
  %321 = vmatprep.subr.bf16.mxu0 0
  %322 = vmatpush2.bf16.msra.mxu0 0
  %323 = vmatprep.mubr.bf16.mxu0 0
  %324 = vmatmul.mubr.bf16.gmra.mxu0 %v289
  %v325 = vpop.f32.mrf.mxu0
  %v326 = vadd.f32 0.0, %v325
  %v327 = vpop.f32.mrf.mxu0
  %v328 = vpop.f32.mrf.mxu0
  %v329 = vpop.f32.mrf.mxu0
  %330 = vdwg.mxu0
  %v335 = vunpack.c.l.b16 %v195
  %v336 = vunpack.c.l.b16 %v196
  %v337 = vunpack.c.l.b16 %v197
  %v338 = vunpack.c.l.b16 %v198
  %v339 = vpack.c.b16 %v336, %v335
  %v340 = vpack.c.b16 %v338, %v337
  %v344 = vsel %vm287, %v194, 0
  %346 = vmatprep.subr.bf16.mxu0 0
  %347 = vmatpush1.bf16.msra.mxu0 0
  %348 = vmatprep.subr.bf16.mxu0 0
  %349 = vmatpush1.bf16.msra.mxu0 0
  %350 = vmatprep.subr.bf16.mxu0 0
  %351 = vmatpush1.bf16.msra.mxu0 0
  %352 = vmatprep.subr.bf16.mxu0 0
  %353 = vmatpush1.bf16.msra.mxu0 0
  %354 = vmatprep.subr.bf16.mxu0 0
  %355 = vmatpush1.bf16.msra.mxu0 0
  %356 = vmatprep.subr.bf16.mxu0 0
  %357 = vmatpush1.bf16.msra.mxu0 0
  %358 = vmatprep.subr.bf16.mxu0 0
  %359 = vmatpush1.bf16.msra.mxu0 %v340
  %360 = vmatprep.subr.bf16.mxu0 0
  %361 = vmatpush1.bf16.msra.mxu0 %v339
  %362 = vmatprep.subr.bf16.mxu0 0
  %363 = vmatpush2.bf16.msra.mxu0 0
  %364 = vmatprep.subr.bf16.mxu0 0
  %365 = vmatpush2.bf16.msra.mxu0 0
  %366 = vmatprep.subr.bf16.mxu0 0
  %367 = vmatpush2.bf16.msra.mxu0 0
  %368 = vmatprep.subr.bf16.mxu0 0
  %369 = vmatpush2.bf16.msra.mxu0 0
  %370 = vmatprep.subr.bf16.mxu0 0
  %371 = vmatpush2.bf16.msra.mxu0 0
  %372 = vmatprep.subr.bf16.mxu0 0
  %373 = vmatpush2.bf16.msra.mxu0 0
  %374 = vmatprep.subr.bf16.mxu0 0
  %375 = vmatpush2.bf16.msra.mxu0 0
  %376 = vmatprep.subr.bf16.mxu0 0
  %377 = vmatpush2.bf16.msra.mxu0 0
  %378 = vmatprep.mubr.bf16.mxu0 0
  %379 = vmatmul.mubr.bf16.gmra.mxu0 %v344
  %v380 = vpop.f32.mrf.mxu0
  %v381 = vadd.f32 %v326, %v380
  %v382 = vpop.f32.mrf.mxu0
  %v383 = vpop.f32.mrf.mxu0
  %v384 = vpop.f32.mrf.mxu0
  %385 = vdwg.mxu0
  %s386 = scalar_lea.vmem %s0, 4
  %v387 = vld [vmem:[%s386] sm:$0x3]
  %v390 = vunpack.c.l.s4 1966171168
  %v391 = vunpack.c.0.s8 %v390
  %v392 = vlaneseq
  %v393 = vshrl.u32 %v392, 7
  %v394 = vsub.s32 %v391, %v393
  %v395 = vrot.slane %v387, %v394
  %v396 = vcombine.high %v395, %v395
  %v398 = vunpack.c.l.s4 1966171168
  %v399 = vunpack.c.0.s8 %v398
  %v400 = vlaneseq
  %v401 = vshrl.u32 %v400, 7
  %v402 = vsub.s32 %v399, %v401
  %v403 = vrot.slane %v395, %v402
  %v405 = vunpack.c.l.s4 1966171168
  %v406 = vunpack.c.0.s8 %v405
  %v407 = vlaneseq
  %v408 = vshrl.u32 %v407, 7
  %v409 = vsub.s32 %v406, %v408
  %v410 = vrot.slane %v396, %v409
  %v413 = vsel %vm149, %v410, 0
  %415 = vmatprep.subr.bf16.mxu0 0
  %416 = vmatpush1.bf16.msra.mxu0 %v138
  %417 = vmatprep.subr.bf16.mxu0 0
  %418 = vmatpush1.bf16.msra.mxu0 %v137
  %419 = vmatprep.subr.bf16.mxu0 0
  %420 = vmatpush1.bf16.msra.mxu0 %v136
  %421 = vmatprep.subr.bf16.mxu0 0
  %422 = vmatpush1.bf16.msra.mxu0 %v135
  %423 = vmatprep.subr.bf16.mxu0 0
  %424 = vmatpush1.bf16.msra.mxu0 %v134
  %425 = vmatprep.subr.bf16.mxu0 0
  %426 = vmatpush1.bf16.msra.mxu0 %v133
  %427 = vmatprep.subr.bf16.mxu0 0
  %428 = vmatpush1.bf16.msra.mxu0 %v132
  %429 = vmatprep.subr.bf16.mxu0 0
  %430 = vmatpush1.bf16.msra.mxu0 %v131
  %431 = vmatprep.subr.bf16.mxu0 0
  %432 = vmatpush2.bf16.msra.mxu0 0
  %433 = vmatprep.subr.bf16.mxu0 0
  %434 = vmatpush2.bf16.msra.mxu0 0
  %435 = vmatprep.subr.bf16.mxu0 0
  %436 = vmatpush2.bf16.msra.mxu0 0
  %437 = vmatprep.subr.bf16.mxu0 0
  %438 = vmatpush2.bf16.msra.mxu0 0
  %439 = vmatprep.subr.bf16.mxu0 0
  %440 = vmatpush2.bf16.msra.mxu0 0
  %441 = vmatprep.subr.bf16.mxu0 0
  %442 = vmatpush2.bf16.msra.mxu0 0
  %443 = vmatprep.subr.bf16.mxu0 0
  %444 = vmatpush2.bf16.msra.mxu0 0
  %445 = vmatprep.subr.bf16.mxu0 0
  %446 = vmatpush2.bf16.msra.mxu0 %v139
  %447 = vmatprep.mubr.bf16.mxu0 %v413
  %448 = vmatmul.mubr.bf16.gmra.mxu0 %v403
  %v449 = vpop.f32.mrf.mxu0
  %v450 = vadd.f32 %v69, %v449
  %v451 = vpop.f32.mrf.mxu0
  %v452 = vpop.f32.mrf.mxu0
  %v453 = vpop.f32.mrf.mxu0
  %454 = vdwg.mxu0
  %v455 = vmax.f32 %v450, 0.0
  %v456 = vpack.c.bf16 %v455, %v455
  %s457 = scalar_lea.vmem %s3, 32
  %v458 = vld [vmem:[%s457] sm:$0xf]
  %v459 = vld [vmem:[%s457 + $0x4] sm:$0xf]
  %v460 = vld [vmem:[%s457 + $0x8] sm:$0xf]
  %v461 = vld [vmem:[%s457 + $0xc] sm:$0xf]
  %v466 = vunpack.c.l.b16 %v458
  %v467 = vunpack.c.l.b16 %v459
  %v468 = vunpack.c.l.b16 %v460
  %v469 = vunpack.c.l.b16 %v461
  %v470 = vpack.c.b16 %v467, %v466
  %v471 = vpack.c.b16 %v469, %v468
  %v475 = vsel %vm287, %v456, 0
  %477 = vmatprep.subr.bf16.mxu0 0
  %478 = vmatpush1.bf16.msra.mxu0 0
  %479 = vmatprep.subr.bf16.mxu0 0
  %480 = vmatpush1.bf16.msra.mxu0 0
  %481 = vmatprep.subr.bf16.mxu0 0
  %482 = vmatpush1.bf16.msra.mxu0 0
  %483 = vmatprep.subr.bf16.mxu0 0
  %484 = vmatpush1.bf16.msra.mxu0 0
  %485 = vmatprep.subr.bf16.mxu0 0
  %486 = vmatpush1.bf16.msra.mxu0 0
  %487 = vmatprep.subr.bf16.mxu0 0
  %488 = vmatpush1.bf16.msra.mxu0 0
  %489 = vmatprep.subr.bf16.mxu0 0
  %490 = vmatpush1.bf16.msra.mxu0 %v471
  %491 = vmatprep.subr.bf16.mxu0 0
  %492 = vmatpush1.bf16.msra.mxu0 %v470
  %493 = vmatprep.subr.bf16.mxu0 0
  %494 = vmatpush2.bf16.msra.mxu0 0
  %495 = vmatprep.subr.bf16.mxu0 0
  %496 = vmatpush2.bf16.msra.mxu0 0
  %497 = vmatprep.subr.bf16.mxu0 0
  %498 = vmatpush2.bf16.msra.mxu0 0
  %499 = vmatprep.subr.bf16.mxu0 0
  %500 = vmatpush2.bf16.msra.mxu0 0
  %501 = vmatprep.subr.bf16.mxu0 0
  %502 = vmatpush2.bf16.msra.mxu0 0
  %503 = vmatprep.subr.bf16.mxu0 0
  %504 = vmatpush2.bf16.msra.mxu0 0
  %505 = vmatprep.subr.bf16.mxu0 0
  %506 = vmatpush2.bf16.msra.mxu0 0
  %507 = vmatprep.subr.bf16.mxu0 0
  %508 = vmatpush2.bf16.msra.mxu0 0
  %509 = vmatprep.mubr.bf16.mxu0 0
  %510 = vmatmul.mubr.bf16.gmra.mxu0 %v475
  %v511 = vpop.f32.mrf.mxu0
  %v512 = vadd.f32 0.0, %v511
  %v513 = vpop.f32.mrf.mxu0
  %v514 = vpop.f32.mrf.mxu0
  %v515 = vpop.f32.mrf.mxu0
  %516 = vdwg.mxu0
  %v517 = vadd.f32 %v381, %v512
  %s518 = scalar_lea.vmem %s0, 6
  %v519 = vld [vmem:[%s518] sm:$0x3]
  %v522 = vunpack.c.l.s4 1966171168
  %v523 = vunpack.c.0.s8 %v522
  %v524 = vlaneseq
  %v525 = vshrl.u32 %v524, 7
  %v526 = vsub.s32 %v523, %v525
  %v527 = vrot.slane %v519, %v526
  %v528 = vcombine.high %v527, %v527
  %v530 = vunpack.c.l.s4 1966171168
  %v531 = vunpack.c.0.s8 %v530
  %v532 = vlaneseq
  %v533 = vshrl.u32 %v532, 7
  %v534 = vsub.s32 %v531, %v533
  %v535 = vrot.slane %v527, %v534
  %v537 = vunpack.c.l.s4 1966171168
  %v538 = vunpack.c.0.s8 %v537
  %v539 = vlaneseq
  %v540 = vshrl.u32 %v539, 7
  %v541 = vsub.s32 %v538, %v540
  %v542 = vrot.slane %v528, %v541
  %v545 = vsel %vm149, %v542, 0
  %547 = vmatprep.subr.bf16.mxu0 0
  %548 = vmatpush1.bf16.msra.mxu0 %v138
  %549 = vmatprep.subr.bf16.mxu0 0
  %550 = vmatpush1.bf16.msra.mxu0 %v137
  %551 = vmatprep.subr.bf16.mxu0 0
  %552 = vmatpush1.bf16.msra.mxu0 %v136
  %553 = vmatprep.subr.bf16.mxu0 0
  %554 = vmatpush1.bf16.msra.mxu0 %v135
  %555 = vmatprep.subr.bf16.mxu0 0
  %556 = vmatpush1.bf16.msra.mxu0 %v134
  %557 = vmatprep.subr.bf16.mxu0 0
  %558 = vmatpush1.bf16.msra.mxu0 %v133
  %559 = vmatprep.subr.bf16.mxu0 0
  %560 = vmatpush1.bf16.msra.mxu0 %v132
  %561 = vmatprep.subr.bf16.mxu0 0
  %562 = vmatpush1.bf16.msra.mxu0 %v131
  %563 = vmatprep.subr.bf16.mxu0 0
  %564 = vmatpush2.bf16.msra.mxu0 0
  %565 = vmatprep.subr.bf16.mxu0 0
  %566 = vmatpush2.bf16.msra.mxu0 0
  %567 = vmatprep.subr.bf16.mxu0 0
  %568 = vmatpush2.bf16.msra.mxu0 0
  %569 = vmatprep.subr.bf16.mxu0 0
  %570 = vmatpush2.bf16.msra.mxu0 0
  %571 = vmatprep.subr.bf16.mxu0 0
  %572 = vmatpush2.bf16.msra.mxu0 0
  %573 = vmatprep.subr.bf16.mxu0 0
  %574 = vmatpush2.bf16.msra.mxu0 0
  %575 = vmatprep.subr.bf16.mxu0 0
  %576 = vmatpush2.bf16.msra.mxu0 0
  %577 = vmatprep.subr.bf16.mxu0 0
  %578 = vmatpush2.bf16.msra.mxu0 %v139
  %579 = vmatprep.mubr.bf16.mxu0 %v545
  %580 = vmatmul.mubr.bf16.gmra.mxu0 %v535
  %v581 = vpop.f32.mrf.mxu0
  %v582 = vadd.f32 %v69, %v581
  %v583 = vpop.f32.mrf.mxu0
  %v584 = vpop.f32.mrf.mxu0
  %v585 = vpop.f32.mrf.mxu0
  %586 = vdwg.mxu0
  %v587 = vmax.f32 %v582, 0.0
  %v588 = vpack.c.bf16 %v587, %v587
  %s589 = scalar_lea.vmem %s3, 48
  %v590 = vld [vmem:[%s589] sm:$0xf]
  %v591 = vld [vmem:[%s589 + $0x4] sm:$0xf]
  %v592 = vld [vmem:[%s589 + $0x8] sm:$0xf]
  %v593 = vld [vmem:[%s589 + $0xc] sm:$0xf]
  %v598 = vunpack.c.l.b16 %v590
  %v599 = vunpack.c.l.b16 %v591
  %v600 = vunpack.c.l.b16 %v592
  %v601 = vunpack.c.l.b16 %v593
  %v602 = vpack.c.b16 %v599, %v598
  %v603 = vpack.c.b16 %v601, %v600
  %v607 = vsel %vm287, %v588, 0
  %609 = vmatprep.subr.bf16.mxu0 0
  %610 = vmatpush1.bf16.msra.mxu0 0
  %611 = vmatprep.subr.bf16.mxu0 0
  %612 = vmatpush1.bf16.msra.mxu0 0
  %613 = vmatprep.subr.bf16.mxu0 0
  %614 = vmatpush1.bf16.msra.mxu0 0
  %615 = vmatprep.subr.bf16.mxu0 0
  %616 = vmatpush1.bf16.msra.mxu0 0
  %617 = vmatprep.subr.bf16.mxu0 0
  %618 = vmatpush1.bf16.msra.mxu0 0
  %619 = vmatprep.subr.bf16.mxu0 0
  %620 = vmatpush1.bf16.msra.mxu0 0
  %621 = vmatprep.subr.bf16.mxu0 0
  %622 = vmatpush1.bf16.msra.mxu0 %v603
  %623 = vmatprep.subr.bf16.mxu0 0
  %624 = vmatpush1.bf16.msra.mxu0 %v602
  %625 = vmatprep.subr.bf16.mxu0 0
  %626 = vmatpush2.bf16.msra.mxu0 0
  %627 = vmatprep.subr.bf16.mxu0 0
  %628 = vmatpush2.bf16.msra.mxu0 0
  %629 = vmatprep.subr.bf16.mxu0 0
  %630 = vmatpush2.bf16.msra.mxu0 0
  %631 = vmatprep.subr.bf16.mxu0 0
  %632 = vmatpush2.bf16.msra.mxu0 0
  %633 = vmatprep.subr.bf16.mxu0 0
  %634 = vmatpush2.bf16.msra.mxu0 0
  %635 = vmatprep.subr.bf16.mxu0 0
  %636 = vmatpush2.bf16.msra.mxu0 0
  %637 = vmatprep.subr.bf16.mxu0 0
  %638 = vmatpush2.bf16.msra.mxu0 0
  %639 = vmatprep.subr.bf16.mxu0 0
  %640 = vmatpush2.bf16.msra.mxu0 0
  %641 = vmatprep.mubr.bf16.mxu0 0
  %642 = vmatmul.mubr.bf16.gmra.mxu0 %v607
  %v643 = vpop.f32.mrf.mxu0
  %v644 = vadd.f32 0.0, %v643
  %v645 = vpop.f32.mrf.mxu0
  %v646 = vpop.f32.mrf.mxu0
  %v647 = vpop.f32.mrf.mxu0
  %648 = vdwg.mxu0
  %v649 = vadd.f32 %v517, %v644
  %s650 = scalar_lea.vmem %s0, 8
  %v651 = vld [vmem:[%s650] sm:$0x3]
  %v654 = vunpack.c.l.s4 1966171168
  %v655 = vunpack.c.0.s8 %v654
  %v656 = vlaneseq
  %v657 = vshrl.u32 %v656, 7
  %v658 = vsub.s32 %v655, %v657
  %v659 = vrot.slane %v651, %v658
  %v660 = vcombine.high %v659, %v659
  %v662 = vunpack.c.l.s4 1966171168
  %v663 = vunpack.c.0.s8 %v662
  %v664 = vlaneseq
  %v665 = vshrl.u32 %v664, 7
  %v666 = vsub.s32 %v663, %v665
  %v667 = vrot.slane %v659, %v666
  %v669 = vunpack.c.l.s4 1966171168
  %v670 = vunpack.c.0.s8 %v669
  %v671 = vlaneseq
  %v672 = vshrl.u32 %v671, 7
  %v673 = vsub.s32 %v670, %v672
  %v674 = vrot.slane %v660, %v673
  %v677 = vsel %vm149, %v674, 0
  %679 = vmatprep.subr.bf16.mxu0 0
  %680 = vmatpush1.bf16.msra.mxu0 %v138
  %681 = vmatprep.subr.bf16.mxu0 0
  %682 = vmatpush1.bf16.msra.mxu0 %v137
  %683 = vmatprep.subr.bf16.mxu0 0
  %684 = vmatpush1.bf16.msra.mxu0 %v136
  %685 = vmatprep.subr.bf16.mxu0 0
  %686 = vmatpush1.bf16.msra.mxu0 %v135
  %687 = vmatprep.subr.bf16.mxu0 0
  %688 = vmatpush1.bf16.msra.mxu0 %v134
  %689 = vmatprep.subr.bf16.mxu0 0
  %690 = vmatpush1.bf16.msra.mxu0 %v133
  %691 = vmatprep.subr.bf16.mxu0 0
  %692 = vmatpush1.bf16.msra.mxu0 %v132
  %693 = vmatprep.subr.bf16.mxu0 0
  %694 = vmatpush1.bf16.msra.mxu0 %v131
  %695 = vmatprep.subr.bf16.mxu0 0
  %696 = vmatpush2.bf16.msra.mxu0 0
  %697 = vmatprep.subr.bf16.mxu0 0
  %698 = vmatpush2.bf16.msra.mxu0 0
  %699 = vmatprep.subr.bf16.mxu0 0
  %700 = vmatpush2.bf16.msra.mxu0 0
  %701 = vmatprep.subr.bf16.mxu0 0
  %702 = vmatpush2.bf16.msra.mxu0 0
  %703 = vmatprep.subr.bf16.mxu0 0
  %704 = vmatpush2.bf16.msra.mxu0 0
  %705 = vmatprep.subr.bf16.mxu0 0
  %706 = vmatpush2.bf16.msra.mxu0 0
  %707 = vmatprep.subr.bf16.mxu0 0
  %708 = vmatpush2.bf16.msra.mxu0 0
  %709 = vmatprep.subr.bf16.mxu0 0
  %710 = vmatpush2.bf16.msra.mxu0 %v139
  %711 = vmatprep.mubr.bf16.mxu0 %v677
  %712 = vmatmul.mubr.bf16.gmra.mxu0 %v667
  %v713 = vpop.f32.mrf.mxu0
  %v714 = vadd.f32 %v69, %v713
  %v715 = vpop.f32.mrf.mxu0
  %v716 = vpop.f32.mrf.mxu0
  %v717 = vpop.f32.mrf.mxu0
  %718 = vdwg.mxu0
  %v719 = vmax.f32 %v714, 0.0
  %v720 = vpack.c.bf16 %v719, %v719
  %s721 = scalar_lea.vmem %s3, 64
  %v722 = vld [vmem:[%s721] sm:$0xf]
  %v723 = vld [vmem:[%s721 + $0x4] sm:$0xf]
  %v724 = vld [vmem:[%s721 + $0x8] sm:$0xf]
  %v725 = vld [vmem:[%s721 + $0xc] sm:$0xf]
  %v730 = vunpack.c.l.b16 %v722
  %v731 = vunpack.c.l.b16 %v723
  %v732 = vunpack.c.l.b16 %v724
  %v733 = vunpack.c.l.b16 %v725
  %v734 = vpack.c.b16 %v731, %v730
  %v735 = vpack.c.b16 %v733, %v732
  %v739 = vsel %vm287, %v720, 0
  %741 = vmatprep.subr.bf16.mxu0 0
  %742 = vmatpush1.bf16.msra.mxu0 0
  %743 = vmatprep.subr.bf16.mxu0 0
  %744 = vmatpush1.bf16.msra.mxu0 0
  %745 = vmatprep.subr.bf16.mxu0 0
  %746 = vmatpush1.bf16.msra.mxu0 0
  %747 = vmatprep.subr.bf16.mxu0 0
  %748 = vmatpush1.bf16.msra.mxu0 0
  %749 = vmatprep.subr.bf16.mxu0 0
  %750 = vmatpush1.bf16.msra.mxu0 0
  %751 = vmatprep.subr.bf16.mxu0 0
  %752 = vmatpush1.bf16.msra.mxu0 0
  %753 = vmatprep.subr.bf16.mxu0 0
  %754 = vmatpush1.bf16.msra.mxu0 %v735
  %755 = vmatprep.subr.bf16.mxu0 0
  %756 = vmatpush1.bf16.msra.mxu0 %v734
  %757 = vmatprep.subr.bf16.mxu0 0
  %758 = vmatpush2.bf16.msra.mxu0 0
  %759 = vmatprep.subr.bf16.mxu0 0
  %760 = vmatpush2.bf16.msra.mxu0 0
  %761 = vmatprep.subr.bf16.mxu0 0
  %762 = vmatpush2.bf16.msra.mxu0 0
  %763 = vmatprep.subr.bf16.mxu0 0
  %764 = vmatpush2.bf16.msra.mxu0 0
  %765 = vmatprep.subr.bf16.mxu0 0
  %766 = vmatpush2.bf16.msra.mxu0 0
  %767 = vmatprep.subr.bf16.mxu0 0
  %768 = vmatpush2.bf16.msra.mxu0 0
  %769 = vmatprep.subr.bf16.mxu0 0
  %770 = vmatpush2.bf16.msra.mxu0 0
  %771 = vmatprep.subr.bf16.mxu0 0
  %772 = vmatpush2.bf16.msra.mxu0 0
  %773 = vmatprep.mubr.bf16.mxu0 0
  %774 = vmatmul.mubr.bf16.gmra.mxu0 %v739
  %v775 = vpop.f32.mrf.mxu0
  %v776 = vadd.f32 0.0, %v775
  %v777 = vpop.f32.mrf.mxu0
  %v778 = vpop.f32.mrf.mxu0
  %v779 = vpop.f32.mrf.mxu0
  %780 = vdwg.mxu0
  %v781 = vadd.f32 %v649, %v776
  %s782 = scalar_lea.vmem %s0, 10
  %v783 = vld [vmem:[%s782] sm:$0x3]
  %v786 = vunpack.c.l.s4 1966171168
  %v787 = vunpack.c.0.s8 %v786
  %v788 = vlaneseq
  %v789 = vshrl.u32 %v788, 7
  %v790 = vsub.s32 %v787, %v789
  %v791 = vrot.slane %v783, %v790
  %v792 = vcombine.high %v791, %v791
  %v794 = vunpack.c.l.s4 1966171168
  %v795 = vunpack.c.0.s8 %v794
  %v796 = vlaneseq
  %v797 = vshrl.u32 %v796, 7
  %v798 = vsub.s32 %v795, %v797
  %v799 = vrot.slane %v791, %v798
  %v801 = vunpack.c.l.s4 1966171168
  %v802 = vunpack.c.0.s8 %v801
  %v803 = vlaneseq
  %v804 = vshrl.u32 %v803, 7
  %v805 = vsub.s32 %v802, %v804
  %v806 = vrot.slane %v792, %v805
  %v809 = vsel %vm149, %v806, 0
  %811 = vmatprep.subr.bf16.mxu0 0
  %812 = vmatpush1.bf16.msra.mxu0 %v138
  %813 = vmatprep.subr.bf16.mxu0 0
  %814 = vmatpush1.bf16.msra.mxu0 %v137
  %815 = vmatprep.subr.bf16.mxu0 0
  %816 = vmatpush1.bf16.msra.mxu0 %v136
  %817 = vmatprep.subr.bf16.mxu0 0
  %818 = vmatpush1.bf16.msra.mxu0 %v135
  %819 = vmatprep.subr.bf16.mxu0 0
  %820 = vmatpush1.bf16.msra.mxu0 %v134
  %821 = vmatprep.subr.bf16.mxu0 0
  %822 = vmatpush1.bf16.msra.mxu0 %v133
  %823 = vmatprep.subr.bf16.mxu0 0
  %824 = vmatpush1.bf16.msra.mxu0 %v132
  %825 = vmatprep.subr.bf16.mxu0 0
  %826 = vmatpush1.bf16.msra.mxu0 %v131
  %827 = vmatprep.subr.bf16.mxu0 0
  %828 = vmatpush2.bf16.msra.mxu0 0
  %829 = vmatprep.subr.bf16.mxu0 0
  %830 = vmatpush2.bf16.msra.mxu0 0
  %831 = vmatprep.subr.bf16.mxu0 0
  %832 = vmatpush2.bf16.msra.mxu0 0
  %833 = vmatprep.subr.bf16.mxu0 0
  %834 = vmatpush2.bf16.msra.mxu0 0
  %835 = vmatprep.subr.bf16.mxu0 0
  %836 = vmatpush2.bf16.msra.mxu0 0
  %837 = vmatprep.subr.bf16.mxu0 0
  %838 = vmatpush2.bf16.msra.mxu0 0
  %839 = vmatprep.subr.bf16.mxu0 0
  %840 = vmatpush2.bf16.msra.mxu0 0
  %841 = vmatprep.subr.bf16.mxu0 0
  %842 = vmatpush2.bf16.msra.mxu0 %v139
  %843 = vmatprep.mubr.bf16.mxu0 %v809
  %844 = vmatmul.mubr.bf16.gmra.mxu0 %v799
  %v845 = vpop.f32.mrf.mxu0
  %v846 = vadd.f32 %v69, %v845
  %v847 = vpop.f32.mrf.mxu0
  %v848 = vpop.f32.mrf.mxu0
  %v849 = vpop.f32.mrf.mxu0
  %850 = vdwg.mxu0
  %v851 = vmax.f32 %v846, 0.0
  %v852 = vpack.c.bf16 %v851, %v851
  %s853 = scalar_lea.vmem %s3, 80
  %v854 = vld [vmem:[%s853] sm:$0xf]
  %v855 = vld [vmem:[%s853 + $0x4] sm:$0xf]
  %v856 = vld [vmem:[%s853 + $0x8] sm:$0xf]
  %v857 = vld [vmem:[%s853 + $0xc] sm:$0xf]
  %v862 = vunpack.c.l.b16 %v854
  %v863 = vunpack.c.l.b16 %v855
  %v864 = vunpack.c.l.b16 %v856
  %v865 = vunpack.c.l.b16 %v857
  %v866 = vpack.c.b16 %v863, %v862
  %v867 = vpack.c.b16 %v865, %v864
  %v871 = vsel %vm287, %v852, 0
  %873 = vmatprep.subr.bf16.mxu0 0
  %874 = vmatpush1.bf16.msra.mxu0 0
  %875 = vmatprep.subr.bf16.mxu0 0
  %876 = vmatpush1.bf16.msra.mxu0 0
  %877 = vmatprep.subr.bf16.mxu0 0
  %878 = vmatpush1.bf16.msra.mxu0 0
  %879 = vmatprep.subr.bf16.mxu0 0
  %880 = vmatpush1.bf16.msra.mxu0 0
  %881 = vmatprep.subr.bf16.mxu0 0
  %882 = vmatpush1.bf16.msra.mxu0 0
  %883 = vmatprep.subr.bf16.mxu0 0
  %884 = vmatpush1.bf16.msra.mxu0 0
  %885 = vmatprep.subr.bf16.mxu0 0
  %886 = vmatpush1.bf16.msra.mxu0 %v867
  %887 = vmatprep.subr.bf16.mxu0 0
  %888 = vmatpush1.bf16.msra.mxu0 %v866
  %889 = vmatprep.subr.bf16.mxu0 0
  %890 = vmatpush2.bf16.msra.mxu0 0
  %891 = vmatprep.subr.bf16.mxu0 0
  %892 = vmatpush2.bf16.msra.mxu0 0
  %893 = vmatprep.subr.bf16.mxu0 0
  %894 = vmatpush2.bf16.msra.mxu0 0
  %895 = vmatprep.subr.bf16.mxu0 0
  %896 = vmatpush2.bf16.msra.mxu0 0
  %897 = vmatprep.subr.bf16.mxu0 0
  %898 = vmatpush2.bf16.msra.mxu0 0
  %899 = vmatprep.subr.bf16.mxu0 0
  %900 = vmatpush2.bf16.msra.mxu0 0
  %901 = vmatprep.subr.bf16.mxu0 0
  %902 = vmatpush2.bf16.msra.mxu0 0
  %903 = vmatprep.subr.bf16.mxu0 0
  %904 = vmatpush2.bf16.msra.mxu0 0
  %905 = vmatprep.mubr.bf16.mxu0 0
  %906 = vmatmul.mubr.bf16.gmra.mxu0 %v871
  %v907 = vpop.f32.mrf.mxu0
  %v908 = vadd.f32 0.0, %v907
  %v909 = vpop.f32.mrf.mxu0
  %v910 = vpop.f32.mrf.mxu0
  %v911 = vpop.f32.mrf.mxu0
  %912 = vdwg.mxu0
  %v913 = vadd.f32 %v781, %v908
  %s914 = scalar_lea.vmem %s0, 12
  %v915 = vld [vmem:[%s914] sm:$0x3]
  %v918 = vunpack.c.l.s4 1966171168
  %v919 = vunpack.c.0.s8 %v918
  %v920 = vlaneseq
  %v921 = vshrl.u32 %v920, 7
  %v922 = vsub.s32 %v919, %v921
  %v923 = vrot.slane %v915, %v922
  %v924 = vcombine.high %v923, %v923
  %v926 = vunpack.c.l.s4 1966171168
  %v927 = vunpack.c.0.s8 %v926
  %v928 = vlaneseq
  %v929 = vshrl.u32 %v928, 7
  %v930 = vsub.s32 %v927, %v929
  %v931 = vrot.slane %v923, %v930
  %v933 = vunpack.c.l.s4 1966171168
  %v934 = vunpack.c.0.s8 %v933
  %v935 = vlaneseq
  %v936 = vshrl.u32 %v935, 7
  %v937 = vsub.s32 %v934, %v936
  %v938 = vrot.slane %v924, %v937
  %v941 = vsel %vm149, %v938, 0
  %943 = vmatprep.subr.bf16.mxu0 0
  %944 = vmatpush1.bf16.msra.mxu0 %v138
  %945 = vmatprep.subr.bf16.mxu0 0
  %946 = vmatpush1.bf16.msra.mxu0 %v137
  %947 = vmatprep.subr.bf16.mxu0 0
  %948 = vmatpush1.bf16.msra.mxu0 %v136
  %949 = vmatprep.subr.bf16.mxu0 0
  %950 = vmatpush1.bf16.msra.mxu0 %v135
  %951 = vmatprep.subr.bf16.mxu0 0
  %952 = vmatpush1.bf16.msra.mxu0 %v134
  %953 = vmatprep.subr.bf16.mxu0 0
  %954 = vmatpush1.bf16.msra.mxu0 %v133
  %955 = vmatprep.subr.bf16.mxu0 0
  %956 = vmatpush1.bf16.msra.mxu0 %v132
  %957 = vmatprep.subr.bf16.mxu0 0
  %958 = vmatpush1.bf16.msra.mxu0 %v131
  %959 = vmatprep.subr.bf16.mxu0 0
  %960 = vmatpush2.bf16.msra.mxu0 0
  %961 = vmatprep.subr.bf16.mxu0 0
  %962 = vmatpush2.bf16.msra.mxu0 0
  %963 = vmatprep.subr.bf16.mxu0 0
  %964 = vmatpush2.bf16.msra.mxu0 0
  %965 = vmatprep.subr.bf16.mxu0 0
  %966 = vmatpush2.bf16.msra.mxu0 0
  %967 = vmatprep.subr.bf16.mxu0 0
  %968 = vmatpush2.bf16.msra.mxu0 0
  %969 = vmatprep.subr.bf16.mxu0 0
  %970 = vmatpush2.bf16.msra.mxu0 0
  %971 = vmatprep.subr.bf16.mxu0 0
  %972 = vmatpush2.bf16.msra.mxu0 0
  %973 = vmatprep.subr.bf16.mxu0 0
  %974 = vmatpush2.bf16.msra.mxu0 %v139
  %975 = vmatprep.mubr.bf16.mxu0 %v941
  %976 = vmatmul.mubr.bf16.gmra.mxu0 %v931
  %v977 = vpop.f32.mrf.mxu0
  %v978 = vadd.f32 %v69, %v977
  %v979 = vpop.f32.mrf.mxu0
  %v980 = vpop.f32.mrf.mxu0
  %v981 = vpop.f32.mrf.mxu0
  %982 = vdwg.mxu0
  %v983 = vmax.f32 %v978, 0.0
  %v984 = vpack.c.bf16 %v983, %v983
  %s985 = scalar_lea.vmem %s3, 96
  %v986 = vld [vmem:[%s985] sm:$0xf]
  %v987 = vld [vmem:[%s985 + $0x4] sm:$0xf]
  %v988 = vld [vmem:[%s985 + $0x8] sm:$0xf]
  %v989 = vld [vmem:[%s985 + $0xc] sm:$0xf]
  %v994 = vunpack.c.l.b16 %v986
  %v995 = vunpack.c.l.b16 %v987
  %v996 = vunpack.c.l.b16 %v988
  %v997 = vunpack.c.l.b16 %v989
  %v998 = vpack.c.b16 %v995, %v994
  %v999 = vpack.c.b16 %v997, %v996
  %v1003 = vsel %vm287, %v984, 0
  %1005 = vmatprep.subr.bf16.mxu0 0
  %1006 = vmatpush1.bf16.msra.mxu0 0
  %1007 = vmatprep.subr.bf16.mxu0 0
  %1008 = vmatpush1.bf16.msra.mxu0 0
  %1009 = vmatprep.subr.bf16.mxu0 0
  %1010 = vmatpush1.bf16.msra.mxu0 0
  %1011 = vmatprep.subr.bf16.mxu0 0
  %1012 = vmatpush1.bf16.msra.mxu0 0
  %1013 = vmatprep.subr.bf16.mxu0 0
  %1014 = vmatpush1.bf16.msra.mxu0 0
  %1015 = vmatprep.subr.bf16.mxu0 0
  %1016 = vmatpush1.bf16.msra.mxu0 0
  %1017 = vmatprep.subr.bf16.mxu0 0
  %1018 = vmatpush1.bf16.msra.mxu0 %v999
  %1019 = vmatprep.subr.bf16.mxu0 0
  %1020 = vmatpush1.bf16.msra.mxu0 %v998
  %1021 = vmatprep.subr.bf16.mxu0 0
  %1022 = vmatpush2.bf16.msra.mxu0 0
  %1023 = vmatprep.subr.bf16.mxu0 0
  %1024 = vmatpush2.bf16.msra.mxu0 0
  %1025 = vmatprep.subr.bf16.mxu0 0
  %1026 = vmatpush2.bf16.msra.mxu0 0
  %1027 = vmatprep.subr.bf16.mxu0 0
  %1028 = vmatpush2.bf16.msra.mxu0 0
  %1029 = vmatprep.subr.bf16.mxu0 0
  %1030 = vmatpush2.bf16.msra.mxu0 0
  %1031 = vmatprep.subr.bf16.mxu0 0
  %1032 = vmatpush2.bf16.msra.mxu0 0
  %1033 = vmatprep.subr.bf16.mxu0 0
  %1034 = vmatpush2.bf16.msra.mxu0 0
  %1035 = vmatprep.subr.bf16.mxu0 0
  %1036 = vmatpush2.bf16.msra.mxu0 0
  %1037 = vmatprep.mubr.bf16.mxu0 0
  %1038 = vmatmul.mubr.bf16.gmra.mxu0 %v1003
  %v1039 = vpop.f32.mrf.mxu0
  %v1040 = vadd.f32 0.0, %v1039
  %v1041 = vpop.f32.mrf.mxu0
  %v1042 = vpop.f32.mrf.mxu0
  %v1043 = vpop.f32.mrf.mxu0
  %1044 = vdwg.mxu0
  %v1045 = vadd.f32 %v913, %v1040
  %s1046 = scalar_lea.vmem %s0, 14
  %v1047 = vld [vmem:[%s1046] sm:$0x3]
  %v1050 = vunpack.c.l.s4 1966171168
  %v1051 = vunpack.c.0.s8 %v1050
  %v1052 = vlaneseq
  %v1053 = vshrl.u32 %v1052, 7
  %v1054 = vsub.s32 %v1051, %v1053
  %v1055 = vrot.slane %v1047, %v1054
  %v1056 = vcombine.high %v1055, %v1055
  %v1058 = vunpack.c.l.s4 1966171168
  %v1059 = vunpack.c.0.s8 %v1058
  %v1060 = vlaneseq
  %v1061 = vshrl.u32 %v1060, 7
  %v1062 = vsub.s32 %v1059, %v1061
  %v1063 = vrot.slane %v1055, %v1062
  %v1065 = vunpack.c.l.s4 1966171168
  %v1066 = vunpack.c.0.s8 %v1065
  %v1067 = vlaneseq
  %v1068 = vshrl.u32 %v1067, 7
  %v1069 = vsub.s32 %v1066, %v1068
  %v1070 = vrot.slane %v1056, %v1069
  %v1073 = vsel %vm149, %v1070, 0
  %1075 = vmatprep.subr.bf16.mxu0 0
  %1076 = vmatpush1.bf16.msra.mxu0 %v138
  %1077 = vmatprep.subr.bf16.mxu0 0
  %1078 = vmatpush1.bf16.msra.mxu0 %v137
  %1079 = vmatprep.subr.bf16.mxu0 0
  %1080 = vmatpush1.bf16.msra.mxu0 %v136
  %1081 = vmatprep.subr.bf16.mxu0 0
  %1082 = vmatpush1.bf16.msra.mxu0 %v135
  %1083 = vmatprep.subr.bf16.mxu0 0
  %1084 = vmatpush1.bf16.msra.mxu0 %v134
  %1085 = vmatprep.subr.bf16.mxu0 0
  %1086 = vmatpush1.bf16.msra.mxu0 %v133
  %1087 = vmatprep.subr.bf16.mxu0 0
  %1088 = vmatpush1.bf16.msra.mxu0 %v132
  %1089 = vmatprep.subr.bf16.mxu0 0
  %1090 = vmatpush1.bf16.msra.mxu0 %v131
  %1091 = vmatprep.subr.bf16.mxu0 0
  %1092 = vmatpush2.bf16.msra.mxu0 0
  %1093 = vmatprep.subr.bf16.mxu0 0
  %1094 = vmatpush2.bf16.msra.mxu0 0
  %1095 = vmatprep.subr.bf16.mxu0 0
  %1096 = vmatpush2.bf16.msra.mxu0 0
  %1097 = vmatprep.subr.bf16.mxu0 0
  %1098 = vmatpush2.bf16.msra.mxu0 0
  %1099 = vmatprep.subr.bf16.mxu0 0
  %1100 = vmatpush2.bf16.msra.mxu0 0
  %1101 = vmatprep.subr.bf16.mxu0 0
  %1102 = vmatpush2.bf16.msra.mxu0 0
  %1103 = vmatprep.subr.bf16.mxu0 0
  %1104 = vmatpush2.bf16.msra.mxu0 0
  %1105 = vmatprep.subr.bf16.mxu0 0
  %1106 = vmatpush2.bf16.msra.mxu0 %v139
  %1107 = vmatprep.mubr.bf16.mxu0 %v1073
  %1108 = vmatmul.mubr.bf16.gmra.mxu0 %v1063
  %v1109 = vpop.f32.mrf.mxu0
  %v1110 = vadd.f32 %v69, %v1109
  %v1111 = vpop.f32.mrf.mxu0
  %v1112 = vpop.f32.mrf.mxu0
  %v1113 = vpop.f32.mrf.mxu0
  %1114 = vdwg.mxu0
  %v1115 = vmax.f32 %v1110, 0.0
  %v1116 = vpack.c.bf16 %v1115, %v1115
  %s1117 = scalar_lea.vmem %s3, 112
  %v1118 = vld [vmem:[%s1117] sm:$0xf]
  %v1119 = vld [vmem:[%s1117 + $0x4] sm:$0xf]
  %v1120 = vld [vmem:[%s1117 + $0x8] sm:$0xf]
  %v1121 = vld [vmem:[%s1117 + $0xc] sm:$0xf]
  %v1126 = vunpack.c.l.b16 %v1118
  %v1127 = vunpack.c.l.b16 %v1119
  %v1128 = vunpack.c.l.b16 %v1120
  %v1129 = vunpack.c.l.b16 %v1121
  %v1130 = vpack.c.b16 %v1127, %v1126
  %v1131 = vpack.c.b16 %v1129, %v1128
  %v1135 = vsel %vm287, %v1116, 0
  %1137 = vmatprep.subr.bf16.mxu0 0
  %1138 = vmatpush1.bf16.msra.mxu0 0
  %1139 = vmatprep.subr.bf16.mxu0 0
  %1140 = vmatpush1.bf16.msra.mxu0 0
  %1141 = vmatprep.subr.bf16.mxu0 0
  %1142 = vmatpush1.bf16.msra.mxu0 0
  %1143 = vmatprep.subr.bf16.mxu0 0
  %1144 = vmatpush1.bf16.msra.mxu0 0
  %1145 = vmatprep.subr.bf16.mxu0 0
  %1146 = vmatpush1.bf16.msra.mxu0 0
  %1147 = vmatprep.subr.bf16.mxu0 0
  %1148 = vmatpush1.bf16.msra.mxu0 0
  %1149 = vmatprep.subr.bf16.mxu0 0
  %1150 = vmatpush1.bf16.msra.mxu0 %v1131
  %1151 = vmatprep.subr.bf16.mxu0 0
  %1152 = vmatpush1.bf16.msra.mxu0 %v1130
  %1153 = vmatprep.subr.bf16.mxu0 0
  %1154 = vmatpush2.bf16.msra.mxu0 0
  %1155 = vmatprep.subr.bf16.mxu0 0
  %1156 = vmatpush2.bf16.msra.mxu0 0
  %1157 = vmatprep.subr.bf16.mxu0 0
  %1158 = vmatpush2.bf16.msra.mxu0 0
  %1159 = vmatprep.subr.bf16.mxu0 0
  %1160 = vmatpush2.bf16.msra.mxu0 0
  %1161 = vmatprep.subr.bf16.mxu0 0
  %1162 = vmatpush2.bf16.msra.mxu0 0
  %1163 = vmatprep.subr.bf16.mxu0 0
  %1164 = vmatpush2.bf16.msra.mxu0 0
  %1165 = vmatprep.subr.bf16.mxu0 0
  %1166 = vmatpush2.bf16.msra.mxu0 0
  %1167 = vmatprep.subr.bf16.mxu0 0
  %1168 = vmatpush2.bf16.msra.mxu0 0
  %1169 = vmatprep.mubr.bf16.mxu0 0
  %1170 = vmatmul.mubr.bf16.gmra.mxu0 %v1135
  %v1171 = vpop.f32.mrf.mxu0
  %v1172 = vadd.f32 0.0, %v1171
  %v1173 = vpop.f32.mrf.mxu0
  %v1174 = vpop.f32.mrf.mxu0
  %v1175 = vpop.f32.mrf.mxu0
  %1176 = vdwg.mxu0
  %v1177 = vadd.f32 %v1045, %v1172
  %s1178 = scalar_lea.vmem %s0, 16
  %v1179 = vld [vmem:[%s1178] sm:$0x3]
  %v1182 = vunpack.c.l.s4 1966171168
  %v1183 = vunpack.c.0.s8 %v1182
  %v1184 = vlaneseq
  %v1185 = vshrl.u32 %v1184, 7
  %v1186 = vsub.s32 %v1183, %v1185
  %v1187 = vrot.slane %v1179, %v1186
  %v1188 = vcombine.high %v1187, %v1187
  %v1190 = vunpack.c.l.s4 1966171168
  %v1191 = vunpack.c.0.s8 %v1190
  %v1192 = vlaneseq
  %v1193 = vshrl.u32 %v1192, 7
  %v1194 = vsub.s32 %v1191, %v1193
  %v1195 = vrot.slane %v1187, %v1194
  %v1197 = vunpack.c.l.s4 1966171168
  %v1198 = vunpack.c.0.s8 %v1197
  %v1199 = vlaneseq
  %v1200 = vshrl.u32 %v1199, 7
  %v1201 = vsub.s32 %v1198, %v1200
  %v1202 = vrot.slane %v1188, %v1201
  %v1205 = vsel %vm149, %v1202, 0
  %1207 = vmatprep.subr.bf16.mxu0 0
  %1208 = vmatpush1.bf16.msra.mxu0 %v138
  %1209 = vmatprep.subr.bf16.mxu0 0
  %1210 = vmatpush1.bf16.msra.mxu0 %v137
  %1211 = vmatprep.subr.bf16.mxu0 0
  %1212 = vmatpush1.bf16.msra.mxu0 %v136
  %1213 = vmatprep.subr.bf16.mxu0 0
  %1214 = vmatpush1.bf16.msra.mxu0 %v135
  %1215 = vmatprep.subr.bf16.mxu0 0
  %1216 = vmatpush1.bf16.msra.mxu0 %v134
  %1217 = vmatprep.subr.bf16.mxu0 0
  %1218 = vmatpush1.bf16.msra.mxu0 %v133
  %1219 = vmatprep.subr.bf16.mxu0 0
  %1220 = vmatpush1.bf16.msra.mxu0 %v132
  %1221 = vmatprep.subr.bf16.mxu0 0
  %1222 = vmatpush1.bf16.msra.mxu0 %v131
  %1223 = vmatprep.subr.bf16.mxu0 0
  %1224 = vmatpush2.bf16.msra.mxu0 0
  %1225 = vmatprep.subr.bf16.mxu0 0
  %1226 = vmatpush2.bf16.msra.mxu0 0
  %1227 = vmatprep.subr.bf16.mxu0 0
  %1228 = vmatpush2.bf16.msra.mxu0 0
  %1229 = vmatprep.subr.bf16.mxu0 0
  %1230 = vmatpush2.bf16.msra.mxu0 0
  %1231 = vmatprep.subr.bf16.mxu0 0
  %1232 = vmatpush2.bf16.msra.mxu0 0
  %1233 = vmatprep.subr.bf16.mxu0 0
  %1234 = vmatpush2.bf16.msra.mxu0 0
  %1235 = vmatprep.subr.bf16.mxu0 0
  %1236 = vmatpush2.bf16.msra.mxu0 0
  %1237 = vmatprep.subr.bf16.mxu0 0
  %1238 = vmatpush2.bf16.msra.mxu0 %v139
  %1239 = vmatprep.mubr.bf16.mxu0 %v1205
  %1240 = vmatmul.mubr.bf16.gmra.mxu0 %v1195
  %v1241 = vpop.f32.mrf.mxu0
  %v1242 = vadd.f32 %v69, %v1241
  %v1243 = vpop.f32.mrf.mxu0
  %v1244 = vpop.f32.mrf.mxu0
  %v1245 = vpop.f32.mrf.mxu0
  %1246 = vdwg.mxu0
  %v1247 = vmax.f32 %v1242, 0.0
  %v1248 = vpack.c.bf16 %v1247, %v1247
  %s1249 = scalar_lea.vmem %s3, 128
  %v1250 = vld [vmem:[%s1249] sm:$0xf]
  %v1251 = vld [vmem:[%s1249 + $0x4] sm:$0xf]
  %v1252 = vld [vmem:[%s1249 + $0x8] sm:$0xf]
  %v1253 = vld [vmem:[%s1249 + $0xc] sm:$0xf]
  %v1258 = vunpack.c.l.b16 %v1250
  %v1259 = vunpack.c.l.b16 %v1251
  %v1260 = vunpack.c.l.b16 %v1252
  %v1261 = vunpack.c.l.b16 %v1253
  %v1262 = vpack.c.b16 %v1259, %v1258
  %v1263 = vpack.c.b16 %v1261, %v1260
  %v1267 = vsel %vm287, %v1248, 0
  %1269 = vmatprep.subr.bf16.mxu0 0
  %1270 = vmatpush1.bf16.msra.mxu0 0
  %1271 = vmatprep.subr.bf16.mxu0 0
  %1272 = vmatpush1.bf16.msra.mxu0 0
  %1273 = vmatprep.subr.bf16.mxu0 0
  %1274 = vmatpush1.bf16.msra.mxu0 0
  %1275 = vmatprep.subr.bf16.mxu0 0
  %1276 = vmatpush1.bf16.msra.mxu0 0
  %1277 = vmatprep.subr.bf16.mxu0 0
  %1278 = vmatpush1.bf16.msra.mxu0 0
  %1279 = vmatprep.subr.bf16.mxu0 0
  %1280 = vmatpush1.bf16.msra.mxu0 0
  %1281 = vmatprep.subr.bf16.mxu0 0
  %1282 = vmatpush1.bf16.msra.mxu0 %v1263
  %1283 = vmatprep.subr.bf16.mxu0 0
  %1284 = vmatpush1.bf16.msra.mxu0 %v1262
  %1285 = vmatprep.subr.bf16.mxu0 0
  %1286 = vmatpush2.bf16.msra.mxu0 0
  %1287 = vmatprep.subr.bf16.mxu0 0
  %1288 = vmatpush2.bf16.msra.mxu0 0
  %1289 = vmatprep.subr.bf16.mxu0 0
  %1290 = vmatpush2.bf16.msra.mxu0 0
  %1291 = vmatprep.subr.bf16.mxu0 0
  %1292 = vmatpush2.bf16.msra.mxu0 0
  %1293 = vmatprep.subr.bf16.mxu0 0
  %1294 = vmatpush2.bf16.msra.mxu0 0
  %1295 = vmatprep.subr.bf16.mxu0 0
  %1296 = vmatpush2.bf16.msra.mxu0 0
  %1297 = vmatprep.subr.bf16.mxu0 0
  %1298 = vmatpush2.bf16.msra.mxu0 0
  %1299 = vmatprep.subr.bf16.mxu0 0
  %1300 = vmatpush2.bf16.msra.mxu0 0
  %1301 = vmatprep.mubr.bf16.mxu0 0
  %1302 = vmatmul.mubr.bf16.gmra.mxu0 %v1267
  %v1303 = vpop.f32.mrf.mxu0
  %v1304 = vadd.f32 0.0, %v1303
  %v1305 = vpop.f32.mrf.mxu0
  %v1306 = vpop.f32.mrf.mxu0
  %v1307 = vpop.f32.mrf.mxu0
  %1308 = vdwg.mxu0
  %v1309 = vadd.f32 %v1177, %v1304
  %s1310 = scalar_lea.vmem %s0, 18
  %v1311 = vld [vmem:[%s1310] sm:$0x3]
  %v1314 = vunpack.c.l.s4 1966171168
  %v1315 = vunpack.c.0.s8 %v1314
  %v1316 = vlaneseq
  %v1317 = vshrl.u32 %v1316, 7
  %v1318 = vsub.s32 %v1315, %v1317
  %v1319 = vrot.slane %v1311, %v1318
  %v1320 = vcombine.high %v1319, %v1319
  %v1322 = vunpack.c.l.s4 1966171168
  %v1323 = vunpack.c.0.s8 %v1322
  %v1324 = vlaneseq
  %v1325 = vshrl.u32 %v1324, 7
  %v1326 = vsub.s32 %v1323, %v1325
  %v1327 = vrot.slane %v1319, %v1326
  %v1329 = vunpack.c.l.s4 1966171168
  %v1330 = vunpack.c.0.s8 %v1329
  %v1331 = vlaneseq
  %v1332 = vshrl.u32 %v1331, 7
  %v1333 = vsub.s32 %v1330, %v1332
  %v1334 = vrot.slane %v1320, %v1333
  %v1337 = vsel %vm149, %v1334, 0
  %1339 = vmatprep.subr.bf16.mxu0 0
  %1340 = vmatpush1.bf16.msra.mxu0 %v138
  %1341 = vmatprep.subr.bf16.mxu0 0
  %1342 = vmatpush1.bf16.msra.mxu0 %v137
  %1343 = vmatprep.subr.bf16.mxu0 0
  %1344 = vmatpush1.bf16.msra.mxu0 %v136
  %1345 = vmatprep.subr.bf16.mxu0 0
  %1346 = vmatpush1.bf16.msra.mxu0 %v135
  %1347 = vmatprep.subr.bf16.mxu0 0
  %1348 = vmatpush1.bf16.msra.mxu0 %v134
  %1349 = vmatprep.subr.bf16.mxu0 0
  %1350 = vmatpush1.bf16.msra.mxu0 %v133
  %1351 = vmatprep.subr.bf16.mxu0 0
  %1352 = vmatpush1.bf16.msra.mxu0 %v132
  %1353 = vmatprep.subr.bf16.mxu0 0
  %1354 = vmatpush1.bf16.msra.mxu0 %v131
  %1355 = vmatprep.subr.bf16.mxu0 0
  %1356 = vmatpush2.bf16.msra.mxu0 0
  %1357 = vmatprep.subr.bf16.mxu0 0
  %1358 = vmatpush2.bf16.msra.mxu0 0
  %1359 = vmatprep.subr.bf16.mxu0 0
  %1360 = vmatpush2.bf16.msra.mxu0 0
  %1361 = vmatprep.subr.bf16.mxu0 0
  %1362 = vmatpush2.bf16.msra.mxu0 0
  %1363 = vmatprep.subr.bf16.mxu0 0
  %1364 = vmatpush2.bf16.msra.mxu0 0
  %1365 = vmatprep.subr.bf16.mxu0 0
  %1366 = vmatpush2.bf16.msra.mxu0 0
  %1367 = vmatprep.subr.bf16.mxu0 0
  %1368 = vmatpush2.bf16.msra.mxu0 0
  %1369 = vmatprep.subr.bf16.mxu0 0
  %1370 = vmatpush2.bf16.msra.mxu0 %v139
  %1371 = vmatprep.mubr.bf16.mxu0 %v1337
  %1372 = vmatmul.mubr.bf16.gmra.mxu0 %v1327
  %v1373 = vpop.f32.mrf.mxu0
  %v1374 = vadd.f32 %v69, %v1373
  %v1375 = vpop.f32.mrf.mxu0
  %v1376 = vpop.f32.mrf.mxu0
  %v1377 = vpop.f32.mrf.mxu0
  %1378 = vdwg.mxu0
  %v1379 = vmax.f32 %v1374, 0.0
  %v1380 = vpack.c.bf16 %v1379, %v1379
  %s1381 = scalar_lea.vmem %s3, 144
  %v1382 = vld [vmem:[%s1381] sm:$0xf]
  %v1383 = vld [vmem:[%s1381 + $0x4] sm:$0xf]
  %v1384 = vld [vmem:[%s1381 + $0x8] sm:$0xf]
  %v1385 = vld [vmem:[%s1381 + $0xc] sm:$0xf]
  %v1390 = vunpack.c.l.b16 %v1382
  %v1391 = vunpack.c.l.b16 %v1383
  %v1392 = vunpack.c.l.b16 %v1384
  %v1393 = vunpack.c.l.b16 %v1385
  %v1394 = vpack.c.b16 %v1391, %v1390
  %v1395 = vpack.c.b16 %v1393, %v1392
  %v1399 = vsel %vm287, %v1380, 0
  %1401 = vmatprep.subr.bf16.mxu0 0
  %1402 = vmatpush1.bf16.msra.mxu0 0
  %1403 = vmatprep.subr.bf16.mxu0 0
  %1404 = vmatpush1.bf16.msra.mxu0 0
  %1405 = vmatprep.subr.bf16.mxu0 0
  %1406 = vmatpush1.bf16.msra.mxu0 0
  %1407 = vmatprep.subr.bf16.mxu0 0
  %1408 = vmatpush1.bf16.msra.mxu0 0
  %1409 = vmatprep.subr.bf16.mxu0 0
  %1410 = vmatpush1.bf16.msra.mxu0 0
  %1411 = vmatprep.subr.bf16.mxu0 0
  %1412 = vmatpush1.bf16.msra.mxu0 0
  %1413 = vmatprep.subr.bf16.mxu0 0
  %1414 = vmatpush1.bf16.msra.mxu0 %v1395
  %1415 = vmatprep.subr.bf16.mxu0 0
  %1416 = vmatpush1.bf16.msra.mxu0 %v1394
  %1417 = vmatprep.subr.bf16.mxu0 0
  %1418 = vmatpush2.bf16.msra.mxu0 0
  %1419 = vmatprep.subr.bf16.mxu0 0
  %1420 = vmatpush2.bf16.msra.mxu0 0
  %1421 = vmatprep.subr.bf16.mxu0 0
  %1422 = vmatpush2.bf16.msra.mxu0 0
  %1423 = vmatprep.subr.bf16.mxu0 0
  %1424 = vmatpush2.bf16.msra.mxu0 0
  %1425 = vmatprep.subr.bf16.mxu0 0
  %1426 = vmatpush2.bf16.msra.mxu0 0
  %1427 = vmatprep.subr.bf16.mxu0 0
  %1428 = vmatpush2.bf16.msra.mxu0 0
  %1429 = vmatprep.subr.bf16.mxu0 0
  %1430 = vmatpush2.bf16.msra.mxu0 0
  %1431 = vmatprep.subr.bf16.mxu0 0
  %1432 = vmatpush2.bf16.msra.mxu0 0
  %1433 = vmatprep.mubr.bf16.mxu0 0
  %1434 = vmatmul.mubr.bf16.gmra.mxu0 %v1399
  %v1435 = vpop.f32.mrf.mxu0
  %v1436 = vadd.f32 0.0, %v1435
  %v1437 = vpop.f32.mrf.mxu0
  %v1438 = vpop.f32.mrf.mxu0
  %v1439 = vpop.f32.mrf.mxu0
  %1440 = vdwg.mxu0
  %v1441 = vadd.f32 %v1309, %v1436
  %s1442 = scalar_lea.vmem %s0, 20
  %v1443 = vld [vmem:[%s1442] sm:$0x3]
  %v1446 = vunpack.c.l.s4 1966171168
  %v1447 = vunpack.c.0.s8 %v1446
  %v1448 = vlaneseq
  %v1449 = vshrl.u32 %v1448, 7
  %v1450 = vsub.s32 %v1447, %v1449
  %v1451 = vrot.slane %v1443, %v1450
  %v1452 = vcombine.high %v1451, %v1451
  %v1454 = vunpack.c.l.s4 1966171168
  %v1455 = vunpack.c.0.s8 %v1454
  %v1456 = vlaneseq
  %v1457 = vshrl.u32 %v1456, 7
  %v1458 = vsub.s32 %v1455, %v1457
  %v1459 = vrot.slane %v1451, %v1458
  %v1461 = vunpack.c.l.s4 1966171168
  %v1462 = vunpack.c.0.s8 %v1461
  %v1463 = vlaneseq
  %v1464 = vshrl.u32 %v1463, 7
  %v1465 = vsub.s32 %v1462, %v1464
  %v1466 = vrot.slane %v1452, %v1465
  %v1469 = vsel %vm149, %v1466, 0
  %1471 = vmatprep.subr.bf16.mxu0 0
  %1472 = vmatpush1.bf16.msra.mxu0 %v138
  %1473 = vmatprep.subr.bf16.mxu0 0
  %1474 = vmatpush1.bf16.msra.mxu0 %v137
  %1475 = vmatprep.subr.bf16.mxu0 0
  %1476 = vmatpush1.bf16.msra.mxu0 %v136
  %1477 = vmatprep.subr.bf16.mxu0 0
  %1478 = vmatpush1.bf16.msra.mxu0 %v135
  %1479 = vmatprep.subr.bf16.mxu0 0
  %1480 = vmatpush1.bf16.msra.mxu0 %v134
  %1481 = vmatprep.subr.bf16.mxu0 0
  %1482 = vmatpush1.bf16.msra.mxu0 %v133
  %1483 = vmatprep.subr.bf16.mxu0 0
  %1484 = vmatpush1.bf16.msra.mxu0 %v132
  %1485 = vmatprep.subr.bf16.mxu0 0
  %1486 = vmatpush1.bf16.msra.mxu0 %v131
  %1487 = vmatprep.subr.bf16.mxu0 0
  %1488 = vmatpush2.bf16.msra.mxu0 0
  %1489 = vmatprep.subr.bf16.mxu0 0
  %1490 = vmatpush2.bf16.msra.mxu0 0
  %1491 = vmatprep.subr.bf16.mxu0 0
  %1492 = vmatpush2.bf16.msra.mxu0 0
  %1493 = vmatprep.subr.bf16.mxu0 0
  %1494 = vmatpush2.bf16.msra.mxu0 0
  %1495 = vmatprep.subr.bf16.mxu0 0
  %1496 = vmatpush2.bf16.msra.mxu0 0
  %1497 = vmatprep.subr.bf16.mxu0 0
  %1498 = vmatpush2.bf16.msra.mxu0 0
  %1499 = vmatprep.subr.bf16.mxu0 0
  %1500 = vmatpush2.bf16.msra.mxu0 0
  %1501 = vmatprep.subr.bf16.mxu0 0
  %1502 = vmatpush2.bf16.msra.mxu0 %v139
  %1503 = vmatprep.mubr.bf16.mxu0 %v1469
  %1504 = vmatmul.mubr.bf16.gmra.mxu0 %v1459
  %v1505 = vpop.f32.mrf.mxu0
  %v1506 = vadd.f32 %v69, %v1505
  %v1507 = vpop.f32.mrf.mxu0
  %v1508 = vpop.f32.mrf.mxu0
  %v1509 = vpop.f32.mrf.mxu0
  %1510 = vdwg.mxu0
  %v1511 = vmax.f32 %v1506, 0.0
  %v1512 = vpack.c.bf16 %v1511, %v1511
  %s1513 = scalar_lea.vmem %s3, 160
  %v1514 = vld [vmem:[%s1513] sm:$0xf]
  %v1515 = vld [vmem:[%s1513 + $0x4] sm:$0xf]
  %v1516 = vld [vmem:[%s1513 + $0x8] sm:$0xf]
  %v1517 = vld [vmem:[%s1513 + $0xc] sm:$0xf]
  %v1522 = vunpack.c.l.b16 %v1514
  %v1523 = vunpack.c.l.b16 %v1515
  %v1524 = vunpack.c.l.b16 %v1516
  %v1525 = vunpack.c.l.b16 %v1517
  %v1526 = vpack.c.b16 %v1523, %v1522
  %v1527 = vpack.c.b16 %v1525, %v1524
  %v1531 = vsel %vm287, %v1512, 0
  %1533 = vmatprep.subr.bf16.mxu0 0
  %1534 = vmatpush1.bf16.msra.mxu0 0
  %1535 = vmatprep.subr.bf16.mxu0 0
  %1536 = vmatpush1.bf16.msra.mxu0 0
  %1537 = vmatprep.subr.bf16.mxu0 0
  %1538 = vmatpush1.bf16.msra.mxu0 0
  %1539 = vmatprep.subr.bf16.mxu0 0
  %1540 = vmatpush1.bf16.msra.mxu0 0
  %1541 = vmatprep.subr.bf16.mxu0 0
  %1542 = vmatpush1.bf16.msra.mxu0 0
  %1543 = vmatprep.subr.bf16.mxu0 0
  %1544 = vmatpush1.bf16.msra.mxu0 0
  %1545 = vmatprep.subr.bf16.mxu0 0
  %1546 = vmatpush1.bf16.msra.mxu0 %v1527
  %1547 = vmatprep.subr.bf16.mxu0 0
  %1548 = vmatpush1.bf16.msra.mxu0 %v1526
  %1549 = vmatprep.subr.bf16.mxu0 0
  %1550 = vmatpush2.bf16.msra.mxu0 0
  %1551 = vmatprep.subr.bf16.mxu0 0
  %1552 = vmatpush2.bf16.msra.mxu0 0
  %1553 = vmatprep.subr.bf16.mxu0 0
  %1554 = vmatpush2.bf16.msra.mxu0 0
  %1555 = vmatprep.subr.bf16.mxu0 0
  %1556 = vmatpush2.bf16.msra.mxu0 0
  %1557 = vmatprep.subr.bf16.mxu0 0
  %1558 = vmatpush2.bf16.msra.mxu0 0
  %1559 = vmatprep.subr.bf16.mxu0 0
  %1560 = vmatpush2.bf16.msra.mxu0 0
  %1561 = vmatprep.subr.bf16.mxu0 0
  %1562 = vmatpush2.bf16.msra.mxu0 0
  %1563 = vmatprep.subr.bf16.mxu0 0
  %1564 = vmatpush2.bf16.msra.mxu0 0
  %1565 = vmatprep.mubr.bf16.mxu0 0
  %1566 = vmatmul.mubr.bf16.gmra.mxu0 %v1531
  %v1567 = vpop.f32.mrf.mxu0
  %v1568 = vadd.f32 0.0, %v1567
  %v1569 = vpop.f32.mrf.mxu0
  %v1570 = vpop.f32.mrf.mxu0
  %v1571 = vpop.f32.mrf.mxu0
  %1572 = vdwg.mxu0
  %v1573 = vadd.f32 %v1441, %v1568
  %s1574 = scalar_lea.vmem %s0, 22
  %v1575 = vld [vmem:[%s1574] sm:$0x3]
  %v1578 = vunpack.c.l.s4 1966171168
  %v1579 = vunpack.c.0.s8 %v1578
  %v1580 = vlaneseq
  %v1581 = vshrl.u32 %v1580, 7
  %v1582 = vsub.s32 %v1579, %v1581
  %v1583 = vrot.slane %v1575, %v1582
  %v1584 = vcombine.high %v1583, %v1583
  %v1586 = vunpack.c.l.s4 1966171168
  %v1587 = vunpack.c.0.s8 %v1586
  %v1588 = vlaneseq
  %v1589 = vshrl.u32 %v1588, 7
  %v1590 = vsub.s32 %v1587, %v1589
  %v1591 = vrot.slane %v1583, %v1590
  %v1593 = vunpack.c.l.s4 1966171168
  %v1594 = vunpack.c.0.s8 %v1593
  %v1595 = vlaneseq
  %v1596 = vshrl.u32 %v1595, 7
  %v1597 = vsub.s32 %v1594, %v1596
  %v1598 = vrot.slane %v1584, %v1597
  %v1601 = vsel %vm149, %v1598, 0
  %1603 = vmatprep.subr.bf16.mxu0 0
  %1604 = vmatpush1.bf16.msra.mxu0 %v138
  %1605 = vmatprep.subr.bf16.mxu0 0
  %1606 = vmatpush1.bf16.msra.mxu0 %v137
  %1607 = vmatprep.subr.bf16.mxu0 0
  %1608 = vmatpush1.bf16.msra.mxu0 %v136
  %1609 = vmatprep.subr.bf16.mxu0 0
  %1610 = vmatpush1.bf16.msra.mxu0 %v135
  %1611 = vmatprep.subr.bf16.mxu0 0
  %1612 = vmatpush1.bf16.msra.mxu0 %v134
  %1613 = vmatprep.subr.bf16.mxu0 0
  %1614 = vmatpush1.bf16.msra.mxu0 %v133
  %1615 = vmatprep.subr.bf16.mxu0 0
  %1616 = vmatpush1.bf16.msra.mxu0 %v132
  %1617 = vmatprep.subr.bf16.mxu0 0
  %1618 = vmatpush1.bf16.msra.mxu0 %v131
  %1619 = vmatprep.subr.bf16.mxu0 0
  %1620 = vmatpush2.bf16.msra.mxu0 0
  %1621 = vmatprep.subr.bf16.mxu0 0
  %1622 = vmatpush2.bf16.msra.mxu0 0
  %1623 = vmatprep.subr.bf16.mxu0 0
  %1624 = vmatpush2.bf16.msra.mxu0 0
  %1625 = vmatprep.subr.bf16.mxu0 0
  %1626 = vmatpush2.bf16.msra.mxu0 0
  %1627 = vmatprep.subr.bf16.mxu0 0
  %1628 = vmatpush2.bf16.msra.mxu0 0
  %1629 = vmatprep.subr.bf16.mxu0 0
  %1630 = vmatpush2.bf16.msra.mxu0 0
  %1631 = vmatprep.subr.bf16.mxu0 0
  %1632 = vmatpush2.bf16.msra.mxu0 0
  %1633 = vmatprep.subr.bf16.mxu0 0
  %1634 = vmatpush2.bf16.msra.mxu0 %v139
  %1635 = vmatprep.mubr.bf16.mxu0 %v1601
  %1636 = vmatmul.mubr.bf16.gmra.mxu0 %v1591
  %v1637 = vpop.f32.mrf.mxu0
  %v1638 = vadd.f32 %v69, %v1637
  %v1639 = vpop.f32.mrf.mxu0
  %v1640 = vpop.f32.mrf.mxu0
  %v1641 = vpop.f32.mrf.mxu0
  %1642 = vdwg.mxu0
  %v1643 = vmax.f32 %v1638, 0.0
  %v1644 = vpack.c.bf16 %v1643, %v1643
  %s1645 = scalar_lea.vmem %s3, 176
  %v1646 = vld [vmem:[%s1645] sm:$0xf]
  %v1647 = vld [vmem:[%s1645 + $0x4] sm:$0xf]
  %v1648 = vld [vmem:[%s1645 + $0x8] sm:$0xf]
  %v1649 = vld [vmem:[%s1645 + $0xc] sm:$0xf]
  %v1654 = vunpack.c.l.b16 %v1646
  %v1655 = vunpack.c.l.b16 %v1647
  %v1656 = vunpack.c.l.b16 %v1648
  %v1657 = vunpack.c.l.b16 %v1649
  %v1658 = vpack.c.b16 %v1655, %v1654
  %v1659 = vpack.c.b16 %v1657, %v1656
  %v1663 = vsel %vm287, %v1644, 0
  %1665 = vmatprep.subr.bf16.mxu0 0
  %1666 = vmatpush1.bf16.msra.mxu0 0
  %1667 = vmatprep.subr.bf16.mxu0 0
  %1668 = vmatpush1.bf16.msra.mxu0 0
  %1669 = vmatprep.subr.bf16.mxu0 0
  %1670 = vmatpush1.bf16.msra.mxu0 0
  %1671 = vmatprep.subr.bf16.mxu0 0
  %1672 = vmatpush1.bf16.msra.mxu0 0
  %1673 = vmatprep.subr.bf16.mxu0 0
  %1674 = vmatpush1.bf16.msra.mxu0 0
  %1675 = vmatprep.subr.bf16.mxu0 0
  %1676 = vmatpush1.bf16.msra.mxu0 0
  %1677 = vmatprep.subr.bf16.mxu0 0
  %1678 = vmatpush1.bf16.msra.mxu0 %v1659
  %1679 = vmatprep.subr.bf16.mxu0 0
  %1680 = vmatpush1.bf16.msra.mxu0 %v1658
  %1681 = vmatprep.subr.bf16.mxu0 0
  %1682 = vmatpush2.bf16.msra.mxu0 0
  %1683 = vmatprep.subr.bf16.mxu0 0
  %1684 = vmatpush2.bf16.msra.mxu0 0
  %1685 = vmatprep.subr.bf16.mxu0 0
  %1686 = vmatpush2.bf16.msra.mxu0 0
  %1687 = vmatprep.subr.bf16.mxu0 0
  %1688 = vmatpush2.bf16.msra.mxu0 0
  %1689 = vmatprep.subr.bf16.mxu0 0
  %1690 = vmatpush2.bf16.msra.mxu0 0
  %1691 = vmatprep.subr.bf16.mxu0 0
  %1692 = vmatpush2.bf16.msra.mxu0 0
  %1693 = vmatprep.subr.bf16.mxu0 0
  %1694 = vmatpush2.bf16.msra.mxu0 0
  %1695 = vmatprep.subr.bf16.mxu0 0
  %1696 = vmatpush2.bf16.msra.mxu0 0
  %1697 = vmatprep.mubr.bf16.mxu0 0
  %1698 = vmatmul.mubr.bf16.gmra.mxu0 %v1663
  %v1699 = vpop.f32.mrf.mxu0
  %v1700 = vadd.f32 0.0, %v1699
  %v1701 = vpop.f32.mrf.mxu0
  %v1702 = vpop.f32.mrf.mxu0
  %v1703 = vpop.f32.mrf.mxu0
  %1704 = vdwg.mxu0
  %v1705 = vadd.f32 %v1573, %v1700
  %s1706 = scalar_lea.vmem %s0, 24
  %v1707 = vld [vmem:[%s1706] sm:$0x3]
  %v1710 = vunpack.c.l.s4 1966171168
  %v1711 = vunpack.c.0.s8 %v1710
  %v1712 = vlaneseq
  %v1713 = vshrl.u32 %v1712, 7
  %v1714 = vsub.s32 %v1711, %v1713
  %v1715 = vrot.slane %v1707, %v1714
  %v1716 = vcombine.high %v1715, %v1715
  %v1718 = vunpack.c.l.s4 1966171168
  %v1719 = vunpack.c.0.s8 %v1718
  %v1720 = vlaneseq
  %v1721 = vshrl.u32 %v1720, 7
  %v1722 = vsub.s32 %v1719, %v1721
  %v1723 = vrot.slane %v1715, %v1722
  %v1725 = vunpack.c.l.s4 1966171168
  %v1726 = vunpack.c.0.s8 %v1725
  %v1727 = vlaneseq
  %v1728 = vshrl.u32 %v1727, 7
  %v1729 = vsub.s32 %v1726, %v1728
  %v1730 = vrot.slane %v1716, %v1729
  %v1733 = vsel %vm149, %v1730, 0
  %1735 = vmatprep.subr.bf16.mxu0 0
  %1736 = vmatpush1.bf16.msra.mxu0 %v138
  %1737 = vmatprep.subr.bf16.mxu0 0
  %1738 = vmatpush1.bf16.msra.mxu0 %v137
  %1739 = vmatprep.subr.bf16.mxu0 0
  %1740 = vmatpush1.bf16.msra.mxu0 %v136
  %1741 = vmatprep.subr.bf16.mxu0 0
  %1742 = vmatpush1.bf16.msra.mxu0 %v135
  %1743 = vmatprep.subr.bf16.mxu0 0
  %1744 = vmatpush1.bf16.msra.mxu0 %v134
  %1745 = vmatprep.subr.bf16.mxu0 0
  %1746 = vmatpush1.bf16.msra.mxu0 %v133
  %1747 = vmatprep.subr.bf16.mxu0 0
  %1748 = vmatpush1.bf16.msra.mxu0 %v132
  %1749 = vmatprep.subr.bf16.mxu0 0
  %1750 = vmatpush1.bf16.msra.mxu0 %v131
  %1751 = vmatprep.subr.bf16.mxu0 0
  %1752 = vmatpush2.bf16.msra.mxu0 0
  %1753 = vmatprep.subr.bf16.mxu0 0
  %1754 = vmatpush2.bf16.msra.mxu0 0
  %1755 = vmatprep.subr.bf16.mxu0 0
  %1756 = vmatpush2.bf16.msra.mxu0 0
  %1757 = vmatprep.subr.bf16.mxu0 0
  %1758 = vmatpush2.bf16.msra.mxu0 0
  %1759 = vmatprep.subr.bf16.mxu0 0
  %1760 = vmatpush2.bf16.msra.mxu0 0
  %1761 = vmatprep.subr.bf16.mxu0 0
  %1762 = vmatpush2.bf16.msra.mxu0 0
  %1763 = vmatprep.subr.bf16.mxu0 0
  %1764 = vmatpush2.bf16.msra.mxu0 0
  %1765 = vmatprep.subr.bf16.mxu0 0
  %1766 = vmatpush2.bf16.msra.mxu0 %v139
  %1767 = vmatprep.mubr.bf16.mxu0 %v1733
  %1768 = vmatmul.mubr.bf16.gmra.mxu0 %v1723
  %v1769 = vpop.f32.mrf.mxu0
  %v1770 = vadd.f32 %v69, %v1769
  %v1771 = vpop.f32.mrf.mxu0
  %v1772 = vpop.f32.mrf.mxu0
  %v1773 = vpop.f32.mrf.mxu0
  %1774 = vdwg.mxu0
  %v1775 = vmax.f32 %v1770, 0.0
  %v1776 = vpack.c.bf16 %v1775, %v1775
  %s1777 = scalar_lea.vmem %s3, 192
  %v1778 = vld [vmem:[%s1777] sm:$0xf]
  %v1779 = vld [vmem:[%s1777 + $0x4] sm:$0xf]
  %v1780 = vld [vmem:[%s1777 + $0x8] sm:$0xf]
  %v1781 = vld [vmem:[%s1777 + $0xc] sm:$0xf]
  %v1786 = vunpack.c.l.b16 %v1778
  %v1787 = vunpack.c.l.b16 %v1779
  %v1788 = vunpack.c.l.b16 %v1780
  %v1789 = vunpack.c.l.b16 %v1781
  %v1790 = vpack.c.b16 %v1787, %v1786
  %v1791 = vpack.c.b16 %v1789, %v1788
  %v1795 = vsel %vm287, %v1776, 0
  %1797 = vmatprep.subr.bf16.mxu0 0
  %1798 = vmatpush1.bf16.msra.mxu0 0
  %1799 = vmatprep.subr.bf16.mxu0 0
  %1800 = vmatpush1.bf16.msra.mxu0 0
  %1801 = vmatprep.subr.bf16.mxu0 0
  %1802 = vmatpush1.bf16.msra.mxu0 0
  %1803 = vmatprep.subr.bf16.mxu0 0
  %1804 = vmatpush1.bf16.msra.mxu0 0
  %1805 = vmatprep.subr.bf16.mxu0 0
  %1806 = vmatpush1.bf16.msra.mxu0 0
  %1807 = vmatprep.subr.bf16.mxu0 0
  %1808 = vmatpush1.bf16.msra.mxu0 0
  %1809 = vmatprep.subr.bf16.mxu0 0
  %1810 = vmatpush1.bf16.msra.mxu0 %v1791
  %1811 = vmatprep.subr.bf16.mxu0 0
  %1812 = vmatpush1.bf16.msra.mxu0 %v1790
  %1813 = vmatprep.subr.bf16.mxu0 0
  %1814 = vmatpush2.bf16.msra.mxu0 0
  %1815 = vmatprep.subr.bf16.mxu0 0
  %1816 = vmatpush2.bf16.msra.mxu0 0
  %1817 = vmatprep.subr.bf16.mxu0 0
  %1818 = vmatpush2.bf16.msra.mxu0 0
  %1819 = vmatprep.subr.bf16.mxu0 0
  %1820 = vmatpush2.bf16.msra.mxu0 0
  %1821 = vmatprep.subr.bf16.mxu0 0
  %1822 = vmatpush2.bf16.msra.mxu0 0
  %1823 = vmatprep.subr.bf16.mxu0 0
  %1824 = vmatpush2.bf16.msra.mxu0 0
  %1825 = vmatprep.subr.bf16.mxu0 0
  %1826 = vmatpush2.bf16.msra.mxu0 0
  %1827 = vmatprep.subr.bf16.mxu0 0
  %1828 = vmatpush2.bf16.msra.mxu0 0
  %1829 = vmatprep.mubr.bf16.mxu0 0
  %1830 = vmatmul.mubr.bf16.gmra.mxu0 %v1795
  %v1831 = vpop.f32.mrf.mxu0
  %v1832 = vadd.f32 0.0, %v1831
  %v1833 = vpop.f32.mrf.mxu0
  %v1834 = vpop.f32.mrf.mxu0
  %v1835 = vpop.f32.mrf.mxu0
  %1836 = vdwg.mxu0
  %v1837 = vadd.f32 %v1705, %v1832
  %s1838 = scalar_lea.vmem %s0, 26
  %v1839 = vld [vmem:[%s1838] sm:$0x3]
  %v1842 = vunpack.c.l.s4 1966171168
  %v1843 = vunpack.c.0.s8 %v1842
  %v1844 = vlaneseq
  %v1845 = vshrl.u32 %v1844, 7
  %v1846 = vsub.s32 %v1843, %v1845
  %v1847 = vrot.slane %v1839, %v1846
  %v1848 = vcombine.high %v1847, %v1847
  %v1850 = vunpack.c.l.s4 1966171168
  %v1851 = vunpack.c.0.s8 %v1850
  %v1852 = vlaneseq
  %v1853 = vshrl.u32 %v1852, 7
  %v1854 = vsub.s32 %v1851, %v1853
  %v1855 = vrot.slane %v1847, %v1854
  %v1857 = vunpack.c.l.s4 1966171168
  %v1858 = vunpack.c.0.s8 %v1857
  %v1859 = vlaneseq
  %v1860 = vshrl.u32 %v1859, 7
  %v1861 = vsub.s32 %v1858, %v1860
  %v1862 = vrot.slane %v1848, %v1861
  %v1865 = vsel %vm149, %v1862, 0
  %1867 = vmatprep.subr.bf16.mxu0 0
  %1868 = vmatpush1.bf16.msra.mxu0 %v138
  %1869 = vmatprep.subr.bf16.mxu0 0
  %1870 = vmatpush1.bf16.msra.mxu0 %v137
  %1871 = vmatprep.subr.bf16.mxu0 0
  %1872 = vmatpush1.bf16.msra.mxu0 %v136
  %1873 = vmatprep.subr.bf16.mxu0 0
  %1874 = vmatpush1.bf16.msra.mxu0 %v135
  %1875 = vmatprep.subr.bf16.mxu0 0
  %1876 = vmatpush1.bf16.msra.mxu0 %v134
  %1877 = vmatprep.subr.bf16.mxu0 0
  %1878 = vmatpush1.bf16.msra.mxu0 %v133
  %1879 = vmatprep.subr.bf16.mxu0 0
  %1880 = vmatpush1.bf16.msra.mxu0 %v132
  %1881 = vmatprep.subr.bf16.mxu0 0
  %1882 = vmatpush1.bf16.msra.mxu0 %v131
  %1883 = vmatprep.subr.bf16.mxu0 0
  %1884 = vmatpush2.bf16.msra.mxu0 0
  %1885 = vmatprep.subr.bf16.mxu0 0
  %1886 = vmatpush2.bf16.msra.mxu0 0
  %1887 = vmatprep.subr.bf16.mxu0 0
  %1888 = vmatpush2.bf16.msra.mxu0 0
  %1889 = vmatprep.subr.bf16.mxu0 0
  %1890 = vmatpush2.bf16.msra.mxu0 0
  %1891 = vmatprep.subr.bf16.mxu0 0
  %1892 = vmatpush2.bf16.msra.mxu0 0
  %1893 = vmatprep.subr.bf16.mxu0 0
  %1894 = vmatpush2.bf16.msra.mxu0 0
  %1895 = vmatprep.subr.bf16.mxu0 0
  %1896 = vmatpush2.bf16.msra.mxu0 0
  %1897 = vmatprep.subr.bf16.mxu0 0
  %1898 = vmatpush2.bf16.msra.mxu0 %v139
  %1899 = vmatprep.mubr.bf16.mxu0 %v1865
  %1900 = vmatmul.mubr.bf16.gmra.mxu0 %v1855
  %v1901 = vpop.f32.mrf.mxu0
  %v1902 = vadd.f32 %v69, %v1901
  %v1903 = vpop.f32.mrf.mxu0
  %v1904 = vpop.f32.mrf.mxu0
  %v1905 = vpop.f32.mrf.mxu0
  %1906 = vdwg.mxu0
  %v1907 = vmax.f32 %v1902, 0.0
  %v1908 = vpack.c.bf16 %v1907, %v1907
  %s1909 = scalar_lea.vmem %s3, 208
  %v1910 = vld [vmem:[%s1909] sm:$0xf]
  %v1911 = vld [vmem:[%s1909 + $0x4] sm:$0xf]
  %v1912 = vld [vmem:[%s1909 + $0x8] sm:$0xf]
  %v1913 = vld [vmem:[%s1909 + $0xc] sm:$0xf]
  %v1918 = vunpack.c.l.b16 %v1910
  %v1919 = vunpack.c.l.b16 %v1911
  %v1920 = vunpack.c.l.b16 %v1912
  %v1921 = vunpack.c.l.b16 %v1913
  %v1922 = vpack.c.b16 %v1919, %v1918
  %v1923 = vpack.c.b16 %v1921, %v1920
  %v1927 = vsel %vm287, %v1908, 0
  %1929 = vmatprep.subr.bf16.mxu0 0
  %1930 = vmatpush1.bf16.msra.mxu0 0
  %1931 = vmatprep.subr.bf16.mxu0 0
  %1932 = vmatpush1.bf16.msra.mxu0 0
  %1933 = vmatprep.subr.bf16.mxu0 0
  %1934 = vmatpush1.bf16.msra.mxu0 0
  %1935 = vmatprep.subr.bf16.mxu0 0
  %1936 = vmatpush1.bf16.msra.mxu0 0
  %1937 = vmatprep.subr.bf16.mxu0 0
  %1938 = vmatpush1.bf16.msra.mxu0 0
  %1939 = vmatprep.subr.bf16.mxu0 0
  %1940 = vmatpush1.bf16.msra.mxu0 0
  %1941 = vmatprep.subr.bf16.mxu0 0
  %1942 = vmatpush1.bf16.msra.mxu0 %v1923
  %1943 = vmatprep.subr.bf16.mxu0 0
  %1944 = vmatpush1.bf16.msra.mxu0 %v1922
  %1945 = vmatprep.subr.bf16.mxu0 0
  %1946 = vmatpush2.bf16.msra.mxu0 0
  %1947 = vmatprep.subr.bf16.mxu0 0
  %1948 = vmatpush2.bf16.msra.mxu0 0
  %1949 = vmatprep.subr.bf16.mxu0 0
  %1950 = vmatpush2.bf16.msra.mxu0 0
  %1951 = vmatprep.subr.bf16.mxu0 0
  %1952 = vmatpush2.bf16.msra.mxu0 0
  %1953 = vmatprep.subr.bf16.mxu0 0
  %1954 = vmatpush2.bf16.msra.mxu0 0
  %1955 = vmatprep.subr.bf16.mxu0 0
  %1956 = vmatpush2.bf16.msra.mxu0 0
  %1957 = vmatprep.subr.bf16.mxu0 0
  %1958 = vmatpush2.bf16.msra.mxu0 0
  %1959 = vmatprep.subr.bf16.mxu0 0
  %1960 = vmatpush2.bf16.msra.mxu0 0
  %1961 = vmatprep.mubr.bf16.mxu0 0
  %1962 = vmatmul.mubr.bf16.gmra.mxu0 %v1927
  %v1963 = vpop.f32.mrf.mxu0
  %v1964 = vadd.f32 0.0, %v1963
  %v1965 = vpop.f32.mrf.mxu0
  %v1966 = vpop.f32.mrf.mxu0
  %v1967 = vpop.f32.mrf.mxu0
  %1968 = vdwg.mxu0
  %v1969 = vadd.f32 %v1837, %v1964
  %s1970 = scalar_lea.vmem %s0, 28
  %v1971 = vld [vmem:[%s1970] sm:$0x3]
  %v1974 = vunpack.c.l.s4 1966171168
  %v1975 = vunpack.c.0.s8 %v1974
  %v1976 = vlaneseq
  %v1977 = vshrl.u32 %v1976, 7
  %v1978 = vsub.s32 %v1975, %v1977
  %v1979 = vrot.slane %v1971, %v1978
  %v1980 = vcombine.high %v1979, %v1979
  %v1982 = vunpack.c.l.s4 1966171168
  %v1983 = vunpack.c.0.s8 %v1982
  %v1984 = vlaneseq
  %v1985 = vshrl.u32 %v1984, 7
  %v1986 = vsub.s32 %v1983, %v1985
  %v1987 = vrot.slane %v1979, %v1986
  %v1989 = vunpack.c.l.s4 1966171168
  %v1990 = vunpack.c.0.s8 %v1989
  %v1991 = vlaneseq
  %v1992 = vshrl.u32 %v1991, 7
  %v1993 = vsub.s32 %v1990, %v1992
  %v1994 = vrot.slane %v1980, %v1993
  %v1997 = vsel %vm149, %v1994, 0
  %1999 = vmatprep.subr.bf16.mxu0 0
  %2000 = vmatpush1.bf16.msra.mxu0 %v138
  %2001 = vmatprep.subr.bf16.mxu0 0
  %2002 = vmatpush1.bf16.msra.mxu0 %v137
  %2003 = vmatprep.subr.bf16.mxu0 0
  %2004 = vmatpush1.bf16.msra.mxu0 %v136
  %2005 = vmatprep.subr.bf16.mxu0 0
  %2006 = vmatpush1.bf16.msra.mxu0 %v135
  %2007 = vmatprep.subr.bf16.mxu0 0
  %2008 = vmatpush1.bf16.msra.mxu0 %v134
  %2009 = vmatprep.subr.bf16.mxu0 0
  %2010 = vmatpush1.bf16.msra.mxu0 %v133
  %2011 = vmatprep.subr.bf16.mxu0 0
  %2012 = vmatpush1.bf16.msra.mxu0 %v132
  %2013 = vmatprep.subr.bf16.mxu0 0
  %2014 = vmatpush1.bf16.msra.mxu0 %v131
  %2015 = vmatprep.subr.bf16.mxu0 0
  %2016 = vmatpush2.bf16.msra.mxu0 0
  %2017 = vmatprep.subr.bf16.mxu0 0
  %2018 = vmatpush2.bf16.msra.mxu0 0
  %2019 = vmatprep.subr.bf16.mxu0 0
  %2020 = vmatpush2.bf16.msra.mxu0 0
  %2021 = vmatprep.subr.bf16.mxu0 0
  %2022 = vmatpush2.bf16.msra.mxu0 0
  %2023 = vmatprep.subr.bf16.mxu0 0
  %2024 = vmatpush2.bf16.msra.mxu0 0
  %2025 = vmatprep.subr.bf16.mxu0 0
  %2026 = vmatpush2.bf16.msra.mxu0 0
  %2027 = vmatprep.subr.bf16.mxu0 0
  %2028 = vmatpush2.bf16.msra.mxu0 0
  %2029 = vmatprep.subr.bf16.mxu0 0
  %2030 = vmatpush2.bf16.msra.mxu0 %v139
  %2031 = vmatprep.mubr.bf16.mxu0 %v1997
  %2032 = vmatmul.mubr.bf16.gmra.mxu0 %v1987
  %v2033 = vpop.f32.mrf.mxu0
  %v2034 = vadd.f32 %v69, %v2033
  %v2035 = vpop.f32.mrf.mxu0
  %v2036 = vpop.f32.mrf.mxu0
  %v2037 = vpop.f32.mrf.mxu0
  %2038 = vdwg.mxu0
  %v2039 = vmax.f32 %v2034, 0.0
  %v2040 = vpack.c.bf16 %v2039, %v2039
  %s2041 = scalar_lea.vmem %s3, 224
  %v2042 = vld [vmem:[%s2041] sm:$0xf]
  %v2043 = vld [vmem:[%s2041 + $0x4] sm:$0xf]
  %v2044 = vld [vmem:[%s2041 + $0x8] sm:$0xf]
  %v2045 = vld [vmem:[%s2041 + $0xc] sm:$0xf]
  %v2050 = vunpack.c.l.b16 %v2042
  %v2051 = vunpack.c.l.b16 %v2043
  %v2052 = vunpack.c.l.b16 %v2044
  %v2053 = vunpack.c.l.b16 %v2045
  %v2054 = vpack.c.b16 %v2051, %v2050
  %v2055 = vpack.c.b16 %v2053, %v2052
  %v2059 = vsel %vm287, %v2040, 0
  %2061 = vmatprep.subr.bf16.mxu0 0
  %2062 = vmatpush1.bf16.msra.mxu0 0
  %2063 = vmatprep.subr.bf16.mxu0 0
  %2064 = vmatpush1.bf16.msra.mxu0 0
  %2065 = vmatprep.subr.bf16.mxu0 0
  %2066 = vmatpush1.bf16.msra.mxu0 0
  %2067 = vmatprep.subr.bf16.mxu0 0
  %2068 = vmatpush1.bf16.msra.mxu0 0
  %2069 = vmatprep.subr.bf16.mxu0 0
  %2070 = vmatpush1.bf16.msra.mxu0 0
  %2071 = vmatprep.subr.bf16.mxu0 0
  %2072 = vmatpush1.bf16.msra.mxu0 0
  %2073 = vmatprep.subr.bf16.mxu0 0
  %2074 = vmatpush1.bf16.msra.mxu0 %v2055
  %2075 = vmatprep.subr.bf16.mxu0 0
  %2076 = vmatpush1.bf16.msra.mxu0 %v2054
  %2077 = vmatprep.subr.bf16.mxu0 0
  %2078 = vmatpush2.bf16.msra.mxu0 0
  %2079 = vmatprep.subr.bf16.mxu0 0
  %2080 = vmatpush2.bf16.msra.mxu0 0
  %2081 = vmatprep.subr.bf16.mxu0 0
  %2082 = vmatpush2.bf16.msra.mxu0 0
  %2083 = vmatprep.subr.bf16.mxu0 0
  %2084 = vmatpush2.bf16.msra.mxu0 0
  %2085 = vmatprep.subr.bf16.mxu0 0
  %2086 = vmatpush2.bf16.msra.mxu0 0
  %2087 = vmatprep.subr.bf16.mxu0 0
  %2088 = vmatpush2.bf16.msra.mxu0 0
  %2089 = vmatprep.subr.bf16.mxu0 0
  %2090 = vmatpush2.bf16.msra.mxu0 0
  %2091 = vmatprep.subr.bf16.mxu0 0
  %2092 = vmatpush2.bf16.msra.mxu0 0
  %2093 = vmatprep.mubr.bf16.mxu0 0
  %2094 = vmatmul.mubr.bf16.gmra.mxu0 %v2059
  %v2095 = vpop.f32.mrf.mxu0
  %v2096 = vadd.f32 0.0, %v2095
  %v2097 = vpop.f32.mrf.mxu0
  %v2098 = vpop.f32.mrf.mxu0
  %v2099 = vpop.f32.mrf.mxu0
  %2100 = vdwg.mxu0
  %v2101 = vadd.f32 %v1969, %v2096
  %s2102 = scalar_lea.vmem %s0, 30
  %v2103 = vld [vmem:[%s2102] sm:$0x3]
  %v2106 = vunpack.c.l.s4 1966171168
  %v2107 = vunpack.c.0.s8 %v2106
  %v2108 = vlaneseq
  %v2109 = vshrl.u32 %v2108, 7
  %v2110 = vsub.s32 %v2107, %v2109
  %v2111 = vrot.slane %v2103, %v2110
  %v2112 = vcombine.high %v2111, %v2111
  %v2114 = vunpack.c.l.s4 1966171168
  %v2115 = vunpack.c.0.s8 %v2114
  %v2116 = vlaneseq
  %v2117 = vshrl.u32 %v2116, 7
  %v2118 = vsub.s32 %v2115, %v2117
  %v2119 = vrot.slane %v2111, %v2118
  %v2121 = vunpack.c.l.s4 1966171168
  %v2122 = vunpack.c.0.s8 %v2121
  %v2123 = vlaneseq
  %v2124 = vshrl.u32 %v2123, 7
  %v2125 = vsub.s32 %v2122, %v2124
  %v2126 = vrot.slane %v2112, %v2125
  %v2129 = vsel %vm149, %v2126, 0
  %2131 = vmatprep.subr.bf16.mxu0 0
  %2132 = vmatpush1.bf16.msra.mxu0 %v138
  %2133 = vmatprep.subr.bf16.mxu0 0
  %2134 = vmatpush1.bf16.msra.mxu0 %v137
  %2135 = vmatprep.subr.bf16.mxu0 0
  %2136 = vmatpush1.bf16.msra.mxu0 %v136
  %2137 = vmatprep.subr.bf16.mxu0 0
  %2138 = vmatpush1.bf16.msra.mxu0 %v135
  %2139 = vmatprep.subr.bf16.mxu0 0
  %2140 = vmatpush1.bf16.msra.mxu0 %v134
  %2141 = vmatprep.subr.bf16.mxu0 0
  %2142 = vmatpush1.bf16.msra.mxu0 %v133
  %2143 = vmatprep.subr.bf16.mxu0 0
  %2144 = vmatpush1.bf16.msra.mxu0 %v132
  %2145 = vmatprep.subr.bf16.mxu0 0
  %2146 = vmatpush1.bf16.msra.mxu0 %v131
  %2147 = vmatprep.subr.bf16.mxu0 0
  %2148 = vmatpush2.bf16.msra.mxu0 0
  %2149 = vmatprep.subr.bf16.mxu0 0
  %2150 = vmatpush2.bf16.msra.mxu0 0
  %2151 = vmatprep.subr.bf16.mxu0 0
  %2152 = vmatpush2.bf16.msra.mxu0 0
  %2153 = vmatprep.subr.bf16.mxu0 0
  %2154 = vmatpush2.bf16.msra.mxu0 0
  %2155 = vmatprep.subr.bf16.mxu0 0
  %2156 = vmatpush2.bf16.msra.mxu0 0
  %2157 = vmatprep.subr.bf16.mxu0 0
  %2158 = vmatpush2.bf16.msra.mxu0 0
  %2159 = vmatprep.subr.bf16.mxu0 0
  %2160 = vmatpush2.bf16.msra.mxu0 0
  %2161 = vmatprep.subr.bf16.mxu0 0
  %2162 = vmatpush2.bf16.msra.mxu0 %v139
  %2163 = vmatprep.mubr.bf16.mxu0 %v2129
  %2164 = vmatmul.mubr.bf16.gmra.mxu0 %v2119
  %v2165 = vpop.f32.mrf.mxu0
  %v2166 = vadd.f32 %v69, %v2165
  %v2167 = vpop.f32.mrf.mxu0
  %v2168 = vpop.f32.mrf.mxu0
  %v2169 = vpop.f32.mrf.mxu0
  %2170 = vdwg.mxu0
  %v2171 = vmax.f32 %v2166, 0.0
  %v2172 = vpack.c.bf16 %v2171, %v2171
  %s2173 = scalar_lea.vmem %s3, 240
  %v2174 = vld [vmem:[%s2173] sm:$0xf]
  %v2175 = vld [vmem:[%s2173 + $0x4] sm:$0xf]
  %v2176 = vld [vmem:[%s2173 + $0x8] sm:$0xf]
  %v2177 = vld [vmem:[%s2173 + $0xc] sm:$0xf]
  %v2182 = vunpack.c.l.b16 %v2174
  %v2183 = vunpack.c.l.b16 %v2175
  %v2184 = vunpack.c.l.b16 %v2176
  %v2185 = vunpack.c.l.b16 %v2177
  %v2186 = vpack.c.b16 %v2183, %v2182
  %v2187 = vpack.c.b16 %v2185, %v2184
  %v2191 = vsel %vm287, %v2172, 0
  %2193 = vmatprep.subr.bf16.mxu0 0
  %2194 = vmatpush1.bf16.msra.mxu0 0
  %2195 = vmatprep.subr.bf16.mxu0 0
  %2196 = vmatpush1.bf16.msra.mxu0 0
  %2197 = vmatprep.subr.bf16.mxu0 0
  %2198 = vmatpush1.bf16.msra.mxu0 0
  %2199 = vmatprep.subr.bf16.mxu0 0
  %2200 = vmatpush1.bf16.msra.mxu0 0
  %2201 = vmatprep.subr.bf16.mxu0 0
  %2202 = vmatpush1.bf16.msra.mxu0 0
  %2203 = vmatprep.subr.bf16.mxu0 0
  %2204 = vmatpush1.bf16.msra.mxu0 0
  %2205 = vmatprep.subr.bf16.mxu0 0
  %2206 = vmatpush1.bf16.msra.mxu0 %v2187
  %2207 = vmatprep.subr.bf16.mxu0 0
  %2208 = vmatpush1.bf16.msra.mxu0 %v2186
  %2209 = vmatprep.subr.bf16.mxu0 0
  %2210 = vmatpush2.bf16.msra.mxu0 0
  %2211 = vmatprep.subr.bf16.mxu0 0
  %2212 = vmatpush2.bf16.msra.mxu0 0
  %2213 = vmatprep.subr.bf16.mxu0 0
  %2214 = vmatpush2.bf16.msra.mxu0 0
  %2215 = vmatprep.subr.bf16.mxu0 0
  %2216 = vmatpush2.bf16.msra.mxu0 0
  %2217 = vmatprep.subr.bf16.mxu0 0
  %2218 = vmatpush2.bf16.msra.mxu0 0
  %2219 = vmatprep.subr.bf16.mxu0 0
  %2220 = vmatpush2.bf16.msra.mxu0 0
  %2221 = vmatprep.subr.bf16.mxu0 0
  %2222 = vmatpush2.bf16.msra.mxu0 0
  %2223 = vmatprep.subr.bf16.mxu0 0
  %2224 = vmatpush2.bf16.msra.mxu0 0
  %2225 = vmatprep.mubr.bf16.mxu0 0
  %2226 = vmatmul.mubr.bf16.gmra.mxu0 %v2191
  %v2227 = vpop.f32.mrf.mxu0
  %v2228 = vadd.f32 0.0, %v2227
  %v2229 = vpop.f32.mrf.mxu0
  %v2230 = vpop.f32.mrf.mxu0
  %v2231 = vpop.f32.mrf.mxu0
  %2232 = vdwg.mxu0
  %v2233 = vadd.f32 %v2101, %v2228
  %s2234 = scalar_lea.vmem %s0, 32
  %v2235 = vld [vmem:[%s2234] sm:$0x3]
  %v2238 = vunpack.c.l.s4 1966171168
  %v2239 = vunpack.c.0.s8 %v2238
  %v2240 = vlaneseq
  %v2241 = vshrl.u32 %v2240, 7
  %v2242 = vsub.s32 %v2239, %v2241
  %v2243 = vrot.slane %v2235, %v2242
  %v2244 = vcombine.high %v2243, %v2243
  %v2246 = vunpack.c.l.s4 1966171168
  %v2247 = vunpack.c.0.s8 %v2246
  %v2248 = vlaneseq
  %v2249 = vshrl.u32 %v2248, 7
  %v2250 = vsub.s32 %v2247, %v2249
  %v2251 = vrot.slane %v2243, %v2250
  %v2253 = vunpack.c.l.s4 1966171168
  %v2254 = vunpack.c.0.s8 %v2253
  %v2255 = vlaneseq
  %v2256 = vshrl.u32 %v2255, 7
  %v2257 = vsub.s32 %v2254, %v2256
  %v2258 = vrot.slane %v2244, %v2257
  %v2261 = vsel %vm149, %v2258, 0
  %2263 = vmatprep.subr.bf16.mxu0 0
  %2264 = vmatpush1.bf16.msra.mxu0 %v138
  %2265 = vmatprep.subr.bf16.mxu0 0
  %2266 = vmatpush1.bf16.msra.mxu0 %v137
  %2267 = vmatprep.subr.bf16.mxu0 0
  %2268 = vmatpush1.bf16.msra.mxu0 %v136
  %2269 = vmatprep.subr.bf16.mxu0 0
  %2270 = vmatpush1.bf16.msra.mxu0 %v135
  %2271 = vmatprep.subr.bf16.mxu0 0
  %2272 = vmatpush1.bf16.msra.mxu0 %v134
  %2273 = vmatprep.subr.bf16.mxu0 0
  %2274 = vmatpush1.bf16.msra.mxu0 %v133
  %2275 = vmatprep.subr.bf16.mxu0 0
  %2276 = vmatpush1.bf16.msra.mxu0 %v132
  %2277 = vmatprep.subr.bf16.mxu0 0
  %2278 = vmatpush1.bf16.msra.mxu0 %v131
  %2279 = vmatprep.subr.bf16.mxu0 0
  %2280 = vmatpush2.bf16.msra.mxu0 0
  %2281 = vmatprep.subr.bf16.mxu0 0
  %2282 = vmatpush2.bf16.msra.mxu0 0
  %2283 = vmatprep.subr.bf16.mxu0 0
  %2284 = vmatpush2.bf16.msra.mxu0 0
  %2285 = vmatprep.subr.bf16.mxu0 0
  %2286 = vmatpush2.bf16.msra.mxu0 0
  %2287 = vmatprep.subr.bf16.mxu0 0
  %2288 = vmatpush2.bf16.msra.mxu0 0
  %2289 = vmatprep.subr.bf16.mxu0 0
  %2290 = vmatpush2.bf16.msra.mxu0 0
  %2291 = vmatprep.subr.bf16.mxu0 0
  %2292 = vmatpush2.bf16.msra.mxu0 0
  %2293 = vmatprep.subr.bf16.mxu0 0
  %2294 = vmatpush2.bf16.msra.mxu0 %v139
  %2295 = vmatprep.mubr.bf16.mxu0 %v2261
  %2296 = vmatmul.mubr.bf16.gmra.mxu0 %v2251
  %v2297 = vpop.f32.mrf.mxu0
  %v2298 = vadd.f32 %v69, %v2297
  %v2299 = vpop.f32.mrf.mxu0
  %v2300 = vpop.f32.mrf.mxu0
  %v2301 = vpop.f32.mrf.mxu0
  %2302 = vdwg.mxu0
  %v2303 = vmax.f32 %v2298, 0.0
  %v2304 = vpack.c.bf16 %v2303, %v2303
  %s2305 = scalar_lea.vmem %s3, 256
  %v2306 = vld [vmem:[%s2305] sm:$0xf]
  %v2307 = vld [vmem:[%s2305 + $0x4] sm:$0xf]
  %v2308 = vld [vmem:[%s2305 + $0x8] sm:$0xf]
  %v2309 = vld [vmem:[%s2305 + $0xc] sm:$0xf]
  %v2314 = vunpack.c.l.b16 %v2306
  %v2315 = vunpack.c.l.b16 %v2307
  %v2316 = vunpack.c.l.b16 %v2308
  %v2317 = vunpack.c.l.b16 %v2309
  %v2318 = vpack.c.b16 %v2315, %v2314
  %v2319 = vpack.c.b16 %v2317, %v2316
  %v2323 = vsel %vm287, %v2304, 0
  %2325 = vmatprep.subr.bf16.mxu0 0
  %2326 = vmatpush1.bf16.msra.mxu0 0
  %2327 = vmatprep.subr.bf16.mxu0 0
  %2328 = vmatpush1.bf16.msra.mxu0 0
  %2329 = vmatprep.subr.bf16.mxu0 0
  %2330 = vmatpush1.bf16.msra.mxu0 0
  %2331 = vmatprep.subr.bf16.mxu0 0
  %2332 = vmatpush1.bf16.msra.mxu0 0
  %2333 = vmatprep.subr.bf16.mxu0 0
  %2334 = vmatpush1.bf16.msra.mxu0 0
  %2335 = vmatprep.subr.bf16.mxu0 0
  %2336 = vmatpush1.bf16.msra.mxu0 0
  %2337 = vmatprep.subr.bf16.mxu0 0
  %2338 = vmatpush1.bf16.msra.mxu0 %v2319
  %2339 = vmatprep.subr.bf16.mxu0 0
  %2340 = vmatpush1.bf16.msra.mxu0 %v2318
  %2341 = vmatprep.subr.bf16.mxu0 0
  %2342 = vmatpush2.bf16.msra.mxu0 0
  %2343 = vmatprep.subr.bf16.mxu0 0
  %2344 = vmatpush2.bf16.msra.mxu0 0
  %2345 = vmatprep.subr.bf16.mxu0 0
  %2346 = vmatpush2.bf16.msra.mxu0 0
  %2347 = vmatprep.subr.bf16.mxu0 0
  %2348 = vmatpush2.bf16.msra.mxu0 0
  %2349 = vmatprep.subr.bf16.mxu0 0
  %2350 = vmatpush2.bf16.msra.mxu0 0
  %2351 = vmatprep.subr.bf16.mxu0 0
  %2352 = vmatpush2.bf16.msra.mxu0 0
  %2353 = vmatprep.subr.bf16.mxu0 0
  %2354 = vmatpush2.bf16.msra.mxu0 0
  %2355 = vmatprep.subr.bf16.mxu0 0
  %2356 = vmatpush2.bf16.msra.mxu0 0
  %2357 = vmatprep.mubr.bf16.mxu0 0
  %2358 = vmatmul.mubr.bf16.gmra.mxu0 %v2323
  %v2359 = vpop.f32.mrf.mxu0
  %v2360 = vadd.f32 0.0, %v2359
  %v2361 = vpop.f32.mrf.mxu0
  %v2362 = vpop.f32.mrf.mxu0
  %v2363 = vpop.f32.mrf.mxu0
  %2364 = vdwg.mxu0
  %v2365 = vadd.f32 %v2233, %v2360
  %s2366 = scalar_lea.vmem %s0, 34
  %v2367 = vld [vmem:[%s2366] sm:$0x3]
  %v2370 = vunpack.c.l.s4 1966171168
  %v2371 = vunpack.c.0.s8 %v2370
  %v2372 = vlaneseq
  %v2373 = vshrl.u32 %v2372, 7
  %v2374 = vsub.s32 %v2371, %v2373
  %v2375 = vrot.slane %v2367, %v2374
  %v2376 = vcombine.high %v2375, %v2375
  %v2378 = vunpack.c.l.s4 1966171168
  %v2379 = vunpack.c.0.s8 %v2378
  %v2380 = vlaneseq
  %v2381 = vshrl.u32 %v2380, 7
  %v2382 = vsub.s32 %v2379, %v2381
  %v2383 = vrot.slane %v2375, %v2382
  %v2385 = vunpack.c.l.s4 1966171168
  %v2386 = vunpack.c.0.s8 %v2385
  %v2387 = vlaneseq
  %v2388 = vshrl.u32 %v2387, 7
  %v2389 = vsub.s32 %v2386, %v2388
  %v2390 = vrot.slane %v2376, %v2389
  %v2393 = vsel %vm149, %v2390, 0
  %2395 = vmatprep.subr.bf16.mxu0 0
  %2396 = vmatpush1.bf16.msra.mxu0 %v138
  %2397 = vmatprep.subr.bf16.mxu0 0
  %2398 = vmatpush1.bf16.msra.mxu0 %v137
  %2399 = vmatprep.subr.bf16.mxu0 0
  %2400 = vmatpush1.bf16.msra.mxu0 %v136
  %2401 = vmatprep.subr.bf16.mxu0 0
  %2402 = vmatpush1.bf16.msra.mxu0 %v135
  %2403 = vmatprep.subr.bf16.mxu0 0
  %2404 = vmatpush1.bf16.msra.mxu0 %v134
  %2405 = vmatprep.subr.bf16.mxu0 0
  %2406 = vmatpush1.bf16.msra.mxu0 %v133
  %2407 = vmatprep.subr.bf16.mxu0 0
  %2408 = vmatpush1.bf16.msra.mxu0 %v132
  %2409 = vmatprep.subr.bf16.mxu0 0
  %2410 = vmatpush1.bf16.msra.mxu0 %v131
  %2411 = vmatprep.subr.bf16.mxu0 0
  %2412 = vmatpush2.bf16.msra.mxu0 0
  %2413 = vmatprep.subr.bf16.mxu0 0
  %2414 = vmatpush2.bf16.msra.mxu0 0
  %2415 = vmatprep.subr.bf16.mxu0 0
  %2416 = vmatpush2.bf16.msra.mxu0 0
  %2417 = vmatprep.subr.bf16.mxu0 0
  %2418 = vmatpush2.bf16.msra.mxu0 0
  %2419 = vmatprep.subr.bf16.mxu0 0
  %2420 = vmatpush2.bf16.msra.mxu0 0
  %2421 = vmatprep.subr.bf16.mxu0 0
  %2422 = vmatpush2.bf16.msra.mxu0 0
  %2423 = vmatprep.subr.bf16.mxu0 0
  %2424 = vmatpush2.bf16.msra.mxu0 0
  %2425 = vmatprep.subr.bf16.mxu0 0
  %2426 = vmatpush2.bf16.msra.mxu0 %v139
  %2427 = vmatprep.mubr.bf16.mxu0 %v2393
  %2428 = vmatmul.mubr.bf16.gmra.mxu0 %v2383
  %v2429 = vpop.f32.mrf.mxu0
  %v2430 = vadd.f32 %v69, %v2429
  %v2431 = vpop.f32.mrf.mxu0
  %v2432 = vpop.f32.mrf.mxu0
  %v2433 = vpop.f32.mrf.mxu0
  %2434 = vdwg.mxu0
  %v2435 = vmax.f32 %v2430, 0.0
  %v2436 = vpack.c.bf16 %v2435, %v2435
  %s2437 = scalar_lea.vmem %s3, 272
  %v2438 = vld [vmem:[%s2437] sm:$0xf]
  %v2439 = vld [vmem:[%s2437 + $0x4] sm:$0xf]
  %v2440 = vld [vmem:[%s2437 + $0x8] sm:$0xf]
  %v2441 = vld [vmem:[%s2437 + $0xc] sm:$0xf]
  %v2446 = vunpack.c.l.b16 %v2438
  %v2447 = vunpack.c.l.b16 %v2439
  %v2448 = vunpack.c.l.b16 %v2440
  %v2449 = vunpack.c.l.b16 %v2441
  %v2450 = vpack.c.b16 %v2447, %v2446
  %v2451 = vpack.c.b16 %v2449, %v2448
  %v2455 = vsel %vm287, %v2436, 0
  %2457 = vmatprep.subr.bf16.mxu0 0
  %2458 = vmatpush1.bf16.msra.mxu0 0
  %2459 = vmatprep.subr.bf16.mxu0 0
  %2460 = vmatpush1.bf16.msra.mxu0 0
  %2461 = vmatprep.subr.bf16.mxu0 0
  %2462 = vmatpush1.bf16.msra.mxu0 0
  %2463 = vmatprep.subr.bf16.mxu0 0
  %2464 = vmatpush1.bf16.msra.mxu0 0
  %2465 = vmatprep.subr.bf16.mxu0 0
  %2466 = vmatpush1.bf16.msra.mxu0 0
  %2467 = vmatprep.subr.bf16.mxu0 0
  %2468 = vmatpush1.bf16.msra.mxu0 0
  %2469 = vmatprep.subr.bf16.mxu0 0
  %2470 = vmatpush1.bf16.msra.mxu0 %v2451
  %2471 = vmatprep.subr.bf16.mxu0 0
  %2472 = vmatpush1.bf16.msra.mxu0 %v2450
  %2473 = vmatprep.subr.bf16.mxu0 0
  %2474 = vmatpush2.bf16.msra.mxu0 0
  %2475 = vmatprep.subr.bf16.mxu0 0
  %2476 = vmatpush2.bf16.msra.mxu0 0
  %2477 = vmatprep.subr.bf16.mxu0 0
  %2478 = vmatpush2.bf16.msra.mxu0 0
  %2479 = vmatprep.subr.bf16.mxu0 0
  %2480 = vmatpush2.bf16.msra.mxu0 0
  %2481 = vmatprep.subr.bf16.mxu0 0
  %2482 = vmatpush2.bf16.msra.mxu0 0
  %2483 = vmatprep.subr.bf16.mxu0 0
  %2484 = vmatpush2.bf16.msra.mxu0 0
  %2485 = vmatprep.subr.bf16.mxu0 0
  %2486 = vmatpush2.bf16.msra.mxu0 0
  %2487 = vmatprep.subr.bf16.mxu0 0
  %2488 = vmatpush2.bf16.msra.mxu0 0
  %2489 = vmatprep.mubr.bf16.mxu0 0
  %2490 = vmatmul.mubr.bf16.gmra.mxu0 %v2455
  %v2491 = vpop.f32.mrf.mxu0
  %v2492 = vadd.f32 0.0, %v2491
  %v2493 = vpop.f32.mrf.mxu0
  %v2494 = vpop.f32.mrf.mxu0
  %v2495 = vpop.f32.mrf.mxu0
  %2496 = vdwg.mxu0
  %v2497 = vadd.f32 %v2365, %v2492
  %s2498 = scalar_lea.vmem %s0, 36
  %v2499 = vld [vmem:[%s2498] sm:$0x3]
  %v2502 = vunpack.c.l.s4 1966171168
  %v2503 = vunpack.c.0.s8 %v2502
  %v2504 = vlaneseq
  %v2505 = vshrl.u32 %v2504, 7
  %v2506 = vsub.s32 %v2503, %v2505
  %v2507 = vrot.slane %v2499, %v2506
  %v2508 = vcombine.high %v2507, %v2507
  %v2510 = vunpack.c.l.s4 1966171168
  %v2511 = vunpack.c.0.s8 %v2510
  %v2512 = vlaneseq
  %v2513 = vshrl.u32 %v2512, 7
  %v2514 = vsub.s32 %v2511, %v2513
  %v2515 = vrot.slane %v2507, %v2514
  %v2517 = vunpack.c.l.s4 1966171168
  %v2518 = vunpack.c.0.s8 %v2517
  %v2519 = vlaneseq
  %v2520 = vshrl.u32 %v2519, 7
  %v2521 = vsub.s32 %v2518, %v2520
  %v2522 = vrot.slane %v2508, %v2521
  %v2525 = vsel %vm149, %v2522, 0
  %2527 = vmatprep.subr.bf16.mxu0 0
  %2528 = vmatpush1.bf16.msra.mxu0 %v138
  %2529 = vmatprep.subr.bf16.mxu0 0
  %2530 = vmatpush1.bf16.msra.mxu0 %v137
  %2531 = vmatprep.subr.bf16.mxu0 0
  %2532 = vmatpush1.bf16.msra.mxu0 %v136
  %2533 = vmatprep.subr.bf16.mxu0 0
  %2534 = vmatpush1.bf16.msra.mxu0 %v135
  %2535 = vmatprep.subr.bf16.mxu0 0
  %2536 = vmatpush1.bf16.msra.mxu0 %v134
  %2537 = vmatprep.subr.bf16.mxu0 0
  %2538 = vmatpush1.bf16.msra.mxu0 %v133
  %2539 = vmatprep.subr.bf16.mxu0 0
  %2540 = vmatpush1.bf16.msra.mxu0 %v132
  %2541 = vmatprep.subr.bf16.mxu0 0
  %2542 = vmatpush1.bf16.msra.mxu0 %v131
  %2543 = vmatprep.subr.bf16.mxu0 0
  %2544 = vmatpush2.bf16.msra.mxu0 0
  %2545 = vmatprep.subr.bf16.mxu0 0
  %2546 = vmatpush2.bf16.msra.mxu0 0
  %2547 = vmatprep.subr.bf16.mxu0 0
  %2548 = vmatpush2.bf16.msra.mxu0 0
  %2549 = vmatprep.subr.bf16.mxu0 0
  %2550 = vmatpush2.bf16.msra.mxu0 0
  %2551 = vmatprep.subr.bf16.mxu0 0
  %2552 = vmatpush2.bf16.msra.mxu0 0
  %2553 = vmatprep.subr.bf16.mxu0 0
  %2554 = vmatpush2.bf16.msra.mxu0 0
  %2555 = vmatprep.subr.bf16.mxu0 0
  %2556 = vmatpush2.bf16.msra.mxu0 0
  %2557 = vmatprep.subr.bf16.mxu0 0
  %2558 = vmatpush2.bf16.msra.mxu0 %v139
  %2559 = vmatprep.mubr.bf16.mxu0 %v2525
  %2560 = vmatmul.mubr.bf16.gmra.mxu0 %v2515
  %v2561 = vpop.f32.mrf.mxu0
  %v2562 = vadd.f32 %v69, %v2561
  %v2563 = vpop.f32.mrf.mxu0
  %v2564 = vpop.f32.mrf.mxu0
  %v2565 = vpop.f32.mrf.mxu0
  %2566 = vdwg.mxu0
  %v2567 = vmax.f32 %v2562, 0.0
  %v2568 = vpack.c.bf16 %v2567, %v2567
  %s2569 = scalar_lea.vmem %s3, 288
  %v2570 = vld [vmem:[%s2569] sm:$0xf]
  %v2571 = vld [vmem:[%s2569 + $0x4] sm:$0xf]
  %v2572 = vld [vmem:[%s2569 + $0x8] sm:$0xf]
  %v2573 = vld [vmem:[%s2569 + $0xc] sm:$0xf]
  %v2578 = vunpack.c.l.b16 %v2570
  %v2579 = vunpack.c.l.b16 %v2571
  %v2580 = vunpack.c.l.b16 %v2572
  %v2581 = vunpack.c.l.b16 %v2573
  %v2582 = vpack.c.b16 %v2579, %v2578
  %v2583 = vpack.c.b16 %v2581, %v2580
  %v2587 = vsel %vm287, %v2568, 0
  %2589 = vmatprep.subr.bf16.mxu0 0
  %2590 = vmatpush1.bf16.msra.mxu0 0
  %2591 = vmatprep.subr.bf16.mxu0 0
  %2592 = vmatpush1.bf16.msra.mxu0 0
  %2593 = vmatprep.subr.bf16.mxu0 0
  %2594 = vmatpush1.bf16.msra.mxu0 0
  %2595 = vmatprep.subr.bf16.mxu0 0
  %2596 = vmatpush1.bf16.msra.mxu0 0
  %2597 = vmatprep.subr.bf16.mxu0 0
  %2598 = vmatpush1.bf16.msra.mxu0 0
  %2599 = vmatprep.subr.bf16.mxu0 0
  %2600 = vmatpush1.bf16.msra.mxu0 0
  %2601 = vmatprep.subr.bf16.mxu0 0
  %2602 = vmatpush1.bf16.msra.mxu0 %v2583
  %2603 = vmatprep.subr.bf16.mxu0 0
  %2604 = vmatpush1.bf16.msra.mxu0 %v2582
  %2605 = vmatprep.subr.bf16.mxu0 0
  %2606 = vmatpush2.bf16.msra.mxu0 0
  %2607 = vmatprep.subr.bf16.mxu0 0
  %2608 = vmatpush2.bf16.msra.mxu0 0
  %2609 = vmatprep.subr.bf16.mxu0 0
  %2610 = vmatpush2.bf16.msra.mxu0 0
  %2611 = vmatprep.subr.bf16.mxu0 0
  %2612 = vmatpush2.bf16.msra.mxu0 0
  %2613 = vmatprep.subr.bf16.mxu0 0
  %2614 = vmatpush2.bf16.msra.mxu0 0
  %2615 = vmatprep.subr.bf16.mxu0 0
  %2616 = vmatpush2.bf16.msra.mxu0 0
  %2617 = vmatprep.subr.bf16.mxu0 0
  %2618 = vmatpush2.bf16.msra.mxu0 0
  %2619 = vmatprep.subr.bf16.mxu0 0
  %2620 = vmatpush2.bf16.msra.mxu0 0
  %2621 = vmatprep.mubr.bf16.mxu0 0
  %2622 = vmatmul.mubr.bf16.gmra.mxu0 %v2587
  %v2623 = vpop.f32.mrf.mxu0
  %v2624 = vadd.f32 0.0, %v2623
  %v2625 = vpop.f32.mrf.mxu0
  %v2626 = vpop.f32.mrf.mxu0
  %v2627 = vpop.f32.mrf.mxu0
  %2628 = vdwg.mxu0
  %v2629 = vadd.f32 %v2497, %v2624
  %s2630 = scalar_lea.vmem %s0, 38
  %v2631 = vld [vmem:[%s2630] sm:$0x3]
  %v2634 = vunpack.c.l.s4 1966171168
  %v2635 = vunpack.c.0.s8 %v2634
  %v2636 = vlaneseq
  %v2637 = vshrl.u32 %v2636, 7
  %v2638 = vsub.s32 %v2635, %v2637
  %v2639 = vrot.slane %v2631, %v2638
  %v2640 = vcombine.high %v2639, %v2639
  %v2642 = vunpack.c.l.s4 1966171168
  %v2643 = vunpack.c.0.s8 %v2642
  %v2644 = vlaneseq
  %v2645 = vshrl.u32 %v2644, 7
  %v2646 = vsub.s32 %v2643, %v2645
  %v2647 = vrot.slane %v2639, %v2646
  %v2649 = vunpack.c.l.s4 1966171168
  %v2650 = vunpack.c.0.s8 %v2649
  %v2651 = vlaneseq
  %v2652 = vshrl.u32 %v2651, 7
  %v2653 = vsub.s32 %v2650, %v2652
  %v2654 = vrot.slane %v2640, %v2653
  %v2657 = vsel %vm149, %v2654, 0
  %2659 = vmatprep.subr.bf16.mxu0 0
  %2660 = vmatpush1.bf16.msra.mxu0 %v138
  %2661 = vmatprep.subr.bf16.mxu0 0
  %2662 = vmatpush1.bf16.msra.mxu0 %v137
  %2663 = vmatprep.subr.bf16.mxu0 0
  %2664 = vmatpush1.bf16.msra.mxu0 %v136
  %2665 = vmatprep.subr.bf16.mxu0 0
  %2666 = vmatpush1.bf16.msra.mxu0 %v135
  %2667 = vmatprep.subr.bf16.mxu0 0
  %2668 = vmatpush1.bf16.msra.mxu0 %v134
  %2669 = vmatprep.subr.bf16.mxu0 0
  %2670 = vmatpush1.bf16.msra.mxu0 %v133
  %2671 = vmatprep.subr.bf16.mxu0 0
  %2672 = vmatpush1.bf16.msra.mxu0 %v132
  %2673 = vmatprep.subr.bf16.mxu0 0
  %2674 = vmatpush1.bf16.msra.mxu0 %v131
  %2675 = vmatprep.subr.bf16.mxu0 0
  %2676 = vmatpush2.bf16.msra.mxu0 0
  %2677 = vmatprep.subr.bf16.mxu0 0
  %2678 = vmatpush2.bf16.msra.mxu0 0
  %2679 = vmatprep.subr.bf16.mxu0 0
  %2680 = vmatpush2.bf16.msra.mxu0 0
  %2681 = vmatprep.subr.bf16.mxu0 0
  %2682 = vmatpush2.bf16.msra.mxu0 0
  %2683 = vmatprep.subr.bf16.mxu0 0
  %2684 = vmatpush2.bf16.msra.mxu0 0
  %2685 = vmatprep.subr.bf16.mxu0 0
  %2686 = vmatpush2.bf16.msra.mxu0 0
  %2687 = vmatprep.subr.bf16.mxu0 0
  %2688 = vmatpush2.bf16.msra.mxu0 0
  %2689 = vmatprep.subr.bf16.mxu0 0
  %2690 = vmatpush2.bf16.msra.mxu0 %v139
  %2691 = vmatprep.mubr.bf16.mxu0 %v2657
  %2692 = vmatmul.mubr.bf16.gmra.mxu0 %v2647
  %v2693 = vpop.f32.mrf.mxu0
  %v2694 = vadd.f32 %v69, %v2693
  %v2695 = vpop.f32.mrf.mxu0
  %v2696 = vpop.f32.mrf.mxu0
  %v2697 = vpop.f32.mrf.mxu0
  %2698 = vdwg.mxu0
  %v2699 = vmax.f32 %v2694, 0.0
  %v2700 = vpack.c.bf16 %v2699, %v2699
  %s2701 = scalar_lea.vmem %s3, 304
  %v2702 = vld [vmem:[%s2701] sm:$0xf]
  %v2703 = vld [vmem:[%s2701 + $0x4] sm:$0xf]
  %v2704 = vld [vmem:[%s2701 + $0x8] sm:$0xf]
  %v2705 = vld [vmem:[%s2701 + $0xc] sm:$0xf]
  %v2710 = vunpack.c.l.b16 %v2702
  %v2711 = vunpack.c.l.b16 %v2703
  %v2712 = vunpack.c.l.b16 %v2704
  %v2713 = vunpack.c.l.b16 %v2705
  %v2714 = vpack.c.b16 %v2711, %v2710
  %v2715 = vpack.c.b16 %v2713, %v2712
  %v2719 = vsel %vm287, %v2700, 0
  %2721 = vmatprep.subr.bf16.mxu0 0
  %2722 = vmatpush1.bf16.msra.mxu0 0
  %2723 = vmatprep.subr.bf16.mxu0 0
  %2724 = vmatpush1.bf16.msra.mxu0 0
  %2725 = vmatprep.subr.bf16.mxu0 0
  %2726 = vmatpush1.bf16.msra.mxu0 0
  %2727 = vmatprep.subr.bf16.mxu0 0
  %2728 = vmatpush1.bf16.msra.mxu0 0
  %2729 = vmatprep.subr.bf16.mxu0 0
  %2730 = vmatpush1.bf16.msra.mxu0 0
  %2731 = vmatprep.subr.bf16.mxu0 0
  %2732 = vmatpush1.bf16.msra.mxu0 0
  %2733 = vmatprep.subr.bf16.mxu0 0
  %2734 = vmatpush1.bf16.msra.mxu0 %v2715
  %2735 = vmatprep.subr.bf16.mxu0 0
  %2736 = vmatpush1.bf16.msra.mxu0 %v2714
  %2737 = vmatprep.subr.bf16.mxu0 0
  %2738 = vmatpush2.bf16.msra.mxu0 0
  %2739 = vmatprep.subr.bf16.mxu0 0
  %2740 = vmatpush2.bf16.msra.mxu0 0
  %2741 = vmatprep.subr.bf16.mxu0 0
  %2742 = vmatpush2.bf16.msra.mxu0 0
  %2743 = vmatprep.subr.bf16.mxu0 0
  %2744 = vmatpush2.bf16.msra.mxu0 0
  %2745 = vmatprep.subr.bf16.mxu0 0
  %2746 = vmatpush2.bf16.msra.mxu0 0
  %2747 = vmatprep.subr.bf16.mxu0 0
  %2748 = vmatpush2.bf16.msra.mxu0 0
  %2749 = vmatprep.subr.bf16.mxu0 0
  %2750 = vmatpush2.bf16.msra.mxu0 0
  %2751 = vmatprep.subr.bf16.mxu0 0
  %2752 = vmatpush2.bf16.msra.mxu0 0
  %2753 = vmatprep.mubr.bf16.mxu0 0
  %2754 = vmatmul.mubr.bf16.gmra.mxu0 %v2719
  %v2755 = vpop.f32.mrf.mxu0
  %v2756 = vadd.f32 0.0, %v2755
  %v2757 = vpop.f32.mrf.mxu0
  %v2758 = vpop.f32.mrf.mxu0
  %v2759 = vpop.f32.mrf.mxu0
  %2760 = vdwg.mxu0
  %v2761 = vadd.f32 %v2629, %v2756
  %s2762 = scalar_lea.vmem %s0, 40
  %v2763 = vld [vmem:[%s2762] sm:$0x3]
  %v2766 = vunpack.c.l.s4 1966171168
  %v2767 = vunpack.c.0.s8 %v2766
  %v2768 = vlaneseq
  %v2769 = vshrl.u32 %v2768, 7
  %v2770 = vsub.s32 %v2767, %v2769
  %v2771 = vrot.slane %v2763, %v2770
  %v2772 = vcombine.high %v2771, %v2771
  %v2774 = vunpack.c.l.s4 1966171168
  %v2775 = vunpack.c.0.s8 %v2774
  %v2776 = vlaneseq
  %v2777 = vshrl.u32 %v2776, 7
  %v2778 = vsub.s32 %v2775, %v2777
  %v2779 = vrot.slane %v2771, %v2778
  %v2781 = vunpack.c.l.s4 1966171168
  %v2782 = vunpack.c.0.s8 %v2781
  %v2783 = vlaneseq
  %v2784 = vshrl.u32 %v2783, 7
  %v2785 = vsub.s32 %v2782, %v2784
  %v2786 = vrot.slane %v2772, %v2785
  %v2789 = vsel %vm149, %v2786, 0
  %2791 = vmatprep.subr.bf16.mxu0 0
  %2792 = vmatpush1.bf16.msra.mxu0 %v138
  %2793 = vmatprep.subr.bf16.mxu0 0
  %2794 = vmatpush1.bf16.msra.mxu0 %v137
  %2795 = vmatprep.subr.bf16.mxu0 0
  %2796 = vmatpush1.bf16.msra.mxu0 %v136
  %2797 = vmatprep.subr.bf16.mxu0 0
  %2798 = vmatpush1.bf16.msra.mxu0 %v135
  %2799 = vmatprep.subr.bf16.mxu0 0
  %2800 = vmatpush1.bf16.msra.mxu0 %v134
  %2801 = vmatprep.subr.bf16.mxu0 0
  %2802 = vmatpush1.bf16.msra.mxu0 %v133
  %2803 = vmatprep.subr.bf16.mxu0 0
  %2804 = vmatpush1.bf16.msra.mxu0 %v132
  %2805 = vmatprep.subr.bf16.mxu0 0
  %2806 = vmatpush1.bf16.msra.mxu0 %v131
  %2807 = vmatprep.subr.bf16.mxu0 0
  %2808 = vmatpush2.bf16.msra.mxu0 0
  %2809 = vmatprep.subr.bf16.mxu0 0
  %2810 = vmatpush2.bf16.msra.mxu0 0
  %2811 = vmatprep.subr.bf16.mxu0 0
  %2812 = vmatpush2.bf16.msra.mxu0 0
  %2813 = vmatprep.subr.bf16.mxu0 0
  %2814 = vmatpush2.bf16.msra.mxu0 0
  %2815 = vmatprep.subr.bf16.mxu0 0
  %2816 = vmatpush2.bf16.msra.mxu0 0
  %2817 = vmatprep.subr.bf16.mxu0 0
  %2818 = vmatpush2.bf16.msra.mxu0 0
  %2819 = vmatprep.subr.bf16.mxu0 0
  %2820 = vmatpush2.bf16.msra.mxu0 0
  %2821 = vmatprep.subr.bf16.mxu0 0
  %2822 = vmatpush2.bf16.msra.mxu0 %v139
  %2823 = vmatprep.mubr.bf16.mxu0 %v2789
  %2824 = vmatmul.mubr.bf16.gmra.mxu0 %v2779
  %v2825 = vpop.f32.mrf.mxu0
  %v2826 = vadd.f32 %v69, %v2825
  %v2827 = vpop.f32.mrf.mxu0
  %v2828 = vpop.f32.mrf.mxu0
  %v2829 = vpop.f32.mrf.mxu0
  %2830 = vdwg.mxu0
  %v2831 = vmax.f32 %v2826, 0.0
  %v2832 = vpack.c.bf16 %v2831, %v2831
  %s2833 = scalar_lea.vmem %s3, 320
  %v2834 = vld [vmem:[%s2833] sm:$0xf]
  %v2835 = vld [vmem:[%s2833 + $0x4] sm:$0xf]
  %v2836 = vld [vmem:[%s2833 + $0x8] sm:$0xf]
  %v2837 = vld [vmem:[%s2833 + $0xc] sm:$0xf]
  %v2842 = vunpack.c.l.b16 %v2834
  %v2843 = vunpack.c.l.b16 %v2835
  %v2844 = vunpack.c.l.b16 %v2836
  %v2845 = vunpack.c.l.b16 %v2837
  %v2846 = vpack.c.b16 %v2843, %v2842
  %v2847 = vpack.c.b16 %v2845, %v2844
  %v2851 = vsel %vm287, %v2832, 0
  %2853 = vmatprep.subr.bf16.mxu0 0
  %2854 = vmatpush1.bf16.msra.mxu0 0
  %2855 = vmatprep.subr.bf16.mxu0 0
  %2856 = vmatpush1.bf16.msra.mxu0 0
  %2857 = vmatprep.subr.bf16.mxu0 0
  %2858 = vmatpush1.bf16.msra.mxu0 0
  %2859 = vmatprep.subr.bf16.mxu0 0
  %2860 = vmatpush1.bf16.msra.mxu0 0
  %2861 = vmatprep.subr.bf16.mxu0 0
  %2862 = vmatpush1.bf16.msra.mxu0 0
  %2863 = vmatprep.subr.bf16.mxu0 0
  %2864 = vmatpush1.bf16.msra.mxu0 0
  %2865 = vmatprep.subr.bf16.mxu0 0
  %2866 = vmatpush1.bf16.msra.mxu0 %v2847
  %2867 = vmatprep.subr.bf16.mxu0 0
  %2868 = vmatpush1.bf16.msra.mxu0 %v2846
  %2869 = vmatprep.subr.bf16.mxu0 0
  %2870 = vmatpush2.bf16.msra.mxu0 0
  %2871 = vmatprep.subr.bf16.mxu0 0
  %2872 = vmatpush2.bf16.msra.mxu0 0
  %2873 = vmatprep.subr.bf16.mxu0 0
  %2874 = vmatpush2.bf16.msra.mxu0 0
  %2875 = vmatprep.subr.bf16.mxu0 0
  %2876 = vmatpush2.bf16.msra.mxu0 0
  %2877 = vmatprep.subr.bf16.mxu0 0
  %2878 = vmatpush2.bf16.msra.mxu0 0
  %2879 = vmatprep.subr.bf16.mxu0 0
  %2880 = vmatpush2.bf16.msra.mxu0 0
  %2881 = vmatprep.subr.bf16.mxu0 0
  %2882 = vmatpush2.bf16.msra.mxu0 0
  %2883 = vmatprep.subr.bf16.mxu0 0
  %2884 = vmatpush2.bf16.msra.mxu0 0
  %2885 = vmatprep.mubr.bf16.mxu0 0
  %2886 = vmatmul.mubr.bf16.gmra.mxu0 %v2851
  %v2887 = vpop.f32.mrf.mxu0
  %v2888 = vadd.f32 0.0, %v2887
  %v2889 = vpop.f32.mrf.mxu0
  %v2890 = vpop.f32.mrf.mxu0
  %v2891 = vpop.f32.mrf.mxu0
  %2892 = vdwg.mxu0
  %v2893 = vadd.f32 %v2761, %v2888
  %s2894 = scalar_lea.vmem %s0, 42
  %v2895 = vld [vmem:[%s2894] sm:$0x3]
  %v2898 = vunpack.c.l.s4 1966171168
  %v2899 = vunpack.c.0.s8 %v2898
  %v2900 = vlaneseq
  %v2901 = vshrl.u32 %v2900, 7
  %v2902 = vsub.s32 %v2899, %v2901
  %v2903 = vrot.slane %v2895, %v2902
  %v2904 = vcombine.high %v2903, %v2903
  %v2906 = vunpack.c.l.s4 1966171168
  %v2907 = vunpack.c.0.s8 %v2906
  %v2908 = vlaneseq
  %v2909 = vshrl.u32 %v2908, 7
  %v2910 = vsub.s32 %v2907, %v2909
  %v2911 = vrot.slane %v2903, %v2910
  %v2913 = vunpack.c.l.s4 1966171168
  %v2914 = vunpack.c.0.s8 %v2913
  %v2915 = vlaneseq
  %v2916 = vshrl.u32 %v2915, 7
  %v2917 = vsub.s32 %v2914, %v2916
  %v2918 = vrot.slane %v2904, %v2917
  %v2921 = vsel %vm149, %v2918, 0
  %2923 = vmatprep.subr.bf16.mxu0 0
  %2924 = vmatpush1.bf16.msra.mxu0 %v138
  %2925 = vmatprep.subr.bf16.mxu0 0
  %2926 = vmatpush1.bf16.msra.mxu0 %v137
  %2927 = vmatprep.subr.bf16.mxu0 0
  %2928 = vmatpush1.bf16.msra.mxu0 %v136
  %2929 = vmatprep.subr.bf16.mxu0 0
  %2930 = vmatpush1.bf16.msra.mxu0 %v135
  %2931 = vmatprep.subr.bf16.mxu0 0
  %2932 = vmatpush1.bf16.msra.mxu0 %v134
  %2933 = vmatprep.subr.bf16.mxu0 0
  %2934 = vmatpush1.bf16.msra.mxu0 %v133
  %2935 = vmatprep.subr.bf16.mxu0 0
  %2936 = vmatpush1.bf16.msra.mxu0 %v132
  %2937 = vmatprep.subr.bf16.mxu0 0
  %2938 = vmatpush1.bf16.msra.mxu0 %v131
  %2939 = vmatprep.subr.bf16.mxu0 0
  %2940 = vmatpush2.bf16.msra.mxu0 0
  %2941 = vmatprep.subr.bf16.mxu0 0
  %2942 = vmatpush2.bf16.msra.mxu0 0
  %2943 = vmatprep.subr.bf16.mxu0 0
  %2944 = vmatpush2.bf16.msra.mxu0 0
  %2945 = vmatprep.subr.bf16.mxu0 0
  %2946 = vmatpush2.bf16.msra.mxu0 0
  %2947 = vmatprep.subr.bf16.mxu0 0
  %2948 = vmatpush2.bf16.msra.mxu0 0
  %2949 = vmatprep.subr.bf16.mxu0 0
  %2950 = vmatpush2.bf16.msra.mxu0 0
  %2951 = vmatprep.subr.bf16.mxu0 0
  %2952 = vmatpush2.bf16.msra.mxu0 0
  %2953 = vmatprep.subr.bf16.mxu0 0
  %2954 = vmatpush2.bf16.msra.mxu0 %v139
  %2955 = vmatprep.mubr.bf16.mxu0 %v2921
  %2956 = vmatmul.mubr.bf16.gmra.mxu0 %v2911
  %v2957 = vpop.f32.mrf.mxu0
  %v2958 = vadd.f32 %v69, %v2957
  %v2959 = vpop.f32.mrf.mxu0
  %v2960 = vpop.f32.mrf.mxu0
  %v2961 = vpop.f32.mrf.mxu0
  %2962 = vdwg.mxu0
  %v2963 = vmax.f32 %v2958, 0.0
  %v2964 = vpack.c.bf16 %v2963, %v2963
  %s2965 = scalar_lea.vmem %s3, 336
  %v2966 = vld [vmem:[%s2965] sm:$0xf]
  %v2967 = vld [vmem:[%s2965 + $0x4] sm:$0xf]
  %v2968 = vld [vmem:[%s2965 + $0x8] sm:$0xf]
  %v2969 = vld [vmem:[%s2965 + $0xc] sm:$0xf]
  %v2974 = vunpack.c.l.b16 %v2966
  %v2975 = vunpack.c.l.b16 %v2967
  %v2976 = vunpack.c.l.b16 %v2968
  %v2977 = vunpack.c.l.b16 %v2969
  %v2978 = vpack.c.b16 %v2975, %v2974
  %v2979 = vpack.c.b16 %v2977, %v2976
  %v2983 = vsel %vm287, %v2964, 0
  %2985 = vmatprep.subr.bf16.mxu0 0
  %2986 = vmatpush1.bf16.msra.mxu0 0
  %2987 = vmatprep.subr.bf16.mxu0 0
  %2988 = vmatpush1.bf16.msra.mxu0 0
  %2989 = vmatprep.subr.bf16.mxu0 0
  %2990 = vmatpush1.bf16.msra.mxu0 0
  %2991 = vmatprep.subr.bf16.mxu0 0
  %2992 = vmatpush1.bf16.msra.mxu0 0
  %2993 = vmatprep.subr.bf16.mxu0 0
  %2994 = vmatpush1.bf16.msra.mxu0 0
  %2995 = vmatprep.subr.bf16.mxu0 0
  %2996 = vmatpush1.bf16.msra.mxu0 0
  %2997 = vmatprep.subr.bf16.mxu0 0
  %2998 = vmatpush1.bf16.msra.mxu0 %v2979
  %2999 = vmatprep.subr.bf16.mxu0 0
  %3000 = vmatpush1.bf16.msra.mxu0 %v2978
  %3001 = vmatprep.subr.bf16.mxu0 0
  %3002 = vmatpush2.bf16.msra.mxu0 0
  %3003 = vmatprep.subr.bf16.mxu0 0
  %3004 = vmatpush2.bf16.msra.mxu0 0
  %3005 = vmatprep.subr.bf16.mxu0 0
  %3006 = vmatpush2.bf16.msra.mxu0 0
  %3007 = vmatprep.subr.bf16.mxu0 0
  %3008 = vmatpush2.bf16.msra.mxu0 0
  %3009 = vmatprep.subr.bf16.mxu0 0
  %3010 = vmatpush2.bf16.msra.mxu0 0
  %3011 = vmatprep.subr.bf16.mxu0 0
  %3012 = vmatpush2.bf16.msra.mxu0 0
  %3013 = vmatprep.subr.bf16.mxu0 0
  %3014 = vmatpush2.bf16.msra.mxu0 0
  %3015 = vmatprep.subr.bf16.mxu0 0
  %3016 = vmatpush2.bf16.msra.mxu0 0
  %3017 = vmatprep.mubr.bf16.mxu0 0
  %3018 = vmatmul.mubr.bf16.gmra.mxu0 %v2983
  %v3019 = vpop.f32.mrf.mxu0
  %v3020 = vadd.f32 0.0, %v3019
  %v3021 = vpop.f32.mrf.mxu0
  %v3022 = vpop.f32.mrf.mxu0
  %v3023 = vpop.f32.mrf.mxu0
  %3024 = vdwg.mxu0
  %v3025 = vadd.f32 %v2893, %v3020
  %s3026 = scalar_lea.vmem %s0, 44
  %v3027 = vld [vmem:[%s3026] sm:$0x3]
  %v3030 = vunpack.c.l.s4 1966171168
  %v3031 = vunpack.c.0.s8 %v3030
  %v3032 = vlaneseq
  %v3033 = vshrl.u32 %v3032, 7
  %v3034 = vsub.s32 %v3031, %v3033
  %v3035 = vrot.slane %v3027, %v3034
  %v3036 = vcombine.high %v3035, %v3035
  %v3038 = vunpack.c.l.s4 1966171168
  %v3039 = vunpack.c.0.s8 %v3038
  %v3040 = vlaneseq
  %v3041 = vshrl.u32 %v3040, 7
  %v3042 = vsub.s32 %v3039, %v3041
  %v3043 = vrot.slane %v3035, %v3042
  %v3045 = vunpack.c.l.s4 1966171168
  %v3046 = vunpack.c.0.s8 %v3045
  %v3047 = vlaneseq
  %v3048 = vshrl.u32 %v3047, 7
  %v3049 = vsub.s32 %v3046, %v3048
  %v3050 = vrot.slane %v3036, %v3049
  %v3053 = vsel %vm149, %v3050, 0
  %3055 = vmatprep.subr.bf16.mxu0 0
  %3056 = vmatpush1.bf16.msra.mxu0 %v138
  %3057 = vmatprep.subr.bf16.mxu0 0
  %3058 = vmatpush1.bf16.msra.mxu0 %v137
  %3059 = vmatprep.subr.bf16.mxu0 0
  %3060 = vmatpush1.bf16.msra.mxu0 %v136
  %3061 = vmatprep.subr.bf16.mxu0 0
  %3062 = vmatpush1.bf16.msra.mxu0 %v135
  %3063 = vmatprep.subr.bf16.mxu0 0
  %3064 = vmatpush1.bf16.msra.mxu0 %v134
  %3065 = vmatprep.subr.bf16.mxu0 0
  %3066 = vmatpush1.bf16.msra.mxu0 %v133
  %3067 = vmatprep.subr.bf16.mxu0 0
  %3068 = vmatpush1.bf16.msra.mxu0 %v132
  %3069 = vmatprep.subr.bf16.mxu0 0
  %3070 = vmatpush1.bf16.msra.mxu0 %v131
  %3071 = vmatprep.subr.bf16.mxu0 0
  %3072 = vmatpush2.bf16.msra.mxu0 0
  %3073 = vmatprep.subr.bf16.mxu0 0
  %3074 = vmatpush2.bf16.msra.mxu0 0
  %3075 = vmatprep.subr.bf16.mxu0 0
  %3076 = vmatpush2.bf16.msra.mxu0 0
  %3077 = vmatprep.subr.bf16.mxu0 0
  %3078 = vmatpush2.bf16.msra.mxu0 0
  %3079 = vmatprep.subr.bf16.mxu0 0
  %3080 = vmatpush2.bf16.msra.mxu0 0
  %3081 = vmatprep.subr.bf16.mxu0 0
  %3082 = vmatpush2.bf16.msra.mxu0 0
  %3083 = vmatprep.subr.bf16.mxu0 0
  %3084 = vmatpush2.bf16.msra.mxu0 0
  %3085 = vmatprep.subr.bf16.mxu0 0
  %3086 = vmatpush2.bf16.msra.mxu0 %v139
  %3087 = vmatprep.mubr.bf16.mxu0 %v3053
  %3088 = vmatmul.mubr.bf16.gmra.mxu0 %v3043
  %v3089 = vpop.f32.mrf.mxu0
  %v3090 = vadd.f32 %v69, %v3089
  %v3091 = vpop.f32.mrf.mxu0
  %v3092 = vpop.f32.mrf.mxu0
  %v3093 = vpop.f32.mrf.mxu0
  %3094 = vdwg.mxu0
  %v3095 = vmax.f32 %v3090, 0.0
  %v3096 = vpack.c.bf16 %v3095, %v3095
  %s3097 = scalar_lea.vmem %s3, 352
  %v3098 = vld [vmem:[%s3097] sm:$0xf]
  %v3099 = vld [vmem:[%s3097 + $0x4] sm:$0xf]
  %v3100 = vld [vmem:[%s3097 + $0x8] sm:$0xf]
  %v3101 = vld [vmem:[%s3097 + $0xc] sm:$0xf]
  %v3106 = vunpack.c.l.b16 %v3098
  %v3107 = vunpack.c.l.b16 %v3099
  %v3108 = vunpack.c.l.b16 %v3100
  %v3109 = vunpack.c.l.b16 %v3101
  %v3110 = vpack.c.b16 %v3107, %v3106
  %v3111 = vpack.c.b16 %v3109, %v3108
  %v3115 = vsel %vm287, %v3096, 0
  %3117 = vmatprep.subr.bf16.mxu0 0
  %3118 = vmatpush1.bf16.msra.mxu0 0
  %3119 = vmatprep.subr.bf16.mxu0 0
  %3120 = vmatpush1.bf16.msra.mxu0 0
  %3121 = vmatprep.subr.bf16.mxu0 0
  %3122 = vmatpush1.bf16.msra.mxu0 0
  %3123 = vmatprep.subr.bf16.mxu0 0
  %3124 = vmatpush1.bf16.msra.mxu0 0
  %3125 = vmatprep.subr.bf16.mxu0 0
  %3126 = vmatpush1.bf16.msra.mxu0 0
  %3127 = vmatprep.subr.bf16.mxu0 0
  %3128 = vmatpush1.bf16.msra.mxu0 0
  %3129 = vmatprep.subr.bf16.mxu0 0
  %3130 = vmatpush1.bf16.msra.mxu0 %v3111
  %3131 = vmatprep.subr.bf16.mxu0 0
  %3132 = vmatpush1.bf16.msra.mxu0 %v3110
  %3133 = vmatprep.subr.bf16.mxu0 0
  %3134 = vmatpush2.bf16.msra.mxu0 0
  %3135 = vmatprep.subr.bf16.mxu0 0
  %3136 = vmatpush2.bf16.msra.mxu0 0
  %3137 = vmatprep.subr.bf16.mxu0 0
  %3138 = vmatpush2.bf16.msra.mxu0 0
  %3139 = vmatprep.subr.bf16.mxu0 0
  %3140 = vmatpush2.bf16.msra.mxu0 0
  %3141 = vmatprep.subr.bf16.mxu0 0
  %3142 = vmatpush2.bf16.msra.mxu0 0
  %3143 = vmatprep.subr.bf16.mxu0 0
  %3144 = vmatpush2.bf16.msra.mxu0 0
  %3145 = vmatprep.subr.bf16.mxu0 0
  %3146 = vmatpush2.bf16.msra.mxu0 0
  %3147 = vmatprep.subr.bf16.mxu0 0
  %3148 = vmatpush2.bf16.msra.mxu0 0
  %3149 = vmatprep.mubr.bf16.mxu0 0
  %3150 = vmatmul.mubr.bf16.gmra.mxu0 %v3115
  %v3151 = vpop.f32.mrf.mxu0
  %v3152 = vadd.f32 0.0, %v3151
  %v3153 = vpop.f32.mrf.mxu0
  %v3154 = vpop.f32.mrf.mxu0
  %v3155 = vpop.f32.mrf.mxu0
  %3156 = vdwg.mxu0
  %v3157 = vadd.f32 %v3025, %v3152
  %s3158 = scalar_lea.vmem %s0, 46
  %v3159 = vld [vmem:[%s3158] sm:$0x3]
  %v3162 = vunpack.c.l.s4 1966171168
  %v3163 = vunpack.c.0.s8 %v3162
  %v3164 = vlaneseq
  %v3165 = vshrl.u32 %v3164, 7
  %v3166 = vsub.s32 %v3163, %v3165
  %v3167 = vrot.slane %v3159, %v3166
  %v3168 = vcombine.high %v3167, %v3167
  %v3170 = vunpack.c.l.s4 1966171168
  %v3171 = vunpack.c.0.s8 %v3170
  %v3172 = vlaneseq
  %v3173 = vshrl.u32 %v3172, 7
  %v3174 = vsub.s32 %v3171, %v3173
  %v3175 = vrot.slane %v3167, %v3174
  %v3177 = vunpack.c.l.s4 1966171168
  %v3178 = vunpack.c.0.s8 %v3177
  %v3179 = vlaneseq
  %v3180 = vshrl.u32 %v3179, 7
  %v3181 = vsub.s32 %v3178, %v3180
  %v3182 = vrot.slane %v3168, %v3181
  %v3185 = vsel %vm149, %v3182, 0
  %3187 = vmatprep.subr.bf16.mxu0 0
  %3188 = vmatpush1.bf16.msra.mxu0 %v138
  %3189 = vmatprep.subr.bf16.mxu0 0
  %3190 = vmatpush1.bf16.msra.mxu0 %v137
  %3191 = vmatprep.subr.bf16.mxu0 0
  %3192 = vmatpush1.bf16.msra.mxu0 %v136
  %3193 = vmatprep.subr.bf16.mxu0 0
  %3194 = vmatpush1.bf16.msra.mxu0 %v135
  %3195 = vmatprep.subr.bf16.mxu0 0
  %3196 = vmatpush1.bf16.msra.mxu0 %v134
  %3197 = vmatprep.subr.bf16.mxu0 0
  %3198 = vmatpush1.bf16.msra.mxu0 %v133
  %3199 = vmatprep.subr.bf16.mxu0 0
  %3200 = vmatpush1.bf16.msra.mxu0 %v132
  %3201 = vmatprep.subr.bf16.mxu0 0
  %3202 = vmatpush1.bf16.msra.mxu0 %v131
  %3203 = vmatprep.subr.bf16.mxu0 0
  %3204 = vmatpush2.bf16.msra.mxu0 0
  %3205 = vmatprep.subr.bf16.mxu0 0
  %3206 = vmatpush2.bf16.msra.mxu0 0
  %3207 = vmatprep.subr.bf16.mxu0 0
  %3208 = vmatpush2.bf16.msra.mxu0 0
  %3209 = vmatprep.subr.bf16.mxu0 0
  %3210 = vmatpush2.bf16.msra.mxu0 0
  %3211 = vmatprep.subr.bf16.mxu0 0
  %3212 = vmatpush2.bf16.msra.mxu0 0
  %3213 = vmatprep.subr.bf16.mxu0 0
  %3214 = vmatpush2.bf16.msra.mxu0 0
  %3215 = vmatprep.subr.bf16.mxu0 0
  %3216 = vmatpush2.bf16.msra.mxu0 0
  %3217 = vmatprep.subr.bf16.mxu0 0
  %3218 = vmatpush2.bf16.msra.mxu0 %v139
  %3219 = vmatprep.mubr.bf16.mxu0 %v3185
  %3220 = vmatmul.mubr.bf16.gmra.mxu0 %v3175
  %v3221 = vpop.f32.mrf.mxu0
  %v3222 = vadd.f32 %v69, %v3221
  %v3223 = vpop.f32.mrf.mxu0
  %v3224 = vpop.f32.mrf.mxu0
  %v3225 = vpop.f32.mrf.mxu0
  %3226 = vdwg.mxu0
  %v3227 = vmax.f32 %v3222, 0.0
  %v3228 = vpack.c.bf16 %v3227, %v3227
  %s3229 = scalar_lea.vmem %s3, 368
  %v3230 = vld [vmem:[%s3229] sm:$0xf]
  %v3231 = vld [vmem:[%s3229 + $0x4] sm:$0xf]
  %v3232 = vld [vmem:[%s3229 + $0x8] sm:$0xf]
  %v3233 = vld [vmem:[%s3229 + $0xc] sm:$0xf]
  %v3238 = vunpack.c.l.b16 %v3230
  %v3239 = vunpack.c.l.b16 %v3231
  %v3240 = vunpack.c.l.b16 %v3232
  %v3241 = vunpack.c.l.b16 %v3233
  %v3242 = vpack.c.b16 %v3239, %v3238
  %v3243 = vpack.c.b16 %v3241, %v3240
  %v3247 = vsel %vm287, %v3228, 0
  %3249 = vmatprep.subr.bf16.mxu0 0
  %3250 = vmatpush1.bf16.msra.mxu0 0
  %3251 = vmatprep.subr.bf16.mxu0 0
  %3252 = vmatpush1.bf16.msra.mxu0 0
  %3253 = vmatprep.subr.bf16.mxu0 0
  %3254 = vmatpush1.bf16.msra.mxu0 0
  %3255 = vmatprep.subr.bf16.mxu0 0
  %3256 = vmatpush1.bf16.msra.mxu0 0
  %3257 = vmatprep.subr.bf16.mxu0 0
  %3258 = vmatpush1.bf16.msra.mxu0 0
  %3259 = vmatprep.subr.bf16.mxu0 0
  %3260 = vmatpush1.bf16.msra.mxu0 0
  %3261 = vmatprep.subr.bf16.mxu0 0
  %3262 = vmatpush1.bf16.msra.mxu0 %v3243
  %3263 = vmatprep.subr.bf16.mxu0 0
  %3264 = vmatpush1.bf16.msra.mxu0 %v3242
  %3265 = vmatprep.subr.bf16.mxu0 0
  %3266 = vmatpush2.bf16.msra.mxu0 0
  %3267 = vmatprep.subr.bf16.mxu0 0
  %3268 = vmatpush2.bf16.msra.mxu0 0
  %3269 = vmatprep.subr.bf16.mxu0 0
  %3270 = vmatpush2.bf16.msra.mxu0 0
  %3271 = vmatprep.subr.bf16.mxu0 0
  %3272 = vmatpush2.bf16.msra.mxu0 0
  %3273 = vmatprep.subr.bf16.mxu0 0
  %3274 = vmatpush2.bf16.msra.mxu0 0
  %3275 = vmatprep.subr.bf16.mxu0 0
  %3276 = vmatpush2.bf16.msra.mxu0 0
  %3277 = vmatprep.subr.bf16.mxu0 0
  %3278 = vmatpush2.bf16.msra.mxu0 0
  %3279 = vmatprep.subr.bf16.mxu0 0
  %3280 = vmatpush2.bf16.msra.mxu0 0
  %3281 = vmatprep.mubr.bf16.mxu0 0
  %3282 = vmatmul.mubr.bf16.gmra.mxu0 %v3247
  %v3283 = vpop.f32.mrf.mxu0
  %v3284 = vadd.f32 0.0, %v3283
  %v3285 = vpop.f32.mrf.mxu0
  %v3286 = vpop.f32.mrf.mxu0
  %v3287 = vpop.f32.mrf.mxu0
  %3288 = vdwg.mxu0
  %v3289 = vadd.f32 %v3157, %v3284
  %s3290 = scalar_lea.vmem %s0, 48
  %v3291 = vld [vmem:[%s3290] sm:$0x3]
  %v3294 = vunpack.c.l.s4 1966171168
  %v3295 = vunpack.c.0.s8 %v3294
  %v3296 = vlaneseq
  %v3297 = vshrl.u32 %v3296, 7
  %v3298 = vsub.s32 %v3295, %v3297
  %v3299 = vrot.slane %v3291, %v3298
  %v3300 = vcombine.high %v3299, %v3299
  %v3302 = vunpack.c.l.s4 1966171168
  %v3303 = vunpack.c.0.s8 %v3302
  %v3304 = vlaneseq
  %v3305 = vshrl.u32 %v3304, 7
  %v3306 = vsub.s32 %v3303, %v3305
  %v3307 = vrot.slane %v3299, %v3306
  %v3309 = vunpack.c.l.s4 1966171168
  %v3310 = vunpack.c.0.s8 %v3309
  %v3311 = vlaneseq
  %v3312 = vshrl.u32 %v3311, 7
  %v3313 = vsub.s32 %v3310, %v3312
  %v3314 = vrot.slane %v3300, %v3313
  %v3317 = vsel %vm149, %v3314, 0
  %3319 = vmatprep.subr.bf16.mxu0 0
  %3320 = vmatpush1.bf16.msra.mxu0 %v138
  %3321 = vmatprep.subr.bf16.mxu0 0
  %3322 = vmatpush1.bf16.msra.mxu0 %v137
  %3323 = vmatprep.subr.bf16.mxu0 0
  %3324 = vmatpush1.bf16.msra.mxu0 %v136
  %3325 = vmatprep.subr.bf16.mxu0 0
  %3326 = vmatpush1.bf16.msra.mxu0 %v135
  %3327 = vmatprep.subr.bf16.mxu0 0
  %3328 = vmatpush1.bf16.msra.mxu0 %v134
  %3329 = vmatprep.subr.bf16.mxu0 0
  %3330 = vmatpush1.bf16.msra.mxu0 %v133
  %3331 = vmatprep.subr.bf16.mxu0 0
  %3332 = vmatpush1.bf16.msra.mxu0 %v132
  %3333 = vmatprep.subr.bf16.mxu0 0
  %3334 = vmatpush1.bf16.msra.mxu0 %v131
  %3335 = vmatprep.subr.bf16.mxu0 0
  %3336 = vmatpush2.bf16.msra.mxu0 0
  %3337 = vmatprep.subr.bf16.mxu0 0
  %3338 = vmatpush2.bf16.msra.mxu0 0
  %3339 = vmatprep.subr.bf16.mxu0 0
  %3340 = vmatpush2.bf16.msra.mxu0 0
  %3341 = vmatprep.subr.bf16.mxu0 0
  %3342 = vmatpush2.bf16.msra.mxu0 0
  %3343 = vmatprep.subr.bf16.mxu0 0
  %3344 = vmatpush2.bf16.msra.mxu0 0
  %3345 = vmatprep.subr.bf16.mxu0 0
  %3346 = vmatpush2.bf16.msra.mxu0 0
  %3347 = vmatprep.subr.bf16.mxu0 0
  %3348 = vmatpush2.bf16.msra.mxu0 0
  %3349 = vmatprep.subr.bf16.mxu0 0
  %3350 = vmatpush2.bf16.msra.mxu0 %v139
  %3351 = vmatprep.mubr.bf16.mxu0 %v3317
  %3352 = vmatmul.mubr.bf16.gmra.mxu0 %v3307
  %v3353 = vpop.f32.mrf.mxu0
  %v3354 = vadd.f32 %v69, %v3353
  %v3355 = vpop.f32.mrf.mxu0
  %v3356 = vpop.f32.mrf.mxu0
  %v3357 = vpop.f32.mrf.mxu0
  %3358 = vdwg.mxu0
  %v3359 = vmax.f32 %v3354, 0.0
  %v3360 = vpack.c.bf16 %v3359, %v3359
  %s3361 = scalar_lea.vmem %s3, 384
  %v3362 = vld [vmem:[%s3361] sm:$0xf]
  %v3363 = vld [vmem:[%s3361 + $0x4] sm:$0xf]
  %v3364 = vld [vmem:[%s3361 + $0x8] sm:$0xf]
  %v3365 = vld [vmem:[%s3361 + $0xc] sm:$0xf]
  %v3370 = vunpack.c.l.b16 %v3362
  %v3371 = vunpack.c.l.b16 %v3363
  %v3372 = vunpack.c.l.b16 %v3364
  %v3373 = vunpack.c.l.b16 %v3365
  %v3374 = vpack.c.b16 %v3371, %v3370
  %v3375 = vpack.c.b16 %v3373, %v3372
  %v3379 = vsel %vm287, %v3360, 0
  %3381 = vmatprep.subr.bf16.mxu0 0
  %3382 = vmatpush1.bf16.msra.mxu0 0
  %3383 = vmatprep.subr.bf16.mxu0 0
  %3384 = vmatpush1.bf16.msra.mxu0 0
  %3385 = vmatprep.subr.bf16.mxu0 0
  %3386 = vmatpush1.bf16.msra.mxu0 0
  %3387 = vmatprep.subr.bf16.mxu0 0
  %3388 = vmatpush1.bf16.msra.mxu0 0
  %3389 = vmatprep.subr.bf16.mxu0 0
  %3390 = vmatpush1.bf16.msra.mxu0 0
  %3391 = vmatprep.subr.bf16.mxu0 0
  %3392 = vmatpush1.bf16.msra.mxu0 0
  %3393 = vmatprep.subr.bf16.mxu0 0
  %3394 = vmatpush1.bf16.msra.mxu0 %v3375
  %3395 = vmatprep.subr.bf16.mxu0 0
  %3396 = vmatpush1.bf16.msra.mxu0 %v3374
  %3397 = vmatprep.subr.bf16.mxu0 0
  %3398 = vmatpush2.bf16.msra.mxu0 0
  %3399 = vmatprep.subr.bf16.mxu0 0
  %3400 = vmatpush2.bf16.msra.mxu0 0
  %3401 = vmatprep.subr.bf16.mxu0 0
  %3402 = vmatpush2.bf16.msra.mxu0 0
  %3403 = vmatprep.subr.bf16.mxu0 0
  %3404 = vmatpush2.bf16.msra.mxu0 0
  %3405 = vmatprep.subr.bf16.mxu0 0
  %3406 = vmatpush2.bf16.msra.mxu0 0
  %3407 = vmatprep.subr.bf16.mxu0 0
  %3408 = vmatpush2.bf16.msra.mxu0 0
  %3409 = vmatprep.subr.bf16.mxu0 0
  %3410 = vmatpush2.bf16.msra.mxu0 0
  %3411 = vmatprep.subr.bf16.mxu0 0
  %3412 = vmatpush2.bf16.msra.mxu0 0
  %3413 = vmatprep.mubr.bf16.mxu0 0
  %3414 = vmatmul.mubr.bf16.gmra.mxu0 %v3379
  %v3415 = vpop.f32.mrf.mxu0
  %v3416 = vadd.f32 0.0, %v3415
  %v3417 = vpop.f32.mrf.mxu0
  %v3418 = vpop.f32.mrf.mxu0
  %v3419 = vpop.f32.mrf.mxu0
  %3420 = vdwg.mxu0
  %v3421 = vadd.f32 %v3289, %v3416
  %s3422 = scalar_lea.vmem %s0, 50
  %v3423 = vld [vmem:[%s3422] sm:$0x3]
  %v3426 = vunpack.c.l.s4 1966171168
  %v3427 = vunpack.c.0.s8 %v3426
  %v3428 = vlaneseq
  %v3429 = vshrl.u32 %v3428, 7
  %v3430 = vsub.s32 %v3427, %v3429
  %v3431 = vrot.slane %v3423, %v3430
  %v3432 = vcombine.high %v3431, %v3431
  %v3434 = vunpack.c.l.s4 1966171168
  %v3435 = vunpack.c.0.s8 %v3434
  %v3436 = vlaneseq
  %v3437 = vshrl.u32 %v3436, 7
  %v3438 = vsub.s32 %v3435, %v3437
  %v3439 = vrot.slane %v3431, %v3438
  %v3441 = vunpack.c.l.s4 1966171168
  %v3442 = vunpack.c.0.s8 %v3441
  %v3443 = vlaneseq
  %v3444 = vshrl.u32 %v3443, 7
  %v3445 = vsub.s32 %v3442, %v3444
  %v3446 = vrot.slane %v3432, %v3445
  %v3449 = vsel %vm149, %v3446, 0
  %3451 = vmatprep.subr.bf16.mxu0 0
  %3452 = vmatpush1.bf16.msra.mxu0 %v138
  %3453 = vmatprep.subr.bf16.mxu0 0
  %3454 = vmatpush1.bf16.msra.mxu0 %v137
  %3455 = vmatprep.subr.bf16.mxu0 0
  %3456 = vmatpush1.bf16.msra.mxu0 %v136
  %3457 = vmatprep.subr.bf16.mxu0 0
  %3458 = vmatpush1.bf16.msra.mxu0 %v135
  %3459 = vmatprep.subr.bf16.mxu0 0
  %3460 = vmatpush1.bf16.msra.mxu0 %v134
  %3461 = vmatprep.subr.bf16.mxu0 0
  %3462 = vmatpush1.bf16.msra.mxu0 %v133
  %3463 = vmatprep.subr.bf16.mxu0 0
  %3464 = vmatpush1.bf16.msra.mxu0 %v132
  %3465 = vmatprep.subr.bf16.mxu0 0
  %3466 = vmatpush1.bf16.msra.mxu0 %v131
  %3467 = vmatprep.subr.bf16.mxu0 0
  %3468 = vmatpush2.bf16.msra.mxu0 0
  %3469 = vmatprep.subr.bf16.mxu0 0
  %3470 = vmatpush2.bf16.msra.mxu0 0
  %3471 = vmatprep.subr.bf16.mxu0 0
  %3472 = vmatpush2.bf16.msra.mxu0 0
  %3473 = vmatprep.subr.bf16.mxu0 0
  %3474 = vmatpush2.bf16.msra.mxu0 0
  %3475 = vmatprep.subr.bf16.mxu0 0
  %3476 = vmatpush2.bf16.msra.mxu0 0
  %3477 = vmatprep.subr.bf16.mxu0 0
  %3478 = vmatpush2.bf16.msra.mxu0 0
  %3479 = vmatprep.subr.bf16.mxu0 0
  %3480 = vmatpush2.bf16.msra.mxu0 0
  %3481 = vmatprep.subr.bf16.mxu0 0
  %3482 = vmatpush2.bf16.msra.mxu0 %v139
  %3483 = vmatprep.mubr.bf16.mxu0 %v3449
  %3484 = vmatmul.mubr.bf16.gmra.mxu0 %v3439
  %v3485 = vpop.f32.mrf.mxu0
  %v3486 = vadd.f32 %v69, %v3485
  %v3487 = vpop.f32.mrf.mxu0
  %v3488 = vpop.f32.mrf.mxu0
  %v3489 = vpop.f32.mrf.mxu0
  %3490 = vdwg.mxu0
  %v3491 = vmax.f32 %v3486, 0.0
  %v3492 = vpack.c.bf16 %v3491, %v3491
  %s3493 = scalar_lea.vmem %s3, 400
  %v3494 = vld [vmem:[%s3493] sm:$0xf]
  %v3495 = vld [vmem:[%s3493 + $0x4] sm:$0xf]
  %v3496 = vld [vmem:[%s3493 + $0x8] sm:$0xf]
  %v3497 = vld [vmem:[%s3493 + $0xc] sm:$0xf]
  %v3502 = vunpack.c.l.b16 %v3494
  %v3503 = vunpack.c.l.b16 %v3495
  %v3504 = vunpack.c.l.b16 %v3496
  %v3505 = vunpack.c.l.b16 %v3497
  %v3506 = vpack.c.b16 %v3503, %v3502
  %v3507 = vpack.c.b16 %v3505, %v3504
  %v3511 = vsel %vm287, %v3492, 0
  %3513 = vmatprep.subr.bf16.mxu0 0
  %3514 = vmatpush1.bf16.msra.mxu0 0
  %3515 = vmatprep.subr.bf16.mxu0 0
  %3516 = vmatpush1.bf16.msra.mxu0 0
  %3517 = vmatprep.subr.bf16.mxu0 0
  %3518 = vmatpush1.bf16.msra.mxu0 0
  %3519 = vmatprep.subr.bf16.mxu0 0
  %3520 = vmatpush1.bf16.msra.mxu0 0
  %3521 = vmatprep.subr.bf16.mxu0 0
  %3522 = vmatpush1.bf16.msra.mxu0 0
  %3523 = vmatprep.subr.bf16.mxu0 0
  %3524 = vmatpush1.bf16.msra.mxu0 0
  %3525 = vmatprep.subr.bf16.mxu0 0
  %3526 = vmatpush1.bf16.msra.mxu0 %v3507
  %3527 = vmatprep.subr.bf16.mxu0 0
  %3528 = vmatpush1.bf16.msra.mxu0 %v3506
  %3529 = vmatprep.subr.bf16.mxu0 0
  %3530 = vmatpush2.bf16.msra.mxu0 0
  %3531 = vmatprep.subr.bf16.mxu0 0
  %3532 = vmatpush2.bf16.msra.mxu0 0
  %3533 = vmatprep.subr.bf16.mxu0 0
  %3534 = vmatpush2.bf16.msra.mxu0 0
  %3535 = vmatprep.subr.bf16.mxu0 0
  %3536 = vmatpush2.bf16.msra.mxu0 0
  %3537 = vmatprep.subr.bf16.mxu0 0
  %3538 = vmatpush2.bf16.msra.mxu0 0
  %3539 = vmatprep.subr.bf16.mxu0 0
  %3540 = vmatpush2.bf16.msra.mxu0 0
  %3541 = vmatprep.subr.bf16.mxu0 0
  %3542 = vmatpush2.bf16.msra.mxu0 0
  %3543 = vmatprep.subr.bf16.mxu0 0
  %3544 = vmatpush2.bf16.msra.mxu0 0
  %3545 = vmatprep.mubr.bf16.mxu0 0
  %3546 = vmatmul.mubr.bf16.gmra.mxu0 %v3511
  %v3547 = vpop.f32.mrf.mxu0
  %v3548 = vadd.f32 0.0, %v3547
  %v3549 = vpop.f32.mrf.mxu0
  %v3550 = vpop.f32.mrf.mxu0
  %v3551 = vpop.f32.mrf.mxu0
  %3552 = vdwg.mxu0
  %v3553 = vadd.f32 %v3421, %v3548
  %s3554 = scalar_lea.vmem %s0, 52
  %v3555 = vld [vmem:[%s3554] sm:$0x3]
  %v3558 = vunpack.c.l.s4 1966171168
  %v3559 = vunpack.c.0.s8 %v3558
  %v3560 = vlaneseq
  %v3561 = vshrl.u32 %v3560, 7
  %v3562 = vsub.s32 %v3559, %v3561
  %v3563 = vrot.slane %v3555, %v3562
  %v3564 = vcombine.high %v3563, %v3563
  %v3566 = vunpack.c.l.s4 1966171168
  %v3567 = vunpack.c.0.s8 %v3566
  %v3568 = vlaneseq
  %v3569 = vshrl.u32 %v3568, 7
  %v3570 = vsub.s32 %v3567, %v3569
  %v3571 = vrot.slane %v3563, %v3570
  %v3573 = vunpack.c.l.s4 1966171168
  %v3574 = vunpack.c.0.s8 %v3573
  %v3575 = vlaneseq
  %v3576 = vshrl.u32 %v3575, 7
  %v3577 = vsub.s32 %v3574, %v3576
  %v3578 = vrot.slane %v3564, %v3577
  %v3581 = vsel %vm149, %v3578, 0
  %3583 = vmatprep.subr.bf16.mxu0 0
  %3584 = vmatpush1.bf16.msra.mxu0 %v138
  %3585 = vmatprep.subr.bf16.mxu0 0
  %3586 = vmatpush1.bf16.msra.mxu0 %v137
  %3587 = vmatprep.subr.bf16.mxu0 0
  %3588 = vmatpush1.bf16.msra.mxu0 %v136
  %3589 = vmatprep.subr.bf16.mxu0 0
  %3590 = vmatpush1.bf16.msra.mxu0 %v135
  %3591 = vmatprep.subr.bf16.mxu0 0
  %3592 = vmatpush1.bf16.msra.mxu0 %v134
  %3593 = vmatprep.subr.bf16.mxu0 0
  %3594 = vmatpush1.bf16.msra.mxu0 %v133
  %3595 = vmatprep.subr.bf16.mxu0 0
  %3596 = vmatpush1.bf16.msra.mxu0 %v132
  %3597 = vmatprep.subr.bf16.mxu0 0
  %3598 = vmatpush1.bf16.msra.mxu0 %v131
  %3599 = vmatprep.subr.bf16.mxu0 0
  %3600 = vmatpush2.bf16.msra.mxu0 0
  %3601 = vmatprep.subr.bf16.mxu0 0
  %3602 = vmatpush2.bf16.msra.mxu0 0
  %3603 = vmatprep.subr.bf16.mxu0 0
  %3604 = vmatpush2.bf16.msra.mxu0 0
  %3605 = vmatprep.subr.bf16.mxu0 0
  %3606 = vmatpush2.bf16.msra.mxu0 0
  %3607 = vmatprep.subr.bf16.mxu0 0
  %3608 = vmatpush2.bf16.msra.mxu0 0
  %3609 = vmatprep.subr.bf16.mxu0 0
  %3610 = vmatpush2.bf16.msra.mxu0 0
  %3611 = vmatprep.subr.bf16.mxu0 0
  %3612 = vmatpush2.bf16.msra.mxu0 0
  %3613 = vmatprep.subr.bf16.mxu0 0
  %3614 = vmatpush2.bf16.msra.mxu0 %v139
  %3615 = vmatprep.mubr.bf16.mxu0 %v3581
  %3616 = vmatmul.mubr.bf16.gmra.mxu0 %v3571
  %v3617 = vpop.f32.mrf.mxu0
  %v3618 = vadd.f32 %v69, %v3617
  %v3619 = vpop.f32.mrf.mxu0
  %v3620 = vpop.f32.mrf.mxu0
  %v3621 = vpop.f32.mrf.mxu0
  %3622 = vdwg.mxu0
  %v3623 = vmax.f32 %v3618, 0.0
  %v3624 = vpack.c.bf16 %v3623, %v3623
  %s3625 = scalar_lea.vmem %s3, 416
  %v3626 = vld [vmem:[%s3625] sm:$0xf]
  %v3627 = vld [vmem:[%s3625 + $0x4] sm:$0xf]
  %v3628 = vld [vmem:[%s3625 + $0x8] sm:$0xf]
  %v3629 = vld [vmem:[%s3625 + $0xc] sm:$0xf]
  %v3634 = vunpack.c.l.b16 %v3626
  %v3635 = vunpack.c.l.b16 %v3627
  %v3636 = vunpack.c.l.b16 %v3628
  %v3637 = vunpack.c.l.b16 %v3629
  %v3638 = vpack.c.b16 %v3635, %v3634
  %v3639 = vpack.c.b16 %v3637, %v3636
  %v3643 = vsel %vm287, %v3624, 0
  %3645 = vmatprep.subr.bf16.mxu0 0
  %3646 = vmatpush1.bf16.msra.mxu0 0
  %3647 = vmatprep.subr.bf16.mxu0 0
  %3648 = vmatpush1.bf16.msra.mxu0 0
  %3649 = vmatprep.subr.bf16.mxu0 0
  %3650 = vmatpush1.bf16.msra.mxu0 0
  %3651 = vmatprep.subr.bf16.mxu0 0
  %3652 = vmatpush1.bf16.msra.mxu0 0
  %3653 = vmatprep.subr.bf16.mxu0 0
  %3654 = vmatpush1.bf16.msra.mxu0 0
  %3655 = vmatprep.subr.bf16.mxu0 0
  %3656 = vmatpush1.bf16.msra.mxu0 0
  %3657 = vmatprep.subr.bf16.mxu0 0
  %3658 = vmatpush1.bf16.msra.mxu0 %v3639
  %3659 = vmatprep.subr.bf16.mxu0 0
  %3660 = vmatpush1.bf16.msra.mxu0 %v3638
  %3661 = vmatprep.subr.bf16.mxu0 0
  %3662 = vmatpush2.bf16.msra.mxu0 0
  %3663 = vmatprep.subr.bf16.mxu0 0
  %3664 = vmatpush2.bf16.msra.mxu0 0
  %3665 = vmatprep.subr.bf16.mxu0 0
  %3666 = vmatpush2.bf16.msra.mxu0 0
  %3667 = vmatprep.subr.bf16.mxu0 0
  %3668 = vmatpush2.bf16.msra.mxu0 0
  %3669 = vmatprep.subr.bf16.mxu0 0
  %3670 = vmatpush2.bf16.msra.mxu0 0
  %3671 = vmatprep.subr.bf16.mxu0 0
  %3672 = vmatpush2.bf16.msra.mxu0 0
  %3673 = vmatprep.subr.bf16.mxu0 0
  %3674 = vmatpush2.bf16.msra.mxu0 0
  %3675 = vmatprep.subr.bf16.mxu0 0
  %3676 = vmatpush2.bf16.msra.mxu0 0
  %3677 = vmatprep.mubr.bf16.mxu0 0
  %3678 = vmatmul.mubr.bf16.gmra.mxu0 %v3643
  %v3679 = vpop.f32.mrf.mxu0
  %v3680 = vadd.f32 0.0, %v3679
  %v3681 = vpop.f32.mrf.mxu0
  %v3682 = vpop.f32.mrf.mxu0
  %v3683 = vpop.f32.mrf.mxu0
  %3684 = vdwg.mxu0
  %v3685 = vadd.f32 %v3553, %v3680
  %s3686 = scalar_lea.vmem %s0, 54
  %v3687 = vld [vmem:[%s3686] sm:$0x3]
  %v3690 = vunpack.c.l.s4 1966171168
  %v3691 = vunpack.c.0.s8 %v3690
  %v3692 = vlaneseq
  %v3693 = vshrl.u32 %v3692, 7
  %v3694 = vsub.s32 %v3691, %v3693
  %v3695 = vrot.slane %v3687, %v3694
  %v3696 = vcombine.high %v3695, %v3695
  %v3698 = vunpack.c.l.s4 1966171168
  %v3699 = vunpack.c.0.s8 %v3698
  %v3700 = vlaneseq
  %v3701 = vshrl.u32 %v3700, 7
  %v3702 = vsub.s32 %v3699, %v3701
  %v3703 = vrot.slane %v3695, %v3702
  %v3705 = vunpack.c.l.s4 1966171168
  %v3706 = vunpack.c.0.s8 %v3705
  %v3707 = vlaneseq
  %v3708 = vshrl.u32 %v3707, 7
  %v3709 = vsub.s32 %v3706, %v3708
  %v3710 = vrot.slane %v3696, %v3709
  %v3713 = vsel %vm149, %v3710, 0
  %3715 = vmatprep.subr.bf16.mxu0 0
  %3716 = vmatpush1.bf16.msra.mxu0 %v138
  %3717 = vmatprep.subr.bf16.mxu0 0
  %3718 = vmatpush1.bf16.msra.mxu0 %v137
  %3719 = vmatprep.subr.bf16.mxu0 0
  %3720 = vmatpush1.bf16.msra.mxu0 %v136
  %3721 = vmatprep.subr.bf16.mxu0 0
  %3722 = vmatpush1.bf16.msra.mxu0 %v135
  %3723 = vmatprep.subr.bf16.mxu0 0
  %3724 = vmatpush1.bf16.msra.mxu0 %v134
  %3725 = vmatprep.subr.bf16.mxu0 0
  %3726 = vmatpush1.bf16.msra.mxu0 %v133
  %3727 = vmatprep.subr.bf16.mxu0 0
  %3728 = vmatpush1.bf16.msra.mxu0 %v132
  %3729 = vmatprep.subr.bf16.mxu0 0
  %3730 = vmatpush1.bf16.msra.mxu0 %v131
  %3731 = vmatprep.subr.bf16.mxu0 0
  %3732 = vmatpush2.bf16.msra.mxu0 0
  %3733 = vmatprep.subr.bf16.mxu0 0
  %3734 = vmatpush2.bf16.msra.mxu0 0
  %3735 = vmatprep.subr.bf16.mxu0 0
  %3736 = vmatpush2.bf16.msra.mxu0 0
  %3737 = vmatprep.subr.bf16.mxu0 0
  %3738 = vmatpush2.bf16.msra.mxu0 0
  %3739 = vmatprep.subr.bf16.mxu0 0
  %3740 = vmatpush2.bf16.msra.mxu0 0
  %3741 = vmatprep.subr.bf16.mxu0 0
  %3742 = vmatpush2.bf16.msra.mxu0 0
  %3743 = vmatprep.subr.bf16.mxu0 0
  %3744 = vmatpush2.bf16.msra.mxu0 0
  %3745 = vmatprep.subr.bf16.mxu0 0
  %3746 = vmatpush2.bf16.msra.mxu0 %v139
  %3747 = vmatprep.mubr.bf16.mxu0 %v3713
  %3748 = vmatmul.mubr.bf16.gmra.mxu0 %v3703
  %v3749 = vpop.f32.mrf.mxu0
  %v3750 = vadd.f32 %v69, %v3749
  %v3751 = vpop.f32.mrf.mxu0
  %v3752 = vpop.f32.mrf.mxu0
  %v3753 = vpop.f32.mrf.mxu0
  %3754 = vdwg.mxu0
  %v3755 = vmax.f32 %v3750, 0.0
  %v3756 = vpack.c.bf16 %v3755, %v3755
  %s3757 = scalar_lea.vmem %s3, 432
  %v3758 = vld [vmem:[%s3757] sm:$0xf]
  %v3759 = vld [vmem:[%s3757 + $0x4] sm:$0xf]
  %v3760 = vld [vmem:[%s3757 + $0x8] sm:$0xf]
  %v3761 = vld [vmem:[%s3757 + $0xc] sm:$0xf]
  %v3766 = vunpack.c.l.b16 %v3758
  %v3767 = vunpack.c.l.b16 %v3759
  %v3768 = vunpack.c.l.b16 %v3760
  %v3769 = vunpack.c.l.b16 %v3761
  %v3770 = vpack.c.b16 %v3767, %v3766
  %v3771 = vpack.c.b16 %v3769, %v3768
  %v3775 = vsel %vm287, %v3756, 0
  %3777 = vmatprep.subr.bf16.mxu0 0
  %3778 = vmatpush1.bf16.msra.mxu0 0
  %3779 = vmatprep.subr.bf16.mxu0 0
  %3780 = vmatpush1.bf16.msra.mxu0 0
  %3781 = vmatprep.subr.bf16.mxu0 0
  %3782 = vmatpush1.bf16.msra.mxu0 0
  %3783 = vmatprep.subr.bf16.mxu0 0
  %3784 = vmatpush1.bf16.msra.mxu0 0
  %3785 = vmatprep.subr.bf16.mxu0 0
  %3786 = vmatpush1.bf16.msra.mxu0 0
  %3787 = vmatprep.subr.bf16.mxu0 0
  %3788 = vmatpush1.bf16.msra.mxu0 0
  %3789 = vmatprep.subr.bf16.mxu0 0
  %3790 = vmatpush1.bf16.msra.mxu0 %v3771
  %3791 = vmatprep.subr.bf16.mxu0 0
  %3792 = vmatpush1.bf16.msra.mxu0 %v3770
  %3793 = vmatprep.subr.bf16.mxu0 0
  %3794 = vmatpush2.bf16.msra.mxu0 0
  %3795 = vmatprep.subr.bf16.mxu0 0
  %3796 = vmatpush2.bf16.msra.mxu0 0
  %3797 = vmatprep.subr.bf16.mxu0 0
  %3798 = vmatpush2.bf16.msra.mxu0 0
  %3799 = vmatprep.subr.bf16.mxu0 0
  %3800 = vmatpush2.bf16.msra.mxu0 0
  %3801 = vmatprep.subr.bf16.mxu0 0
  %3802 = vmatpush2.bf16.msra.mxu0 0
  %3803 = vmatprep.subr.bf16.mxu0 0
  %3804 = vmatpush2.bf16.msra.mxu0 0
  %3805 = vmatprep.subr.bf16.mxu0 0
  %3806 = vmatpush2.bf16.msra.mxu0 0
  %3807 = vmatprep.subr.bf16.mxu0 0
  %3808 = vmatpush2.bf16.msra.mxu0 0
  %3809 = vmatprep.mubr.bf16.mxu0 0
  %3810 = vmatmul.mubr.bf16.gmra.mxu0 %v3775
  %v3811 = vpop.f32.mrf.mxu0
  %v3812 = vadd.f32 0.0, %v3811
  %v3813 = vpop.f32.mrf.mxu0
  %v3814 = vpop.f32.mrf.mxu0
  %v3815 = vpop.f32.mrf.mxu0
  %3816 = vdwg.mxu0
  %v3817 = vadd.f32 %v3685, %v3812
  %s3818 = scalar_lea.vmem %s0, 56
  %v3819 = vld [vmem:[%s3818] sm:$0x3]
  %v3822 = vunpack.c.l.s4 1966171168
  %v3823 = vunpack.c.0.s8 %v3822
  %v3824 = vlaneseq
  %v3825 = vshrl.u32 %v3824, 7
  %v3826 = vsub.s32 %v3823, %v3825
  %v3827 = vrot.slane %v3819, %v3826
  %v3828 = vcombine.high %v3827, %v3827
  %v3830 = vunpack.c.l.s4 1966171168
  %v3831 = vunpack.c.0.s8 %v3830
  %v3832 = vlaneseq
  %v3833 = vshrl.u32 %v3832, 7
  %v3834 = vsub.s32 %v3831, %v3833
  %v3835 = vrot.slane %v3827, %v3834
  %v3837 = vunpack.c.l.s4 1966171168
  %v3838 = vunpack.c.0.s8 %v3837
  %v3839 = vlaneseq
  %v3840 = vshrl.u32 %v3839, 7
  %v3841 = vsub.s32 %v3838, %v3840
  %v3842 = vrot.slane %v3828, %v3841
  %v3845 = vsel %vm149, %v3842, 0
  %3847 = vmatprep.subr.bf16.mxu0 0
  %3848 = vmatpush1.bf16.msra.mxu0 %v138
  %3849 = vmatprep.subr.bf16.mxu0 0
  %3850 = vmatpush1.bf16.msra.mxu0 %v137
  %3851 = vmatprep.subr.bf16.mxu0 0
  %3852 = vmatpush1.bf16.msra.mxu0 %v136
  %3853 = vmatprep.subr.bf16.mxu0 0
  %3854 = vmatpush1.bf16.msra.mxu0 %v135
  %3855 = vmatprep.subr.bf16.mxu0 0
  %3856 = vmatpush1.bf16.msra.mxu0 %v134
  %3857 = vmatprep.subr.bf16.mxu0 0
  %3858 = vmatpush1.bf16.msra.mxu0 %v133
  %3859 = vmatprep.subr.bf16.mxu0 0
  %3860 = vmatpush1.bf16.msra.mxu0 %v132
  %3861 = vmatprep.subr.bf16.mxu0 0
  %3862 = vmatpush1.bf16.msra.mxu0 %v131
  %3863 = vmatprep.subr.bf16.mxu0 0
  %3864 = vmatpush2.bf16.msra.mxu0 0
  %3865 = vmatprep.subr.bf16.mxu0 0
  %3866 = vmatpush2.bf16.msra.mxu0 0
  %3867 = vmatprep.subr.bf16.mxu0 0
  %3868 = vmatpush2.bf16.msra.mxu0 0
  %3869 = vmatprep.subr.bf16.mxu0 0
  %3870 = vmatpush2.bf16.msra.mxu0 0
  %3871 = vmatprep.subr.bf16.mxu0 0
  %3872 = vmatpush2.bf16.msra.mxu0 0
  %3873 = vmatprep.subr.bf16.mxu0 0
  %3874 = vmatpush2.bf16.msra.mxu0 0
  %3875 = vmatprep.subr.bf16.mxu0 0
  %3876 = vmatpush2.bf16.msra.mxu0 0
  %3877 = vmatprep.subr.bf16.mxu0 0
  %3878 = vmatpush2.bf16.msra.mxu0 %v139
  %3879 = vmatprep.mubr.bf16.mxu0 %v3845
  %3880 = vmatmul.mubr.bf16.gmra.mxu0 %v3835
  %v3881 = vpop.f32.mrf.mxu0
  %v3882 = vadd.f32 %v69, %v3881
  %v3883 = vpop.f32.mrf.mxu0
  %v3884 = vpop.f32.mrf.mxu0
  %v3885 = vpop.f32.mrf.mxu0
  %3886 = vdwg.mxu0
  %v3887 = vmax.f32 %v3882, 0.0
  %v3888 = vpack.c.bf16 %v3887, %v3887
  %s3889 = scalar_lea.vmem %s3, 448
  %v3890 = vld [vmem:[%s3889] sm:$0xf]
  %v3891 = vld [vmem:[%s3889 + $0x4] sm:$0xf]
  %v3892 = vld [vmem:[%s3889 + $0x8] sm:$0xf]
  %v3893 = vld [vmem:[%s3889 + $0xc] sm:$0xf]
  %v3898 = vunpack.c.l.b16 %v3890
  %v3899 = vunpack.c.l.b16 %v3891
  %v3900 = vunpack.c.l.b16 %v3892
  %v3901 = vunpack.c.l.b16 %v3893
  %v3902 = vpack.c.b16 %v3899, %v3898
  %v3903 = vpack.c.b16 %v3901, %v3900
  %v3907 = vsel %vm287, %v3888, 0
  %3909 = vmatprep.subr.bf16.mxu0 0
  %3910 = vmatpush1.bf16.msra.mxu0 0
  %3911 = vmatprep.subr.bf16.mxu0 0
  %3912 = vmatpush1.bf16.msra.mxu0 0
  %3913 = vmatprep.subr.bf16.mxu0 0
  %3914 = vmatpush1.bf16.msra.mxu0 0
  %3915 = vmatprep.subr.bf16.mxu0 0
  %3916 = vmatpush1.bf16.msra.mxu0 0
  %3917 = vmatprep.subr.bf16.mxu0 0
  %3918 = vmatpush1.bf16.msra.mxu0 0
  %3919 = vmatprep.subr.bf16.mxu0 0
  %3920 = vmatpush1.bf16.msra.mxu0 0
  %3921 = vmatprep.subr.bf16.mxu0 0
  %3922 = vmatpush1.bf16.msra.mxu0 %v3903
  %3923 = vmatprep.subr.bf16.mxu0 0
  %3924 = vmatpush1.bf16.msra.mxu0 %v3902
  %3925 = vmatprep.subr.bf16.mxu0 0
  %3926 = vmatpush2.bf16.msra.mxu0 0
  %3927 = vmatprep.subr.bf16.mxu0 0
  %3928 = vmatpush2.bf16.msra.mxu0 0
  %3929 = vmatprep.subr.bf16.mxu0 0
  %3930 = vmatpush2.bf16.msra.mxu0 0
  %3931 = vmatprep.subr.bf16.mxu0 0
  %3932 = vmatpush2.bf16.msra.mxu0 0
  %3933 = vmatprep.subr.bf16.mxu0 0
  %3934 = vmatpush2.bf16.msra.mxu0 0
  %3935 = vmatprep.subr.bf16.mxu0 0
  %3936 = vmatpush2.bf16.msra.mxu0 0
  %3937 = vmatprep.subr.bf16.mxu0 0
  %3938 = vmatpush2.bf16.msra.mxu0 0
  %3939 = vmatprep.subr.bf16.mxu0 0
  %3940 = vmatpush2.bf16.msra.mxu0 0
  %3941 = vmatprep.mubr.bf16.mxu0 0
  %3942 = vmatmul.mubr.bf16.gmra.mxu0 %v3907
  %v3943 = vpop.f32.mrf.mxu0
  %v3944 = vadd.f32 0.0, %v3943
  %v3945 = vpop.f32.mrf.mxu0
  %v3946 = vpop.f32.mrf.mxu0
  %v3947 = vpop.f32.mrf.mxu0
  %3948 = vdwg.mxu0
  %v3949 = vadd.f32 %v3817, %v3944
  %s3950 = scalar_lea.vmem %s0, 58
  %v3951 = vld [vmem:[%s3950] sm:$0x3]
  %v3954 = vunpack.c.l.s4 1966171168
  %v3955 = vunpack.c.0.s8 %v3954
  %v3956 = vlaneseq
  %v3957 = vshrl.u32 %v3956, 7
  %v3958 = vsub.s32 %v3955, %v3957
  %v3959 = vrot.slane %v3951, %v3958
  %v3960 = vcombine.high %v3959, %v3959
  %v3962 = vunpack.c.l.s4 1966171168
  %v3963 = vunpack.c.0.s8 %v3962
  %v3964 = vlaneseq
  %v3965 = vshrl.u32 %v3964, 7
  %v3966 = vsub.s32 %v3963, %v3965
  %v3967 = vrot.slane %v3959, %v3966
  %v3969 = vunpack.c.l.s4 1966171168
  %v3970 = vunpack.c.0.s8 %v3969
  %v3971 = vlaneseq
  %v3972 = vshrl.u32 %v3971, 7
  %v3973 = vsub.s32 %v3970, %v3972
  %v3974 = vrot.slane %v3960, %v3973
  %v3977 = vsel %vm149, %v3974, 0
  %3979 = vmatprep.subr.bf16.mxu0 0
  %3980 = vmatpush1.bf16.msra.mxu0 %v138
  %3981 = vmatprep.subr.bf16.mxu0 0
  %3982 = vmatpush1.bf16.msra.mxu0 %v137
  %3983 = vmatprep.subr.bf16.mxu0 0
  %3984 = vmatpush1.bf16.msra.mxu0 %v136
  %3985 = vmatprep.subr.bf16.mxu0 0
  %3986 = vmatpush1.bf16.msra.mxu0 %v135
  %3987 = vmatprep.subr.bf16.mxu0 0
  %3988 = vmatpush1.bf16.msra.mxu0 %v134
  %3989 = vmatprep.subr.bf16.mxu0 0
  %3990 = vmatpush1.bf16.msra.mxu0 %v133
  %3991 = vmatprep.subr.bf16.mxu0 0
  %3992 = vmatpush1.bf16.msra.mxu0 %v132
  %3993 = vmatprep.subr.bf16.mxu0 0
  %3994 = vmatpush1.bf16.msra.mxu0 %v131
  %3995 = vmatprep.subr.bf16.mxu0 0
  %3996 = vmatpush2.bf16.msra.mxu0 0
  %3997 = vmatprep.subr.bf16.mxu0 0
  %3998 = vmatpush2.bf16.msra.mxu0 0
  %3999 = vmatprep.subr.bf16.mxu0 0
  %4000 = vmatpush2.bf16.msra.mxu0 0
  %4001 = vmatprep.subr.bf16.mxu0 0
  %4002 = vmatpush2.bf16.msra.mxu0 0
  %4003 = vmatprep.subr.bf16.mxu0 0
  %4004 = vmatpush2.bf16.msra.mxu0 0
  %4005 = vmatprep.subr.bf16.mxu0 0
  %4006 = vmatpush2.bf16.msra.mxu0 0
  %4007 = vmatprep.subr.bf16.mxu0 0
  %4008 = vmatpush2.bf16.msra.mxu0 0
  %4009 = vmatprep.subr.bf16.mxu0 0
  %4010 = vmatpush2.bf16.msra.mxu0 %v139
  %4011 = vmatprep.mubr.bf16.mxu0 %v3977
  %4012 = vmatmul.mubr.bf16.gmra.mxu0 %v3967
  %v4013 = vpop.f32.mrf.mxu0
  %v4014 = vadd.f32 %v69, %v4013
  %v4015 = vpop.f32.mrf.mxu0
  %v4016 = vpop.f32.mrf.mxu0
  %v4017 = vpop.f32.mrf.mxu0
  %4018 = vdwg.mxu0
  %v4019 = vmax.f32 %v4014, 0.0
  %v4020 = vpack.c.bf16 %v4019, %v4019
  %s4021 = scalar_lea.vmem %s3, 464
  %v4022 = vld [vmem:[%s4021] sm:$0xf]
  %v4023 = vld [vmem:[%s4021 + $0x4] sm:$0xf]
  %v4024 = vld [vmem:[%s4021 + $0x8] sm:$0xf]
  %v4025 = vld [vmem:[%s4021 + $0xc] sm:$0xf]
  %v4030 = vunpack.c.l.b16 %v4022
  %v4031 = vunpack.c.l.b16 %v4023
  %v4032 = vunpack.c.l.b16 %v4024
  %v4033 = vunpack.c.l.b16 %v4025
  %v4034 = vpack.c.b16 %v4031, %v4030
  %v4035 = vpack.c.b16 %v4033, %v4032
  %v4039 = vsel %vm287, %v4020, 0
  %4041 = vmatprep.subr.bf16.mxu0 0
  %4042 = vmatpush1.bf16.msra.mxu0 0
  %4043 = vmatprep.subr.bf16.mxu0 0
  %4044 = vmatpush1.bf16.msra.mxu0 0
  %4045 = vmatprep.subr.bf16.mxu0 0
  %4046 = vmatpush1.bf16.msra.mxu0 0
  %4047 = vmatprep.subr.bf16.mxu0 0
  %4048 = vmatpush1.bf16.msra.mxu0 0
  %4049 = vmatprep.subr.bf16.mxu0 0
  %4050 = vmatpush1.bf16.msra.mxu0 0
  %4051 = vmatprep.subr.bf16.mxu0 0
  %4052 = vmatpush1.bf16.msra.mxu0 0
  %4053 = vmatprep.subr.bf16.mxu0 0
  %4054 = vmatpush1.bf16.msra.mxu0 %v4035
  %4055 = vmatprep.subr.bf16.mxu0 0
  %4056 = vmatpush1.bf16.msra.mxu0 %v4034
  %4057 = vmatprep.subr.bf16.mxu0 0
  %4058 = vmatpush2.bf16.msra.mxu0 0
  %4059 = vmatprep.subr.bf16.mxu0 0
  %4060 = vmatpush2.bf16.msra.mxu0 0
  %4061 = vmatprep.subr.bf16.mxu0 0
  %4062 = vmatpush2.bf16.msra.mxu0 0
  %4063 = vmatprep.subr.bf16.mxu0 0
  %4064 = vmatpush2.bf16.msra.mxu0 0
  %4065 = vmatprep.subr.bf16.mxu0 0
  %4066 = vmatpush2.bf16.msra.mxu0 0
  %4067 = vmatprep.subr.bf16.mxu0 0
  %4068 = vmatpush2.bf16.msra.mxu0 0
  %4069 = vmatprep.subr.bf16.mxu0 0
  %4070 = vmatpush2.bf16.msra.mxu0 0
  %4071 = vmatprep.subr.bf16.mxu0 0
  %4072 = vmatpush2.bf16.msra.mxu0 0
  %4073 = vmatprep.mubr.bf16.mxu0 0
  %4074 = vmatmul.mubr.bf16.gmra.mxu0 %v4039
  %v4075 = vpop.f32.mrf.mxu0
  %v4076 = vadd.f32 0.0, %v4075
  %v4077 = vpop.f32.mrf.mxu0
  %v4078 = vpop.f32.mrf.mxu0
  %v4079 = vpop.f32.mrf.mxu0
  %4080 = vdwg.mxu0
  %v4081 = vadd.f32 %v3949, %v4076
  %s4082 = scalar_lea.vmem %s0, 60
  %v4083 = vld [vmem:[%s4082] sm:$0x3]
  %v4086 = vunpack.c.l.s4 1966171168
  %v4087 = vunpack.c.0.s8 %v4086
  %v4088 = vlaneseq
  %v4089 = vshrl.u32 %v4088, 7
  %v4090 = vsub.s32 %v4087, %v4089
  %v4091 = vrot.slane %v4083, %v4090
  %v4092 = vcombine.high %v4091, %v4091
  %v4094 = vunpack.c.l.s4 1966171168
  %v4095 = vunpack.c.0.s8 %v4094
  %v4096 = vlaneseq
  %v4097 = vshrl.u32 %v4096, 7
  %v4098 = vsub.s32 %v4095, %v4097
  %v4099 = vrot.slane %v4091, %v4098
  %v4101 = vunpack.c.l.s4 1966171168
  %v4102 = vunpack.c.0.s8 %v4101
  %v4103 = vlaneseq
  %v4104 = vshrl.u32 %v4103, 7
  %v4105 = vsub.s32 %v4102, %v4104
  %v4106 = vrot.slane %v4092, %v4105
  %v4109 = vsel %vm149, %v4106, 0
  %4111 = vmatprep.subr.bf16.mxu0 0
  %4112 = vmatpush1.bf16.msra.mxu0 %v138
  %4113 = vmatprep.subr.bf16.mxu0 0
  %4114 = vmatpush1.bf16.msra.mxu0 %v137
  %4115 = vmatprep.subr.bf16.mxu0 0
  %4116 = vmatpush1.bf16.msra.mxu0 %v136
  %4117 = vmatprep.subr.bf16.mxu0 0
  %4118 = vmatpush1.bf16.msra.mxu0 %v135
  %4119 = vmatprep.subr.bf16.mxu0 0
  %4120 = vmatpush1.bf16.msra.mxu0 %v134
  %4121 = vmatprep.subr.bf16.mxu0 0
  %4122 = vmatpush1.bf16.msra.mxu0 %v133
  %4123 = vmatprep.subr.bf16.mxu0 0
  %4124 = vmatpush1.bf16.msra.mxu0 %v132
  %4125 = vmatprep.subr.bf16.mxu0 0
  %4126 = vmatpush1.bf16.msra.mxu0 %v131
  %4127 = vmatprep.subr.bf16.mxu0 0
  %4128 = vmatpush2.bf16.msra.mxu0 0
  %4129 = vmatprep.subr.bf16.mxu0 0
  %4130 = vmatpush2.bf16.msra.mxu0 0
  %4131 = vmatprep.subr.bf16.mxu0 0
  %4132 = vmatpush2.bf16.msra.mxu0 0
  %4133 = vmatprep.subr.bf16.mxu0 0
  %4134 = vmatpush2.bf16.msra.mxu0 0
  %4135 = vmatprep.subr.bf16.mxu0 0
  %4136 = vmatpush2.bf16.msra.mxu0 0
  %4137 = vmatprep.subr.bf16.mxu0 0
  %4138 = vmatpush2.bf16.msra.mxu0 0
  %4139 = vmatprep.subr.bf16.mxu0 0
  %4140 = vmatpush2.bf16.msra.mxu0 0
  %4141 = vmatprep.subr.bf16.mxu0 0
  %4142 = vmatpush2.bf16.msra.mxu0 %v139
  %4143 = vmatprep.mubr.bf16.mxu0 %v4109
  %4144 = vmatmul.mubr.bf16.gmra.mxu0 %v4099
  %v4145 = vpop.f32.mrf.mxu0
  %v4146 = vadd.f32 %v69, %v4145
  %v4147 = vpop.f32.mrf.mxu0
  %v4148 = vpop.f32.mrf.mxu0
  %v4149 = vpop.f32.mrf.mxu0
  %4150 = vdwg.mxu0
  %v4151 = vmax.f32 %v4146, 0.0
  %v4152 = vpack.c.bf16 %v4151, %v4151
  %s4153 = scalar_lea.vmem %s3, 480
  %v4154 = vld [vmem:[%s4153] sm:$0xf]
  %v4155 = vld [vmem:[%s4153 + $0x4] sm:$0xf]
  %v4156 = vld [vmem:[%s4153 + $0x8] sm:$0xf]
  %v4157 = vld [vmem:[%s4153 + $0xc] sm:$0xf]
  %v4162 = vunpack.c.l.b16 %v4154
  %v4163 = vunpack.c.l.b16 %v4155
  %v4164 = vunpack.c.l.b16 %v4156
  %v4165 = vunpack.c.l.b16 %v4157
  %v4166 = vpack.c.b16 %v4163, %v4162
  %v4167 = vpack.c.b16 %v4165, %v4164
  %v4171 = vsel %vm287, %v4152, 0
  %4173 = vmatprep.subr.bf16.mxu0 0
  %4174 = vmatpush1.bf16.msra.mxu0 0
  %4175 = vmatprep.subr.bf16.mxu0 0
  %4176 = vmatpush1.bf16.msra.mxu0 0
  %4177 = vmatprep.subr.bf16.mxu0 0
  %4178 = vmatpush1.bf16.msra.mxu0 0
  %4179 = vmatprep.subr.bf16.mxu0 0
  %4180 = vmatpush1.bf16.msra.mxu0 0
  %4181 = vmatprep.subr.bf16.mxu0 0
  %4182 = vmatpush1.bf16.msra.mxu0 0
  %4183 = vmatprep.subr.bf16.mxu0 0
  %4184 = vmatpush1.bf16.msra.mxu0 0
  %4185 = vmatprep.subr.bf16.mxu0 0
  %4186 = vmatpush1.bf16.msra.mxu0 %v4167
  %4187 = vmatprep.subr.bf16.mxu0 0
  %4188 = vmatpush1.bf16.msra.mxu0 %v4166
  %4189 = vmatprep.subr.bf16.mxu0 0
  %4190 = vmatpush2.bf16.msra.mxu0 0
  %4191 = vmatprep.subr.bf16.mxu0 0
  %4192 = vmatpush2.bf16.msra.mxu0 0
  %4193 = vmatprep.subr.bf16.mxu0 0
  %4194 = vmatpush2.bf16.msra.mxu0 0
  %4195 = vmatprep.subr.bf16.mxu0 0
  %4196 = vmatpush2.bf16.msra.mxu0 0
  %4197 = vmatprep.subr.bf16.mxu0 0
  %4198 = vmatpush2.bf16.msra.mxu0 0
  %4199 = vmatprep.subr.bf16.mxu0 0
  %4200 = vmatpush2.bf16.msra.mxu0 0
  %4201 = vmatprep.subr.bf16.mxu0 0
  %4202 = vmatpush2.bf16.msra.mxu0 0
  %4203 = vmatprep.subr.bf16.mxu0 0
  %4204 = vmatpush2.bf16.msra.mxu0 0
  %4205 = vmatprep.mubr.bf16.mxu0 0
  %4206 = vmatmul.mubr.bf16.gmra.mxu0 %v4171
  %v4207 = vpop.f32.mrf.mxu0
  %v4208 = vadd.f32 0.0, %v4207
  %v4209 = vpop.f32.mrf.mxu0
  %v4210 = vpop.f32.mrf.mxu0
  %v4211 = vpop.f32.mrf.mxu0
  %4212 = vdwg.mxu0
  %v4213 = vadd.f32 %v4081, %v4208
  %s4214 = scalar_lea.vmem %s0, 62
  %v4215 = vld [vmem:[%s4214] sm:$0x3]
  %v4218 = vunpack.c.l.s4 1966171168
  %v4219 = vunpack.c.0.s8 %v4218
  %v4220 = vlaneseq
  %v4221 = vshrl.u32 %v4220, 7
  %v4222 = vsub.s32 %v4219, %v4221
  %v4223 = vrot.slane %v4215, %v4222
  %v4224 = vcombine.high %v4223, %v4223
  %v4226 = vunpack.c.l.s4 1966171168
  %v4227 = vunpack.c.0.s8 %v4226
  %v4228 = vlaneseq
  %v4229 = vshrl.u32 %v4228, 7
  %v4230 = vsub.s32 %v4227, %v4229
  %v4231 = vrot.slane %v4223, %v4230
  %v4233 = vunpack.c.l.s4 1966171168
  %v4234 = vunpack.c.0.s8 %v4233
  %v4235 = vlaneseq
  %v4236 = vshrl.u32 %v4235, 7
  %v4237 = vsub.s32 %v4234, %v4236
  %v4238 = vrot.slane %v4224, %v4237
  %v4241 = vsel %vm149, %v4238, 0
  %4243 = vmatprep.subr.bf16.mxu0 0
  %4244 = vmatpush1.bf16.msra.mxu0 %v138
  %4245 = vmatprep.subr.bf16.mxu0 0
  %4246 = vmatpush1.bf16.msra.mxu0 %v137
  %4247 = vmatprep.subr.bf16.mxu0 0
  %4248 = vmatpush1.bf16.msra.mxu0 %v136
  %4249 = vmatprep.subr.bf16.mxu0 0
  %4250 = vmatpush1.bf16.msra.mxu0 %v135
  %4251 = vmatprep.subr.bf16.mxu0 0
  %4252 = vmatpush1.bf16.msra.mxu0 %v134
  %4253 = vmatprep.subr.bf16.mxu0 0
  %4254 = vmatpush1.bf16.msra.mxu0 %v133
  %4255 = vmatprep.subr.bf16.mxu0 0
  %4256 = vmatpush1.bf16.msra.mxu0 %v132
  %4257 = vmatprep.subr.bf16.mxu0 0
  %4258 = vmatpush1.bf16.msra.mxu0 %v131
  %4259 = vmatprep.subr.bf16.mxu0 0
  %4260 = vmatpush2.bf16.msra.mxu0 0
  %4261 = vmatprep.subr.bf16.mxu0 0
  %4262 = vmatpush2.bf16.msra.mxu0 0
  %4263 = vmatprep.subr.bf16.mxu0 0
  %4264 = vmatpush2.bf16.msra.mxu0 0
  %4265 = vmatprep.subr.bf16.mxu0 0
  %4266 = vmatpush2.bf16.msra.mxu0 0
  %4267 = vmatprep.subr.bf16.mxu0 0
  %4268 = vmatpush2.bf16.msra.mxu0 0
  %4269 = vmatprep.subr.bf16.mxu0 0
  %4270 = vmatpush2.bf16.msra.mxu0 0
  %4271 = vmatprep.subr.bf16.mxu0 0
  %4272 = vmatpush2.bf16.msra.mxu0 0
  %4273 = vmatprep.subr.bf16.mxu0 0
  %4274 = vmatpush2.bf16.msra.mxu0 %v139
  %4275 = vmatprep.mubr.bf16.mxu0 %v4241
  %4276 = vmatmul.mubr.bf16.gmra.mxu0 %v4231
  %v4277 = vpop.f32.mrf.mxu0
  %v4278 = vadd.f32 %v69, %v4277
  %v4279 = vpop.f32.mrf.mxu0
  %v4280 = vpop.f32.mrf.mxu0
  %v4281 = vpop.f32.mrf.mxu0
  %4282 = vdwg.mxu0
  %v4283 = vmax.f32 %v4278, 0.0
  %v4284 = vpack.c.bf16 %v4283, %v4283
  %s4285 = scalar_lea.vmem %s3, 496
  %v4286 = vld [vmem:[%s4285] sm:$0xf]
  %v4287 = vld [vmem:[%s4285 + $0x4] sm:$0xf]
  %v4288 = vld [vmem:[%s4285 + $0x8] sm:$0xf]
  %v4289 = vld [vmem:[%s4285 + $0xc] sm:$0xf]
  %v4294 = vunpack.c.l.b16 %v4286
  %v4295 = vunpack.c.l.b16 %v4287
  %v4296 = vunpack.c.l.b16 %v4288
  %v4297 = vunpack.c.l.b16 %v4289
  %v4298 = vpack.c.b16 %v4295, %v4294
  %v4299 = vpack.c.b16 %v4297, %v4296
  %v4303 = vsel %vm287, %v4284, 0
  %4305 = vmatprep.subr.bf16.mxu0 0
  %4306 = vmatpush1.bf16.msra.mxu0 0
  %4307 = vmatprep.subr.bf16.mxu0 0
  %4308 = vmatpush1.bf16.msra.mxu0 0
  %4309 = vmatprep.subr.bf16.mxu0 0
  %4310 = vmatpush1.bf16.msra.mxu0 0
  %4311 = vmatprep.subr.bf16.mxu0 0
  %4312 = vmatpush1.bf16.msra.mxu0 0
  %4313 = vmatprep.subr.bf16.mxu0 0
  %4314 = vmatpush1.bf16.msra.mxu0 0
  %4315 = vmatprep.subr.bf16.mxu0 0
  %4316 = vmatpush1.bf16.msra.mxu0 0
  %4317 = vmatprep.subr.bf16.mxu0 0
  %4318 = vmatpush1.bf16.msra.mxu0 %v4299
  %4319 = vmatprep.subr.bf16.mxu0 0
  %4320 = vmatpush1.bf16.msra.mxu0 %v4298
  %4321 = vmatprep.subr.bf16.mxu0 0
  %4322 = vmatpush2.bf16.msra.mxu0 0
  %4323 = vmatprep.subr.bf16.mxu0 0
  %4324 = vmatpush2.bf16.msra.mxu0 0
  %4325 = vmatprep.subr.bf16.mxu0 0
  %4326 = vmatpush2.bf16.msra.mxu0 0
  %4327 = vmatprep.subr.bf16.mxu0 0
  %4328 = vmatpush2.bf16.msra.mxu0 0
  %4329 = vmatprep.subr.bf16.mxu0 0
  %4330 = vmatpush2.bf16.msra.mxu0 0
  %4331 = vmatprep.subr.bf16.mxu0 0
  %4332 = vmatpush2.bf16.msra.mxu0 0
  %4333 = vmatprep.subr.bf16.mxu0 0
  %4334 = vmatpush2.bf16.msra.mxu0 0
  %4335 = vmatprep.subr.bf16.mxu0 0
  %4336 = vmatpush2.bf16.msra.mxu0 0
  %4337 = vmatprep.mubr.bf16.mxu0 0
  %4338 = vmatmul.mubr.bf16.gmra.mxu0 %v4303
  %v4339 = vpop.f32.mrf.mxu0
  %v4340 = vadd.f32 0.0, %v4339
  %v4341 = vpop.f32.mrf.mxu0
  %v4342 = vpop.f32.mrf.mxu0
  %v4343 = vpop.f32.mrf.mxu0
  %4344 = vdwg.mxu0
  %v4345 = vadd.f32 %v4213, %v4340
  %s4346 = scalar_lea.vmem %s0, 64
  %v4347 = vld [vmem:[%s4346] sm:$0x3]
  %v4350 = vunpack.c.l.s4 1966171168
  %v4351 = vunpack.c.0.s8 %v4350
  %v4352 = vlaneseq
  %v4353 = vshrl.u32 %v4352, 7
  %v4354 = vsub.s32 %v4351, %v4353
  %v4355 = vrot.slane %v4347, %v4354
  %v4356 = vcombine.high %v4355, %v4355
  %v4358 = vunpack.c.l.s4 1966171168
  %v4359 = vunpack.c.0.s8 %v4358
  %v4360 = vlaneseq
  %v4361 = vshrl.u32 %v4360, 7
  %v4362 = vsub.s32 %v4359, %v4361
  %v4363 = vrot.slane %v4355, %v4362
  %v4365 = vunpack.c.l.s4 1966171168
  %v4366 = vunpack.c.0.s8 %v4365
  %v4367 = vlaneseq
  %v4368 = vshrl.u32 %v4367, 7
  %v4369 = vsub.s32 %v4366, %v4368
  %v4370 = vrot.slane %v4356, %v4369
  %v4373 = vsel %vm149, %v4370, 0
  %4375 = vmatprep.subr.bf16.mxu0 0
  %4376 = vmatpush1.bf16.msra.mxu0 %v138
  %4377 = vmatprep.subr.bf16.mxu0 0
  %4378 = vmatpush1.bf16.msra.mxu0 %v137
  %4379 = vmatprep.subr.bf16.mxu0 0
  %4380 = vmatpush1.bf16.msra.mxu0 %v136
  %4381 = vmatprep.subr.bf16.mxu0 0
  %4382 = vmatpush1.bf16.msra.mxu0 %v135
  %4383 = vmatprep.subr.bf16.mxu0 0
  %4384 = vmatpush1.bf16.msra.mxu0 %v134
  %4385 = vmatprep.subr.bf16.mxu0 0
  %4386 = vmatpush1.bf16.msra.mxu0 %v133
  %4387 = vmatprep.subr.bf16.mxu0 0
  %4388 = vmatpush1.bf16.msra.mxu0 %v132
  %4389 = vmatprep.subr.bf16.mxu0 0
  %4390 = vmatpush1.bf16.msra.mxu0 %v131
  %4391 = vmatprep.subr.bf16.mxu0 0
  %4392 = vmatpush2.bf16.msra.mxu0 0
  %4393 = vmatprep.subr.bf16.mxu0 0
  %4394 = vmatpush2.bf16.msra.mxu0 0
  %4395 = vmatprep.subr.bf16.mxu0 0
  %4396 = vmatpush2.bf16.msra.mxu0 0
  %4397 = vmatprep.subr.bf16.mxu0 0
  %4398 = vmatpush2.bf16.msra.mxu0 0
  %4399 = vmatprep.subr.bf16.mxu0 0
  %4400 = vmatpush2.bf16.msra.mxu0 0
  %4401 = vmatprep.subr.bf16.mxu0 0
  %4402 = vmatpush2.bf16.msra.mxu0 0
  %4403 = vmatprep.subr.bf16.mxu0 0
  %4404 = vmatpush2.bf16.msra.mxu0 0
  %4405 = vmatprep.subr.bf16.mxu0 0
  %4406 = vmatpush2.bf16.msra.mxu0 %v139
  %4407 = vmatprep.mubr.bf16.mxu0 %v4373
  %4408 = vmatmul.mubr.bf16.gmra.mxu0 %v4363
  %v4409 = vpop.f32.mrf.mxu0
  %v4410 = vadd.f32 %v69, %v4409
  %v4411 = vpop.f32.mrf.mxu0
  %v4412 = vpop.f32.mrf.mxu0
  %v4413 = vpop.f32.mrf.mxu0
  %4414 = vdwg.mxu0
  %v4415 = vmax.f32 %v4410, 0.0
  %v4416 = vpack.c.bf16 %v4415, %v4415
  %s4417 = scalar_lea.vmem %s3, 512
  %v4418 = vld [vmem:[%s4417] sm:$0xf]
  %v4419 = vld [vmem:[%s4417 + $0x4] sm:$0xf]
  %v4420 = vld [vmem:[%s4417 + $0x8] sm:$0xf]
  %v4421 = vld [vmem:[%s4417 + $0xc] sm:$0xf]
  %v4426 = vunpack.c.l.b16 %v4418
  %v4427 = vunpack.c.l.b16 %v4419
  %v4428 = vunpack.c.l.b16 %v4420
  %v4429 = vunpack.c.l.b16 %v4421
  %v4430 = vpack.c.b16 %v4427, %v4426
  %v4431 = vpack.c.b16 %v4429, %v4428
  %v4435 = vsel %vm287, %v4416, 0
  %4437 = vmatprep.subr.bf16.mxu0 0
  %4438 = vmatpush1.bf16.msra.mxu0 0
  %4439 = vmatprep.subr.bf16.mxu0 0
  %4440 = vmatpush1.bf16.msra.mxu0 0
  %4441 = vmatprep.subr.bf16.mxu0 0
  %4442 = vmatpush1.bf16.msra.mxu0 0
  %4443 = vmatprep.subr.bf16.mxu0 0
  %4444 = vmatpush1.bf16.msra.mxu0 0
  %4445 = vmatprep.subr.bf16.mxu0 0
  %4446 = vmatpush1.bf16.msra.mxu0 0
  %4447 = vmatprep.subr.bf16.mxu0 0
  %4448 = vmatpush1.bf16.msra.mxu0 0
  %4449 = vmatprep.subr.bf16.mxu0 0
  %4450 = vmatpush1.bf16.msra.mxu0 %v4431
  %4451 = vmatprep.subr.bf16.mxu0 0
  %4452 = vmatpush1.bf16.msra.mxu0 %v4430
  %4453 = vmatprep.subr.bf16.mxu0 0
  %4454 = vmatpush2.bf16.msra.mxu0 0
  %4455 = vmatprep.subr.bf16.mxu0 0
  %4456 = vmatpush2.bf16.msra.mxu0 0
  %4457 = vmatprep.subr.bf16.mxu0 0
  %4458 = vmatpush2.bf16.msra.mxu0 0
  %4459 = vmatprep.subr.bf16.mxu0 0
  %4460 = vmatpush2.bf16.msra.mxu0 0
  %4461 = vmatprep.subr.bf16.mxu0 0
  %4462 = vmatpush2.bf16.msra.mxu0 0
  %4463 = vmatprep.subr.bf16.mxu0 0
  %4464 = vmatpush2.bf16.msra.mxu0 0
  %4465 = vmatprep.subr.bf16.mxu0 0
  %4466 = vmatpush2.bf16.msra.mxu0 0
  %4467 = vmatprep.subr.bf16.mxu0 0
  %4468 = vmatpush2.bf16.msra.mxu0 0
  %4469 = vmatprep.mubr.bf16.mxu0 0
  %4470 = vmatmul.mubr.bf16.gmra.mxu0 %v4435
  %v4471 = vpop.f32.mrf.mxu0
  %v4472 = vadd.f32 0.0, %v4471
  %v4473 = vpop.f32.mrf.mxu0
  %v4474 = vpop.f32.mrf.mxu0
  %v4475 = vpop.f32.mrf.mxu0
  %4476 = vdwg.mxu0
  %v4477 = vadd.f32 %v4345, %v4472
  %s4478 = scalar_lea.vmem %s0, 66
  %v4479 = vld [vmem:[%s4478] sm:$0x3]
  %v4482 = vunpack.c.l.s4 1966171168
  %v4483 = vunpack.c.0.s8 %v4482
  %v4484 = vlaneseq
  %v4485 = vshrl.u32 %v4484, 7
  %v4486 = vsub.s32 %v4483, %v4485
  %v4487 = vrot.slane %v4479, %v4486
  %v4488 = vcombine.high %v4487, %v4487
  %v4490 = vunpack.c.l.s4 1966171168
  %v4491 = vunpack.c.0.s8 %v4490
  %v4492 = vlaneseq
  %v4493 = vshrl.u32 %v4492, 7
  %v4494 = vsub.s32 %v4491, %v4493
  %v4495 = vrot.slane %v4487, %v4494
  %v4497 = vunpack.c.l.s4 1966171168
  %v4498 = vunpack.c.0.s8 %v4497
  %v4499 = vlaneseq
  %v4500 = vshrl.u32 %v4499, 7
  %v4501 = vsub.s32 %v4498, %v4500
  %v4502 = vrot.slane %v4488, %v4501
  %v4505 = vsel %vm149, %v4502, 0
  %4507 = vmatprep.subr.bf16.mxu0 0
  %4508 = vmatpush1.bf16.msra.mxu0 %v138
  %4509 = vmatprep.subr.bf16.mxu0 0
  %4510 = vmatpush1.bf16.msra.mxu0 %v137
  %4511 = vmatprep.subr.bf16.mxu0 0
  %4512 = vmatpush1.bf16.msra.mxu0 %v136
  %4513 = vmatprep.subr.bf16.mxu0 0
  %4514 = vmatpush1.bf16.msra.mxu0 %v135
  %4515 = vmatprep.subr.bf16.mxu0 0
  %4516 = vmatpush1.bf16.msra.mxu0 %v134
  %4517 = vmatprep.subr.bf16.mxu0 0
  %4518 = vmatpush1.bf16.msra.mxu0 %v133
  %4519 = vmatprep.subr.bf16.mxu0 0
  %4520 = vmatpush1.bf16.msra.mxu0 %v132
  %4521 = vmatprep.subr.bf16.mxu0 0
  %4522 = vmatpush1.bf16.msra.mxu0 %v131
  %4523 = vmatprep.subr.bf16.mxu0 0
  %4524 = vmatpush2.bf16.msra.mxu0 0
  %4525 = vmatprep.subr.bf16.mxu0 0
  %4526 = vmatpush2.bf16.msra.mxu0 0
  %4527 = vmatprep.subr.bf16.mxu0 0
  %4528 = vmatpush2.bf16.msra.mxu0 0
  %4529 = vmatprep.subr.bf16.mxu0 0
  %4530 = vmatpush2.bf16.msra.mxu0 0
  %4531 = vmatprep.subr.bf16.mxu0 0
  %4532 = vmatpush2.bf16.msra.mxu0 0
  %4533 = vmatprep.subr.bf16.mxu0 0
  %4534 = vmatpush2.bf16.msra.mxu0 0
  %4535 = vmatprep.subr.bf16.mxu0 0
  %4536 = vmatpush2.bf16.msra.mxu0 0
  %4537 = vmatprep.subr.bf16.mxu0 0
  %4538 = vmatpush2.bf16.msra.mxu0 %v139
  %4539 = vmatprep.mubr.bf16.mxu0 %v4505
  %4540 = vmatmul.mubr.bf16.gmra.mxu0 %v4495
  %v4541 = vpop.f32.mrf.mxu0
  %v4542 = vadd.f32 %v69, %v4541
  %v4543 = vpop.f32.mrf.mxu0
  %v4544 = vpop.f32.mrf.mxu0
  %v4545 = vpop.f32.mrf.mxu0
  %4546 = vdwg.mxu0
  %v4547 = vmax.f32 %v4542, 0.0
  %v4548 = vpack.c.bf16 %v4547, %v4547
  %s4549 = scalar_lea.vmem %s3, 528
  %v4550 = vld [vmem:[%s4549] sm:$0xf]
  %v4551 = vld [vmem:[%s4549 + $0x4] sm:$0xf]
  %v4552 = vld [vmem:[%s4549 + $0x8] sm:$0xf]
  %v4553 = vld [vmem:[%s4549 + $0xc] sm:$0xf]
  %v4558 = vunpack.c.l.b16 %v4550
  %v4559 = vunpack.c.l.b16 %v4551
  %v4560 = vunpack.c.l.b16 %v4552
  %v4561 = vunpack.c.l.b16 %v4553
  %v4562 = vpack.c.b16 %v4559, %v4558
  %v4563 = vpack.c.b16 %v4561, %v4560
  %v4567 = vsel %vm287, %v4548, 0
  %4569 = vmatprep.subr.bf16.mxu0 0
  %4570 = vmatpush1.bf16.msra.mxu0 0
  %4571 = vmatprep.subr.bf16.mxu0 0
  %4572 = vmatpush1.bf16.msra.mxu0 0
  %4573 = vmatprep.subr.bf16.mxu0 0
  %4574 = vmatpush1.bf16.msra.mxu0 0
  %4575 = vmatprep.subr.bf16.mxu0 0
  %4576 = vmatpush1.bf16.msra.mxu0 0
  %4577 = vmatprep.subr.bf16.mxu0 0
  %4578 = vmatpush1.bf16.msra.mxu0 0
  %4579 = vmatprep.subr.bf16.mxu0 0
  %4580 = vmatpush1.bf16.msra.mxu0 0
  %4581 = vmatprep.subr.bf16.mxu0 0
  %4582 = vmatpush1.bf16.msra.mxu0 %v4563
  %4583 = vmatprep.subr.bf16.mxu0 0
  %4584 = vmatpush1.bf16.msra.mxu0 %v4562
  %4585 = vmatprep.subr.bf16.mxu0 0
  %4586 = vmatpush2.bf16.msra.mxu0 0
  %4587 = vmatprep.subr.bf16.mxu0 0
  %4588 = vmatpush2.bf16.msra.mxu0 0
  %4589 = vmatprep.subr.bf16.mxu0 0
  %4590 = vmatpush2.bf16.msra.mxu0 0
  %4591 = vmatprep.subr.bf16.mxu0 0
  %4592 = vmatpush2.bf16.msra.mxu0 0
  %4593 = vmatprep.subr.bf16.mxu0 0
  %4594 = vmatpush2.bf16.msra.mxu0 0
  %4595 = vmatprep.subr.bf16.mxu0 0
  %4596 = vmatpush2.bf16.msra.mxu0 0
  %4597 = vmatprep.subr.bf16.mxu0 0
  %4598 = vmatpush2.bf16.msra.mxu0 0
  %4599 = vmatprep.subr.bf16.mxu0 0
  %4600 = vmatpush2.bf16.msra.mxu0 0
  %4601 = vmatprep.mubr.bf16.mxu0 0
  %4602 = vmatmul.mubr.bf16.gmra.mxu0 %v4567
  %v4603 = vpop.f32.mrf.mxu0
  %v4604 = vadd.f32 0.0, %v4603
  %v4605 = vpop.f32.mrf.mxu0
  %v4606 = vpop.f32.mrf.mxu0
  %v4607 = vpop.f32.mrf.mxu0
  %4608 = vdwg.mxu0
  %v4609 = vadd.f32 %v4477, %v4604
  %s4610 = scalar_lea.vmem %s0, 68
  %v4611 = vld [vmem:[%s4610] sm:$0x3]
  %v4614 = vunpack.c.l.s4 1966171168
  %v4615 = vunpack.c.0.s8 %v4614
  %v4616 = vlaneseq
  %v4617 = vshrl.u32 %v4616, 7
  %v4618 = vsub.s32 %v4615, %v4617
  %v4619 = vrot.slane %v4611, %v4618
  %v4620 = vcombine.high %v4619, %v4619
  %v4622 = vunpack.c.l.s4 1966171168
  %v4623 = vunpack.c.0.s8 %v4622
  %v4624 = vlaneseq
  %v4625 = vshrl.u32 %v4624, 7
  %v4626 = vsub.s32 %v4623, %v4625
  %v4627 = vrot.slane %v4619, %v4626
  %v4629 = vunpack.c.l.s4 1966171168
  %v4630 = vunpack.c.0.s8 %v4629
  %v4631 = vlaneseq
  %v4632 = vshrl.u32 %v4631, 7
  %v4633 = vsub.s32 %v4630, %v4632
  %v4634 = vrot.slane %v4620, %v4633
  %v4637 = vsel %vm149, %v4634, 0
  %4639 = vmatprep.subr.bf16.mxu0 0
  %4640 = vmatpush1.bf16.msra.mxu0 %v138
  %4641 = vmatprep.subr.bf16.mxu0 0
  %4642 = vmatpush1.bf16.msra.mxu0 %v137
  %4643 = vmatprep.subr.bf16.mxu0 0
  %4644 = vmatpush1.bf16.msra.mxu0 %v136
  %4645 = vmatprep.subr.bf16.mxu0 0
  %4646 = vmatpush1.bf16.msra.mxu0 %v135
  %4647 = vmatprep.subr.bf16.mxu0 0
  %4648 = vmatpush1.bf16.msra.mxu0 %v134
  %4649 = vmatprep.subr.bf16.mxu0 0
  %4650 = vmatpush1.bf16.msra.mxu0 %v133
  %4651 = vmatprep.subr.bf16.mxu0 0
  %4652 = vmatpush1.bf16.msra.mxu0 %v132
  %4653 = vmatprep.subr.bf16.mxu0 0
  %4654 = vmatpush1.bf16.msra.mxu0 %v131
  %4655 = vmatprep.subr.bf16.mxu0 0
  %4656 = vmatpush2.bf16.msra.mxu0 0
  %4657 = vmatprep.subr.bf16.mxu0 0
  %4658 = vmatpush2.bf16.msra.mxu0 0
  %4659 = vmatprep.subr.bf16.mxu0 0
  %4660 = vmatpush2.bf16.msra.mxu0 0
  %4661 = vmatprep.subr.bf16.mxu0 0
  %4662 = vmatpush2.bf16.msra.mxu0 0
  %4663 = vmatprep.subr.bf16.mxu0 0
  %4664 = vmatpush2.bf16.msra.mxu0 0
  %4665 = vmatprep.subr.bf16.mxu0 0
  %4666 = vmatpush2.bf16.msra.mxu0 0
  %4667 = vmatprep.subr.bf16.mxu0 0
  %4668 = vmatpush2.bf16.msra.mxu0 0
  %4669 = vmatprep.subr.bf16.mxu0 0
  %4670 = vmatpush2.bf16.msra.mxu0 %v139
  %4671 = vmatprep.mubr.bf16.mxu0 %v4637
  %4672 = vmatmul.mubr.bf16.gmra.mxu0 %v4627
  %v4673 = vpop.f32.mrf.mxu0
  %v4674 = vadd.f32 %v69, %v4673
  %v4675 = vpop.f32.mrf.mxu0
  %v4676 = vpop.f32.mrf.mxu0
  %v4677 = vpop.f32.mrf.mxu0
  %4678 = vdwg.mxu0
  %v4679 = vmax.f32 %v4674, 0.0
  %v4680 = vpack.c.bf16 %v4679, %v4679
  %s4681 = scalar_lea.vmem %s3, 544
  %v4682 = vld [vmem:[%s4681] sm:$0xf]
  %v4683 = vld [vmem:[%s4681 + $0x4] sm:$0xf]
  %v4684 = vld [vmem:[%s4681 + $0x8] sm:$0xf]
  %v4685 = vld [vmem:[%s4681 + $0xc] sm:$0xf]
  %v4690 = vunpack.c.l.b16 %v4682
  %v4691 = vunpack.c.l.b16 %v4683
  %v4692 = vunpack.c.l.b16 %v4684
  %v4693 = vunpack.c.l.b16 %v4685
  %v4694 = vpack.c.b16 %v4691, %v4690
  %v4695 = vpack.c.b16 %v4693, %v4692
  %v4699 = vsel %vm287, %v4680, 0
  %4701 = vmatprep.subr.bf16.mxu0 0
  %4702 = vmatpush1.bf16.msra.mxu0 0
  %4703 = vmatprep.subr.bf16.mxu0 0
  %4704 = vmatpush1.bf16.msra.mxu0 0
  %4705 = vmatprep.subr.bf16.mxu0 0
  %4706 = vmatpush1.bf16.msra.mxu0 0
  %4707 = vmatprep.subr.bf16.mxu0 0
  %4708 = vmatpush1.bf16.msra.mxu0 0
  %4709 = vmatprep.subr.bf16.mxu0 0
  %4710 = vmatpush1.bf16.msra.mxu0 0
  %4711 = vmatprep.subr.bf16.mxu0 0
  %4712 = vmatpush1.bf16.msra.mxu0 0
  %4713 = vmatprep.subr.bf16.mxu0 0
  %4714 = vmatpush1.bf16.msra.mxu0 %v4695
  %4715 = vmatprep.subr.bf16.mxu0 0
  %4716 = vmatpush1.bf16.msra.mxu0 %v4694
  %4717 = vmatprep.subr.bf16.mxu0 0
  %4718 = vmatpush2.bf16.msra.mxu0 0
  %4719 = vmatprep.subr.bf16.mxu0 0
  %4720 = vmatpush2.bf16.msra.mxu0 0
  %4721 = vmatprep.subr.bf16.mxu0 0
  %4722 = vmatpush2.bf16.msra.mxu0 0
  %4723 = vmatprep.subr.bf16.mxu0 0
  %4724 = vmatpush2.bf16.msra.mxu0 0
  %4725 = vmatprep.subr.bf16.mxu0 0
  %4726 = vmatpush2.bf16.msra.mxu0 0
  %4727 = vmatprep.subr.bf16.mxu0 0
  %4728 = vmatpush2.bf16.msra.mxu0 0
  %4729 = vmatprep.subr.bf16.mxu0 0
  %4730 = vmatpush2.bf16.msra.mxu0 0
  %4731 = vmatprep.subr.bf16.mxu0 0
  %4732 = vmatpush2.bf16.msra.mxu0 0
  %4733 = vmatprep.mubr.bf16.mxu0 0
  %4734 = vmatmul.mubr.bf16.gmra.mxu0 %v4699
  %v4735 = vpop.f32.mrf.mxu0
  %v4736 = vadd.f32 0.0, %v4735
  %v4737 = vpop.f32.mrf.mxu0
  %v4738 = vpop.f32.mrf.mxu0
  %v4739 = vpop.f32.mrf.mxu0
  %4740 = vdwg.mxu0
  %v4741 = vadd.f32 %v4609, %v4736
  %s4742 = scalar_lea.vmem %s0, 70
  %v4743 = vld [vmem:[%s4742] sm:$0x3]
  %v4746 = vunpack.c.l.s4 1966171168
  %v4747 = vunpack.c.0.s8 %v4746
  %v4748 = vlaneseq
  %v4749 = vshrl.u32 %v4748, 7
  %v4750 = vsub.s32 %v4747, %v4749
  %v4751 = vrot.slane %v4743, %v4750
  %v4752 = vcombine.high %v4751, %v4751
  %v4754 = vunpack.c.l.s4 1966171168
  %v4755 = vunpack.c.0.s8 %v4754
  %v4756 = vlaneseq
  %v4757 = vshrl.u32 %v4756, 7
  %v4758 = vsub.s32 %v4755, %v4757
  %v4759 = vrot.slane %v4751, %v4758
  %v4761 = vunpack.c.l.s4 1966171168
  %v4762 = vunpack.c.0.s8 %v4761
  %v4763 = vlaneseq
  %v4764 = vshrl.u32 %v4763, 7
  %v4765 = vsub.s32 %v4762, %v4764
  %v4766 = vrot.slane %v4752, %v4765
  %v4769 = vsel %vm149, %v4766, 0
  %4771 = vmatprep.subr.bf16.mxu0 0
  %4772 = vmatpush1.bf16.msra.mxu0 %v138
  %4773 = vmatprep.subr.bf16.mxu0 0
  %4774 = vmatpush1.bf16.msra.mxu0 %v137
  %4775 = vmatprep.subr.bf16.mxu0 0
  %4776 = vmatpush1.bf16.msra.mxu0 %v136
  %4777 = vmatprep.subr.bf16.mxu0 0
  %4778 = vmatpush1.bf16.msra.mxu0 %v135
  %4779 = vmatprep.subr.bf16.mxu0 0
  %4780 = vmatpush1.bf16.msra.mxu0 %v134
  %4781 = vmatprep.subr.bf16.mxu0 0
  %4782 = vmatpush1.bf16.msra.mxu0 %v133
  %4783 = vmatprep.subr.bf16.mxu0 0
  %4784 = vmatpush1.bf16.msra.mxu0 %v132
  %4785 = vmatprep.subr.bf16.mxu0 0
  %4786 = vmatpush1.bf16.msra.mxu0 %v131
  %4787 = vmatprep.subr.bf16.mxu0 0
  %4788 = vmatpush2.bf16.msra.mxu0 0
  %4789 = vmatprep.subr.bf16.mxu0 0
  %4790 = vmatpush2.bf16.msra.mxu0 0
  %4791 = vmatprep.subr.bf16.mxu0 0
  %4792 = vmatpush2.bf16.msra.mxu0 0
  %4793 = vmatprep.subr.bf16.mxu0 0
  %4794 = vmatpush2.bf16.msra.mxu0 0
  %4795 = vmatprep.subr.bf16.mxu0 0
  %4796 = vmatpush2.bf16.msra.mxu0 0
  %4797 = vmatprep.subr.bf16.mxu0 0
  %4798 = vmatpush2.bf16.msra.mxu0 0
  %4799 = vmatprep.subr.bf16.mxu0 0
  %4800 = vmatpush2.bf16.msra.mxu0 0
  %4801 = vmatprep.subr.bf16.mxu0 0
  %4802 = vmatpush2.bf16.msra.mxu0 %v139
  %4803 = vmatprep.mubr.bf16.mxu0 %v4769
  %4804 = vmatmul.mubr.bf16.gmra.mxu0 %v4759
  %v4805 = vpop.f32.mrf.mxu0
  %v4806 = vadd.f32 %v69, %v4805
  %v4807 = vpop.f32.mrf.mxu0
  %v4808 = vpop.f32.mrf.mxu0
  %v4809 = vpop.f32.mrf.mxu0
  %4810 = vdwg.mxu0
  %v4811 = vmax.f32 %v4806, 0.0
  %v4812 = vpack.c.bf16 %v4811, %v4811
  %s4813 = scalar_lea.vmem %s3, 560
  %v4814 = vld [vmem:[%s4813] sm:$0xf]
  %v4815 = vld [vmem:[%s4813 + $0x4] sm:$0xf]
  %v4816 = vld [vmem:[%s4813 + $0x8] sm:$0xf]
  %v4817 = vld [vmem:[%s4813 + $0xc] sm:$0xf]
  %v4822 = vunpack.c.l.b16 %v4814
  %v4823 = vunpack.c.l.b16 %v4815
  %v4824 = vunpack.c.l.b16 %v4816
  %v4825 = vunpack.c.l.b16 %v4817
  %v4826 = vpack.c.b16 %v4823, %v4822
  %v4827 = vpack.c.b16 %v4825, %v4824
  %v4831 = vsel %vm287, %v4812, 0
  %4833 = vmatprep.subr.bf16.mxu0 0
  %4834 = vmatpush1.bf16.msra.mxu0 0
  %4835 = vmatprep.subr.bf16.mxu0 0
  %4836 = vmatpush1.bf16.msra.mxu0 0
  %4837 = vmatprep.subr.bf16.mxu0 0
  %4838 = vmatpush1.bf16.msra.mxu0 0
  %4839 = vmatprep.subr.bf16.mxu0 0
  %4840 = vmatpush1.bf16.msra.mxu0 0
  %4841 = vmatprep.subr.bf16.mxu0 0
  %4842 = vmatpush1.bf16.msra.mxu0 0
  %4843 = vmatprep.subr.bf16.mxu0 0
  %4844 = vmatpush1.bf16.msra.mxu0 0
  %4845 = vmatprep.subr.bf16.mxu0 0
  %4846 = vmatpush1.bf16.msra.mxu0 %v4827
  %4847 = vmatprep.subr.bf16.mxu0 0
  %4848 = vmatpush1.bf16.msra.mxu0 %v4826
  %4849 = vmatprep.subr.bf16.mxu0 0
  %4850 = vmatpush2.bf16.msra.mxu0 0
  %4851 = vmatprep.subr.bf16.mxu0 0
  %4852 = vmatpush2.bf16.msra.mxu0 0
  %4853 = vmatprep.subr.bf16.mxu0 0
  %4854 = vmatpush2.bf16.msra.mxu0 0
  %4855 = vmatprep.subr.bf16.mxu0 0
  %4856 = vmatpush2.bf16.msra.mxu0 0
  %4857 = vmatprep.subr.bf16.mxu0 0
  %4858 = vmatpush2.bf16.msra.mxu0 0
  %4859 = vmatprep.subr.bf16.mxu0 0
  %4860 = vmatpush2.bf16.msra.mxu0 0
  %4861 = vmatprep.subr.bf16.mxu0 0
  %4862 = vmatpush2.bf16.msra.mxu0 0
  %4863 = vmatprep.subr.bf16.mxu0 0
  %4864 = vmatpush2.bf16.msra.mxu0 0
  %4865 = vmatprep.mubr.bf16.mxu0 0
  %4866 = vmatmul.mubr.bf16.gmra.mxu0 %v4831
  %v4867 = vpop.f32.mrf.mxu0
  %v4868 = vadd.f32 0.0, %v4867
  %v4869 = vpop.f32.mrf.mxu0
  %v4870 = vpop.f32.mrf.mxu0
  %v4871 = vpop.f32.mrf.mxu0
  %4872 = vdwg.mxu0
  %v4873 = vadd.f32 %v4741, %v4868
  %s4874 = scalar_lea.vmem %s0, 72
  %v4875 = vld [vmem:[%s4874] sm:$0x3]
  %v4878 = vunpack.c.l.s4 1966171168
  %v4879 = vunpack.c.0.s8 %v4878
  %v4880 = vlaneseq
  %v4881 = vshrl.u32 %v4880, 7
  %v4882 = vsub.s32 %v4879, %v4881
  %v4883 = vrot.slane %v4875, %v4882
  %v4884 = vcombine.high %v4883, %v4883
  %v4886 = vunpack.c.l.s4 1966171168
  %v4887 = vunpack.c.0.s8 %v4886
  %v4888 = vlaneseq
  %v4889 = vshrl.u32 %v4888, 7
  %v4890 = vsub.s32 %v4887, %v4889
  %v4891 = vrot.slane %v4883, %v4890
  %v4893 = vunpack.c.l.s4 1966171168
  %v4894 = vunpack.c.0.s8 %v4893
  %v4895 = vlaneseq
  %v4896 = vshrl.u32 %v4895, 7
  %v4897 = vsub.s32 %v4894, %v4896
  %v4898 = vrot.slane %v4884, %v4897
  %v4901 = vsel %vm149, %v4898, 0
  %4903 = vmatprep.subr.bf16.mxu0 0
  %4904 = vmatpush1.bf16.msra.mxu0 %v138
  %4905 = vmatprep.subr.bf16.mxu0 0
  %4906 = vmatpush1.bf16.msra.mxu0 %v137
  %4907 = vmatprep.subr.bf16.mxu0 0
  %4908 = vmatpush1.bf16.msra.mxu0 %v136
  %4909 = vmatprep.subr.bf16.mxu0 0
  %4910 = vmatpush1.bf16.msra.mxu0 %v135
  %4911 = vmatprep.subr.bf16.mxu0 0
  %4912 = vmatpush1.bf16.msra.mxu0 %v134
  %4913 = vmatprep.subr.bf16.mxu0 0
  %4914 = vmatpush1.bf16.msra.mxu0 %v133
  %4915 = vmatprep.subr.bf16.mxu0 0
  %4916 = vmatpush1.bf16.msra.mxu0 %v132
  %4917 = vmatprep.subr.bf16.mxu0 0
  %4918 = vmatpush1.bf16.msra.mxu0 %v131
  %4919 = vmatprep.subr.bf16.mxu0 0
  %4920 = vmatpush2.bf16.msra.mxu0 0
  %4921 = vmatprep.subr.bf16.mxu0 0
  %4922 = vmatpush2.bf16.msra.mxu0 0
  %4923 = vmatprep.subr.bf16.mxu0 0
  %4924 = vmatpush2.bf16.msra.mxu0 0
  %4925 = vmatprep.subr.bf16.mxu0 0
  %4926 = vmatpush2.bf16.msra.mxu0 0
  %4927 = vmatprep.subr.bf16.mxu0 0
  %4928 = vmatpush2.bf16.msra.mxu0 0
  %4929 = vmatprep.subr.bf16.mxu0 0
  %4930 = vmatpush2.bf16.msra.mxu0 0
  %4931 = vmatprep.subr.bf16.mxu0 0
  %4932 = vmatpush2.bf16.msra.mxu0 0
  %4933 = vmatprep.subr.bf16.mxu0 0
  %4934 = vmatpush2.bf16.msra.mxu0 %v139
  %4935 = vmatprep.mubr.bf16.mxu0 %v4901
  %4936 = vmatmul.mubr.bf16.gmra.mxu0 %v4891
  %v4937 = vpop.f32.mrf.mxu0
  %v4938 = vadd.f32 %v69, %v4937
  %v4939 = vpop.f32.mrf.mxu0
  %v4940 = vpop.f32.mrf.mxu0
  %v4941 = vpop.f32.mrf.mxu0
  %4942 = vdwg.mxu0
  %v4943 = vmax.f32 %v4938, 0.0
  %v4944 = vpack.c.bf16 %v4943, %v4943
  %s4945 = scalar_lea.vmem %s3, 576
  %v4946 = vld [vmem:[%s4945] sm:$0xf]
  %v4947 = vld [vmem:[%s4945 + $0x4] sm:$0xf]
  %v4948 = vld [vmem:[%s4945 + $0x8] sm:$0xf]
  %v4949 = vld [vmem:[%s4945 + $0xc] sm:$0xf]
  %v4954 = vunpack.c.l.b16 %v4946
  %v4955 = vunpack.c.l.b16 %v4947
  %v4956 = vunpack.c.l.b16 %v4948
  %v4957 = vunpack.c.l.b16 %v4949
  %v4958 = vpack.c.b16 %v4955, %v4954
  %v4959 = vpack.c.b16 %v4957, %v4956
  %v4963 = vsel %vm287, %v4944, 0
  %4965 = vmatprep.subr.bf16.mxu0 0
  %4966 = vmatpush1.bf16.msra.mxu0 0
  %4967 = vmatprep.subr.bf16.mxu0 0
  %4968 = vmatpush1.bf16.msra.mxu0 0
  %4969 = vmatprep.subr.bf16.mxu0 0
  %4970 = vmatpush1.bf16.msra.mxu0 0
  %4971 = vmatprep.subr.bf16.mxu0 0
  %4972 = vmatpush1.bf16.msra.mxu0 0
  %4973 = vmatprep.subr.bf16.mxu0 0
  %4974 = vmatpush1.bf16.msra.mxu0 0
  %4975 = vmatprep.subr.bf16.mxu0 0
  %4976 = vmatpush1.bf16.msra.mxu0 0
  %4977 = vmatprep.subr.bf16.mxu0 0
  %4978 = vmatpush1.bf16.msra.mxu0 %v4959
  %4979 = vmatprep.subr.bf16.mxu0 0
  %4980 = vmatpush1.bf16.msra.mxu0 %v4958
  %4981 = vmatprep.subr.bf16.mxu0 0
  %4982 = vmatpush2.bf16.msra.mxu0 0
  %4983 = vmatprep.subr.bf16.mxu0 0
  %4984 = vmatpush2.bf16.msra.mxu0 0
  %4985 = vmatprep.subr.bf16.mxu0 0
  %4986 = vmatpush2.bf16.msra.mxu0 0
  %4987 = vmatprep.subr.bf16.mxu0 0
  %4988 = vmatpush2.bf16.msra.mxu0 0
  %4989 = vmatprep.subr.bf16.mxu0 0
  %4990 = vmatpush2.bf16.msra.mxu0 0
  %4991 = vmatprep.subr.bf16.mxu0 0
  %4992 = vmatpush2.bf16.msra.mxu0 0
  %4993 = vmatprep.subr.bf16.mxu0 0
  %4994 = vmatpush2.bf16.msra.mxu0 0
  %4995 = vmatprep.subr.bf16.mxu0 0
  %4996 = vmatpush2.bf16.msra.mxu0 0
  %4997 = vmatprep.mubr.bf16.mxu0 0
  %4998 = vmatmul.mubr.bf16.gmra.mxu0 %v4963
  %v4999 = vpop.f32.mrf.mxu0
  %v5000 = vadd.f32 0.0, %v4999
  %v5001 = vpop.f32.mrf.mxu0
  %v5002 = vpop.f32.mrf.mxu0
  %v5003 = vpop.f32.mrf.mxu0
  %5004 = vdwg.mxu0
  %v5005 = vadd.f32 %v4873, %v5000
  %s5006 = scalar_lea.vmem %s0, 74
  %v5007 = vld [vmem:[%s5006] sm:$0x3]
  %v5010 = vunpack.c.l.s4 1966171168
  %v5011 = vunpack.c.0.s8 %v5010
  %v5012 = vlaneseq
  %v5013 = vshrl.u32 %v5012, 7
  %v5014 = vsub.s32 %v5011, %v5013
  %v5015 = vrot.slane %v5007, %v5014
  %v5016 = vcombine.high %v5015, %v5015
  %v5018 = vunpack.c.l.s4 1966171168
  %v5019 = vunpack.c.0.s8 %v5018
  %v5020 = vlaneseq
  %v5021 = vshrl.u32 %v5020, 7
  %v5022 = vsub.s32 %v5019, %v5021
  %v5023 = vrot.slane %v5015, %v5022
  %v5025 = vunpack.c.l.s4 1966171168
  %v5026 = vunpack.c.0.s8 %v5025
  %v5027 = vlaneseq
  %v5028 = vshrl.u32 %v5027, 7
  %v5029 = vsub.s32 %v5026, %v5028
  %v5030 = vrot.slane %v5016, %v5029
  %v5033 = vsel %vm149, %v5030, 0
  %5035 = vmatprep.subr.bf16.mxu0 0
  %5036 = vmatpush1.bf16.msra.mxu0 %v138
  %5037 = vmatprep.subr.bf16.mxu0 0
  %5038 = vmatpush1.bf16.msra.mxu0 %v137
  %5039 = vmatprep.subr.bf16.mxu0 0
  %5040 = vmatpush1.bf16.msra.mxu0 %v136
  %5041 = vmatprep.subr.bf16.mxu0 0
  %5042 = vmatpush1.bf16.msra.mxu0 %v135
  %5043 = vmatprep.subr.bf16.mxu0 0
  %5044 = vmatpush1.bf16.msra.mxu0 %v134
  %5045 = vmatprep.subr.bf16.mxu0 0
  %5046 = vmatpush1.bf16.msra.mxu0 %v133
  %5047 = vmatprep.subr.bf16.mxu0 0
  %5048 = vmatpush1.bf16.msra.mxu0 %v132
  %5049 = vmatprep.subr.bf16.mxu0 0
  %5050 = vmatpush1.bf16.msra.mxu0 %v131
  %5051 = vmatprep.subr.bf16.mxu0 0
  %5052 = vmatpush2.bf16.msra.mxu0 0
  %5053 = vmatprep.subr.bf16.mxu0 0
  %5054 = vmatpush2.bf16.msra.mxu0 0
  %5055 = vmatprep.subr.bf16.mxu0 0
  %5056 = vmatpush2.bf16.msra.mxu0 0
  %5057 = vmatprep.subr.bf16.mxu0 0
  %5058 = vmatpush2.bf16.msra.mxu0 0
  %5059 = vmatprep.subr.bf16.mxu0 0
  %5060 = vmatpush2.bf16.msra.mxu0 0
  %5061 = vmatprep.subr.bf16.mxu0 0
  %5062 = vmatpush2.bf16.msra.mxu0 0
  %5063 = vmatprep.subr.bf16.mxu0 0
  %5064 = vmatpush2.bf16.msra.mxu0 0
  %5065 = vmatprep.subr.bf16.mxu0 0
  %5066 = vmatpush2.bf16.msra.mxu0 %v139
  %5067 = vmatprep.mubr.bf16.mxu0 %v5033
  %5068 = vmatmul.mubr.bf16.gmra.mxu0 %v5023
  %v5069 = vpop.f32.mrf.mxu0
  %v5070 = vadd.f32 %v69, %v5069
  %v5071 = vpop.f32.mrf.mxu0
  %v5072 = vpop.f32.mrf.mxu0
  %v5073 = vpop.f32.mrf.mxu0
  %5074 = vdwg.mxu0
  %v5075 = vmax.f32 %v5070, 0.0
  %v5076 = vpack.c.bf16 %v5075, %v5075
  %s5077 = scalar_lea.vmem %s3, 592
  %v5078 = vld [vmem:[%s5077] sm:$0xf]
  %v5079 = vld [vmem:[%s5077 + $0x4] sm:$0xf]
  %v5080 = vld [vmem:[%s5077 + $0x8] sm:$0xf]
  %v5081 = vld [vmem:[%s5077 + $0xc] sm:$0xf]
  %v5086 = vunpack.c.l.b16 %v5078
  %v5087 = vunpack.c.l.b16 %v5079
  %v5088 = vunpack.c.l.b16 %v5080
  %v5089 = vunpack.c.l.b16 %v5081
  %v5090 = vpack.c.b16 %v5087, %v5086
  %v5091 = vpack.c.b16 %v5089, %v5088
  %v5095 = vsel %vm287, %v5076, 0
  %5097 = vmatprep.subr.bf16.mxu0 0
  %5098 = vmatpush1.bf16.msra.mxu0 0
  %5099 = vmatprep.subr.bf16.mxu0 0
  %5100 = vmatpush1.bf16.msra.mxu0 0
  %5101 = vmatprep.subr.bf16.mxu0 0
  %5102 = vmatpush1.bf16.msra.mxu0 0
  %5103 = vmatprep.subr.bf16.mxu0 0
  %5104 = vmatpush1.bf16.msra.mxu0 0
  %5105 = vmatprep.subr.bf16.mxu0 0
  %5106 = vmatpush1.bf16.msra.mxu0 0
  %5107 = vmatprep.subr.bf16.mxu0 0
  %5108 = vmatpush1.bf16.msra.mxu0 0
  %5109 = vmatprep.subr.bf16.mxu0 0
  %5110 = vmatpush1.bf16.msra.mxu0 %v5091
  %5111 = vmatprep.subr.bf16.mxu0 0
  %5112 = vmatpush1.bf16.msra.mxu0 %v5090
  %5113 = vmatprep.subr.bf16.mxu0 0
  %5114 = vmatpush2.bf16.msra.mxu0 0
  %5115 = vmatprep.subr.bf16.mxu0 0
  %5116 = vmatpush2.bf16.msra.mxu0 0
  %5117 = vmatprep.subr.bf16.mxu0 0
  %5118 = vmatpush2.bf16.msra.mxu0 0
  %5119 = vmatprep.subr.bf16.mxu0 0
  %5120 = vmatpush2.bf16.msra.mxu0 0
  %5121 = vmatprep.subr.bf16.mxu0 0
  %5122 = vmatpush2.bf16.msra.mxu0 0
  %5123 = vmatprep.subr.bf16.mxu0 0
  %5124 = vmatpush2.bf16.msra.mxu0 0
  %5125 = vmatprep.subr.bf16.mxu0 0
  %5126 = vmatpush2.bf16.msra.mxu0 0
  %5127 = vmatprep.subr.bf16.mxu0 0
  %5128 = vmatpush2.bf16.msra.mxu0 0
  %5129 = vmatprep.mubr.bf16.mxu0 0
  %5130 = vmatmul.mubr.bf16.gmra.mxu0 %v5095
  %v5131 = vpop.f32.mrf.mxu0
  %v5132 = vadd.f32 0.0, %v5131
  %v5133 = vpop.f32.mrf.mxu0
  %v5134 = vpop.f32.mrf.mxu0
  %v5135 = vpop.f32.mrf.mxu0
  %5136 = vdwg.mxu0
  %v5137 = vadd.f32 %v5005, %v5132
  %s5138 = scalar_lea.vmem %s0, 76
  %v5139 = vld [vmem:[%s5138] sm:$0x3]
  %v5142 = vunpack.c.l.s4 1966171168
  %v5143 = vunpack.c.0.s8 %v5142
  %v5144 = vlaneseq
  %v5145 = vshrl.u32 %v5144, 7
  %v5146 = vsub.s32 %v5143, %v5145
  %v5147 = vrot.slane %v5139, %v5146
  %v5148 = vcombine.high %v5147, %v5147
  %v5150 = vunpack.c.l.s4 1966171168
  %v5151 = vunpack.c.0.s8 %v5150
  %v5152 = vlaneseq
  %v5153 = vshrl.u32 %v5152, 7
  %v5154 = vsub.s32 %v5151, %v5153
  %v5155 = vrot.slane %v5147, %v5154
  %v5157 = vunpack.c.l.s4 1966171168
  %v5158 = vunpack.c.0.s8 %v5157
  %v5159 = vlaneseq
  %v5160 = vshrl.u32 %v5159, 7
  %v5161 = vsub.s32 %v5158, %v5160
  %v5162 = vrot.slane %v5148, %v5161
  %v5165 = vsel %vm149, %v5162, 0
  %5167 = vmatprep.subr.bf16.mxu0 0
  %5168 = vmatpush1.bf16.msra.mxu0 %v138
  %5169 = vmatprep.subr.bf16.mxu0 0
  %5170 = vmatpush1.bf16.msra.mxu0 %v137
  %5171 = vmatprep.subr.bf16.mxu0 0
  %5172 = vmatpush1.bf16.msra.mxu0 %v136
  %5173 = vmatprep.subr.bf16.mxu0 0
  %5174 = vmatpush1.bf16.msra.mxu0 %v135
  %5175 = vmatprep.subr.bf16.mxu0 0
  %5176 = vmatpush1.bf16.msra.mxu0 %v134
  %5177 = vmatprep.subr.bf16.mxu0 0
  %5178 = vmatpush1.bf16.msra.mxu0 %v133
  %5179 = vmatprep.subr.bf16.mxu0 0
  %5180 = vmatpush1.bf16.msra.mxu0 %v132
  %5181 = vmatprep.subr.bf16.mxu0 0
  %5182 = vmatpush1.bf16.msra.mxu0 %v131
  %5183 = vmatprep.subr.bf16.mxu0 0
  %5184 = vmatpush2.bf16.msra.mxu0 0
  %5185 = vmatprep.subr.bf16.mxu0 0
  %5186 = vmatpush2.bf16.msra.mxu0 0
  %5187 = vmatprep.subr.bf16.mxu0 0
  %5188 = vmatpush2.bf16.msra.mxu0 0
  %5189 = vmatprep.subr.bf16.mxu0 0
  %5190 = vmatpush2.bf16.msra.mxu0 0
  %5191 = vmatprep.subr.bf16.mxu0 0
  %5192 = vmatpush2.bf16.msra.mxu0 0
  %5193 = vmatprep.subr.bf16.mxu0 0
  %5194 = vmatpush2.bf16.msra.mxu0 0
  %5195 = vmatprep.subr.bf16.mxu0 0
  %5196 = vmatpush2.bf16.msra.mxu0 0
  %5197 = vmatprep.subr.bf16.mxu0 0
  %5198 = vmatpush2.bf16.msra.mxu0 %v139
  %5199 = vmatprep.mubr.bf16.mxu0 %v5165
  %5200 = vmatmul.mubr.bf16.gmra.mxu0 %v5155
  %v5201 = vpop.f32.mrf.mxu0
  %v5202 = vadd.f32 %v69, %v5201
  %v5203 = vpop.f32.mrf.mxu0
  %v5204 = vpop.f32.mrf.mxu0
  %v5205 = vpop.f32.mrf.mxu0
  %5206 = vdwg.mxu0
  %v5207 = vmax.f32 %v5202, 0.0
  %v5208 = vpack.c.bf16 %v5207, %v5207
  %s5209 = scalar_lea.vmem %s3, 608
  %v5210 = vld [vmem:[%s5209] sm:$0xf]
  %v5211 = vld [vmem:[%s5209 + $0x4] sm:$0xf]
  %v5212 = vld [vmem:[%s5209 + $0x8] sm:$0xf]
  %v5213 = vld [vmem:[%s5209 + $0xc] sm:$0xf]
  %v5218 = vunpack.c.l.b16 %v5210
  %v5219 = vunpack.c.l.b16 %v5211
  %v5220 = vunpack.c.l.b16 %v5212
  %v5221 = vunpack.c.l.b16 %v5213
  %v5222 = vpack.c.b16 %v5219, %v5218
  %v5223 = vpack.c.b16 %v5221, %v5220
  %v5227 = vsel %vm287, %v5208, 0
  %5229 = vmatprep.subr.bf16.mxu0 0
  %5230 = vmatpush1.bf16.msra.mxu0 0
  %5231 = vmatprep.subr.bf16.mxu0 0
  %5232 = vmatpush1.bf16.msra.mxu0 0
  %5233 = vmatprep.subr.bf16.mxu0 0
  %5234 = vmatpush1.bf16.msra.mxu0 0
  %5235 = vmatprep.subr.bf16.mxu0 0
  %5236 = vmatpush1.bf16.msra.mxu0 0
  %5237 = vmatprep.subr.bf16.mxu0 0
  %5238 = vmatpush1.bf16.msra.mxu0 0
  %5239 = vmatprep.subr.bf16.mxu0 0
  %5240 = vmatpush1.bf16.msra.mxu0 0
  %5241 = vmatprep.subr.bf16.mxu0 0
  %5242 = vmatpush1.bf16.msra.mxu0 %v5223
  %5243 = vmatprep.subr.bf16.mxu0 0
  %5244 = vmatpush1.bf16.msra.mxu0 %v5222
  %5245 = vmatprep.subr.bf16.mxu0 0
  %5246 = vmatpush2.bf16.msra.mxu0 0
  %5247 = vmatprep.subr.bf16.mxu0 0
  %5248 = vmatpush2.bf16.msra.mxu0 0
  %5249 = vmatprep.subr.bf16.mxu0 0
  %5250 = vmatpush2.bf16.msra.mxu0 0
  %5251 = vmatprep.subr.bf16.mxu0 0
  %5252 = vmatpush2.bf16.msra.mxu0 0
  %5253 = vmatprep.subr.bf16.mxu0 0
  %5254 = vmatpush2.bf16.msra.mxu0 0
  %5255 = vmatprep.subr.bf16.mxu0 0
  %5256 = vmatpush2.bf16.msra.mxu0 0
  %5257 = vmatprep.subr.bf16.mxu0 0
  %5258 = vmatpush2.bf16.msra.mxu0 0
  %5259 = vmatprep.subr.bf16.mxu0 0
  %5260 = vmatpush2.bf16.msra.mxu0 0
  %5261 = vmatprep.mubr.bf16.mxu0 0
  %5262 = vmatmul.mubr.bf16.gmra.mxu0 %v5227
  %v5263 = vpop.f32.mrf.mxu0
  %v5264 = vadd.f32 0.0, %v5263
  %v5265 = vpop.f32.mrf.mxu0
  %v5266 = vpop.f32.mrf.mxu0
  %v5267 = vpop.f32.mrf.mxu0
  %5268 = vdwg.mxu0
  %v5269 = vadd.f32 %v5137, %v5264
  %s5270 = scalar_lea.vmem %s0, 78
  %v5271 = vld [vmem:[%s5270] sm:$0x3]
  %v5274 = vunpack.c.l.s4 1966171168
  %v5275 = vunpack.c.0.s8 %v5274
  %v5276 = vlaneseq
  %v5277 = vshrl.u32 %v5276, 7
  %v5278 = vsub.s32 %v5275, %v5277
  %v5279 = vrot.slane %v5271, %v5278
  %v5280 = vcombine.high %v5279, %v5279
  %v5282 = vunpack.c.l.s4 1966171168
  %v5283 = vunpack.c.0.s8 %v5282
  %v5284 = vlaneseq
  %v5285 = vshrl.u32 %v5284, 7
  %v5286 = vsub.s32 %v5283, %v5285
  %v5287 = vrot.slane %v5279, %v5286
  %v5289 = vunpack.c.l.s4 1966171168
  %v5290 = vunpack.c.0.s8 %v5289
  %v5291 = vlaneseq
  %v5292 = vshrl.u32 %v5291, 7
  %v5293 = vsub.s32 %v5290, %v5292
  %v5294 = vrot.slane %v5280, %v5293
  %v5297 = vsel %vm149, %v5294, 0
  %5299 = vmatprep.subr.bf16.mxu0 0
  %5300 = vmatpush1.bf16.msra.mxu0 %v138
  %5301 = vmatprep.subr.bf16.mxu0 0
  %5302 = vmatpush1.bf16.msra.mxu0 %v137
  %5303 = vmatprep.subr.bf16.mxu0 0
  %5304 = vmatpush1.bf16.msra.mxu0 %v136
  %5305 = vmatprep.subr.bf16.mxu0 0
  %5306 = vmatpush1.bf16.msra.mxu0 %v135
  %5307 = vmatprep.subr.bf16.mxu0 0
  %5308 = vmatpush1.bf16.msra.mxu0 %v134
  %5309 = vmatprep.subr.bf16.mxu0 0
  %5310 = vmatpush1.bf16.msra.mxu0 %v133
  %5311 = vmatprep.subr.bf16.mxu0 0
  %5312 = vmatpush1.bf16.msra.mxu0 %v132
  %5313 = vmatprep.subr.bf16.mxu0 0
  %5314 = vmatpush1.bf16.msra.mxu0 %v131
  %5315 = vmatprep.subr.bf16.mxu0 0
  %5316 = vmatpush2.bf16.msra.mxu0 0
  %5317 = vmatprep.subr.bf16.mxu0 0
  %5318 = vmatpush2.bf16.msra.mxu0 0
  %5319 = vmatprep.subr.bf16.mxu0 0
  %5320 = vmatpush2.bf16.msra.mxu0 0
  %5321 = vmatprep.subr.bf16.mxu0 0
  %5322 = vmatpush2.bf16.msra.mxu0 0
  %5323 = vmatprep.subr.bf16.mxu0 0
  %5324 = vmatpush2.bf16.msra.mxu0 0
  %5325 = vmatprep.subr.bf16.mxu0 0
  %5326 = vmatpush2.bf16.msra.mxu0 0
  %5327 = vmatprep.subr.bf16.mxu0 0
  %5328 = vmatpush2.bf16.msra.mxu0 0
  %5329 = vmatprep.subr.bf16.mxu0 0
  %5330 = vmatpush2.bf16.msra.mxu0 %v139
  %5331 = vmatprep.mubr.bf16.mxu0 %v5297
  %5332 = vmatmul.mubr.bf16.gmra.mxu0 %v5287
  %v5333 = vpop.f32.mrf.mxu0
  %v5334 = vadd.f32 %v69, %v5333
  %v5335 = vpop.f32.mrf.mxu0
  %v5336 = vpop.f32.mrf.mxu0
  %v5337 = vpop.f32.mrf.mxu0
  %5338 = vdwg.mxu0
  %v5339 = vmax.f32 %v5334, 0.0
  %v5340 = vpack.c.bf16 %v5339, %v5339
  %s5341 = scalar_lea.vmem %s3, 624
  %v5342 = vld [vmem:[%s5341] sm:$0xf]
  %v5343 = vld [vmem:[%s5341 + $0x4] sm:$0xf]
  %v5344 = vld [vmem:[%s5341 + $0x8] sm:$0xf]
  %v5345 = vld [vmem:[%s5341 + $0xc] sm:$0xf]
  %v5350 = vunpack.c.l.b16 %v5342
  %v5351 = vunpack.c.l.b16 %v5343
  %v5352 = vunpack.c.l.b16 %v5344
  %v5353 = vunpack.c.l.b16 %v5345
  %v5354 = vpack.c.b16 %v5351, %v5350
  %v5355 = vpack.c.b16 %v5353, %v5352
  %v5359 = vsel %vm287, %v5340, 0
  %5361 = vmatprep.subr.bf16.mxu0 0
  %5362 = vmatpush1.bf16.msra.mxu0 0
  %5363 = vmatprep.subr.bf16.mxu0 0
  %5364 = vmatpush1.bf16.msra.mxu0 0
  %5365 = vmatprep.subr.bf16.mxu0 0
  %5366 = vmatpush1.bf16.msra.mxu0 0
  %5367 = vmatprep.subr.bf16.mxu0 0
  %5368 = vmatpush1.bf16.msra.mxu0 0
  %5369 = vmatprep.subr.bf16.mxu0 0
  %5370 = vmatpush1.bf16.msra.mxu0 0
  %5371 = vmatprep.subr.bf16.mxu0 0
  %5372 = vmatpush1.bf16.msra.mxu0 0
  %5373 = vmatprep.subr.bf16.mxu0 0
  %5374 = vmatpush1.bf16.msra.mxu0 %v5355
  %5375 = vmatprep.subr.bf16.mxu0 0
  %5376 = vmatpush1.bf16.msra.mxu0 %v5354
  %5377 = vmatprep.subr.bf16.mxu0 0
  %5378 = vmatpush2.bf16.msra.mxu0 0
  %5379 = vmatprep.subr.bf16.mxu0 0
  %5380 = vmatpush2.bf16.msra.mxu0 0
  %5381 = vmatprep.subr.bf16.mxu0 0
  %5382 = vmatpush2.bf16.msra.mxu0 0
  %5383 = vmatprep.subr.bf16.mxu0 0
  %5384 = vmatpush2.bf16.msra.mxu0 0
  %5385 = vmatprep.subr.bf16.mxu0 0
  %5386 = vmatpush2.bf16.msra.mxu0 0
  %5387 = vmatprep.subr.bf16.mxu0 0
  %5388 = vmatpush2.bf16.msra.mxu0 0
  %5389 = vmatprep.subr.bf16.mxu0 0
  %5390 = vmatpush2.bf16.msra.mxu0 0
  %5391 = vmatprep.subr.bf16.mxu0 0
  %5392 = vmatpush2.bf16.msra.mxu0 0
  %5393 = vmatprep.mubr.bf16.mxu0 0
  %5394 = vmatmul.mubr.bf16.gmra.mxu0 %v5359
  %v5395 = vpop.f32.mrf.mxu0
  %v5396 = vadd.f32 0.0, %v5395
  %v5397 = vpop.f32.mrf.mxu0
  %v5398 = vpop.f32.mrf.mxu0
  %v5399 = vpop.f32.mrf.mxu0
  %5400 = vdwg.mxu0
  %v5401 = vadd.f32 %v5269, %v5396
  %s5402 = scalar_lea.vmem %s0, 80
  %v5403 = vld [vmem:[%s5402] sm:$0x3]
  %v5406 = vunpack.c.l.s4 1966171168
  %v5407 = vunpack.c.0.s8 %v5406
  %v5408 = vlaneseq
  %v5409 = vshrl.u32 %v5408, 7
  %v5410 = vsub.s32 %v5407, %v5409
  %v5411 = vrot.slane %v5403, %v5410
  %v5412 = vcombine.high %v5411, %v5411
  %v5414 = vunpack.c.l.s4 1966171168
  %v5415 = vunpack.c.0.s8 %v5414
  %v5416 = vlaneseq
  %v5417 = vshrl.u32 %v5416, 7
  %v5418 = vsub.s32 %v5415, %v5417
  %v5419 = vrot.slane %v5411, %v5418
  %v5421 = vunpack.c.l.s4 1966171168
  %v5422 = vunpack.c.0.s8 %v5421
  %v5423 = vlaneseq
  %v5424 = vshrl.u32 %v5423, 7
  %v5425 = vsub.s32 %v5422, %v5424
  %v5426 = vrot.slane %v5412, %v5425
  %v5429 = vsel %vm149, %v5426, 0
  %5431 = vmatprep.subr.bf16.mxu0 0
  %5432 = vmatpush1.bf16.msra.mxu0 %v138
  %5433 = vmatprep.subr.bf16.mxu0 0
  %5434 = vmatpush1.bf16.msra.mxu0 %v137
  %5435 = vmatprep.subr.bf16.mxu0 0
  %5436 = vmatpush1.bf16.msra.mxu0 %v136
  %5437 = vmatprep.subr.bf16.mxu0 0
  %5438 = vmatpush1.bf16.msra.mxu0 %v135
  %5439 = vmatprep.subr.bf16.mxu0 0
  %5440 = vmatpush1.bf16.msra.mxu0 %v134
  %5441 = vmatprep.subr.bf16.mxu0 0
  %5442 = vmatpush1.bf16.msra.mxu0 %v133
  %5443 = vmatprep.subr.bf16.mxu0 0
  %5444 = vmatpush1.bf16.msra.mxu0 %v132
  %5445 = vmatprep.subr.bf16.mxu0 0
  %5446 = vmatpush1.bf16.msra.mxu0 %v131
  %5447 = vmatprep.subr.bf16.mxu0 0
  %5448 = vmatpush2.bf16.msra.mxu0 0
  %5449 = vmatprep.subr.bf16.mxu0 0
  %5450 = vmatpush2.bf16.msra.mxu0 0
  %5451 = vmatprep.subr.bf16.mxu0 0
  %5452 = vmatpush2.bf16.msra.mxu0 0
  %5453 = vmatprep.subr.bf16.mxu0 0
  %5454 = vmatpush2.bf16.msra.mxu0 0
  %5455 = vmatprep.subr.bf16.mxu0 0
  %5456 = vmatpush2.bf16.msra.mxu0 0
  %5457 = vmatprep.subr.bf16.mxu0 0
  %5458 = vmatpush2.bf16.msra.mxu0 0
  %5459 = vmatprep.subr.bf16.mxu0 0
  %5460 = vmatpush2.bf16.msra.mxu0 0
  %5461 = vmatprep.subr.bf16.mxu0 0
  %5462 = vmatpush2.bf16.msra.mxu0 %v139
  %5463 = vmatprep.mubr.bf16.mxu0 %v5429
  %5464 = vmatmul.mubr.bf16.gmra.mxu0 %v5419
  %v5465 = vpop.f32.mrf.mxu0
  %v5466 = vadd.f32 %v69, %v5465
  %v5467 = vpop.f32.mrf.mxu0
  %v5468 = vpop.f32.mrf.mxu0
  %v5469 = vpop.f32.mrf.mxu0
  %5470 = vdwg.mxu0
  %v5471 = vmax.f32 %v5466, 0.0
  %v5472 = vpack.c.bf16 %v5471, %v5471
  %s5473 = scalar_lea.vmem %s3, 640
  %v5474 = vld [vmem:[%s5473] sm:$0xf]
  %v5475 = vld [vmem:[%s5473 + $0x4] sm:$0xf]
  %v5476 = vld [vmem:[%s5473 + $0x8] sm:$0xf]
  %v5477 = vld [vmem:[%s5473 + $0xc] sm:$0xf]
  %v5482 = vunpack.c.l.b16 %v5474
  %v5483 = vunpack.c.l.b16 %v5475
  %v5484 = vunpack.c.l.b16 %v5476
  %v5485 = vunpack.c.l.b16 %v5477
  %v5486 = vpack.c.b16 %v5483, %v5482
  %v5487 = vpack.c.b16 %v5485, %v5484
  %v5491 = vsel %vm287, %v5472, 0
  %5493 = vmatprep.subr.bf16.mxu0 0
  %5494 = vmatpush1.bf16.msra.mxu0 0
  %5495 = vmatprep.subr.bf16.mxu0 0
  %5496 = vmatpush1.bf16.msra.mxu0 0
  %5497 = vmatprep.subr.bf16.mxu0 0
  %5498 = vmatpush1.bf16.msra.mxu0 0
  %5499 = vmatprep.subr.bf16.mxu0 0
  %5500 = vmatpush1.bf16.msra.mxu0 0
  %5501 = vmatprep.subr.bf16.mxu0 0
  %5502 = vmatpush1.bf16.msra.mxu0 0
  %5503 = vmatprep.subr.bf16.mxu0 0
  %5504 = vmatpush1.bf16.msra.mxu0 0
  %5505 = vmatprep.subr.bf16.mxu0 0
  %5506 = vmatpush1.bf16.msra.mxu0 %v5487
  %5507 = vmatprep.subr.bf16.mxu0 0
  %5508 = vmatpush1.bf16.msra.mxu0 %v5486
  %5509 = vmatprep.subr.bf16.mxu0 0
  %5510 = vmatpush2.bf16.msra.mxu0 0
  %5511 = vmatprep.subr.bf16.mxu0 0
  %5512 = vmatpush2.bf16.msra.mxu0 0
  %5513 = vmatprep.subr.bf16.mxu0 0
  %5514 = vmatpush2.bf16.msra.mxu0 0
  %5515 = vmatprep.subr.bf16.mxu0 0
  %5516 = vmatpush2.bf16.msra.mxu0 0
  %5517 = vmatprep.subr.bf16.mxu0 0
  %5518 = vmatpush2.bf16.msra.mxu0 0
  %5519 = vmatprep.subr.bf16.mxu0 0
  %5520 = vmatpush2.bf16.msra.mxu0 0
  %5521 = vmatprep.subr.bf16.mxu0 0
  %5522 = vmatpush2.bf16.msra.mxu0 0
  %5523 = vmatprep.subr.bf16.mxu0 0
  %5524 = vmatpush2.bf16.msra.mxu0 0
  %5525 = vmatprep.mubr.bf16.mxu0 0
  %5526 = vmatmul.mubr.bf16.gmra.mxu0 %v5491
  %v5527 = vpop.f32.mrf.mxu0
  %v5528 = vadd.f32 0.0, %v5527
  %v5529 = vpop.f32.mrf.mxu0
  %v5530 = vpop.f32.mrf.mxu0
  %v5531 = vpop.f32.mrf.mxu0
  %5532 = vdwg.mxu0
  %v5533 = vadd.f32 %v5401, %v5528
  %s5534 = scalar_lea.vmem %s0, 82
  %v5535 = vld [vmem:[%s5534] sm:$0x3]
  %v5538 = vunpack.c.l.s4 1966171168
  %v5539 = vunpack.c.0.s8 %v5538
  %v5540 = vlaneseq
  %v5541 = vshrl.u32 %v5540, 7
  %v5542 = vsub.s32 %v5539, %v5541
  %v5543 = vrot.slane %v5535, %v5542
  %v5544 = vcombine.high %v5543, %v5543
  %v5546 = vunpack.c.l.s4 1966171168
  %v5547 = vunpack.c.0.s8 %v5546
  %v5548 = vlaneseq
  %v5549 = vshrl.u32 %v5548, 7
  %v5550 = vsub.s32 %v5547, %v5549
  %v5551 = vrot.slane %v5543, %v5550
  %v5553 = vunpack.c.l.s4 1966171168
  %v5554 = vunpack.c.0.s8 %v5553
  %v5555 = vlaneseq
  %v5556 = vshrl.u32 %v5555, 7
  %v5557 = vsub.s32 %v5554, %v5556
  %v5558 = vrot.slane %v5544, %v5557
  %v5561 = vsel %vm149, %v5558, 0
  %5563 = vmatprep.subr.bf16.mxu0 0
  %5564 = vmatpush1.bf16.msra.mxu0 %v138
  %5565 = vmatprep.subr.bf16.mxu0 0
  %5566 = vmatpush1.bf16.msra.mxu0 %v137
  %5567 = vmatprep.subr.bf16.mxu0 0
  %5568 = vmatpush1.bf16.msra.mxu0 %v136
  %5569 = vmatprep.subr.bf16.mxu0 0
  %5570 = vmatpush1.bf16.msra.mxu0 %v135
  %5571 = vmatprep.subr.bf16.mxu0 0
  %5572 = vmatpush1.bf16.msra.mxu0 %v134
  %5573 = vmatprep.subr.bf16.mxu0 0
  %5574 = vmatpush1.bf16.msra.mxu0 %v133
  %5575 = vmatprep.subr.bf16.mxu0 0
  %5576 = vmatpush1.bf16.msra.mxu0 %v132
  %5577 = vmatprep.subr.bf16.mxu0 0
  %5578 = vmatpush1.bf16.msra.mxu0 %v131
  %5579 = vmatprep.subr.bf16.mxu0 0
  %5580 = vmatpush2.bf16.msra.mxu0 0
  %5581 = vmatprep.subr.bf16.mxu0 0
  %5582 = vmatpush2.bf16.msra.mxu0 0
  %5583 = vmatprep.subr.bf16.mxu0 0
  %5584 = vmatpush2.bf16.msra.mxu0 0
  %5585 = vmatprep.subr.bf16.mxu0 0
  %5586 = vmatpush2.bf16.msra.mxu0 0
  %5587 = vmatprep.subr.bf16.mxu0 0
  %5588 = vmatpush2.bf16.msra.mxu0 0
  %5589 = vmatprep.subr.bf16.mxu0 0
  %5590 = vmatpush2.bf16.msra.mxu0 0
  %5591 = vmatprep.subr.bf16.mxu0 0
  %5592 = vmatpush2.bf16.msra.mxu0 0
  %5593 = vmatprep.subr.bf16.mxu0 0
  %5594 = vmatpush2.bf16.msra.mxu0 %v139
  %5595 = vmatprep.mubr.bf16.mxu0 %v5561
  %5596 = vmatmul.mubr.bf16.gmra.mxu0 %v5551
  %v5597 = vpop.f32.mrf.mxu0
  %v5598 = vadd.f32 %v69, %v5597
  %v5599 = vpop.f32.mrf.mxu0
  %v5600 = vpop.f32.mrf.mxu0
  %v5601 = vpop.f32.mrf.mxu0
  %5602 = vdwg.mxu0
  %v5603 = vmax.f32 %v5598, 0.0
  %v5604 = vpack.c.bf16 %v5603, %v5603
  %s5605 = scalar_lea.vmem %s3, 656
  %v5606 = vld [vmem:[%s5605] sm:$0xf]
  %v5607 = vld [vmem:[%s5605 + $0x4] sm:$0xf]
  %v5608 = vld [vmem:[%s5605 + $0x8] sm:$0xf]
  %v5609 = vld [vmem:[%s5605 + $0xc] sm:$0xf]
  %v5614 = vunpack.c.l.b16 %v5606
  %v5615 = vunpack.c.l.b16 %v5607
  %v5616 = vunpack.c.l.b16 %v5608
  %v5617 = vunpack.c.l.b16 %v5609
  %v5618 = vpack.c.b16 %v5615, %v5614
  %v5619 = vpack.c.b16 %v5617, %v5616
  %v5623 = vsel %vm287, %v5604, 0
  %5625 = vmatprep.subr.bf16.mxu0 0
  %5626 = vmatpush1.bf16.msra.mxu0 0
  %5627 = vmatprep.subr.bf16.mxu0 0
  %5628 = vmatpush1.bf16.msra.mxu0 0
  %5629 = vmatprep.subr.bf16.mxu0 0
  %5630 = vmatpush1.bf16.msra.mxu0 0
  %5631 = vmatprep.subr.bf16.mxu0 0
  %5632 = vmatpush1.bf16.msra.mxu0 0
  %5633 = vmatprep.subr.bf16.mxu0 0
  %5634 = vmatpush1.bf16.msra.mxu0 0
  %5635 = vmatprep.subr.bf16.mxu0 0
  %5636 = vmatpush1.bf16.msra.mxu0 0
  %5637 = vmatprep.subr.bf16.mxu0 0
  %5638 = vmatpush1.bf16.msra.mxu0 %v5619
  %5639 = vmatprep.subr.bf16.mxu0 0
  %5640 = vmatpush1.bf16.msra.mxu0 %v5618
  %5641 = vmatprep.subr.bf16.mxu0 0
  %5642 = vmatpush2.bf16.msra.mxu0 0
  %5643 = vmatprep.subr.bf16.mxu0 0
  %5644 = vmatpush2.bf16.msra.mxu0 0
  %5645 = vmatprep.subr.bf16.mxu0 0
  %5646 = vmatpush2.bf16.msra.mxu0 0
  %5647 = vmatprep.subr.bf16.mxu0 0
  %5648 = vmatpush2.bf16.msra.mxu0 0
  %5649 = vmatprep.subr.bf16.mxu0 0
  %5650 = vmatpush2.bf16.msra.mxu0 0
  %5651 = vmatprep.subr.bf16.mxu0 0
  %5652 = vmatpush2.bf16.msra.mxu0 0
  %5653 = vmatprep.subr.bf16.mxu0 0
  %5654 = vmatpush2.bf16.msra.mxu0 0
  %5655 = vmatprep.subr.bf16.mxu0 0
  %5656 = vmatpush2.bf16.msra.mxu0 0
  %5657 = vmatprep.mubr.bf16.mxu0 0
  %5658 = vmatmul.mubr.bf16.gmra.mxu0 %v5623
  %v5659 = vpop.f32.mrf.mxu0
  %v5660 = vadd.f32 0.0, %v5659
  %v5661 = vpop.f32.mrf.mxu0
  %v5662 = vpop.f32.mrf.mxu0
  %v5663 = vpop.f32.mrf.mxu0
  %5664 = vdwg.mxu0
  %v5665 = vadd.f32 %v5533, %v5660
  %s5666 = scalar_lea.vmem %s0, 84
  %v5667 = vld [vmem:[%s5666] sm:$0x3]
  %v5670 = vunpack.c.l.s4 1966171168
  %v5671 = vunpack.c.0.s8 %v5670
  %v5672 = vlaneseq
  %v5673 = vshrl.u32 %v5672, 7
  %v5674 = vsub.s32 %v5671, %v5673
  %v5675 = vrot.slane %v5667, %v5674
  %v5676 = vcombine.high %v5675, %v5675
  %v5678 = vunpack.c.l.s4 1966171168
  %v5679 = vunpack.c.0.s8 %v5678
  %v5680 = vlaneseq
  %v5681 = vshrl.u32 %v5680, 7
  %v5682 = vsub.s32 %v5679, %v5681
  %v5683 = vrot.slane %v5675, %v5682
  %v5685 = vunpack.c.l.s4 1966171168
  %v5686 = vunpack.c.0.s8 %v5685
  %v5687 = vlaneseq
  %v5688 = vshrl.u32 %v5687, 7
  %v5689 = vsub.s32 %v5686, %v5688
  %v5690 = vrot.slane %v5676, %v5689
  %v5693 = vsel %vm149, %v5690, 0
  %5695 = vmatprep.subr.bf16.mxu0 0
  %5696 = vmatpush1.bf16.msra.mxu0 %v138
  %5697 = vmatprep.subr.bf16.mxu0 0
  %5698 = vmatpush1.bf16.msra.mxu0 %v137
  %5699 = vmatprep.subr.bf16.mxu0 0
  %5700 = vmatpush1.bf16.msra.mxu0 %v136
  %5701 = vmatprep.subr.bf16.mxu0 0
  %5702 = vmatpush1.bf16.msra.mxu0 %v135
  %5703 = vmatprep.subr.bf16.mxu0 0
  %5704 = vmatpush1.bf16.msra.mxu0 %v134
  %5705 = vmatprep.subr.bf16.mxu0 0
  %5706 = vmatpush1.bf16.msra.mxu0 %v133
  %5707 = vmatprep.subr.bf16.mxu0 0
  %5708 = vmatpush1.bf16.msra.mxu0 %v132
  %5709 = vmatprep.subr.bf16.mxu0 0
  %5710 = vmatpush1.bf16.msra.mxu0 %v131
  %5711 = vmatprep.subr.bf16.mxu0 0
  %5712 = vmatpush2.bf16.msra.mxu0 0
  %5713 = vmatprep.subr.bf16.mxu0 0
  %5714 = vmatpush2.bf16.msra.mxu0 0
  %5715 = vmatprep.subr.bf16.mxu0 0
  %5716 = vmatpush2.bf16.msra.mxu0 0
  %5717 = vmatprep.subr.bf16.mxu0 0
  %5718 = vmatpush2.bf16.msra.mxu0 0
  %5719 = vmatprep.subr.bf16.mxu0 0
  %5720 = vmatpush2.bf16.msra.mxu0 0
  %5721 = vmatprep.subr.bf16.mxu0 0
  %5722 = vmatpush2.bf16.msra.mxu0 0
  %5723 = vmatprep.subr.bf16.mxu0 0
  %5724 = vmatpush2.bf16.msra.mxu0 0
  %5725 = vmatprep.subr.bf16.mxu0 0
  %5726 = vmatpush2.bf16.msra.mxu0 %v139
  %5727 = vmatprep.mubr.bf16.mxu0 %v5693
  %5728 = vmatmul.mubr.bf16.gmra.mxu0 %v5683
  %v5729 = vpop.f32.mrf.mxu0
  %v5730 = vadd.f32 %v69, %v5729
  %v5731 = vpop.f32.mrf.mxu0
  %v5732 = vpop.f32.mrf.mxu0
  %v5733 = vpop.f32.mrf.mxu0
  %5734 = vdwg.mxu0
  %v5735 = vmax.f32 %v5730, 0.0
  %v5736 = vpack.c.bf16 %v5735, %v5735
  %s5737 = scalar_lea.vmem %s3, 672
  %v5738 = vld [vmem:[%s5737] sm:$0xf]
  %v5739 = vld [vmem:[%s5737 + $0x4] sm:$0xf]
  %v5740 = vld [vmem:[%s5737 + $0x8] sm:$0xf]
  %v5741 = vld [vmem:[%s5737 + $0xc] sm:$0xf]
  %v5746 = vunpack.c.l.b16 %v5738
  %v5747 = vunpack.c.l.b16 %v5739
  %v5748 = vunpack.c.l.b16 %v5740
  %v5749 = vunpack.c.l.b16 %v5741
  %v5750 = vpack.c.b16 %v5747, %v5746
  %v5751 = vpack.c.b16 %v5749, %v5748
  %v5755 = vsel %vm287, %v5736, 0
  %5757 = vmatprep.subr.bf16.mxu0 0
  %5758 = vmatpush1.bf16.msra.mxu0 0
  %5759 = vmatprep.subr.bf16.mxu0 0
  %5760 = vmatpush1.bf16.msra.mxu0 0
  %5761 = vmatprep.subr.bf16.mxu0 0
  %5762 = vmatpush1.bf16.msra.mxu0 0
  %5763 = vmatprep.subr.bf16.mxu0 0
  %5764 = vmatpush1.bf16.msra.mxu0 0
  %5765 = vmatprep.subr.bf16.mxu0 0
  %5766 = vmatpush1.bf16.msra.mxu0 0
  %5767 = vmatprep.subr.bf16.mxu0 0
  %5768 = vmatpush1.bf16.msra.mxu0 0
  %5769 = vmatprep.subr.bf16.mxu0 0
  %5770 = vmatpush1.bf16.msra.mxu0 %v5751
  %5771 = vmatprep.subr.bf16.mxu0 0
  %5772 = vmatpush1.bf16.msra.mxu0 %v5750
  %5773 = vmatprep.subr.bf16.mxu0 0
  %5774 = vmatpush2.bf16.msra.mxu0 0
  %5775 = vmatprep.subr.bf16.mxu0 0
  %5776 = vmatpush2.bf16.msra.mxu0 0
  %5777 = vmatprep.subr.bf16.mxu0 0
  %5778 = vmatpush2.bf16.msra.mxu0 0
  %5779 = vmatprep.subr.bf16.mxu0 0
  %5780 = vmatpush2.bf16.msra.mxu0 0
  %5781 = vmatprep.subr.bf16.mxu0 0
  %5782 = vmatpush2.bf16.msra.mxu0 0
  %5783 = vmatprep.subr.bf16.mxu0 0
  %5784 = vmatpush2.bf16.msra.mxu0 0
  %5785 = vmatprep.subr.bf16.mxu0 0
  %5786 = vmatpush2.bf16.msra.mxu0 0
  %5787 = vmatprep.subr.bf16.mxu0 0
  %5788 = vmatpush2.bf16.msra.mxu0 0
  %5789 = vmatprep.mubr.bf16.mxu0 0
  %5790 = vmatmul.mubr.bf16.gmra.mxu0 %v5755
  %v5791 = vpop.f32.mrf.mxu0
  %v5792 = vadd.f32 0.0, %v5791
  %v5793 = vpop.f32.mrf.mxu0
  %v5794 = vpop.f32.mrf.mxu0
  %v5795 = vpop.f32.mrf.mxu0
  %5796 = vdwg.mxu0
  %v5797 = vadd.f32 %v5665, %v5792
  %s5798 = scalar_lea.vmem %s0, 86
  %v5799 = vld [vmem:[%s5798] sm:$0x3]
  %v5802 = vunpack.c.l.s4 1966171168
  %v5803 = vunpack.c.0.s8 %v5802
  %v5804 = vlaneseq
  %v5805 = vshrl.u32 %v5804, 7
  %v5806 = vsub.s32 %v5803, %v5805
  %v5807 = vrot.slane %v5799, %v5806
  %v5808 = vcombine.high %v5807, %v5807
  %v5810 = vunpack.c.l.s4 1966171168
  %v5811 = vunpack.c.0.s8 %v5810
  %v5812 = vlaneseq
  %v5813 = vshrl.u32 %v5812, 7
  %v5814 = vsub.s32 %v5811, %v5813
  %v5815 = vrot.slane %v5807, %v5814
  %v5817 = vunpack.c.l.s4 1966171168
  %v5818 = vunpack.c.0.s8 %v5817
  %v5819 = vlaneseq
  %v5820 = vshrl.u32 %v5819, 7
  %v5821 = vsub.s32 %v5818, %v5820
  %v5822 = vrot.slane %v5808, %v5821
  %v5825 = vsel %vm149, %v5822, 0
  %5827 = vmatprep.subr.bf16.mxu0 0
  %5828 = vmatpush1.bf16.msra.mxu0 %v138
  %5829 = vmatprep.subr.bf16.mxu0 0
  %5830 = vmatpush1.bf16.msra.mxu0 %v137
  %5831 = vmatprep.subr.bf16.mxu0 0
  %5832 = vmatpush1.bf16.msra.mxu0 %v136
  %5833 = vmatprep.subr.bf16.mxu0 0
  %5834 = vmatpush1.bf16.msra.mxu0 %v135
  %5835 = vmatprep.subr.bf16.mxu0 0
  %5836 = vmatpush1.bf16.msra.mxu0 %v134
  %5837 = vmatprep.subr.bf16.mxu0 0
  %5838 = vmatpush1.bf16.msra.mxu0 %v133
  %5839 = vmatprep.subr.bf16.mxu0 0
  %5840 = vmatpush1.bf16.msra.mxu0 %v132
  %5841 = vmatprep.subr.bf16.mxu0 0
  %5842 = vmatpush1.bf16.msra.mxu0 %v131
  %5843 = vmatprep.subr.bf16.mxu0 0
  %5844 = vmatpush2.bf16.msra.mxu0 0
  %5845 = vmatprep.subr.bf16.mxu0 0
  %5846 = vmatpush2.bf16.msra.mxu0 0
  %5847 = vmatprep.subr.bf16.mxu0 0
  %5848 = vmatpush2.bf16.msra.mxu0 0
  %5849 = vmatprep.subr.bf16.mxu0 0
  %5850 = vmatpush2.bf16.msra.mxu0 0
  %5851 = vmatprep.subr.bf16.mxu0 0
  %5852 = vmatpush2.bf16.msra.mxu0 0
  %5853 = vmatprep.subr.bf16.mxu0 0
  %5854 = vmatpush2.bf16.msra.mxu0 0
  %5855 = vmatprep.subr.bf16.mxu0 0
  %5856 = vmatpush2.bf16.msra.mxu0 0
  %5857 = vmatprep.subr.bf16.mxu0 0
  %5858 = vmatpush2.bf16.msra.mxu0 %v139
  %5859 = vmatprep.mubr.bf16.mxu0 %v5825
  %5860 = vmatmul.mubr.bf16.gmra.mxu0 %v5815
  %v5861 = vpop.f32.mrf.mxu0
  %v5862 = vadd.f32 %v69, %v5861
  %v5863 = vpop.f32.mrf.mxu0
  %v5864 = vpop.f32.mrf.mxu0
  %v5865 = vpop.f32.mrf.mxu0
  %5866 = vdwg.mxu0
  %v5867 = vmax.f32 %v5862, 0.0
  %v5868 = vpack.c.bf16 %v5867, %v5867
  %s5869 = scalar_lea.vmem %s3, 688
  %v5870 = vld [vmem:[%s5869] sm:$0xf]
  %v5871 = vld [vmem:[%s5869 + $0x4] sm:$0xf]
  %v5872 = vld [vmem:[%s5869 + $0x8] sm:$0xf]
  %v5873 = vld [vmem:[%s5869 + $0xc] sm:$0xf]
  %v5878 = vunpack.c.l.b16 %v5870
  %v5879 = vunpack.c.l.b16 %v5871
  %v5880 = vunpack.c.l.b16 %v5872
  %v5881 = vunpack.c.l.b16 %v5873
  %v5882 = vpack.c.b16 %v5879, %v5878
  %v5883 = vpack.c.b16 %v5881, %v5880
  %v5887 = vsel %vm287, %v5868, 0
  %5889 = vmatprep.subr.bf16.mxu0 0
  %5890 = vmatpush1.bf16.msra.mxu0 0
  %5891 = vmatprep.subr.bf16.mxu0 0
  %5892 = vmatpush1.bf16.msra.mxu0 0
  %5893 = vmatprep.subr.bf16.mxu0 0
  %5894 = vmatpush1.bf16.msra.mxu0 0
  %5895 = vmatprep.subr.bf16.mxu0 0
  %5896 = vmatpush1.bf16.msra.mxu0 0
  %5897 = vmatprep.subr.bf16.mxu0 0
  %5898 = vmatpush1.bf16.msra.mxu0 0
  %5899 = vmatprep.subr.bf16.mxu0 0
  %5900 = vmatpush1.bf16.msra.mxu0 0
  %5901 = vmatprep.subr.bf16.mxu0 0
  %5902 = vmatpush1.bf16.msra.mxu0 %v5883
  %5903 = vmatprep.subr.bf16.mxu0 0
  %5904 = vmatpush1.bf16.msra.mxu0 %v5882
  %5905 = vmatprep.subr.bf16.mxu0 0
  %5906 = vmatpush2.bf16.msra.mxu0 0
  %5907 = vmatprep.subr.bf16.mxu0 0
  %5908 = vmatpush2.bf16.msra.mxu0 0
  %5909 = vmatprep.subr.bf16.mxu0 0
  %5910 = vmatpush2.bf16.msra.mxu0 0
  %5911 = vmatprep.subr.bf16.mxu0 0
  %5912 = vmatpush2.bf16.msra.mxu0 0
  %5913 = vmatprep.subr.bf16.mxu0 0
  %5914 = vmatpush2.bf16.msra.mxu0 0
  %5915 = vmatprep.subr.bf16.mxu0 0
  %5916 = vmatpush2.bf16.msra.mxu0 0
  %5917 = vmatprep.subr.bf16.mxu0 0
  %5918 = vmatpush2.bf16.msra.mxu0 0
  %5919 = vmatprep.subr.bf16.mxu0 0
  %5920 = vmatpush2.bf16.msra.mxu0 0
  %5921 = vmatprep.mubr.bf16.mxu0 0
  %5922 = vmatmul.mubr.bf16.gmra.mxu0 %v5887
  %v5923 = vpop.f32.mrf.mxu0
  %v5924 = vadd.f32 0.0, %v5923
  %v5925 = vpop.f32.mrf.mxu0
  %v5926 = vpop.f32.mrf.mxu0
  %v5927 = vpop.f32.mrf.mxu0
  %5928 = vdwg.mxu0
  %v5929 = vadd.f32 %v5797, %v5924
  %s5930 = scalar_lea.vmem %s0, 88
  %v5931 = vld [vmem:[%s5930] sm:$0x3]
  %v5934 = vunpack.c.l.s4 1966171168
  %v5935 = vunpack.c.0.s8 %v5934
  %v5936 = vlaneseq
  %v5937 = vshrl.u32 %v5936, 7
  %v5938 = vsub.s32 %v5935, %v5937
  %v5939 = vrot.slane %v5931, %v5938
  %v5940 = vcombine.high %v5939, %v5939
  %v5942 = vunpack.c.l.s4 1966171168
  %v5943 = vunpack.c.0.s8 %v5942
  %v5944 = vlaneseq
  %v5945 = vshrl.u32 %v5944, 7
  %v5946 = vsub.s32 %v5943, %v5945
  %v5947 = vrot.slane %v5939, %v5946
  %v5949 = vunpack.c.l.s4 1966171168
  %v5950 = vunpack.c.0.s8 %v5949
  %v5951 = vlaneseq
  %v5952 = vshrl.u32 %v5951, 7
  %v5953 = vsub.s32 %v5950, %v5952
  %v5954 = vrot.slane %v5940, %v5953
  %v5957 = vsel %vm149, %v5954, 0
  %5959 = vmatprep.subr.bf16.mxu0 0
  %5960 = vmatpush1.bf16.msra.mxu0 %v138
  %5961 = vmatprep.subr.bf16.mxu0 0
  %5962 = vmatpush1.bf16.msra.mxu0 %v137
  %5963 = vmatprep.subr.bf16.mxu0 0
  %5964 = vmatpush1.bf16.msra.mxu0 %v136
  %5965 = vmatprep.subr.bf16.mxu0 0
  %5966 = vmatpush1.bf16.msra.mxu0 %v135
  %5967 = vmatprep.subr.bf16.mxu0 0
  %5968 = vmatpush1.bf16.msra.mxu0 %v134
  %5969 = vmatprep.subr.bf16.mxu0 0
  %5970 = vmatpush1.bf16.msra.mxu0 %v133
  %5971 = vmatprep.subr.bf16.mxu0 0
  %5972 = vmatpush1.bf16.msra.mxu0 %v132
  %5973 = vmatprep.subr.bf16.mxu0 0
  %5974 = vmatpush1.bf16.msra.mxu0 %v131
  %5975 = vmatprep.subr.bf16.mxu0 0
  %5976 = vmatpush2.bf16.msra.mxu0 0
  %5977 = vmatprep.subr.bf16.mxu0 0
  %5978 = vmatpush2.bf16.msra.mxu0 0
  %5979 = vmatprep.subr.bf16.mxu0 0
  %5980 = vmatpush2.bf16.msra.mxu0 0
  %5981 = vmatprep.subr.bf16.mxu0 0
  %5982 = vmatpush2.bf16.msra.mxu0 0
  %5983 = vmatprep.subr.bf16.mxu0 0
  %5984 = vmatpush2.bf16.msra.mxu0 0
  %5985 = vmatprep.subr.bf16.mxu0 0
  %5986 = vmatpush2.bf16.msra.mxu0 0
  %5987 = vmatprep.subr.bf16.mxu0 0
  %5988 = vmatpush2.bf16.msra.mxu0 0
  %5989 = vmatprep.subr.bf16.mxu0 0
  %5990 = vmatpush2.bf16.msra.mxu0 %v139
  %5991 = vmatprep.mubr.bf16.mxu0 %v5957
  %5992 = vmatmul.mubr.bf16.gmra.mxu0 %v5947
  %v5993 = vpop.f32.mrf.mxu0
  %v5994 = vadd.f32 %v69, %v5993
  %v5995 = vpop.f32.mrf.mxu0
  %v5996 = vpop.f32.mrf.mxu0
  %v5997 = vpop.f32.mrf.mxu0
  %5998 = vdwg.mxu0
  %v5999 = vmax.f32 %v5994, 0.0
  %v6000 = vpack.c.bf16 %v5999, %v5999
  %s6001 = scalar_lea.vmem %s3, 704
  %v6002 = vld [vmem:[%s6001] sm:$0xf]
  %v6003 = vld [vmem:[%s6001 + $0x4] sm:$0xf]
  %v6004 = vld [vmem:[%s6001 + $0x8] sm:$0xf]
  %v6005 = vld [vmem:[%s6001 + $0xc] sm:$0xf]
  %v6010 = vunpack.c.l.b16 %v6002
  %v6011 = vunpack.c.l.b16 %v6003
  %v6012 = vunpack.c.l.b16 %v6004
  %v6013 = vunpack.c.l.b16 %v6005
  %v6014 = vpack.c.b16 %v6011, %v6010
  %v6015 = vpack.c.b16 %v6013, %v6012
  %v6019 = vsel %vm287, %v6000, 0
  %6021 = vmatprep.subr.bf16.mxu0 0
  %6022 = vmatpush1.bf16.msra.mxu0 0
  %6023 = vmatprep.subr.bf16.mxu0 0
  %6024 = vmatpush1.bf16.msra.mxu0 0
  %6025 = vmatprep.subr.bf16.mxu0 0
  %6026 = vmatpush1.bf16.msra.mxu0 0
  %6027 = vmatprep.subr.bf16.mxu0 0
  %6028 = vmatpush1.bf16.msra.mxu0 0
  %6029 = vmatprep.subr.bf16.mxu0 0
  %6030 = vmatpush1.bf16.msra.mxu0 0
  %6031 = vmatprep.subr.bf16.mxu0 0
  %6032 = vmatpush1.bf16.msra.mxu0 0
  %6033 = vmatprep.subr.bf16.mxu0 0
  %6034 = vmatpush1.bf16.msra.mxu0 %v6015
  %6035 = vmatprep.subr.bf16.mxu0 0
  %6036 = vmatpush1.bf16.msra.mxu0 %v6014
  %6037 = vmatprep.subr.bf16.mxu0 0
  %6038 = vmatpush2.bf16.msra.mxu0 0
  %6039 = vmatprep.subr.bf16.mxu0 0
  %6040 = vmatpush2.bf16.msra.mxu0 0
  %6041 = vmatprep.subr.bf16.mxu0 0
  %6042 = vmatpush2.bf16.msra.mxu0 0
  %6043 = vmatprep.subr.bf16.mxu0 0
  %6044 = vmatpush2.bf16.msra.mxu0 0
  %6045 = vmatprep.subr.bf16.mxu0 0
  %6046 = vmatpush2.bf16.msra.mxu0 0
  %6047 = vmatprep.subr.bf16.mxu0 0
  %6048 = vmatpush2.bf16.msra.mxu0 0
  %6049 = vmatprep.subr.bf16.mxu0 0
  %6050 = vmatpush2.bf16.msra.mxu0 0
  %6051 = vmatprep.subr.bf16.mxu0 0
  %6052 = vmatpush2.bf16.msra.mxu0 0
  %6053 = vmatprep.mubr.bf16.mxu0 0
  %6054 = vmatmul.mubr.bf16.gmra.mxu0 %v6019
  %v6055 = vpop.f32.mrf.mxu0
  %v6056 = vadd.f32 0.0, %v6055
  %v6057 = vpop.f32.mrf.mxu0
  %v6058 = vpop.f32.mrf.mxu0
  %v6059 = vpop.f32.mrf.mxu0
  %6060 = vdwg.mxu0
  %v6061 = vadd.f32 %v5929, %v6056
  %s6062 = scalar_lea.vmem %s0, 90
  %v6063 = vld [vmem:[%s6062] sm:$0x3]
  %v6066 = vunpack.c.l.s4 1966171168
  %v6067 = vunpack.c.0.s8 %v6066
  %v6068 = vlaneseq
  %v6069 = vshrl.u32 %v6068, 7
  %v6070 = vsub.s32 %v6067, %v6069
  %v6071 = vrot.slane %v6063, %v6070
  %v6072 = vcombine.high %v6071, %v6071
  %v6074 = vunpack.c.l.s4 1966171168
  %v6075 = vunpack.c.0.s8 %v6074
  %v6076 = vlaneseq
  %v6077 = vshrl.u32 %v6076, 7
  %v6078 = vsub.s32 %v6075, %v6077
  %v6079 = vrot.slane %v6071, %v6078
  %v6081 = vunpack.c.l.s4 1966171168
  %v6082 = vunpack.c.0.s8 %v6081
  %v6083 = vlaneseq
  %v6084 = vshrl.u32 %v6083, 7
  %v6085 = vsub.s32 %v6082, %v6084
  %v6086 = vrot.slane %v6072, %v6085
  %v6089 = vsel %vm149, %v6086, 0
  %6091 = vmatprep.subr.bf16.mxu0 0
  %6092 = vmatpush1.bf16.msra.mxu0 %v138
  %6093 = vmatprep.subr.bf16.mxu0 0
  %6094 = vmatpush1.bf16.msra.mxu0 %v137
  %6095 = vmatprep.subr.bf16.mxu0 0
  %6096 = vmatpush1.bf16.msra.mxu0 %v136
  %6097 = vmatprep.subr.bf16.mxu0 0
  %6098 = vmatpush1.bf16.msra.mxu0 %v135
  %6099 = vmatprep.subr.bf16.mxu0 0
  %6100 = vmatpush1.bf16.msra.mxu0 %v134
  %6101 = vmatprep.subr.bf16.mxu0 0
  %6102 = vmatpush1.bf16.msra.mxu0 %v133
  %6103 = vmatprep.subr.bf16.mxu0 0
  %6104 = vmatpush1.bf16.msra.mxu0 %v132
  %6105 = vmatprep.subr.bf16.mxu0 0
  %6106 = vmatpush1.bf16.msra.mxu0 %v131
  %6107 = vmatprep.subr.bf16.mxu0 0
  %6108 = vmatpush2.bf16.msra.mxu0 0
  %6109 = vmatprep.subr.bf16.mxu0 0
  %6110 = vmatpush2.bf16.msra.mxu0 0
  %6111 = vmatprep.subr.bf16.mxu0 0
  %6112 = vmatpush2.bf16.msra.mxu0 0
  %6113 = vmatprep.subr.bf16.mxu0 0
  %6114 = vmatpush2.bf16.msra.mxu0 0
  %6115 = vmatprep.subr.bf16.mxu0 0
  %6116 = vmatpush2.bf16.msra.mxu0 0
  %6117 = vmatprep.subr.bf16.mxu0 0
  %6118 = vmatpush2.bf16.msra.mxu0 0
  %6119 = vmatprep.subr.bf16.mxu0 0
  %6120 = vmatpush2.bf16.msra.mxu0 0
  %6121 = vmatprep.subr.bf16.mxu0 0
  %6122 = vmatpush2.bf16.msra.mxu0 %v139
  %6123 = vmatprep.mubr.bf16.mxu0 %v6089
  %6124 = vmatmul.mubr.bf16.gmra.mxu0 %v6079
  %v6125 = vpop.f32.mrf.mxu0
  %v6126 = vadd.f32 %v69, %v6125
  %v6127 = vpop.f32.mrf.mxu0
  %v6128 = vpop.f32.mrf.mxu0
  %v6129 = vpop.f32.mrf.mxu0
  %6130 = vdwg.mxu0
  %v6131 = vmax.f32 %v6126, 0.0
  %v6132 = vpack.c.bf16 %v6131, %v6131
  %s6133 = scalar_lea.vmem %s3, 720
  %v6134 = vld [vmem:[%s6133] sm:$0xf]
  %v6135 = vld [vmem:[%s6133 + $0x4] sm:$0xf]
  %v6136 = vld [vmem:[%s6133 + $0x8] sm:$0xf]
  %v6137 = vld [vmem:[%s6133 + $0xc] sm:$0xf]
  %v6142 = vunpack.c.l.b16 %v6134
  %v6143 = vunpack.c.l.b16 %v6135
  %v6144 = vunpack.c.l.b16 %v6136
  %v6145 = vunpack.c.l.b16 %v6137
  %v6146 = vpack.c.b16 %v6143, %v6142
  %v6147 = vpack.c.b16 %v6145, %v6144
  %v6151 = vsel %vm287, %v6132, 0
  %6153 = vmatprep.subr.bf16.mxu0 0
  %6154 = vmatpush1.bf16.msra.mxu0 0
  %6155 = vmatprep.subr.bf16.mxu0 0
  %6156 = vmatpush1.bf16.msra.mxu0 0
  %6157 = vmatprep.subr.bf16.mxu0 0
  %6158 = vmatpush1.bf16.msra.mxu0 0
  %6159 = vmatprep.subr.bf16.mxu0 0
  %6160 = vmatpush1.bf16.msra.mxu0 0
  %6161 = vmatprep.subr.bf16.mxu0 0
  %6162 = vmatpush1.bf16.msra.mxu0 0
  %6163 = vmatprep.subr.bf16.mxu0 0
  %6164 = vmatpush1.bf16.msra.mxu0 0
  %6165 = vmatprep.subr.bf16.mxu0 0
  %6166 = vmatpush1.bf16.msra.mxu0 %v6147
  %6167 = vmatprep.subr.bf16.mxu0 0
  %6168 = vmatpush1.bf16.msra.mxu0 %v6146
  %6169 = vmatprep.subr.bf16.mxu0 0
  %6170 = vmatpush2.bf16.msra.mxu0 0
  %6171 = vmatprep.subr.bf16.mxu0 0
  %6172 = vmatpush2.bf16.msra.mxu0 0
  %6173 = vmatprep.subr.bf16.mxu0 0
  %6174 = vmatpush2.bf16.msra.mxu0 0
  %6175 = vmatprep.subr.bf16.mxu0 0
  %6176 = vmatpush2.bf16.msra.mxu0 0
  %6177 = vmatprep.subr.bf16.mxu0 0
  %6178 = vmatpush2.bf16.msra.mxu0 0
  %6179 = vmatprep.subr.bf16.mxu0 0
  %6180 = vmatpush2.bf16.msra.mxu0 0
  %6181 = vmatprep.subr.bf16.mxu0 0
  %6182 = vmatpush2.bf16.msra.mxu0 0
  %6183 = vmatprep.subr.bf16.mxu0 0
  %6184 = vmatpush2.bf16.msra.mxu0 0
  %6185 = vmatprep.mubr.bf16.mxu0 0
  %6186 = vmatmul.mubr.bf16.gmra.mxu0 %v6151
  %v6187 = vpop.f32.mrf.mxu0
  %v6188 = vadd.f32 0.0, %v6187
  %v6189 = vpop.f32.mrf.mxu0
  %v6190 = vpop.f32.mrf.mxu0
  %v6191 = vpop.f32.mrf.mxu0
  %6192 = vdwg.mxu0
  %v6193 = vadd.f32 %v6061, %v6188
  %s6194 = scalar_lea.vmem %s0, 92
  %v6195 = vld [vmem:[%s6194] sm:$0x3]
  %v6198 = vunpack.c.l.s4 1966171168
  %v6199 = vunpack.c.0.s8 %v6198
  %v6200 = vlaneseq
  %v6201 = vshrl.u32 %v6200, 7
  %v6202 = vsub.s32 %v6199, %v6201
  %v6203 = vrot.slane %v6195, %v6202
  %v6204 = vcombine.high %v6203, %v6203
  %v6206 = vunpack.c.l.s4 1966171168
  %v6207 = vunpack.c.0.s8 %v6206
  %v6208 = vlaneseq
  %v6209 = vshrl.u32 %v6208, 7
  %v6210 = vsub.s32 %v6207, %v6209
  %v6211 = vrot.slane %v6203, %v6210
  %v6213 = vunpack.c.l.s4 1966171168
  %v6214 = vunpack.c.0.s8 %v6213
  %v6215 = vlaneseq
  %v6216 = vshrl.u32 %v6215, 7
  %v6217 = vsub.s32 %v6214, %v6216
  %v6218 = vrot.slane %v6204, %v6217
  %v6221 = vsel %vm149, %v6218, 0
  %6223 = vmatprep.subr.bf16.mxu0 0
  %6224 = vmatpush1.bf16.msra.mxu0 %v138
  %6225 = vmatprep.subr.bf16.mxu0 0
  %6226 = vmatpush1.bf16.msra.mxu0 %v137
  %6227 = vmatprep.subr.bf16.mxu0 0
  %6228 = vmatpush1.bf16.msra.mxu0 %v136
  %6229 = vmatprep.subr.bf16.mxu0 0
  %6230 = vmatpush1.bf16.msra.mxu0 %v135
  %6231 = vmatprep.subr.bf16.mxu0 0
  %6232 = vmatpush1.bf16.msra.mxu0 %v134
  %6233 = vmatprep.subr.bf16.mxu0 0
  %6234 = vmatpush1.bf16.msra.mxu0 %v133
  %6235 = vmatprep.subr.bf16.mxu0 0
  %6236 = vmatpush1.bf16.msra.mxu0 %v132
  %6237 = vmatprep.subr.bf16.mxu0 0
  %6238 = vmatpush1.bf16.msra.mxu0 %v131
  %6239 = vmatprep.subr.bf16.mxu0 0
  %6240 = vmatpush2.bf16.msra.mxu0 0
  %6241 = vmatprep.subr.bf16.mxu0 0
  %6242 = vmatpush2.bf16.msra.mxu0 0
  %6243 = vmatprep.subr.bf16.mxu0 0
  %6244 = vmatpush2.bf16.msra.mxu0 0
  %6245 = vmatprep.subr.bf16.mxu0 0
  %6246 = vmatpush2.bf16.msra.mxu0 0
  %6247 = vmatprep.subr.bf16.mxu0 0
  %6248 = vmatpush2.bf16.msra.mxu0 0
  %6249 = vmatprep.subr.bf16.mxu0 0
  %6250 = vmatpush2.bf16.msra.mxu0 0
  %6251 = vmatprep.subr.bf16.mxu0 0
  %6252 = vmatpush2.bf16.msra.mxu0 0
  %6253 = vmatprep.subr.bf16.mxu0 0
  %6254 = vmatpush2.bf16.msra.mxu0 %v139
  %6255 = vmatprep.mubr.bf16.mxu0 %v6221
  %6256 = vmatmul.mubr.bf16.gmra.mxu0 %v6211
  %v6257 = vpop.f32.mrf.mxu0
  %v6258 = vadd.f32 %v69, %v6257
  %v6259 = vpop.f32.mrf.mxu0
  %v6260 = vpop.f32.mrf.mxu0
  %v6261 = vpop.f32.mrf.mxu0
  %6262 = vdwg.mxu0
  %v6263 = vmax.f32 %v6258, 0.0
  %v6264 = vpack.c.bf16 %v6263, %v6263
  %s6265 = scalar_lea.vmem %s3, 736
  %v6266 = vld [vmem:[%s6265] sm:$0xf]
  %v6267 = vld [vmem:[%s6265 + $0x4] sm:$0xf]
  %v6268 = vld [vmem:[%s6265 + $0x8] sm:$0xf]
  %v6269 = vld [vmem:[%s6265 + $0xc] sm:$0xf]
  %v6274 = vunpack.c.l.b16 %v6266
  %v6275 = vunpack.c.l.b16 %v6267
  %v6276 = vunpack.c.l.b16 %v6268
  %v6277 = vunpack.c.l.b16 %v6269
  %v6278 = vpack.c.b16 %v6275, %v6274
  %v6279 = vpack.c.b16 %v6277, %v6276
  %v6283 = vsel %vm287, %v6264, 0
  %6285 = vmatprep.subr.bf16.mxu0 0
  %6286 = vmatpush1.bf16.msra.mxu0 0
  %6287 = vmatprep.subr.bf16.mxu0 0
  %6288 = vmatpush1.bf16.msra.mxu0 0
  %6289 = vmatprep.subr.bf16.mxu0 0
  %6290 = vmatpush1.bf16.msra.mxu0 0
  %6291 = vmatprep.subr.bf16.mxu0 0
  %6292 = vmatpush1.bf16.msra.mxu0 0
  %6293 = vmatprep.subr.bf16.mxu0 0
  %6294 = vmatpush1.bf16.msra.mxu0 0
  %6295 = vmatprep.subr.bf16.mxu0 0
  %6296 = vmatpush1.bf16.msra.mxu0 0
  %6297 = vmatprep.subr.bf16.mxu0 0
  %6298 = vmatpush1.bf16.msra.mxu0 %v6279
  %6299 = vmatprep.subr.bf16.mxu0 0
  %6300 = vmatpush1.bf16.msra.mxu0 %v6278
  %6301 = vmatprep.subr.bf16.mxu0 0
  %6302 = vmatpush2.bf16.msra.mxu0 0
  %6303 = vmatprep.subr.bf16.mxu0 0
  %6304 = vmatpush2.bf16.msra.mxu0 0
  %6305 = vmatprep.subr.bf16.mxu0 0
  %6306 = vmatpush2.bf16.msra.mxu0 0
  %6307 = vmatprep.subr.bf16.mxu0 0
  %6308 = vmatpush2.bf16.msra.mxu0 0
  %6309 = vmatprep.subr.bf16.mxu0 0
  %6310 = vmatpush2.bf16.msra.mxu0 0
  %6311 = vmatprep.subr.bf16.mxu0 0
  %6312 = vmatpush2.bf16.msra.mxu0 0
  %6313 = vmatprep.subr.bf16.mxu0 0
  %6314 = vmatpush2.bf16.msra.mxu0 0
  %6315 = vmatprep.subr.bf16.mxu0 0
  %6316 = vmatpush2.bf16.msra.mxu0 0
  %6317 = vmatprep.mubr.bf16.mxu0 0
  %6318 = vmatmul.mubr.bf16.gmra.mxu0 %v6283
  %v6319 = vpop.f32.mrf.mxu0
  %v6320 = vadd.f32 0.0, %v6319
  %v6321 = vpop.f32.mrf.mxu0
  %v6322 = vpop.f32.mrf.mxu0
  %v6323 = vpop.f32.mrf.mxu0
  %6324 = vdwg.mxu0
  %v6325 = vadd.f32 %v6193, %v6320
  %s6326 = scalar_lea.vmem %s0, 94
  %v6327 = vld [vmem:[%s6326] sm:$0x3]
  %v6330 = vunpack.c.l.s4 1966171168
  %v6331 = vunpack.c.0.s8 %v6330
  %v6332 = vlaneseq
  %v6333 = vshrl.u32 %v6332, 7
  %v6334 = vsub.s32 %v6331, %v6333
  %v6335 = vrot.slane %v6327, %v6334
  %v6336 = vcombine.high %v6335, %v6335
  %v6338 = vunpack.c.l.s4 1966171168
  %v6339 = vunpack.c.0.s8 %v6338
  %v6340 = vlaneseq
  %v6341 = vshrl.u32 %v6340, 7
  %v6342 = vsub.s32 %v6339, %v6341
  %v6343 = vrot.slane %v6335, %v6342
  %v6345 = vunpack.c.l.s4 1966171168
  %v6346 = vunpack.c.0.s8 %v6345
  %v6347 = vlaneseq
  %v6348 = vshrl.u32 %v6347, 7
  %v6349 = vsub.s32 %v6346, %v6348
  %v6350 = vrot.slane %v6336, %v6349
  %v6353 = vsel %vm149, %v6350, 0
  %6355 = vmatprep.subr.bf16.mxu0 0
  %6356 = vmatpush1.bf16.msra.mxu0 %v138
  %6357 = vmatprep.subr.bf16.mxu0 0
  %6358 = vmatpush1.bf16.msra.mxu0 %v137
  %6359 = vmatprep.subr.bf16.mxu0 0
  %6360 = vmatpush1.bf16.msra.mxu0 %v136
  %6361 = vmatprep.subr.bf16.mxu0 0
  %6362 = vmatpush1.bf16.msra.mxu0 %v135
  %6363 = vmatprep.subr.bf16.mxu0 0
  %6364 = vmatpush1.bf16.msra.mxu0 %v134
  %6365 = vmatprep.subr.bf16.mxu0 0
  %6366 = vmatpush1.bf16.msra.mxu0 %v133
  %6367 = vmatprep.subr.bf16.mxu0 0
  %6368 = vmatpush1.bf16.msra.mxu0 %v132
  %6369 = vmatprep.subr.bf16.mxu0 0
  %6370 = vmatpush1.bf16.msra.mxu0 %v131
  %6371 = vmatprep.subr.bf16.mxu0 0
  %6372 = vmatpush2.bf16.msra.mxu0 0
  %6373 = vmatprep.subr.bf16.mxu0 0
  %6374 = vmatpush2.bf16.msra.mxu0 0
  %6375 = vmatprep.subr.bf16.mxu0 0
  %6376 = vmatpush2.bf16.msra.mxu0 0
  %6377 = vmatprep.subr.bf16.mxu0 0
  %6378 = vmatpush2.bf16.msra.mxu0 0
  %6379 = vmatprep.subr.bf16.mxu0 0
  %6380 = vmatpush2.bf16.msra.mxu0 0
  %6381 = vmatprep.subr.bf16.mxu0 0
  %6382 = vmatpush2.bf16.msra.mxu0 0
  %6383 = vmatprep.subr.bf16.mxu0 0
  %6384 = vmatpush2.bf16.msra.mxu0 0
  %6385 = vmatprep.subr.bf16.mxu0 0
  %6386 = vmatpush2.bf16.msra.mxu0 %v139
  %6387 = vmatprep.mubr.bf16.mxu0 %v6353
  %6388 = vmatmul.mubr.bf16.gmra.mxu0 %v6343
  %v6389 = vpop.f32.mrf.mxu0
  %v6390 = vadd.f32 %v69, %v6389
  %v6391 = vpop.f32.mrf.mxu0
  %v6392 = vpop.f32.mrf.mxu0
  %v6393 = vpop.f32.mrf.mxu0
  %6394 = vdwg.mxu0
  %v6395 = vmax.f32 %v6390, 0.0
  %v6396 = vpack.c.bf16 %v6395, %v6395
  %s6397 = scalar_lea.vmem %s3, 752
  %v6398 = vld [vmem:[%s6397] sm:$0xf]
  %v6399 = vld [vmem:[%s6397 + $0x4] sm:$0xf]
  %v6400 = vld [vmem:[%s6397 + $0x8] sm:$0xf]
  %v6401 = vld [vmem:[%s6397 + $0xc] sm:$0xf]
  %v6406 = vunpack.c.l.b16 %v6398
  %v6407 = vunpack.c.l.b16 %v6399
  %v6408 = vunpack.c.l.b16 %v6400
  %v6409 = vunpack.c.l.b16 %v6401
  %v6410 = vpack.c.b16 %v6407, %v6406
  %v6411 = vpack.c.b16 %v6409, %v6408
  %v6415 = vsel %vm287, %v6396, 0
  %6417 = vmatprep.subr.bf16.mxu0 0
  %6418 = vmatpush1.bf16.msra.mxu0 0
  %6419 = vmatprep.subr.bf16.mxu0 0
  %6420 = vmatpush1.bf16.msra.mxu0 0
  %6421 = vmatprep.subr.bf16.mxu0 0
  %6422 = vmatpush1.bf16.msra.mxu0 0
  %6423 = vmatprep.subr.bf16.mxu0 0
  %6424 = vmatpush1.bf16.msra.mxu0 0
  %6425 = vmatprep.subr.bf16.mxu0 0
  %6426 = vmatpush1.bf16.msra.mxu0 0
  %6427 = vmatprep.subr.bf16.mxu0 0
  %6428 = vmatpush1.bf16.msra.mxu0 0
  %6429 = vmatprep.subr.bf16.mxu0 0
  %6430 = vmatpush1.bf16.msra.mxu0 %v6411
  %6431 = vmatprep.subr.bf16.mxu0 0
  %6432 = vmatpush1.bf16.msra.mxu0 %v6410
  %6433 = vmatprep.subr.bf16.mxu0 0
  %6434 = vmatpush2.bf16.msra.mxu0 0
  %6435 = vmatprep.subr.bf16.mxu0 0
  %6436 = vmatpush2.bf16.msra.mxu0 0
  %6437 = vmatprep.subr.bf16.mxu0 0
  %6438 = vmatpush2.bf16.msra.mxu0 0
  %6439 = vmatprep.subr.bf16.mxu0 0
  %6440 = vmatpush2.bf16.msra.mxu0 0
  %6441 = vmatprep.subr.bf16.mxu0 0
  %6442 = vmatpush2.bf16.msra.mxu0 0
  %6443 = vmatprep.subr.bf16.mxu0 0
  %6444 = vmatpush2.bf16.msra.mxu0 0
  %6445 = vmatprep.subr.bf16.mxu0 0
  %6446 = vmatpush2.bf16.msra.mxu0 0
  %6447 = vmatprep.subr.bf16.mxu0 0
  %6448 = vmatpush2.bf16.msra.mxu0 0
  %6449 = vmatprep.mubr.bf16.mxu0 0
  %6450 = vmatmul.mubr.bf16.gmra.mxu0 %v6415
  %v6451 = vpop.f32.mrf.mxu0
  %v6452 = vadd.f32 0.0, %v6451
  %v6453 = vpop.f32.mrf.mxu0
  %v6454 = vpop.f32.mrf.mxu0
  %v6455 = vpop.f32.mrf.mxu0
  %6456 = vdwg.mxu0
  %v6457 = vadd.f32 %v6325, %v6452
  %s6458 = scalar_lea.vmem %s0, 96
  %v6459 = vld [vmem:[%s6458] sm:$0x3]
  %v6462 = vunpack.c.l.s4 1966171168
  %v6463 = vunpack.c.0.s8 %v6462
  %v6464 = vlaneseq
  %v6465 = vshrl.u32 %v6464, 7
  %v6466 = vsub.s32 %v6463, %v6465
  %v6467 = vrot.slane %v6459, %v6466
  %v6468 = vcombine.high %v6467, %v6467
  %v6470 = vunpack.c.l.s4 1966171168
  %v6471 = vunpack.c.0.s8 %v6470
  %v6472 = vlaneseq
  %v6473 = vshrl.u32 %v6472, 7
  %v6474 = vsub.s32 %v6471, %v6473
  %v6475 = vrot.slane %v6467, %v6474
  %v6477 = vunpack.c.l.s4 1966171168
  %v6478 = vunpack.c.0.s8 %v6477
  %v6479 = vlaneseq
  %v6480 = vshrl.u32 %v6479, 7
  %v6481 = vsub.s32 %v6478, %v6480
  %v6482 = vrot.slane %v6468, %v6481
  %v6485 = vsel %vm149, %v6482, 0
  %6487 = vmatprep.subr.bf16.mxu0 0
  %6488 = vmatpush1.bf16.msra.mxu0 %v138
  %6489 = vmatprep.subr.bf16.mxu0 0
  %6490 = vmatpush1.bf16.msra.mxu0 %v137
  %6491 = vmatprep.subr.bf16.mxu0 0
  %6492 = vmatpush1.bf16.msra.mxu0 %v136
  %6493 = vmatprep.subr.bf16.mxu0 0
  %6494 = vmatpush1.bf16.msra.mxu0 %v135
  %6495 = vmatprep.subr.bf16.mxu0 0
  %6496 = vmatpush1.bf16.msra.mxu0 %v134
  %6497 = vmatprep.subr.bf16.mxu0 0
  %6498 = vmatpush1.bf16.msra.mxu0 %v133
  %6499 = vmatprep.subr.bf16.mxu0 0
  %6500 = vmatpush1.bf16.msra.mxu0 %v132
  %6501 = vmatprep.subr.bf16.mxu0 0
  %6502 = vmatpush1.bf16.msra.mxu0 %v131
  %6503 = vmatprep.subr.bf16.mxu0 0
  %6504 = vmatpush2.bf16.msra.mxu0 0
  %6505 = vmatprep.subr.bf16.mxu0 0
  %6506 = vmatpush2.bf16.msra.mxu0 0
  %6507 = vmatprep.subr.bf16.mxu0 0
  %6508 = vmatpush2.bf16.msra.mxu0 0
  %6509 = vmatprep.subr.bf16.mxu0 0
  %6510 = vmatpush2.bf16.msra.mxu0 0
  %6511 = vmatprep.subr.bf16.mxu0 0
  %6512 = vmatpush2.bf16.msra.mxu0 0
  %6513 = vmatprep.subr.bf16.mxu0 0
  %6514 = vmatpush2.bf16.msra.mxu0 0
  %6515 = vmatprep.subr.bf16.mxu0 0
  %6516 = vmatpush2.bf16.msra.mxu0 0
  %6517 = vmatprep.subr.bf16.mxu0 0
  %6518 = vmatpush2.bf16.msra.mxu0 %v139
  %6519 = vmatprep.mubr.bf16.mxu0 %v6485
  %6520 = vmatmul.mubr.bf16.gmra.mxu0 %v6475
  %v6521 = vpop.f32.mrf.mxu0
  %v6522 = vadd.f32 %v69, %v6521
  %v6523 = vpop.f32.mrf.mxu0
  %v6524 = vpop.f32.mrf.mxu0
  %v6525 = vpop.f32.mrf.mxu0
  %6526 = vdwg.mxu0
  %v6527 = vmax.f32 %v6522, 0.0
  %v6528 = vpack.c.bf16 %v6527, %v6527
  %s6529 = scalar_lea.vmem %s3, 768
  %v6530 = vld [vmem:[%s6529] sm:$0xf]
  %v6531 = vld [vmem:[%s6529 + $0x4] sm:$0xf]
  %v6532 = vld [vmem:[%s6529 + $0x8] sm:$0xf]
  %v6533 = vld [vmem:[%s6529 + $0xc] sm:$0xf]
  %v6538 = vunpack.c.l.b16 %v6530
  %v6539 = vunpack.c.l.b16 %v6531
  %v6540 = vunpack.c.l.b16 %v6532
  %v6541 = vunpack.c.l.b16 %v6533
  %v6542 = vpack.c.b16 %v6539, %v6538
  %v6543 = vpack.c.b16 %v6541, %v6540
  %v6547 = vsel %vm287, %v6528, 0
  %6549 = vmatprep.subr.bf16.mxu0 0
  %6550 = vmatpush1.bf16.msra.mxu0 0
  %6551 = vmatprep.subr.bf16.mxu0 0
  %6552 = vmatpush1.bf16.msra.mxu0 0
  %6553 = vmatprep.subr.bf16.mxu0 0
  %6554 = vmatpush1.bf16.msra.mxu0 0
  %6555 = vmatprep.subr.bf16.mxu0 0
  %6556 = vmatpush1.bf16.msra.mxu0 0
  %6557 = vmatprep.subr.bf16.mxu0 0
  %6558 = vmatpush1.bf16.msra.mxu0 0
  %6559 = vmatprep.subr.bf16.mxu0 0
  %6560 = vmatpush1.bf16.msra.mxu0 0
  %6561 = vmatprep.subr.bf16.mxu0 0
  %6562 = vmatpush1.bf16.msra.mxu0 %v6543
  %6563 = vmatprep.subr.bf16.mxu0 0
  %6564 = vmatpush1.bf16.msra.mxu0 %v6542
  %6565 = vmatprep.subr.bf16.mxu0 0
  %6566 = vmatpush2.bf16.msra.mxu0 0
  %6567 = vmatprep.subr.bf16.mxu0 0
  %6568 = vmatpush2.bf16.msra.mxu0 0
  %6569 = vmatprep.subr.bf16.mxu0 0
  %6570 = vmatpush2.bf16.msra.mxu0 0
  %6571 = vmatprep.subr.bf16.mxu0 0
  %6572 = vmatpush2.bf16.msra.mxu0 0
  %6573 = vmatprep.subr.bf16.mxu0 0
  %6574 = vmatpush2.bf16.msra.mxu0 0
  %6575 = vmatprep.subr.bf16.mxu0 0
  %6576 = vmatpush2.bf16.msra.mxu0 0
  %6577 = vmatprep.subr.bf16.mxu0 0
  %6578 = vmatpush2.bf16.msra.mxu0 0
  %6579 = vmatprep.subr.bf16.mxu0 0
  %6580 = vmatpush2.bf16.msra.mxu0 0
  %6581 = vmatprep.mubr.bf16.mxu0 0
  %6582 = vmatmul.mubr.bf16.gmra.mxu0 %v6547
  %v6583 = vpop.f32.mrf.mxu0
  %v6584 = vadd.f32 0.0, %v6583
  %v6585 = vpop.f32.mrf.mxu0
  %v6586 = vpop.f32.mrf.mxu0
  %v6587 = vpop.f32.mrf.mxu0
  %6588 = vdwg.mxu0
  %v6589 = vadd.f32 %v6457, %v6584
  %v6590 = vld [vmem:[%s4] sm:$0x1]
  %v6592 = vlaneseq
  %v6593 = vshrl.u32 %v6592, 7
  %v6594 = vsub.s32 0, %v6593
  %v6595 = vrot.slane %v6590, %v6594
  %v6597 = vadd.f32 %v6589, %v6595
  %v6598 = vmax.f32 %v6597, 0.0
  %v6599 = vpack.c.bf16 %v6598, %v6598
  %v6600 = vld [vmem:[%s5] sm:$0xf]
  %v6601 = vld [vmem:[%s5 + $0x4] sm:$0xf]
  %v6602 = vld [vmem:[%s5 + $0x8] sm:$0xf]
  %v6603 = vld [vmem:[%s5 + $0xc] sm:$0xf]
  %v6604 = vld [vmem:[%s5 + $0x10] sm:$0xf]
  %v6605 = vld [vmem:[%s5 + $0x14] sm:$0xf]
  %v6606 = vld [vmem:[%s5 + $0x18] sm:$0xf]
  %v6607 = vld [vmem:[%s5 + $0x1c] sm:$0xf]
  %v6608 = vld [vmem:[%s6] sm:$0x1]
  %v6610 = vlaneseq
  %v6611 = vshrl.u32 %v6610, 7
  %v6612 = vsub.s32 0, %v6611
  %v6613 = vrot.slane %v6608, %v6612
  %v6623 = vunpack.c.l.b16 %v6600
  %v6624 = vunpack.c.l.b16 %v6601
  %v6625 = vunpack.c.l.b16 %v6602
  %v6626 = vunpack.c.l.b16 %v6603
  %v6627 = vunpack.c.l.b16 %v6604
  %v6628 = vunpack.c.l.b16 %v6605
  %v6629 = vunpack.c.l.b16 %v6606
  %v6630 = vunpack.c.l.b16 %v6607
  %v6631 = vpack.c.b16 %v6624, %v6623
  %v6632 = vpack.c.b16 %v6626, %v6625
  %v6633 = vpack.c.b16 %v6628, %v6627
  %v6634 = vpack.c.b16 %v6630, %v6629
  %vm6639 = vcmask 523264
  %v6641 = vsel %vm6639, %v6599, 0
  %6643 = vmatprep.subr.bf16.mxu0 0
  %6644 = vmatpush1.bf16.msra.mxu0 0
  %6645 = vmatprep.subr.bf16.mxu0 0
  %6646 = vmatpush1.bf16.msra.mxu0 0
  %6647 = vmatprep.subr.bf16.mxu0 0
  %6648 = vmatpush1.bf16.msra.mxu0 0
  %6649 = vmatprep.subr.bf16.mxu0 0
  %6650 = vmatpush1.bf16.msra.mxu0 0
  %6651 = vmatprep.subr.bf16.mxu0 0
  %6652 = vmatpush1.bf16.msra.mxu0 %v6634
  %6653 = vmatprep.subr.bf16.mxu0 0
  %6654 = vmatpush1.bf16.msra.mxu0 %v6633
  %6655 = vmatprep.subr.bf16.mxu0 0
  %6656 = vmatpush1.bf16.msra.mxu0 %v6632
  %6657 = vmatprep.subr.bf16.mxu0 0
  %6658 = vmatpush1.bf16.msra.mxu0 %v6631
  %6659 = vmatprep.subr.bf16.mxu0 0
  %6660 = vmatpush2.bf16.msra.mxu0 0
  %6661 = vmatprep.subr.bf16.mxu0 0
  %6662 = vmatpush2.bf16.msra.mxu0 0
  %6663 = vmatprep.subr.bf16.mxu0 0
  %6664 = vmatpush2.bf16.msra.mxu0 0
  %6665 = vmatprep.subr.bf16.mxu0 0
  %6666 = vmatpush2.bf16.msra.mxu0 0
  %6667 = vmatprep.subr.bf16.mxu0 0
  %6668 = vmatpush2.bf16.msra.mxu0 0
  %6669 = vmatprep.subr.bf16.mxu0 0
  %6670 = vmatpush2.bf16.msra.mxu0 0
  %6671 = vmatprep.subr.bf16.mxu0 0
  %6672 = vmatpush2.bf16.msra.mxu0 0
  %6673 = vmatprep.subr.bf16.mxu0 0
  %6674 = vmatpush2.bf16.msra.mxu0 0
  %6675 = vmatprep.mubr.bf16.mxu0 0
  %6676 = vmatmul.mubr.bf16.gmra.mxu0 %v6641
  %v6677 = vpop.f32.mrf.mxu0
  %v6678 = vadd.f32 %v6613, %v6677
  %v6679 = vpop.f32.mrf.mxu0
  %v6680 = vpop.f32.mrf.mxu0
  %v6681 = vpop.f32.mrf.mxu0
  %6682 = vdwg.mxu0
  %v6683 = vpack.c.bf16 %v6678, %v6678
  %v6684 = vld [vmem:[%s7] sm:$0xf]
  %v6685 = vld [vmem:[%s7 + $0x4] sm:$0xf]
  %v6686 = vld [vmem:[%s7 + $0x8] sm:$0xf]
  %v6687 = vld [vmem:[%s7 + $0xc] sm:$0xf]
  %v6688 = vld [vmem:[%s7 + $0x10] sm:$0xf]
  %v6689 = vld [vmem:[%s7 + $0x14] sm:$0xf]
  %v6690 = vld [vmem:[%s7 + $0x18] sm:$0xf]
  %v6691 = vld [vmem:[%s7 + $0x1c] sm:$0xf]
  %v6692 = vld [vmem:[%s8] sm:$0x1]
  %v6694 = vlaneseq
  %v6695 = vshrl.u32 %v6694, 7
  %v6696 = vsub.s32 0, %v6695
  %v6697 = vrot.slane %v6692, %v6696
  %v6707 = vunpack.c.l.b16 %v6684
  %v6708 = vunpack.c.l.b16 %v6685
  %v6709 = vunpack.c.l.b16 %v6686
  %v6710 = vunpack.c.l.b16 %v6687
  %v6711 = vunpack.c.l.b16 %v6688
  %v6712 = vunpack.c.l.b16 %v6689
  %v6713 = vunpack.c.l.b16 %v6690
  %v6714 = vunpack.c.l.b16 %v6691
  %v6715 = vpack.c.b16 %v6708, %v6707
  %v6716 = vpack.c.b16 %v6710, %v6709
  %v6717 = vpack.c.b16 %v6712, %v6711
  %v6718 = vpack.c.b16 %v6714, %v6713
  %v6724 = vsel %vm6639, %v6683, 0
  %6726 = vmatprep.subr.bf16.mxu0 0
  %6727 = vmatpush1.bf16.msra.mxu0 0
  %6728 = vmatprep.subr.bf16.mxu0 0
  %6729 = vmatpush1.bf16.msra.mxu0 0
  %6730 = vmatprep.subr.bf16.mxu0 0
  %6731 = vmatpush1.bf16.msra.mxu0 0
  %6732 = vmatprep.subr.bf16.mxu0 0
  %6733 = vmatpush1.bf16.msra.mxu0 0
  %6734 = vmatprep.subr.bf16.mxu0 0
  %6735 = vmatpush1.bf16.msra.mxu0 %v6718
  %6736 = vmatprep.subr.bf16.mxu0 0
  %6737 = vmatpush1.bf16.msra.mxu0 %v6717
  %6738 = vmatprep.subr.bf16.mxu0 0
  %6739 = vmatpush1.bf16.msra.mxu0 %v6716
  %6740 = vmatprep.subr.bf16.mxu0 0
  %6741 = vmatpush1.bf16.msra.mxu0 %v6715
  %6742 = vmatprep.subr.bf16.mxu0 0
  %6743 = vmatpush2.bf16.msra.mxu0 0
  %6744 = vmatprep.subr.bf16.mxu0 0
  %6745 = vmatpush2.bf16.msra.mxu0 0
  %6746 = vmatprep.subr.bf16.mxu0 0
  %6747 = vmatpush2.bf16.msra.mxu0 0
  %6748 = vmatprep.subr.bf16.mxu0 0
  %6749 = vmatpush2.bf16.msra.mxu0 0
  %6750 = vmatprep.subr.bf16.mxu0 0
  %6751 = vmatpush2.bf16.msra.mxu0 0
  %6752 = vmatprep.subr.bf16.mxu0 0
  %6753 = vmatpush2.bf16.msra.mxu0 0
  %6754 = vmatprep.subr.bf16.mxu0 0
  %6755 = vmatpush2.bf16.msra.mxu0 0
  %6756 = vmatprep.subr.bf16.mxu0 0
  %6757 = vmatpush2.bf16.msra.mxu0 0
  %6758 = vmatprep.mubr.bf16.mxu0 0
  %6759 = vmatmul.mubr.bf16.gmra.mxu0 %v6724
  %v6760 = vpop.f32.mrf.mxu0
  %v6761 = vadd.f32 %v6697, %v6760
  %v6762 = vpop.f32.mrf.mxu0
  %v6763 = vpop.f32.mrf.mxu0
  %v6764 = vpop.f32.mrf.mxu0
  %6765 = vdwg.mxu0
  %v6766 = vpack.c.bf16 %v6761, %v6761
  %v6767 = vld [vmem:[%s9] sm:$0xf]
  %v6768 = vld [vmem:[%s9 + $0x4] sm:$0xf]
  %v6769 = vld [vmem:[%s10] sm:$0x1]
  %v6771 = vlaneseq
  %v6772 = vshrl.u32 %v6771, 7
  %v6773 = vsub.s32 0, %v6772
  %v6774 = vrot.slane %v6769, %v6773
  %v6778 = vunpack.c.l.b16 %v6767
  %v6779 = vunpack.c.l.b16 %v6768
  %v6780 = vpack.c.b16 %v6779, %v6778
  %v6783 = vsel %vm149, %v6766, 0
  %6785 = vmatprep.subr.bf16.mxu0 0
  %6786 = vmatpush1.bf16.msra.mxu0 0
  %6787 = vmatprep.subr.bf16.mxu0 0
  %6788 = vmatpush1.bf16.msra.mxu0 0
  %6789 = vmatprep.subr.bf16.mxu0 0
  %6790 = vmatpush1.bf16.msra.mxu0 0
  %6791 = vmatprep.subr.bf16.mxu0 0
  %6792 = vmatpush1.bf16.msra.mxu0 0
  %6793 = vmatprep.subr.bf16.mxu0 0
  %6794 = vmatpush1.bf16.msra.mxu0 0
  %6795 = vmatprep.subr.bf16.mxu0 0
  %6796 = vmatpush1.bf16.msra.mxu0 0
  %6797 = vmatprep.subr.bf16.mxu0 0
  %6798 = vmatpush1.bf16.msra.mxu0 0
  %6799 = vmatprep.subr.bf16.mxu0 0
  %6800 = vmatpush1.bf16.msra.mxu0 %v6780
  %6801 = vmatprep.subr.bf16.mxu0 0
  %6802 = vmatpush2.bf16.msra.mxu0 0
  %6803 = vmatprep.subr.bf16.mxu0 0
  %6804 = vmatpush2.bf16.msra.mxu0 0
  %6805 = vmatprep.subr.bf16.mxu0 0
  %6806 = vmatpush2.bf16.msra.mxu0 0
  %6807 = vmatprep.subr.bf16.mxu0 0
  %6808 = vmatpush2.bf16.msra.mxu0 0
  %6809 = vmatprep.subr.bf16.mxu0 0
  %6810 = vmatpush2.bf16.msra.mxu0 0
  %6811 = vmatprep.subr.bf16.mxu0 0
  %6812 = vmatpush2.bf16.msra.mxu0 0
  %6813 = vmatprep.subr.bf16.mxu0 0
  %6814 = vmatpush2.bf16.msra.mxu0 0
  %6815 = vmatprep.subr.bf16.mxu0 0
  %6816 = vmatpush2.bf16.msra.mxu0 0
  %6817 = vmatprep.mubr.bf16.mxu0 0
  %6818 = vmatmul.mubr.bf16.gmra.mxu0 %v6783
  %v6819 = vpop.f32.mrf.mxu0
  %v6820 = vadd.f32 %v6774, %v6819
  %v6821 = vpop.f32.mrf.mxu0
  %v6822 = vpop.f32.mrf.mxu0
  %v6823 = vpop.f32.mrf.mxu0
  %6824 = vdwg.mxu0
  %v6825 = vmax.f32 %v6820, 0.0
  %v6826 = vpack.c.bf16 %v6825, %v6825
  %v6827 = vld [vmem:[%s11] sm:$0xff]
  %v6828 = vld [vmem:[%s11 + $0x8] sm:$0xff]
  %v6829 = vld [vmem:[%s11 + $0x10] sm:$0xff]
  %v6830 = vld [vmem:[%s11 + $0x18] sm:$0xff]
  %v6831 = vld [vmem:[%s11 + $0x20] sm:$0xff]
  %v6832 = vld [vmem:[%s11 + $0x28] sm:$0xff]
  %v6833 = vld [vmem:[%s11 + $0x30] sm:$0xf]
  %v6834 = vld [vmem:[%s11 + $0x34] sm:$0xff]
  %v6835 = vld [vmem:[%s11 + $0x3c] sm:$0xff]
  %v6836 = vld [vmem:[%s11 + $0x44] sm:$0xff]
  %v6837 = vld [vmem:[%s11 + $0x4c] sm:$0xff]
  %v6838 = vld [vmem:[%s11 + $0x54] sm:$0xff]
  %v6839 = vld [vmem:[%s11 + $0x5c] sm:$0xff]
  %v6840 = vld [vmem:[%s11 + $0x64] sm:$0xf]
  %v6841 = vld [vmem:[%s11 + $0x68] sm:$0xff]
  %v6842 = vld [vmem:[%s11 + $0x70] sm:$0xff]
  %v6843 = vld [vmem:[%s11 + $0x78] sm:$0xff]
  %v6844 = vld [vmem:[%s11 + $0x80] sm:$0xff]
  %v6845 = vld [vmem:[%s11 + $0x88] sm:$0xff]
  %v6846 = vld [vmem:[%s11 + $0x90] sm:$0xff]
  %v6847 = vld [vmem:[%s11 + $0x98] sm:$0xf]
  %v6848 = vld [vmem:[%s11 + $0x9c] sm:$0xff]
  %v6849 = vld [vmem:[%s11 + $0xa4] sm:$0xff]
  %v6850 = vld [vmem:[%s11 + $0xac] sm:$0xff]
  %v6851 = vld [vmem:[%s11 + $0xb4] sm:$0xff]
  %v6852 = vld [vmem:[%s11 + $0xbc] sm:$0xff]
  %v6853 = vld [vmem:[%s11 + $0xc4] sm:$0xff]
  %v6854 = vld [vmem:[%s11 + $0xcc] sm:$0xf]
  %v6855 = vld [vmem:[%s11 + $0xd0] sm:$0xff]
  %v6856 = vld [vmem:[%s11 + $0xd8] sm:$0xff]
  %v6857 = vld [vmem:[%s11 + $0xe0] sm:$0xff]
  %v6858 = vld [vmem:[%s11 + $0xe8] sm:$0xff]
  %v6859 = vld [vmem:[%s11 + $0xf0] sm:$0xff]
  %v6860 = vld [vmem:[%s11 + $0xf8] sm:$0xff]
  %v6861 = vld [vmem:[%s11 + $0x100] sm:$0xf]
  %v6862 = vld [vmem:[%s11 + $0x104] sm:$0xff]
  %v6863 = vld [vmem:[%s11 + $0x10c] sm:$0xff]
  %v6864 = vld [vmem:[%s11 + $0x114] sm:$0xff]
  %v6865 = vld [vmem:[%s11 + $0x11c] sm:$0xff]
  %v6866 = vld [vmem:[%s11 + $0x124] sm:$0xff]
  %v6867 = vld [vmem:[%s11 + $0x12c] sm:$0xff]
  %v6868 = vld [vmem:[%s11 + $0x134] sm:$0xf]
  %v6869 = vld [vmem:[%s11 + $0x138] sm:$0xff]
  %v6870 = vld [vmem:[%s11 + $0x140] sm:$0xff]
  %v6871 = vld [vmem:[%s11 + $0x148] sm:$0xff]
  %v6872 = vld [vmem:[%s11 + $0x150] sm:$0xff]
  %v6873 = vld [vmem:[%s11 + $0x158] sm:$0xff]
  %v6874 = vld [vmem:[%s11 + $0x160] sm:$0xff]
  %v6875 = vld [vmem:[%s11 + $0x168] sm:$0xf]
  %v6876 = vld [vmem:[%s11 + $0x16c] sm:$0xff]
  %v6877 = vld [vmem:[%s11 + $0x174] sm:$0xff]
  %v6878 = vld [vmem:[%s11 + $0x17c] sm:$0xff]
  %v6879 = vld [vmem:[%s11 + $0x184] sm:$0xff]
  %v6880 = vld [vmem:[%s11 + $0x18c] sm:$0xff]
  %v6881 = vld [vmem:[%s11 + $0x194] sm:$0xff]
  %v6882 = vld [vmem:[%s11 + $0x19c] sm:$0xf]
  %v6883 = vld [vmem:[%s12] sm:$0xff]
  %v6884 = vld [vmem:[%s12 + $0x8] sm:$0x1f]
  %v6887 = vlaneseq
  %v6888 = vshrl.u32 %v6887, 7
  %v6889 = vsub.s32 0, %v6888
  %v6890 = vrot.slane %v6883, %v6889
  %v6891 = vlaneseq
  %v6892 = vshrl.u32 %v6891, 7
  %v6893 = vsub.s32 1, %v6892
  %v6894 = vrot.slane %v6883, %v6893
  %v6895 = vlaneseq
  %v6896 = vshrl.u32 %v6895, 7
  %v6897 = vsub.s32 2, %v6896
  %v6898 = vrot.slane %v6883, %v6897
  %v6899 = vlaneseq
  %v6900 = vshrl.u32 %v6899, 7
  %v6901 = vsub.s32 3, %v6900
  %v6902 = vrot.slane %v6883, %v6901
  %v6903 = vlaneseq
  %v6904 = vshrl.u32 %v6903, 7
  %v6905 = vsub.s32 4, %v6904
  %v6906 = vrot.slane %v6883, %v6905
  %v6907 = vlaneseq
  %v6908 = vshrl.u32 %v6907, 7
  %v6909 = vsub.s32 5, %v6908
  %v6910 = vrot.slane %v6883, %v6909
  %v6911 = vlaneseq
  %v6912 = vshrl.u32 %v6911, 7
  %v6913 = vsub.s32 6, %v6912
  %v6914 = vrot.slane %v6883, %v6913
  %v6915 = vlaneseq
  %v6916 = vshrl.u32 %v6915, 7
  %v6917 = vsub.s32 7, %v6916
  %v6918 = vrot.slane %v6883, %v6917
  %v6919 = vlaneseq
  %v6920 = vshrl.u32 %v6919, 7
  %v6921 = vsub.s32 0, %v6920
  %v6922 = vrot.slane %v6884, %v6921
  %v6923 = vlaneseq
  %v6924 = vshrl.u32 %v6923, 7
  %v6925 = vsub.s32 1, %v6924
  %v6926 = vrot.slane %v6884, %v6925
  %v6927 = vlaneseq
  %v6928 = vshrl.u32 %v6927, 7
  %v6929 = vsub.s32 2, %v6928
  %v6930 = vrot.slane %v6884, %v6929
  %v6931 = vlaneseq
  %v6932 = vshrl.u32 %v6931, 7
  %v6933 = vsub.s32 3, %v6932
  %v6934 = vrot.slane %v6884, %v6933
  %v6935 = vlaneseq
  %v6936 = vshrl.u32 %v6935, 7
  %v6937 = vsub.s32 4, %v6936
  %v6938 = vrot.slane %v6884, %v6937
  %v7008 = vunpack.c.l.b16 %v6827
  %v7009 = vunpack.c.h.b16 %v6827
  %v7010 = vunpack.c.l.b16 %v6828
  %v7011 = vunpack.c.h.b16 %v6828
  %v7012 = vunpack.c.l.b16 %v6829
  %v7013 = vunpack.c.h.b16 %v6829
  %v7014 = vunpack.c.l.b16 %v6830
  %v7015 = vunpack.c.h.b16 %v6830
  %v7016 = vunpack.c.l.b16 %v6831
  %v7017 = vunpack.c.h.b16 %v6831
  %v7018 = vunpack.c.l.b16 %v6832
  %v7019 = vunpack.c.h.b16 %v6832
  %v7020 = vunpack.c.l.b16 %v6833
  %v7021 = vunpack.c.l.b16 %v6834
  %v7022 = vunpack.c.h.b16 %v6834
  %v7023 = vunpack.c.l.b16 %v6835
  %v7024 = vunpack.c.h.b16 %v6835
  %v7025 = vunpack.c.l.b16 %v6836
  %v7026 = vunpack.c.h.b16 %v6836
  %v7027 = vunpack.c.l.b16 %v6837
  %v7028 = vunpack.c.h.b16 %v6837
  %v7029 = vunpack.c.l.b16 %v6838
  %v7030 = vunpack.c.h.b16 %v6838
  %v7031 = vunpack.c.l.b16 %v6839
  %v7032 = vunpack.c.h.b16 %v6839
  %v7033 = vunpack.c.l.b16 %v6840
  %v7034 = vunpack.c.l.b16 %v6841
  %v7035 = vunpack.c.h.b16 %v6841
  %v7036 = vunpack.c.l.b16 %v6842
  %v7037 = vunpack.c.h.b16 %v6842
  %v7038 = vunpack.c.l.b16 %v6843
  %v7039 = vunpack.c.h.b16 %v6843
  %v7040 = vunpack.c.l.b16 %v6844
  %v7041 = vunpack.c.h.b16 %v6844
  %v7042 = vunpack.c.l.b16 %v6845
  %v7043 = vunpack.c.h.b16 %v6845
  %v7044 = vunpack.c.l.b16 %v6846
  %v7045 = vunpack.c.h.b16 %v6846
  %v7046 = vunpack.c.l.b16 %v6847
  %v7047 = vunpack.c.l.b16 %v6848
  %v7048 = vunpack.c.h.b16 %v6848
  %v7049 = vunpack.c.l.b16 %v6849
  %v7050 = vunpack.c.h.b16 %v6849
  %v7051 = vunpack.c.l.b16 %v6850
  %v7052 = vunpack.c.h.b16 %v6850
  %v7053 = vunpack.c.l.b16 %v6851
  %v7054 = vunpack.c.h.b16 %v6851
  %v7055 = vunpack.c.l.b16 %v6852
  %v7056 = vunpack.c.h.b16 %v6852
  %v7057 = vunpack.c.l.b16 %v6853
  %v7058 = vunpack.c.h.b16 %v6853
  %v7059 = vunpack.c.l.b16 %v6854
  %v7060 = vunpack.c.l.b16 %v6855
  %v7061 = vunpack.c.h.b16 %v6855
  %v7062 = vunpack.c.l.b16 %v6856
  %v7063 = vunpack.c.h.b16 %v6856
  %v7064 = vunpack.c.l.b16 %v6857
  %v7065 = vunpack.c.h.b16 %v6857
  %v7066 = vunpack.c.l.b16 %v6858
  %v7067 = vunpack.c.h.b16 %v6858
  %v7068 = vunpack.c.l.b16 %v6859
  %v7069 = vunpack.c.h.b16 %v6859
  %v7070 = vunpack.c.l.b16 %v6860
  %v7071 = vunpack.c.h.b16 %v6860
  %v7072 = vunpack.c.l.b16 %v6861
  %v7073 = vunpack.c.l.b16 %v6862
  %v7074 = vunpack.c.h.b16 %v6862
  %v7075 = vunpack.c.l.b16 %v6863
  %v7076 = vunpack.c.h.b16 %v6863
  %v7077 = vunpack.c.l.b16 %v6864
  %v7078 = vunpack.c.h.b16 %v6864
  %v7079 = vunpack.c.l.b16 %v6865
  %v7080 = vunpack.c.h.b16 %v6865
  %v7081 = vunpack.c.l.b16 %v6866
  %v7082 = vunpack.c.h.b16 %v6866
  %v7083 = vunpack.c.l.b16 %v6867
  %v7084 = vunpack.c.h.b16 %v6867
  %v7085 = vunpack.c.l.b16 %v6868
  %v7086 = vunpack.c.l.b16 %v6869
  %v7087 = vunpack.c.h.b16 %v6869
  %v7088 = vunpack.c.l.b16 %v6870
  %v7089 = vunpack.c.h.b16 %v6870
  %v7090 = vunpack.c.l.b16 %v6871
  %v7091 = vunpack.c.h.b16 %v6871
  %v7092 = vunpack.c.l.b16 %v6872
  %v7093 = vunpack.c.h.b16 %v6872
  %v7094 = vunpack.c.l.b16 %v6873
  %v7095 = vunpack.c.h.b16 %v6873
  %v7096 = vunpack.c.l.b16 %v6874
  %v7097 = vunpack.c.h.b16 %v6874
  %v7098 = vunpack.c.l.b16 %v6875
  %v7099 = vunpack.c.l.b16 %v6876
  %v7100 = vunpack.c.h.b16 %v6876
  %v7101 = vunpack.c.l.b16 %v6877
  %v7102 = vunpack.c.h.b16 %v6877
  %v7103 = vunpack.c.l.b16 %v6878
  %v7104 = vunpack.c.h.b16 %v6878
  %v7105 = vunpack.c.l.b16 %v6879
  %v7106 = vunpack.c.h.b16 %v6879
  %v7107 = vunpack.c.l.b16 %v6880
  %v7108 = vunpack.c.h.b16 %v6880
  %v7109 = vunpack.c.l.b16 %v6881
  %v7110 = vunpack.c.h.b16 %v6881
  %v7111 = vunpack.c.l.b16 %v6882
  %v7112 = vpack.c.b16 %v7021, %v7008
  %v7113 = vpack.c.b16 %v7022, %v7009
  %v7114 = vpack.c.b16 %v7023, %v7010
  %v7115 = vpack.c.b16 %v7024, %v7011
  %v7116 = vpack.c.b16 %v7025, %v7012
  %v7117 = vpack.c.b16 %v7026, %v7013
  %v7118 = vpack.c.b16 %v7027, %v7014
  %v7119 = vpack.c.b16 %v7028, %v7015
  %v7120 = vpack.c.b16 %v7029, %v7016
  %v7121 = vpack.c.b16 %v7030, %v7017
  %v7122 = vpack.c.b16 %v7031, %v7018
  %v7123 = vpack.c.b16 %v7032, %v7019
  %v7124 = vpack.c.b16 %v7033, %v7020
  %v7125 = vpack.c.b16 %v7047, %v7034
  %v7126 = vpack.c.b16 %v7048, %v7035
  %v7127 = vpack.c.b16 %v7049, %v7036
  %v7128 = vpack.c.b16 %v7050, %v7037
  %v7129 = vpack.c.b16 %v7051, %v7038
  %v7130 = vpack.c.b16 %v7052, %v7039
  %v7131 = vpack.c.b16 %v7053, %v7040
  %v7132 = vpack.c.b16 %v7054, %v7041
  %v7133 = vpack.c.b16 %v7055, %v7042
  %v7134 = vpack.c.b16 %v7056, %v7043
  %v7135 = vpack.c.b16 %v7057, %v7044
  %v7136 = vpack.c.b16 %v7058, %v7045
  %v7137 = vpack.c.b16 %v7059, %v7046
  %v7138 = vpack.c.b16 %v7073, %v7060
  %v7139 = vpack.c.b16 %v7074, %v7061
  %v7140 = vpack.c.b16 %v7075, %v7062
  %v7141 = vpack.c.b16 %v7076, %v7063
  %v7142 = vpack.c.b16 %v7077, %v7064
  %v7143 = vpack.c.b16 %v7078, %v7065
  %v7144 = vpack.c.b16 %v7079, %v7066
  %v7145 = vpack.c.b16 %v7080, %v7067
  %v7146 = vpack.c.b16 %v7081, %v7068
  %v7147 = vpack.c.b16 %v7082, %v7069
  %v7148 = vpack.c.b16 %v7083, %v7070
  %v7149 = vpack.c.b16 %v7084, %v7071
  %v7150 = vpack.c.b16 %v7085, %v7072
  %v7151 = vpack.c.b16 %v7099, %v7086
  %v7152 = vpack.c.b16 %v7100, %v7087
  %v7153 = vpack.c.b16 %v7101, %v7088
  %v7154 = vpack.c.b16 %v7102, %v7089
  %v7155 = vpack.c.b16 %v7103, %v7090
  %v7156 = vpack.c.b16 %v7104, %v7091
  %v7157 = vpack.c.b16 %v7105, %v7092
  %v7158 = vpack.c.b16 %v7106, %v7093
  %v7159 = vpack.c.b16 %v7107, %v7094
  %v7160 = vpack.c.b16 %v7108, %v7095
  %v7161 = vpack.c.b16 %v7109, %v7096
  %v7162 = vpack.c.b16 %v7110, %v7097
  %v7163 = vpack.c.b16 %v7111, %v7098
  %v7217 = vsel %vm6639, %v6826, 0
  %7219 = vmatprep.subr.bf16.mxu0 0
  %7220 = vmatpush1.bf16.msra.mxu0 0
  %7221 = vmatprep.subr.bf16.mxu0 0
  %7222 = vmatpush1.bf16.msra.mxu0 0
  %7223 = vmatprep.subr.bf16.mxu0 0
  %7224 = vmatpush1.bf16.msra.mxu0 0
  %7225 = vmatprep.subr.bf16.mxu0 0
  %7226 = vmatpush1.bf16.msra.mxu0 0
  %7227 = vmatprep.subr.bf16.mxu0 %v7152
  %7228 = vmatpush1.bf16.msra.mxu0 %v7151
  %7229 = vmatprep.subr.bf16.mxu0 %v7139
  %7230 = vmatpush1.bf16.msra.mxu0 %v7138
  %7231 = vmatprep.subr.bf16.mxu0 %v7126
  %7232 = vmatpush1.bf16.msra.mxu0 %v7125
  %7233 = vmatprep.subr.bf16.mxu0 %v7113
  %7234 = vmatpush1.bf16.msra.mxu0 %v7112
  %7235 = vmatprep.subr.bf16.mxu0 0
  %7236 = vmatpush2.bf16.msra.mxu0 0
  %7237 = vmatprep.subr.bf16.mxu0 0
  %7238 = vmatpush2.bf16.msra.mxu0 0
  %7239 = vmatprep.subr.bf16.mxu0 0
  %7240 = vmatpush2.bf16.msra.mxu0 0
  %7241 = vmatprep.subr.bf16.mxu0 0
  %7242 = vmatpush2.bf16.msra.mxu0 0
  %7243 = vmatprep.subr.bf16.mxu0 0
  %7244 = vmatpush2.bf16.msra.mxu0 0
  %7245 = vmatprep.subr.bf16.mxu0 0
  %7246 = vmatpush2.bf16.msra.mxu0 0
  %7247 = vmatprep.subr.bf16.mxu0 0
  %7248 = vmatpush2.bf16.msra.mxu0 0
  %7249 = vmatprep.subr.bf16.mxu0 0
  %7250 = vmatpush2.bf16.msra.mxu0 0
  %7251 = vmatprep.mubr.bf16.mxu0 0
  %7252 = vmatmul.mubr.bf16.gmra.mxu0 %v7217
  %v7253 = vpop.f32.mrf.mxu0
  %v7254 = vadd.f32 %v6890, %v7253
  %v7255 = vpop.f32.mrf.mxu0
  %v7256 = vadd.f32 %v6894, %v7255
  %v7257 = vpop.f32.mrf.mxu0
  %v7258 = vpop.f32.mrf.mxu0
  %7259 = vdwg.mxu0
  %7260 = vmatprep.subr.bf16.mxu0 0
  %7261 = vmatpush1.bf16.msra.mxu0 0
  %7262 = vmatprep.subr.bf16.mxu0 0
  %7263 = vmatpush1.bf16.msra.mxu0 0
  %7264 = vmatprep.subr.bf16.mxu0 0
  %7265 = vmatpush1.bf16.msra.mxu0 0
  %7266 = vmatprep.subr.bf16.mxu0 0
  %7267 = vmatpush1.bf16.msra.mxu0 0
  %7268 = vmatprep.subr.bf16.mxu0 %v7154
  %7269 = vmatpush1.bf16.msra.mxu0 %v7153
  %7270 = vmatprep.subr.bf16.mxu0 %v7141
  %7271 = vmatpush1.bf16.msra.mxu0 %v7140
  %7272 = vmatprep.subr.bf16.mxu0 %v7128
  %7273 = vmatpush1.bf16.msra.mxu0 %v7127
  %7274 = vmatprep.subr.bf16.mxu0 %v7115
  %7275 = vmatpush1.bf16.msra.mxu0 %v7114
  %7276 = vmatprep.subr.bf16.mxu0 0
  %7277 = vmatpush2.bf16.msra.mxu0 0
  %7278 = vmatprep.subr.bf16.mxu0 0
  %7279 = vmatpush2.bf16.msra.mxu0 0
  %7280 = vmatprep.subr.bf16.mxu0 0
  %7281 = vmatpush2.bf16.msra.mxu0 0
  %7282 = vmatprep.subr.bf16.mxu0 0
  %7283 = vmatpush2.bf16.msra.mxu0 0
  %7284 = vmatprep.subr.bf16.mxu0 0
  %7285 = vmatpush2.bf16.msra.mxu0 0
  %7286 = vmatprep.subr.bf16.mxu0 0
  %7287 = vmatpush2.bf16.msra.mxu0 0
  %7288 = vmatprep.subr.bf16.mxu0 0
  %7289 = vmatpush2.bf16.msra.mxu0 0
  %7290 = vmatprep.subr.bf16.mxu0 0
  %7291 = vmatpush2.bf16.msra.mxu0 0
  %7292 = vmatprep.mubr.bf16.mxu0 0
  %7293 = vmatmul.mubr.bf16.gmra.mxu0 %v7217
  %v7294 = vpop.f32.mrf.mxu0
  %v7295 = vadd.f32 %v6898, %v7294
  %v7296 = vpop.f32.mrf.mxu0
  %v7297 = vadd.f32 %v6902, %v7296
  %v7298 = vpop.f32.mrf.mxu0
  %v7299 = vpop.f32.mrf.mxu0
  %7300 = vdwg.mxu0
  %7301 = vmatprep.subr.bf16.mxu0 0
  %7302 = vmatpush1.bf16.msra.mxu0 0
  %7303 = vmatprep.subr.bf16.mxu0 0
  %7304 = vmatpush1.bf16.msra.mxu0 0
  %7305 = vmatprep.subr.bf16.mxu0 0
  %7306 = vmatpush1.bf16.msra.mxu0 0
  %7307 = vmatprep.subr.bf16.mxu0 0
  %7308 = vmatpush1.bf16.msra.mxu0 0
  %7309 = vmatprep.subr.bf16.mxu0 %v7156
  %7310 = vmatpush1.bf16.msra.mxu0 %v7155
  %7311 = vmatprep.subr.bf16.mxu0 %v7143
  %7312 = vmatpush1.bf16.msra.mxu0 %v7142
  %7313 = vmatprep.subr.bf16.mxu0 %v7130
  %7314 = vmatpush1.bf16.msra.mxu0 %v7129
  %7315 = vmatprep.subr.bf16.mxu0 %v7117
  %7316 = vmatpush1.bf16.msra.mxu0 %v7116
  %7317 = vmatprep.subr.bf16.mxu0 0
  %7318 = vmatpush2.bf16.msra.mxu0 0
  %7319 = vmatprep.subr.bf16.mxu0 0
  %7320 = vmatpush2.bf16.msra.mxu0 0
  %7321 = vmatprep.subr.bf16.mxu0 0
  %7322 = vmatpush2.bf16.msra.mxu0 0
  %7323 = vmatprep.subr.bf16.mxu0 0
  %7324 = vmatpush2.bf16.msra.mxu0 0
  %7325 = vmatprep.subr.bf16.mxu0 0
  %7326 = vmatpush2.bf16.msra.mxu0 0
  %7327 = vmatprep.subr.bf16.mxu0 0
  %7328 = vmatpush2.bf16.msra.mxu0 0
  %7329 = vmatprep.subr.bf16.mxu0 0
  %7330 = vmatpush2.bf16.msra.mxu0 0
  %7331 = vmatprep.subr.bf16.mxu0 0
  %7332 = vmatpush2.bf16.msra.mxu0 0
  %7333 = vmatprep.mubr.bf16.mxu0 0
  %7334 = vmatmul.mubr.bf16.gmra.mxu0 %v7217
  %v7335 = vpop.f32.mrf.mxu0
  %v7336 = vadd.f32 %v6906, %v7335
  %v7337 = vpop.f32.mrf.mxu0
  %v7338 = vadd.f32 %v6910, %v7337
  %v7339 = vpop.f32.mrf.mxu0
  %v7340 = vpop.f32.mrf.mxu0
  %7341 = vdwg.mxu0
  %7342 = vmatprep.subr.bf16.mxu0 0
  %7343 = vmatpush1.bf16.msra.mxu0 0
  %7344 = vmatprep.subr.bf16.mxu0 0
  %7345 = vmatpush1.bf16.msra.mxu0 0
  %7346 = vmatprep.subr.bf16.mxu0 0
  %7347 = vmatpush1.bf16.msra.mxu0 0
  %7348 = vmatprep.subr.bf16.mxu0 0
  %7349 = vmatpush1.bf16.msra.mxu0 0
  %7350 = vmatprep.subr.bf16.mxu0 %v7158
  %7351 = vmatpush1.bf16.msra.mxu0 %v7157
  %7352 = vmatprep.subr.bf16.mxu0 %v7145
  %7353 = vmatpush1.bf16.msra.mxu0 %v7144
  %7354 = vmatprep.subr.bf16.mxu0 %v7132
  %7355 = vmatpush1.bf16.msra.mxu0 %v7131
  %7356 = vmatprep.subr.bf16.mxu0 %v7119
  %7357 = vmatpush1.bf16.msra.mxu0 %v7118
  %7358 = vmatprep.subr.bf16.mxu0 0
  %7359 = vmatpush2.bf16.msra.mxu0 0
  %7360 = vmatprep.subr.bf16.mxu0 0
  %7361 = vmatpush2.bf16.msra.mxu0 0
  %7362 = vmatprep.subr.bf16.mxu0 0
  %7363 = vmatpush2.bf16.msra.mxu0 0
  %7364 = vmatprep.subr.bf16.mxu0 0
  %7365 = vmatpush2.bf16.msra.mxu0 0
  %7366 = vmatprep.subr.bf16.mxu0 0
  %7367 = vmatpush2.bf16.msra.mxu0 0
  %7368 = vmatprep.subr.bf16.mxu0 0
  %7369 = vmatpush2.bf16.msra.mxu0 0
  %7370 = vmatprep.subr.bf16.mxu0 0
  %7371 = vmatpush2.bf16.msra.mxu0 0
  %7372 = vmatprep.subr.bf16.mxu0 0
  %7373 = vmatpush2.bf16.msra.mxu0 0
  %7374 = vmatprep.mubr.bf16.mxu0 0
  %7375 = vmatmul.mubr.bf16.gmra.mxu0 %v7217
  %v7376 = vpop.f32.mrf.mxu0
  %v7377 = vadd.f32 %v6914, %v7376
  %v7378 = vpop.f32.mrf.mxu0
  %v7379 = vadd.f32 %v6918, %v7378
  %v7380 = vpop.f32.mrf.mxu0
  %v7381 = vpop.f32.mrf.mxu0
  %7382 = vdwg.mxu0
  %7383 = vmatprep.subr.bf16.mxu0 0
  %7384 = vmatpush1.bf16.msra.mxu0 0
  %7385 = vmatprep.subr.bf16.mxu0 0
  %7386 = vmatpush1.bf16.msra.mxu0 0
  %7387 = vmatprep.subr.bf16.mxu0 0
  %7388 = vmatpush1.bf16.msra.mxu0 0
  %7389 = vmatprep.subr.bf16.mxu0 0
  %7390 = vmatpush1.bf16.msra.mxu0 0
  %7391 = vmatprep.subr.bf16.mxu0 %v7160
  %7392 = vmatpush1.bf16.msra.mxu0 %v7159
  %7393 = vmatprep.subr.bf16.mxu0 %v7147
  %7394 = vmatpush1.bf16.msra.mxu0 %v7146
  %7395 = vmatprep.subr.bf16.mxu0 %v7134
  %7396 = vmatpush1.bf16.msra.mxu0 %v7133
  %7397 = vmatprep.subr.bf16.mxu0 %v7121
  %7398 = vmatpush1.bf16.msra.mxu0 %v7120
  %7399 = vmatprep.subr.bf16.mxu0 0
  %7400 = vmatpush2.bf16.msra.mxu0 0
  %7401 = vmatprep.subr.bf16.mxu0 0
  %7402 = vmatpush2.bf16.msra.mxu0 0
  %7403 = vmatprep.subr.bf16.mxu0 0
  %7404 = vmatpush2.bf16.msra.mxu0 0
  %7405 = vmatprep.subr.bf16.mxu0 0
  %7406 = vmatpush2.bf16.msra.mxu0 0
  %7407 = vmatprep.subr.bf16.mxu0 0
  %7408 = vmatpush2.bf16.msra.mxu0 0
  %7409 = vmatprep.subr.bf16.mxu0 0
  %7410 = vmatpush2.bf16.msra.mxu0 0
  %7411 = vmatprep.subr.bf16.mxu0 0
  %7412 = vmatpush2.bf16.msra.mxu0 0
  %7413 = vmatprep.subr.bf16.mxu0 0
  %7414 = vmatpush2.bf16.msra.mxu0 0
  %7415 = vmatprep.mubr.bf16.mxu0 0
  %7416 = vmatmul.mubr.bf16.gmra.mxu0 %v7217
  %v7417 = vpop.f32.mrf.mxu0
  %v7418 = vadd.f32 %v6922, %v7417
  %v7419 = vpop.f32.mrf.mxu0
  %v7420 = vadd.f32 %v6926, %v7419
  %v7421 = vpop.f32.mrf.mxu0
  %v7422 = vpop.f32.mrf.mxu0
  %7423 = vdwg.mxu0
  %7424 = vmatprep.subr.bf16.mxu0 0
  %7425 = vmatpush1.bf16.msra.mxu0 0
  %7426 = vmatprep.subr.bf16.mxu0 0
  %7427 = vmatpush1.bf16.msra.mxu0 0
  %7428 = vmatprep.subr.bf16.mxu0 0
  %7429 = vmatpush1.bf16.msra.mxu0 0
  %7430 = vmatprep.subr.bf16.mxu0 0
  %7431 = vmatpush1.bf16.msra.mxu0 0
  %7432 = vmatprep.subr.bf16.mxu0 %v7162
  %7433 = vmatpush1.bf16.msra.mxu0 %v7161
  %7434 = vmatprep.subr.bf16.mxu0 %v7149
  %7435 = vmatpush1.bf16.msra.mxu0 %v7148
  %7436 = vmatprep.subr.bf16.mxu0 %v7136
  %7437 = vmatpush1.bf16.msra.mxu0 %v7135
  %7438 = vmatprep.subr.bf16.mxu0 %v7123
  %7439 = vmatpush1.bf16.msra.mxu0 %v7122
  %7440 = vmatprep.subr.bf16.mxu0 0
  %7441 = vmatpush2.bf16.msra.mxu0 0
  %7442 = vmatprep.subr.bf16.mxu0 0
  %7443 = vmatpush2.bf16.msra.mxu0 0
  %7444 = vmatprep.subr.bf16.mxu0 0
  %7445 = vmatpush2.bf16.msra.mxu0 0
  %7446 = vmatprep.subr.bf16.mxu0 0
  %7447 = vmatpush2.bf16.msra.mxu0 0
  %7448 = vmatprep.subr.bf16.mxu0 0
  %7449 = vmatpush2.bf16.msra.mxu0 0
  %7450 = vmatprep.subr.bf16.mxu0 0
  %7451 = vmatpush2.bf16.msra.mxu0 0
  %7452 = vmatprep.subr.bf16.mxu0 0
  %7453 = vmatpush2.bf16.msra.mxu0 0
  %7454 = vmatprep.subr.bf16.mxu0 0
  %7455 = vmatpush2.bf16.msra.mxu0 0
  %7456 = vmatprep.mubr.bf16.mxu0 0
  %7457 = vmatmul.mubr.bf16.gmra.mxu0 %v7217
  %v7458 = vpop.f32.mrf.mxu0
  %v7459 = vadd.f32 %v6930, %v7458
  %v7460 = vpop.f32.mrf.mxu0
  %v7461 = vadd.f32 %v6934, %v7460
  %v7462 = vpop.f32.mrf.mxu0
  %v7463 = vpop.f32.mrf.mxu0
  %7464 = vdwg.mxu0
  %7465 = vmatprep.subr.bf16.mxu0 0
  %7466 = vmatpush1.bf16.msra.mxu0 0
  %7467 = vmatprep.subr.bf16.mxu0 0
  %7468 = vmatpush1.bf16.msra.mxu0 0
  %7469 = vmatprep.subr.bf16.mxu0 0
  %7470 = vmatpush1.bf16.msra.mxu0 0
  %7471 = vmatprep.subr.bf16.mxu0 0
  %7472 = vmatpush1.bf16.msra.mxu0 0
  %7473 = vmatprep.subr.bf16.mxu0 0
  %7474 = vmatpush1.bf16.msra.mxu0 %v7163
  %7475 = vmatprep.subr.bf16.mxu0 0
  %7476 = vmatpush1.bf16.msra.mxu0 %v7150
  %7477 = vmatprep.subr.bf16.mxu0 0
  %7478 = vmatpush1.bf16.msra.mxu0 %v7137
  %7479 = vmatprep.subr.bf16.mxu0 0
  %7480 = vmatpush1.bf16.msra.mxu0 %v7124
  %7481 = vmatprep.subr.bf16.mxu0 0
  %7482 = vmatpush2.bf16.msra.mxu0 0
  %7483 = vmatprep.subr.bf16.mxu0 0
  %7484 = vmatpush2.bf16.msra.mxu0 0
  %7485 = vmatprep.subr.bf16.mxu0 0
  %7486 = vmatpush2.bf16.msra.mxu0 0
  %7487 = vmatprep.subr.bf16.mxu0 0
  %7488 = vmatpush2.bf16.msra.mxu0 0
  %7489 = vmatprep.subr.bf16.mxu0 0
  %7490 = vmatpush2.bf16.msra.mxu0 0
  %7491 = vmatprep.subr.bf16.mxu0 0
  %7492 = vmatpush2.bf16.msra.mxu0 0
  %7493 = vmatprep.subr.bf16.mxu0 0
  %7494 = vmatpush2.bf16.msra.mxu0 0
  %7495 = vmatprep.subr.bf16.mxu0 0
  %7496 = vmatpush2.bf16.msra.mxu0 0
  %7497 = vmatprep.mubr.bf16.mxu0 0
  %7498 = vmatmul.mubr.bf16.gmra.mxu0 %v7217
  %v7499 = vpop.f32.mrf.mxu0
  %v7500 = vadd.f32 %v6938, %v7499
  %v7501 = vpop.f32.mrf.mxu0
  %v7502 = vpop.f32.mrf.mxu0
  %v7503 = vpop.f32.mrf.mxu0
  %7504 = vdwg.mxu0
  %v7505 = vmax.f32 %v7254, 0.0
  %v7506 = vmax.f32 %v7256, 0.0
  %v7507 = vmax.f32 %v7295, 0.0
  %v7508 = vmax.f32 %v7297, 0.0
  %v7509 = vmax.f32 %v7336, 0.0
  %v7510 = vmax.f32 %v7338, 0.0
  %v7511 = vmax.f32 %v7377, 0.0
  %v7512 = vmax.f32 %v7379, 0.0
  %v7513 = vmax.f32 %v7418, 0.0
  %v7514 = vmax.f32 %v7420, 0.0
  %v7515 = vmax.f32 %v7459, 0.0
  %v7516 = vmax.f32 %v7461, 0.0
  %v7517 = vmax.f32 %v7500, 0.0
  %v7518 = vpack.c.bf16 %v7505, %v7505
  %v7519 = vpack.c.bf16 %v7506, %v7506
  %v7520 = vpack.c.bf16 %v7507, %v7507
  %v7521 = vpack.c.bf16 %v7508, %v7508
  %v7522 = vpack.c.bf16 %v7509, %v7509
  %v7523 = vpack.c.bf16 %v7510, %v7510
  %v7524 = vpack.c.bf16 %v7511, %v7511
  %v7525 = vpack.c.bf16 %v7512, %v7512
  %v7526 = vpack.c.bf16 %v7513, %v7513
  %v7527 = vpack.c.bf16 %v7514, %v7514
  %v7528 = vpack.c.bf16 %v7515, %v7515
  %v7529 = vpack.c.bf16 %v7516, %v7516
  %v7530 = vpack.c.bf16 %v7517, %v7517
  %v7544 = vcombine.low %v7518, %v7519
  %v7545 = vcombine.low %v7520, %v7521
  %v7546 = vcombine.low %v7522, %v7523
  %v7547 = vcombine.low %v7524, %v7525
  %v7549 = vunpack.c.l.s4 1966171168
  %v7550 = vunpack.c.0.s8 %v7549
  %v7551 = vlaneseq
  %v7552 = vshrl.u32 %v7551, 7
  %v7553 = vsub.s32 %v7550, %v7552
  %v7554 = vrot.slane %v7544, %v7553
  %v7556 = vunpack.c.l.s4 1966171168
  %v7557 = vunpack.c.0.s8 %v7556
  %v7558 = vlaneseq
  %v7559 = vshrl.u32 %v7558, 7
  %v7560 = vsub.s32 %v7557, %v7559
  %v7561 = vrot.slane %v7545, %v7560
  %v7563 = vunpack.c.l.s4 1966171168
  %v7564 = vunpack.c.0.s8 %v7563
  %v7565 = vlaneseq
  %v7566 = vshrl.u32 %v7565, 7
  %v7567 = vsub.s32 %v7564, %v7566
  %v7568 = vrot.slane %v7546, %v7567
  %v7570 = vunpack.c.l.s4 1966171168
  %v7571 = vunpack.c.0.s8 %v7570
  %v7572 = vlaneseq
  %v7573 = vshrl.u32 %v7572, 7
  %v7574 = vsub.s32 %v7571, %v7573
  %v7575 = vrot.slane %v7547, %v7574
  %v7576 = vcombine.low %v7554, %v7561
  %v7577 = vcombine.low %v7568, %v7575
  %v7579 = vunpack.c.l.s4 1966171168
  %v7580 = vunpack.c.0.s8 %v7579
  %v7581 = vlaneseq
  %v7582 = vshrl.u32 %v7581, 7
  %v7583 = vsub.s32 %v7580, %v7582
  %v7584 = vrot.slane %v7576, %v7583
  %v7586 = vunpack.c.l.s4 1966171168
  %v7587 = vunpack.c.0.s8 %v7586
  %v7588 = vlaneseq
  %v7589 = vshrl.u32 %v7588, 7
  %v7590 = vsub.s32 %v7587, %v7589
  %v7591 = vrot.slane %v7577, %v7590
  %v7592 = vcombine.low %v7584, %v7591
  %v7593 = vcombine.low %v7526, %v7527
  %v7594 = vcombine.low %v7528, %v7529
  %v7596 = vunpack.c.l.s4 1966171168
  %v7597 = vunpack.c.0.s8 %v7596
  %v7598 = vlaneseq
  %v7599 = vshrl.u32 %v7598, 7
  %v7600 = vsub.s32 %v7597, %v7599
  %v7601 = vrot.slane %v7593, %v7600
  %v7603 = vunpack.c.l.s4 1966171168
  %v7604 = vunpack.c.0.s8 %v7603
  %v7605 = vlaneseq
  %v7606 = vshrl.u32 %v7605, 7
  %v7607 = vsub.s32 %v7604, %v7606
  %v7608 = vrot.slane %v7594, %v7607
  %v7610 = vunpack.c.l.s4 1966171168
  %v7611 = vunpack.c.0.s8 %v7610
  %v7612 = vlaneseq
  %v7613 = vshrl.u32 %v7612, 7
  %v7614 = vsub.s32 %v7611, %v7613
  %v7615 = vrot.slane %v7530, %v7614
  %v7616 = vcombine.low %v7601, %v7608
  %v7618 = vunpack.c.l.s4 1966171168
  %v7619 = vunpack.c.0.s8 %v7618
  %v7620 = vlaneseq
  %v7621 = vshrl.u32 %v7620, 7
  %v7622 = vsub.s32 %v7619, %v7621
  %v7623 = vrot.slane %v7616, %v7622
  %v7625 = vunpack.c.l.s4 1966171168
  %v7626 = vunpack.c.0.s8 %v7625
  %v7627 = vlaneseq
  %v7628 = vshrl.u32 %v7627, 7
  %v7629 = vsub.s32 %v7626, %v7628
  %v7630 = vrot.slane %v7615, %v7629
  %v7631 = vcombine.low %v7623, %v7630
  %7634 = vst [vmem:[%s13] sm:$0xff] %v7592
  %vm7635 = vcmask 1040384
  %vm7636 = vcmask 1041409
  %vm7637 = vmor %vm7636, %vm7635
  %vm7638 = vcmask 1042434
  %vm7639 = vmor %vm7638, %vm7637
  %vm7640 = vcmask 1043459
  %vm7641 = vmor %vm7640, %vm7639
  %vm7642 = vcmask 258052
  %vm7643 = vmor %vm7642, %vm7641
  %7644 = vst.msk [vmem:[%s13 + $0x8] sm:$0x1f] %vm7643, %v7631
  // Predicated region
  $region54: #{autoencoder_forward.5} parent=0 // pred_check
    _
  $region55: #{autoencoder_forward.5} parent=0 // pred_check_branch
    %7646 = sbr.rel (0) target = $region57
  $region56: #{autoencoder_forward.5} parent=0 // pred_region
    _
  $region57: #{autoencoder_forward.5} parent=0 // pred_fallthru
    _
  // Predicated region
  $region58: #{autoencoder_forward.5} parent=0 // pred_check
    _
  $region59: #{autoencoder_forward.5} parent=0 // pred_check_branch
    %7648 = sbr.rel (0) target = $region61
  $region60: #{autoencoder_forward.5} parent=0 // pred_region
    _
  $region61: #{autoencoder_forward.5} parent=0 // pred_fallthru
    _

// kernel: autoencoder_forward.6
$region0: #{autoencoder_forward.6}
  #allocation0 [shape = 'u32[]', space=smem, size = 0x4, offset = 0x4, fixed_abs, tag = 'smem constant byte address 0x4 - core index']
  #allocation1 [shape = 'u32[144,128]{1,0:T(1,128)}', space=vmem, size = 0x12000, scoped, tag = 'internal scratch']
  %s0 = inlined_call_operand.vmem [shape: bf16[392,288], index: 0, kind: input, shape index: {}]
  %s1 = inlined_call_operand.vmem [shape: bf16[288,16], index: 1, kind: input, shape index: {}]
  %s2 = inlined_call_operand.vmem [shape: f32[1,16], index: 2, kind: input, shape index: {}]
  %s3 = inlined_call_operand.vmem [shape: bf16[392,16], index: 3, kind: output, shape index: {}]
  %s4 = sld [smem:[#allocation0]]
  $region22: #{autoencoder_forward.6} parent=0
    _
  %s6 = ssub.s32 1, %s4
  %s7 = scalar_select 0, %s6, %s4
  // Predicated region
  $region2: #{autoencoder_forward.6} parent=0 // pred_check
    _
  $region3: #{autoencoder_forward.6} parent=0 // pred_check_branch
    %9 = sbr.rel (0) target = $region5
  $region4: #{autoencoder_forward.6} parent=0 // pred_region
    _
  $region5: #{autoencoder_forward.6} parent=0 // pred_fallthru
    _
  // Predicated region
  $region6: #{autoencoder_forward.6} parent=0 // pred_check
    _
  $region7: #{autoencoder_forward.6} parent=0 // pred_check_branch
    %11 = sbr.rel (0) target = $region9
  $region8: #{autoencoder_forward.6} parent=0 // pred_region
    _
  $region9: #{autoencoder_forward.6} parent=0 // pred_fallthru
    _
  // Predicated region
  $region10: #{autoencoder_forward.6} parent=0 // pred_check
    _
  $region11: #{autoencoder_forward.6} parent=0 // pred_check_branch
    %13 = sbr.rel (0) target = $region13
  $region12: #{autoencoder_forward.6} parent=0 // pred_region
    _
  $region13: #{autoencoder_forward.6} parent=0 // pred_fallthru
    _
  %v15 = vld [vmem:[%s0] sm:$0xff]
  %v16 = vld [vmem:[%s0 + $0x8] sm:$0xf]
  %v17 = vld [vmem:[%s0 + $0xc] sm:$0xff]
  %v18 = vld [vmem:[%s0 + $0x14] sm:$0xf]
  %v19 = vld [vmem:[%s0 + $0x18] sm:$0xff]
  %v20 = vld [vmem:[%s0 + $0x20] sm:$0xf]
  %v21 = vld [vmem:[%s0 + $0x24] sm:$0xff]
  %v22 = vld [vmem:[%s0 + $0x2c] sm:$0xf]
  %v23 = vld [vmem:[%s0 + $0x30] sm:$0xff]
  %v24 = vld [vmem:[%s0 + $0x38] sm:$0xf]
  %v25 = vld [vmem:[%s0 + $0x3c] sm:$0xff]
  %v26 = vld [vmem:[%s0 + $0x44] sm:$0xf]
  %v27 = vld [vmem:[%s0 + $0x48] sm:$0xff]
  %v28 = vld [vmem:[%s0 + $0x50] sm:$0xf]
  %v29 = vld [vmem:[%s0 + $0x54] sm:$0xff]
  %v30 = vld [vmem:[%s0 + $0x5c] sm:$0xf]
  %v31 = vld [vmem:[%s0 + $0x60] sm:$0xff]
  %v32 = vld [vmem:[%s0 + $0x68] sm:$0xf]
  %v33 = vld [vmem:[%s0 + $0x6c] sm:$0xff]
  %v34 = vld [vmem:[%s0 + $0x74] sm:$0xf]
  %v35 = vld [vmem:[%s0 + $0x78] sm:$0xff]
  %v36 = vld [vmem:[%s0 + $0x80] sm:$0xf]
  %v37 = vld [vmem:[%s0 + $0x84] sm:$0xff]
  %v38 = vld [vmem:[%s0 + $0x8c] sm:$0xf]
  %v39 = vld [vmem:[%s0 + $0x90] sm:$0xff]
  %v40 = vld [vmem:[%s0 + $0x98] sm:$0xf]
  %v41 = vld [vmem:[%s0 + $0x9c] sm:$0xff]
  %v42 = vld [vmem:[%s0 + $0xa4] sm:$0xf]
  %v43 = vld [vmem:[%s0 + $0xa8] sm:$0xff]
  %v44 = vld [vmem:[%s0 + $0xb0] sm:$0xf]
  %v45 = vld [vmem:[%s0 + $0xb4] sm:$0xff]
  %v46 = vld [vmem:[%s0 + $0xbc] sm:$0xf]
  %v47 = vld [vmem:[%s0 + $0xc0] sm:$0xff]
  %v48 = vld [vmem:[%s0 + $0xc8] sm:$0xf]
  %v49 = vld [vmem:[%s0 + $0xcc] sm:$0xff]
  %v50 = vld [vmem:[%s0 + $0xd4] sm:$0xf]
  %v51 = vld [vmem:[%s0 + $0xd8] sm:$0xff]
  %v52 = vld [vmem:[%s0 + $0xe0] sm:$0xf]
  %v53 = vld [vmem:[%s0 + $0xe4] sm:$0xff]
  %v54 = vld [vmem:[%s0 + $0xec] sm:$0xf]
  %v55 = vld [vmem:[%s0 + $0xf0] sm:$0xff]
  %v56 = vld [vmem:[%s0 + $0xf8] sm:$0xf]
  %v57 = vld [vmem:[%s0 + $0xfc] sm:$0xff]
  %v58 = vld [vmem:[%s0 + $0x104] sm:$0xf]
  %v59 = vld [vmem:[%s0 + $0x108] sm:$0xff]
  %v60 = vld [vmem:[%s0 + $0x110] sm:$0xf]
  %v61 = vld [vmem:[%s0 + $0x114] sm:$0xff]
  %v62 = vld [vmem:[%s0 + $0x11c] sm:$0xf]
  %v63 = vld [vmem:[%s0 + $0x120] sm:$0xff]
  %v64 = vld [vmem:[%s0 + $0x128] sm:$0xf]
  %v65 = vld [vmem:[%s0 + $0x12c] sm:$0xff]
  %v66 = vld [vmem:[%s0 + $0x134] sm:$0xf]
  %v67 = vld [vmem:[%s0 + $0x138] sm:$0xff]
  %v68 = vld [vmem:[%s0 + $0x140] sm:$0xf]
  %v69 = vld [vmem:[%s0 + $0x144] sm:$0xff]
  %v70 = vld [vmem:[%s0 + $0x14c] sm:$0xf]
  %v71 = vld [vmem:[%s0 + $0x150] sm:$0xff]
  %v72 = vld [vmem:[%s0 + $0x158] sm:$0xf]
  %v73 = vld [vmem:[%s0 + $0x15c] sm:$0xff]
  %v74 = vld [vmem:[%s0 + $0x164] sm:$0xf]
  %v75 = vld [vmem:[%s0 + $0x168] sm:$0xff]
  %v76 = vld [vmem:[%s0 + $0x170] sm:$0xf]
  %v77 = vld [vmem:[%s0 + $0x174] sm:$0xff]
  %v78 = vld [vmem:[%s0 + $0x17c] sm:$0xf]
  %v79 = vld [vmem:[%s0 + $0x180] sm:$0xff]
  %v80 = vld [vmem:[%s0 + $0x188] sm:$0xf]
  %v81 = vld [vmem:[%s0 + $0x18c] sm:$0xff]
  %v82 = vld [vmem:[%s0 + $0x194] sm:$0xf]
  %v83 = vld [vmem:[%s0 + $0x198] sm:$0xff]
  %v84 = vld [vmem:[%s0 + $0x1a0] sm:$0xf]
  %v85 = vld [vmem:[%s0 + $0x1a4] sm:$0xff]
  %v86 = vld [vmem:[%s0 + $0x1ac] sm:$0xf]
  %v87 = vld [vmem:[%s0 + $0x1b0] sm:$0xff]
  %v88 = vld [vmem:[%s0 + $0x1b8] sm:$0xf]
  %v89 = vld [vmem:[%s0 + $0x1bc] sm:$0xff]
  %v90 = vld [vmem:[%s0 + $0x1c4] sm:$0xf]
  %v91 = vld [vmem:[%s0 + $0x1c8] sm:$0xff]
  %v92 = vld [vmem:[%s0 + $0x1d0] sm:$0xf]
  %v93 = vld [vmem:[%s0 + $0x1d4] sm:$0xff]
  %v94 = vld [vmem:[%s0 + $0x1dc] sm:$0xf]
  %v95 = vld [vmem:[%s0 + $0x1e0] sm:$0xff]
  %v96 = vld [vmem:[%s0 + $0x1e8] sm:$0xf]
  %v97 = vld [vmem:[%s0 + $0x1ec] sm:$0xff]
  %v98 = vld [vmem:[%s0 + $0x1f4] sm:$0xf]
  %v99 = vld [vmem:[%s0 + $0x1f8] sm:$0xff]
  %v100 = vld [vmem:[%s0 + $0x200] sm:$0xf]
  %v101 = vld [vmem:[%s0 + $0x204] sm:$0xff]
  %v102 = vld [vmem:[%s0 + $0x20c] sm:$0xf]
  %v103 = vld [vmem:[%s0 + $0x210] sm:$0xff]
  %v104 = vld [vmem:[%s0 + $0x218] sm:$0xf]
  %v105 = vld [vmem:[%s0 + $0x21c] sm:$0xff]
  %v106 = vld [vmem:[%s0 + $0x224] sm:$0xf]
  %v107 = vld [vmem:[%s0 + $0x228] sm:$0xff]
  %v108 = vld [vmem:[%s0 + $0x230] sm:$0xf]
  %v109 = vld [vmem:[%s0 + $0x234] sm:$0xff]
  %v110 = vld [vmem:[%s0 + $0x23c] sm:$0xf]
  %v111 = vld [vmem:[%s0 + $0x240] sm:$0xff]
  %v112 = vld [vmem:[%s0 + $0x248] sm:$0xf]
  %v113 = vld [vmem:[%s1] sm:$0xf]
  %v114 = vld [vmem:[%s1 + $0x4] sm:$0xf]
  %v115 = vld [vmem:[%s1 + $0x8] sm:$0xf]
  %v116 = vld [vmem:[%s1 + $0xc] sm:$0xf]
  %v117 = vld [vmem:[%s1 + $0x10] sm:$0xf]
  %v118 = vld [vmem:[%s1 + $0x14] sm:$0xf]
  %v119 = vld [vmem:[%s1 + $0x18] sm:$0xf]
  %v120 = vld [vmem:[%s1 + $0x1c] sm:$0xf]
  %v121 = vld [vmem:[%s1 + $0x20] sm:$0xf]
  %v122 = vld [vmem:[%s1 + $0x24] sm:$0xf]
  %v123 = vld [vmem:[%s1 + $0x28] sm:$0xf]
  %v124 = vld [vmem:[%s1 + $0x2c] sm:$0xf]
  %v125 = vld [vmem:[%s1 + $0x30] sm:$0xf]
  %v126 = vld [vmem:[%s1 + $0x34] sm:$0xf]
  %v127 = vld [vmem:[%s1 + $0x38] sm:$0xf]
  %v128 = vld [vmem:[%s1 + $0x3c] sm:$0xf]
  %v129 = vld [vmem:[%s1 + $0x40] sm:$0xf]
  %v130 = vld [vmem:[%s1 + $0x44] sm:$0xf]
  %v131 = vld [vmem:[%s1 + $0x48] sm:$0xf]
  %v132 = vld [vmem:[%s1 + $0x4c] sm:$0xf]
  %v133 = vld [vmem:[%s1 + $0x50] sm:$0xf]
  %v134 = vld [vmem:[%s1 + $0x54] sm:$0xf]
  %v135 = vld [vmem:[%s1 + $0x58] sm:$0xf]
  %v136 = vld [vmem:[%s1 + $0x5c] sm:$0xf]
  %v137 = vld [vmem:[%s1 + $0x60] sm:$0xf]
  %v138 = vld [vmem:[%s1 + $0x64] sm:$0xf]
  %v139 = vld [vmem:[%s1 + $0x68] sm:$0xf]
  %v140 = vld [vmem:[%s1 + $0x6c] sm:$0xf]
  %v141 = vld [vmem:[%s1 + $0x70] sm:$0xf]
  %v142 = vld [vmem:[%s1 + $0x74] sm:$0xf]
  %v143 = vld [vmem:[%s1 + $0x78] sm:$0xf]
  %v144 = vld [vmem:[%s1 + $0x7c] sm:$0xf]
  %v145 = vld [vmem:[%s1 + $0x80] sm:$0xf]
  %v146 = vld [vmem:[%s1 + $0x84] sm:$0xf]
  %v147 = vld [vmem:[%s1 + $0x88] sm:$0xf]
  %v148 = vld [vmem:[%s1 + $0x8c] sm:$0xf]
  %v149 = vld [vmem:[%s2] sm:$0x1]
  %v151 = vlaneseq
  %v152 = vshrl.u32 %v151, 7
  %v153 = vsub.s32 0, %v152
  %v154 = vrot.slane %v149, %v153
  %v254 = vunpack.c.l.b16 %v15
  %v255 = vunpack.c.h.b16 %v15
  %v256 = vunpack.c.l.b16 %v16
  %v257 = vunpack.c.l.b16 %v17
  %v258 = vunpack.c.h.b16 %v17
  %v259 = vunpack.c.l.b16 %v18
  %v260 = vunpack.c.l.b16 %v19
  %v261 = vunpack.c.h.b16 %v19
  %v262 = vunpack.c.l.b16 %v20
  %v263 = vunpack.c.l.b16 %v21
  %v264 = vunpack.c.h.b16 %v21
  %v265 = vunpack.c.l.b16 %v22
  %v266 = vunpack.c.l.b16 %v23
  %v267 = vunpack.c.h.b16 %v23
  %v268 = vunpack.c.l.b16 %v24
  %v269 = vunpack.c.l.b16 %v25
  %v270 = vunpack.c.h.b16 %v25
  %v271 = vunpack.c.l.b16 %v26
  %v272 = vunpack.c.l.b16 %v27
  %v273 = vunpack.c.h.b16 %v27
  %v274 = vunpack.c.l.b16 %v28
  %v275 = vunpack.c.l.b16 %v29
  %v276 = vunpack.c.h.b16 %v29
  %v277 = vunpack.c.l.b16 %v30
  %v278 = vunpack.c.l.b16 %v31
  %v279 = vunpack.c.h.b16 %v31
  %v280 = vunpack.c.l.b16 %v32
  %v281 = vunpack.c.l.b16 %v33
  %v282 = vunpack.c.h.b16 %v33
  %v283 = vunpack.c.l.b16 %v34
  %v284 = vunpack.c.l.b16 %v35
  %v285 = vunpack.c.h.b16 %v35
  %v286 = vunpack.c.l.b16 %v36
  %v287 = vunpack.c.l.b16 %v37
  %v288 = vunpack.c.h.b16 %v37
  %v289 = vunpack.c.l.b16 %v38
  %v290 = vunpack.c.l.b16 %v39
  %v291 = vunpack.c.h.b16 %v39
  %v292 = vunpack.c.l.b16 %v40
  %v293 = vunpack.c.l.b16 %v41
  %v294 = vunpack.c.h.b16 %v41
  %v295 = vunpack.c.l.b16 %v42
  %v296 = vunpack.c.l.b16 %v43
  %v297 = vunpack.c.h.b16 %v43
  %v298 = vunpack.c.l.b16 %v44
  %v299 = vunpack.c.l.b16 %v45
  %v300 = vunpack.c.h.b16 %v45
  %v301 = vunpack.c.l.b16 %v46
  %v302 = vunpack.c.l.b16 %v47
  %v303 = vunpack.c.h.b16 %v47
  %v304 = vunpack.c.l.b16 %v48
  %v305 = vunpack.c.l.b16 %v49
  %v306 = vunpack.c.h.b16 %v49
  %v307 = vunpack.c.l.b16 %v50
  %v308 = vunpack.c.l.b16 %v51
  %v309 = vunpack.c.h.b16 %v51
  %v310 = vunpack.c.l.b16 %v52
  %v311 = vunpack.c.l.b16 %v53
  %v312 = vunpack.c.h.b16 %v53
  %v313 = vunpack.c.l.b16 %v54
  %v314 = vunpack.c.l.b16 %v55
  %v315 = vunpack.c.h.b16 %v55
  %v316 = vunpack.c.l.b16 %v56
  %v317 = vunpack.c.l.b16 %v57
  %v318 = vunpack.c.h.b16 %v57
  %v319 = vunpack.c.l.b16 %v58
  %v320 = vunpack.c.l.b16 %v59
  %v321 = vunpack.c.h.b16 %v59
  %v322 = vunpack.c.l.b16 %v60
  %v323 = vunpack.c.l.b16 %v61
  %v324 = vunpack.c.h.b16 %v61
  %v325 = vunpack.c.l.b16 %v62
  %v326 = vunpack.c.l.b16 %v63
  %v327 = vunpack.c.h.b16 %v63
  %v328 = vunpack.c.l.b16 %v64
  %v329 = vunpack.c.l.b16 %v65
  %v330 = vunpack.c.h.b16 %v65
  %v331 = vunpack.c.l.b16 %v66
  %v332 = vunpack.c.l.b16 %v67
  %v333 = vunpack.c.h.b16 %v67
  %v334 = vunpack.c.l.b16 %v68
  %v335 = vunpack.c.l.b16 %v69
  %v336 = vunpack.c.h.b16 %v69
  %v337 = vunpack.c.l.b16 %v70
  %v338 = vunpack.c.l.b16 %v71
  %v339 = vunpack.c.h.b16 %v71
  %v340 = vunpack.c.l.b16 %v72
  %v341 = vunpack.c.l.b16 %v73
  %v342 = vunpack.c.h.b16 %v73
  %v343 = vunpack.c.l.b16 %v74
  %v344 = vunpack.c.l.b16 %v75
  %v345 = vunpack.c.h.b16 %v75
  %v346 = vunpack.c.l.b16 %v76
  %v347 = vunpack.c.l.b16 %v77
  %v348 = vunpack.c.h.b16 %v77
  %v349 = vunpack.c.l.b16 %v78
  %v350 = vunpack.c.l.b16 %v79
  %v351 = vunpack.c.h.b16 %v79
  %v352 = vunpack.c.l.b16 %v80
  %v353 = vunpack.c.l.b16 %v81
  %v354 = vunpack.c.h.b16 %v81
  %v355 = vunpack.c.l.b16 %v82
  %v356 = vunpack.c.l.b16 %v83
  %v357 = vunpack.c.h.b16 %v83
  %v358 = vunpack.c.l.b16 %v84
  %v359 = vunpack.c.l.b16 %v85
  %v360 = vunpack.c.h.b16 %v85
  %v361 = vunpack.c.l.b16 %v86
  %v362 = vunpack.c.l.b16 %v87
  %v363 = vunpack.c.h.b16 %v87
  %v364 = vunpack.c.l.b16 %v88
  %v365 = vunpack.c.l.b16 %v89
  %v366 = vunpack.c.h.b16 %v89
  %v367 = vunpack.c.l.b16 %v90
  %v368 = vunpack.c.l.b16 %v91
  %v369 = vunpack.c.h.b16 %v91
  %v370 = vunpack.c.l.b16 %v92
  %v371 = vunpack.c.l.b16 %v93
  %v372 = vunpack.c.h.b16 %v93
  %v373 = vunpack.c.l.b16 %v94
  %v374 = vunpack.c.l.b16 %v95
  %v375 = vunpack.c.h.b16 %v95
  %v376 = vunpack.c.l.b16 %v96
  %v377 = vunpack.c.l.b16 %v97
  %v378 = vunpack.c.h.b16 %v97
  %v379 = vunpack.c.l.b16 %v98
  %v380 = vunpack.c.l.b16 %v99
  %v381 = vunpack.c.h.b16 %v99
  %v382 = vunpack.c.l.b16 %v100
  %v383 = vunpack.c.l.b16 %v101
  %v384 = vunpack.c.h.b16 %v101
  %v385 = vunpack.c.l.b16 %v102
  %v386 = vunpack.c.l.b16 %v103
  %v387 = vunpack.c.h.b16 %v103
  %v388 = vunpack.c.l.b16 %v104
  %v389 = vunpack.c.l.b16 %v105
  %v390 = vunpack.c.h.b16 %v105
  %v391 = vunpack.c.l.b16 %v106
  %v392 = vunpack.c.l.b16 %v107
  %v393 = vunpack.c.h.b16 %v107
  %v394 = vunpack.c.l.b16 %v108
  %v395 = vunpack.c.l.b16 %v109
  %v396 = vunpack.c.h.b16 %v109
  %v397 = vunpack.c.l.b16 %v110
  %v398 = vunpack.c.l.b16 %v111
  %v399 = vunpack.c.h.b16 %v111
  %v400 = vunpack.c.l.b16 %v112
  %v401 = vpack.c.b16 %v257, %v254
  %v402 = vpack.c.b16 %v258, %v255
  %v403 = vpack.c.b16 %v259, %v256
  %v404 = vpack.c.b16 %v263, %v260
  %v405 = vpack.c.b16 %v264, %v261
  %v406 = vpack.c.b16 %v265, %v262
  %v407 = vpack.c.b16 %v269, %v266
  %v408 = vpack.c.b16 %v270, %v267
  %v409 = vpack.c.b16 %v271, %v268
  %v410 = vpack.c.b16 %v275, %v272
  %v411 = vpack.c.b16 %v276, %v273
  %v412 = vpack.c.b16 %v277, %v274
  %v413 = vpack.c.b16 %v281, %v278
  %v414 = vpack.c.b16 %v282, %v279
  %v415 = vpack.c.b16 %v283, %v280
  %v416 = vpack.c.b16 %v287, %v284
  %v417 = vpack.c.b16 %v288, %v285
  %v418 = vpack.c.b16 %v289, %v286
  %v419 = vpack.c.b16 %v293, %v290
  %v420 = vpack.c.b16 %v294, %v291
  %v421 = vpack.c.b16 %v295, %v292
  %v422 = vpack.c.b16 %v299, %v296
  %v423 = vpack.c.b16 %v300, %v297
  %v424 = vpack.c.b16 %v301, %v298
  %v425 = vpack.c.b16 %v305, %v302
  %v426 = vpack.c.b16 %v306, %v303
  %v427 = vpack.c.b16 %v307, %v304
  %v428 = vpack.c.b16 %v311, %v308
  %v429 = vpack.c.b16 %v312, %v309
  %v430 = vpack.c.b16 %v313, %v310
  %v431 = vpack.c.b16 %v317, %v314
  %v432 = vpack.c.b16 %v318, %v315
  %v433 = vpack.c.b16 %v319, %v316
  %v434 = vpack.c.b16 %v323, %v320
  %v435 = vpack.c.b16 %v324, %v321
  %v436 = vpack.c.b16 %v325, %v322
  %v437 = vpack.c.b16 %v329, %v326
  %v438 = vpack.c.b16 %v330, %v327
  %v439 = vpack.c.b16 %v331, %v328
  %v440 = vpack.c.b16 %v335, %v332
  %v441 = vpack.c.b16 %v336, %v333
  %v442 = vpack.c.b16 %v337, %v334
  %v443 = vpack.c.b16 %v341, %v338
  %v444 = vpack.c.b16 %v342, %v339
  %v445 = vpack.c.b16 %v343, %v340
  %v446 = vpack.c.b16 %v347, %v344
  %v447 = vpack.c.b16 %v348, %v345
  %v448 = vpack.c.b16 %v349, %v346
  %v449 = vpack.c.b16 %v353, %v350
  %v450 = vpack.c.b16 %v354, %v351
  %v451 = vpack.c.b16 %v355, %v352
  %v452 = vpack.c.b16 %v359, %v356
  %v453 = vpack.c.b16 %v360, %v357
  %v454 = vpack.c.b16 %v361, %v358
  %v455 = vpack.c.b16 %v365, %v362
  %v456 = vpack.c.b16 %v366, %v363
  %v457 = vpack.c.b16 %v367, %v364
  %v458 = vpack.c.b16 %v371, %v368
  %v459 = vpack.c.b16 %v372, %v369
  %v460 = vpack.c.b16 %v373, %v370
  %v461 = vpack.c.b16 %v377, %v374
  %v462 = vpack.c.b16 %v378, %v375
  %v463 = vpack.c.b16 %v379, %v376
  %v464 = vpack.c.b16 %v383, %v380
  %v465 = vpack.c.b16 %v384, %v381
  %v466 = vpack.c.b16 %v385, %v382
  %v467 = vpack.c.b16 %v389, %v386
  %v468 = vpack.c.b16 %v390, %v387
  %v469 = vpack.c.b16 %v391, %v388
  %v470 = vpack.c.b16 %v395, %v392
  %v471 = vpack.c.b16 %v396, %v393
  %v472 = vpack.c.b16 %v397, %v394
  %v473 = vpack.c.b16 %v398, %v398
  %v474 = vpack.c.b16 %v399, %v399
  %v475 = vpack.c.b16 %v400, %v400
  %v562 = vunpack.c.l.b16 %v113
  %v563 = vunpack.c.l.b16 %v114
  %v564 = vunpack.c.l.b16 %v115
  %v565 = vunpack.c.l.b16 %v116
  %v566 = vunpack.c.l.b16 %v117
  %v567 = vunpack.c.l.b16 %v118
  %v568 = vunpack.c.l.b16 %v119
  %v569 = vunpack.c.l.b16 %v120
  %v570 = vunpack.c.l.b16 %v121
  %v571 = vunpack.c.l.b16 %v122
  %v572 = vunpack.c.l.b16 %v123
  %v573 = vunpack.c.l.b16 %v124
  %v574 = vunpack.c.l.b16 %v125
  %v575 = vunpack.c.l.b16 %v126
  %v576 = vunpack.c.l.b16 %v127
  %v577 = vunpack.c.l.b16 %v128
  %v578 = vunpack.c.l.b16 %v129
  %v579 = vunpack.c.l.b16 %v130
  %v580 = vunpack.c.l.b16 %v131
  %v581 = vunpack.c.l.b16 %v132
  %v582 = vunpack.c.l.b16 %v133
  %v583 = vunpack.c.l.b16 %v134
  %v584 = vunpack.c.l.b16 %v135
  %v585 = vunpack.c.l.b16 %v136
  %v586 = vunpack.c.l.b16 %v137
  %v587 = vunpack.c.l.b16 %v138
  %v588 = vunpack.c.l.b16 %v139
  %v589 = vunpack.c.l.b16 %v140
  %v590 = vunpack.c.l.b16 %v141
  %v591 = vunpack.c.l.b16 %v142
  %v592 = vunpack.c.l.b16 %v143
  %v593 = vunpack.c.l.b16 %v144
  %v594 = vunpack.c.l.b16 %v145
  %v595 = vunpack.c.l.b16 %v146
  %v596 = vunpack.c.l.b16 %v147
  %v597 = vunpack.c.l.b16 %v148
  %v598 = vpack.c.b16 %v563, %v562
  %v599 = vpack.c.b16 %v565, %v564
  %v600 = vpack.c.b16 %v567, %v566
  %v601 = vpack.c.b16 %v569, %v568
  %v602 = vpack.c.b16 %v571, %v570
  %v603 = vpack.c.b16 %v573, %v572
  %v604 = vpack.c.b16 %v575, %v574
  %v605 = vpack.c.b16 %v577, %v576
  %v606 = vpack.c.b16 %v579, %v578
  %v607 = vpack.c.b16 %v581, %v580
  %v608 = vpack.c.b16 %v583, %v582
  %v609 = vpack.c.b16 %v585, %v584
  %v610 = vpack.c.b16 %v587, %v586
  %v611 = vpack.c.b16 %v589, %v588
  %v612 = vpack.c.b16 %v591, %v590
  %v613 = vpack.c.b16 %v593, %v592
  %v614 = vpack.c.b16 %v595, %v594
  %v615 = vpack.c.b16 %v597, %v596
  %vm634 = vcmask 261120
  %v636 = vsel %vm634, %v403, 0
  %v639 = vsel %vm634, %v406, 0
  %v642 = vsel %vm634, %v409, 0
  %v645 = vsel %vm634, %v412, 0
  %v648 = vsel %vm634, %v415, 0
  %v651 = vsel %vm634, %v418, 0
  %v654 = vsel %vm634, %v421, 0
  %v657 = vsel %vm634, %v424, 0
  %v660 = vsel %vm634, %v427, 0
  %v663 = vsel %vm634, %v430, 0
  %v666 = vsel %vm634, %v433, 0
  %v669 = vsel %vm634, %v436, 0
  %v672 = vsel %vm634, %v439, 0
  %v675 = vsel %vm634, %v442, 0
  %v678 = vsel %vm634, %v445, 0
  %v681 = vsel %vm634, %v448, 0
  %v684 = vsel %vm634, %v451, 0
  %v687 = vsel %vm634, %v454, 0
  %v690 = vsel %vm634, %v457, 0
  %v693 = vsel %vm634, %v460, 0
  %v696 = vsel %vm634, %v463, 0
  %v699 = vsel %vm634, %v466, 0
  %v702 = vsel %vm634, %v469, 0
  %v705 = vsel %vm634, %v472, 0
  %v708 = vsel %vm634, %v475, 0
  %710 = vmatprep.subr.bf16.mxu0 0
  %711 = vmatpush1.bf16.msra.mxu0 %v605
  %712 = vmatprep.subr.bf16.mxu0 0
  %713 = vmatpush1.bf16.msra.mxu0 %v604
  %714 = vmatprep.subr.bf16.mxu0 0
  %715 = vmatpush1.bf16.msra.mxu0 %v603
  %716 = vmatprep.subr.bf16.mxu0 0
  %717 = vmatpush1.bf16.msra.mxu0 %v602
  %718 = vmatprep.subr.bf16.mxu0 0
  %719 = vmatpush1.bf16.msra.mxu0 %v601
  %720 = vmatprep.subr.bf16.mxu0 0
  %721 = vmatpush1.bf16.msra.mxu0 %v600
  %722 = vmatprep.subr.bf16.mxu0 0
  %723 = vmatpush1.bf16.msra.mxu0 %v599
  %724 = vmatprep.subr.bf16.mxu0 0
  %725 = vmatpush1.bf16.msra.mxu0 %v598
  %726 = vmatprep.subr.bf16.mxu0 0
  %727 = vmatpush2.bf16.msra.mxu0 %v613
  %728 = vmatprep.subr.bf16.mxu0 0
  %729 = vmatpush2.bf16.msra.mxu0 %v612
  %730 = vmatprep.subr.bf16.mxu0 0
  %731 = vmatpush2.bf16.msra.mxu0 %v611
  %732 = vmatprep.subr.bf16.mxu0 0
  %733 = vmatpush2.bf16.msra.mxu0 %v610
  %734 = vmatprep.subr.bf16.mxu0 0
  %735 = vmatpush2.bf16.msra.mxu0 %v609
  %736 = vmatprep.subr.bf16.mxu0 0
  %737 = vmatpush2.bf16.msra.mxu0 %v608
  %738 = vmatprep.subr.bf16.mxu0 0
  %739 = vmatpush2.bf16.msra.mxu0 %v607
  %740 = vmatprep.subr.bf16.mxu0 0
  %741 = vmatpush2.bf16.msra.mxu0 %v606
  %742 = vmatprep.mubr.bf16.mxu0 %v402
  %743 = vmatmul.mubr.bf16.gmra.mxu0 %v401
  %v744 = vpop.f32.mrf.mxu0
  %v745 = vadd.f32 %v154, %v744
  %v746 = vpop.f32.mrf.mxu0
  %v747 = vpop.f32.mrf.mxu0
  %v748 = vadd.f32 %v154, %v747
  %v749 = vpop.f32.mrf.mxu0
  %750 = vmatprep.mubr.bf16.mxu0 %v405
  %751 = vmatmul.mubr.bf16.gmra.mxu0 %v404
  %v752 = vpop.f32.mrf.mxu0
  %v753 = vadd.f32 %v154, %v752
  %v754 = vpop.f32.mrf.mxu0
  %v755 = vpop.f32.mrf.mxu0
  %v756 = vadd.f32 %v154, %v755
  %v757 = vpop.f32.mrf.mxu0
  %758 = vmatprep.mubr.bf16.mxu0 %v408
  %759 = vmatmul.mubr.bf16.gmra.mxu0 %v407
  %v760 = vpop.f32.mrf.mxu0
  %v761 = vadd.f32 %v154, %v760
  %v762 = vpop.f32.mrf.mxu0
  %v763 = vpop.f32.mrf.mxu0
  %v764 = vadd.f32 %v154, %v763
  %v765 = vpop.f32.mrf.mxu0
  %766 = vmatprep.mubr.bf16.mxu0 %v411
  %767 = vmatmul.mubr.bf16.gmra.mxu0 %v410
  %v768 = vpop.f32.mrf.mxu0
  %v769 = vadd.f32 %v154, %v768
  %v770 = vpop.f32.mrf.mxu0
  %v771 = vpop.f32.mrf.mxu0
  %v772 = vadd.f32 %v154, %v771
  %v773 = vpop.f32.mrf.mxu0
  %774 = vmatprep.mubr.bf16.mxu0 %v414
  %775 = vmatmul.mubr.bf16.gmra.mxu0 %v413
  %v776 = vpop.f32.mrf.mxu0
  %v777 = vadd.f32 %v154, %v776
  %v778 = vpop.f32.mrf.mxu0
  %v779 = vpop.f32.mrf.mxu0
  %v780 = vadd.f32 %v154, %v779
  %v781 = vpop.f32.mrf.mxu0
  %782 = vmatprep.mubr.bf16.mxu0 %v417
  %783 = vmatmul.mubr.bf16.gmra.mxu0 %v416
  %v784 = vpop.f32.mrf.mxu0
  %v785 = vadd.f32 %v154, %v784
  %v786 = vpop.f32.mrf.mxu0
  %v787 = vpop.f32.mrf.mxu0
  %v788 = vadd.f32 %v154, %v787
  %v789 = vpop.f32.mrf.mxu0
  %790 = vmatprep.mubr.bf16.mxu0 %v420
  %791 = vmatmul.mubr.bf16.gmra.mxu0 %v419
  %v792 = vpop.f32.mrf.mxu0
  %v793 = vadd.f32 %v154, %v792
  %v794 = vpop.f32.mrf.mxu0
  %v795 = vpop.f32.mrf.mxu0
  %v796 = vadd.f32 %v154, %v795
  %v797 = vpop.f32.mrf.mxu0
  %798 = vmatprep.mubr.bf16.mxu0 %v423
  %799 = vmatmul.mubr.bf16.gmra.mxu0 %v422
  %v800 = vpop.f32.mrf.mxu0
  %v801 = vadd.f32 %v154, %v800
  %v802 = vpop.f32.mrf.mxu0
  %v803 = vpop.f32.mrf.mxu0
  %v804 = vadd.f32 %v154, %v803
  %v805 = vpop.f32.mrf.mxu0
  %806 = vmatprep.mubr.bf16.mxu0 %v426
  %807 = vmatmul.mubr.bf16.gmra.mxu0 %v425
  %v808 = vpop.f32.mrf.mxu0
  %v809 = vadd.f32 %v154, %v808
  %v810 = vpop.f32.mrf.mxu0
  %v811 = vpop.f32.mrf.mxu0
  %v812 = vadd.f32 %v154, %v811
  %v813 = vpop.f32.mrf.mxu0
  %814 = vmatprep.mubr.bf16.mxu0 %v429
  %815 = vmatmul.mubr.bf16.gmra.mxu0 %v428
  %v816 = vpop.f32.mrf.mxu0
  %v817 = vadd.f32 %v154, %v816
  %v818 = vpop.f32.mrf.mxu0
  %v819 = vpop.f32.mrf.mxu0
  %v820 = vadd.f32 %v154, %v819
  %v821 = vpop.f32.mrf.mxu0
  %822 = vmatprep.mubr.bf16.mxu0 %v432
  %823 = vmatmul.mubr.bf16.gmra.mxu0 %v431
  %v824 = vpop.f32.mrf.mxu0
  %v825 = vadd.f32 %v154, %v824
  %v826 = vpop.f32.mrf.mxu0
  %v827 = vpop.f32.mrf.mxu0
  %v828 = vadd.f32 %v154, %v827
  %v829 = vpop.f32.mrf.mxu0
  %830 = vmatprep.mubr.bf16.mxu0 %v435
  %831 = vmatmul.mubr.bf16.gmra.mxu0 %v434
  %v832 = vpop.f32.mrf.mxu0
  %v833 = vadd.f32 %v154, %v832
  %v834 = vpop.f32.mrf.mxu0
  %v835 = vpop.f32.mrf.mxu0
  %v836 = vadd.f32 %v154, %v835
  %v837 = vpop.f32.mrf.mxu0
  %838 = vmatprep.mubr.bf16.mxu0 %v438
  %839 = vmatmul.mubr.bf16.gmra.mxu0 %v437
  %v840 = vpop.f32.mrf.mxu0
  %v841 = vadd.f32 %v154, %v840
  %v842 = vpop.f32.mrf.mxu0
  %v843 = vpop.f32.mrf.mxu0
  %v844 = vadd.f32 %v154, %v843
  %v845 = vpop.f32.mrf.mxu0
  %846 = vmatprep.mubr.bf16.mxu0 %v441
  %847 = vmatmul.mubr.bf16.gmra.mxu0 %v440
  %v848 = vpop.f32.mrf.mxu0
  %v849 = vadd.f32 %v154, %v848
  %v850 = vpop.f32.mrf.mxu0
  %v851 = vpop.f32.mrf.mxu0
  %v852 = vadd.f32 %v154, %v851
  %v853 = vpop.f32.mrf.mxu0
  %854 = vmatprep.mubr.bf16.mxu0 %v444
  %855 = vmatmul.mubr.bf16.gmra.mxu0 %v443
  %v856 = vpop.f32.mrf.mxu0
  %v857 = vadd.f32 %v154, %v856
  %v858 = vpop.f32.mrf.mxu0
  %v859 = vpop.f32.mrf.mxu0
  %v860 = vadd.f32 %v154, %v859
  %v861 = vpop.f32.mrf.mxu0
  %862 = vmatprep.mubr.bf16.mxu0 %v447
  %863 = vmatmul.mubr.bf16.gmra.mxu0 %v446
  %v864 = vpop.f32.mrf.mxu0
  %v865 = vadd.f32 %v154, %v864
  %v866 = vpop.f32.mrf.mxu0
  %v867 = vpop.f32.mrf.mxu0
  %v868 = vadd.f32 %v154, %v867
  %v869 = vpop.f32.mrf.mxu0
  %870 = vmatprep.mubr.bf16.mxu0 %v450
  %871 = vmatmul.mubr.bf16.gmra.mxu0 %v449
  %v872 = vpop.f32.mrf.mxu0
  %v873 = vadd.f32 %v154, %v872
  %v874 = vpop.f32.mrf.mxu0
  %v875 = vpop.f32.mrf.mxu0
  %v876 = vadd.f32 %v154, %v875
  %v877 = vpop.f32.mrf.mxu0
  %878 = vmatprep.mubr.bf16.mxu0 %v453
  %879 = vmatmul.mubr.bf16.gmra.mxu0 %v452
  %v880 = vpop.f32.mrf.mxu0
  %v881 = vadd.f32 %v154, %v880
  %v882 = vpop.f32.mrf.mxu0
  %v883 = vpop.f32.mrf.mxu0
  %v884 = vadd.f32 %v154, %v883
  %v885 = vpop.f32.mrf.mxu0
  %886 = vmatprep.mubr.bf16.mxu0 %v456
  %887 = vmatmul.mubr.bf16.gmra.mxu0 %v455
  %v888 = vpop.f32.mrf.mxu0
  %v889 = vadd.f32 %v154, %v888
  %v890 = vpop.f32.mrf.mxu0
  %v891 = vpop.f32.mrf.mxu0
  %v892 = vadd.f32 %v154, %v891
  %v893 = vpop.f32.mrf.mxu0
  %894 = vmatprep.mubr.bf16.mxu0 %v459
  %895 = vmatmul.mubr.bf16.gmra.mxu0 %v458
  %v896 = vpop.f32.mrf.mxu0
  %v897 = vadd.f32 %v154, %v896
  %v898 = vpop.f32.mrf.mxu0
  %v899 = vpop.f32.mrf.mxu0
  %v900 = vadd.f32 %v154, %v899
  %v901 = vpop.f32.mrf.mxu0
  %902 = vmatprep.mubr.bf16.mxu0 %v462
  %903 = vmatmul.mubr.bf16.gmra.mxu0 %v461
  %v904 = vpop.f32.mrf.mxu0
  %v905 = vadd.f32 %v154, %v904
  %v906 = vpop.f32.mrf.mxu0
  %v907 = vpop.f32.mrf.mxu0
  %v908 = vadd.f32 %v154, %v907
  %v909 = vpop.f32.mrf.mxu0
  %910 = vmatprep.mubr.bf16.mxu0 %v465
  %911 = vmatmul.mubr.bf16.gmra.mxu0 %v464
  %v912 = vpop.f32.mrf.mxu0
  %v913 = vadd.f32 %v154, %v912
  %v914 = vpop.f32.mrf.mxu0
  %v915 = vpop.f32.mrf.mxu0
  %v916 = vadd.f32 %v154, %v915
  %v917 = vpop.f32.mrf.mxu0
  %918 = vmatprep.mubr.bf16.mxu0 %v468
  %919 = vmatmul.mubr.bf16.gmra.mxu0 %v467
  %v920 = vpop.f32.mrf.mxu0
  %v921 = vadd.f32 %v154, %v920
  %v922 = vpop.f32.mrf.mxu0
  %v923 = vpop.f32.mrf.mxu0
  %v924 = vadd.f32 %v154, %v923
  %v925 = vpop.f32.mrf.mxu0
  %926 = vmatprep.mubr.bf16.mxu0 %v471
  %927 = vmatmul.mubr.bf16.gmra.mxu0 %v470
  %v928 = vpop.f32.mrf.mxu0
  %v929 = vadd.f32 %v154, %v928
  %v930 = vpop.f32.mrf.mxu0
  %v931 = vpop.f32.mrf.mxu0
  %v932 = vadd.f32 %v154, %v931
  %v933 = vpop.f32.mrf.mxu0
  %934 = vmatprep.mubr.bf16.mxu0 %v474
  %935 = vmatmul.mubr.bf16.gmra.mxu0 %v473
  %v936 = vpop.f32.mrf.mxu0
  %v937 = vadd.f32 %v154, %v936
  %v938 = vpop.f32.mrf.mxu0
  %v939 = vpop.f32.mrf.mxu0
  %v940 = vpop.f32.mrf.mxu0
  %941 = vdwg.mxu0
  %942 = vmatprep.subr.bf16.mxu0 0
  %943 = vmatpush1.bf16.msra.mxu0 0
  %944 = vmatprep.subr.bf16.mxu0 0
  %945 = vmatpush1.bf16.msra.mxu0 0
  %946 = vmatprep.subr.bf16.mxu0 0
  %947 = vmatpush1.bf16.msra.mxu0 0
  %948 = vmatprep.subr.bf16.mxu0 0
  %949 = vmatpush1.bf16.msra.mxu0 0
  %950 = vmatprep.subr.bf16.mxu0 0
  %951 = vmatpush1.bf16.msra.mxu0 0
  %952 = vmatprep.subr.bf16.mxu0 0
  %953 = vmatpush1.bf16.msra.mxu0 0
  %954 = vmatprep.subr.bf16.mxu0 0
  %955 = vmatpush1.bf16.msra.mxu0 %v615
  %956 = vmatprep.subr.bf16.mxu0 0
  %957 = vmatpush1.bf16.msra.mxu0 %v614
  %958 = vmatprep.subr.bf16.mxu0 0
  %959 = vmatpush2.bf16.msra.mxu0 0
  %960 = vmatprep.subr.bf16.mxu0 0
  %961 = vmatpush2.bf16.msra.mxu0 0
  %962 = vmatprep.subr.bf16.mxu0 0
  %963 = vmatpush2.bf16.msra.mxu0 0
  %964 = vmatprep.subr.bf16.mxu0 0
  %965 = vmatpush2.bf16.msra.mxu0 0
  %966 = vmatprep.subr.bf16.mxu0 0
  %967 = vmatpush2.bf16.msra.mxu0 0
  %968 = vmatprep.subr.bf16.mxu0 0
  %969 = vmatpush2.bf16.msra.mxu0 0
  %970 = vmatprep.subr.bf16.mxu0 0
  %971 = vmatpush2.bf16.msra.mxu0 0
  %972 = vmatprep.subr.bf16.mxu0 0
  %973 = vmatpush2.bf16.msra.mxu0 0
  %974 = vmatprep.mubr.bf16.mxu0 0
  %975 = vmatmul.mubr.bf16.gmra.mxu0 %v636
  %v976 = vpop.f32.mrf.mxu0
  %v977 = vadd.f32 %v745, %v976
  %v978 = vpop.f32.mrf.mxu0
  %v979 = vpop.f32.mrf.mxu0
  %v980 = vadd.f32 %v748, %v979
  %v981 = vpop.f32.mrf.mxu0
  %982 = vmatprep.mubr.bf16.mxu0 0
  %983 = vmatmul.mubr.bf16.gmra.mxu0 %v639
  %v984 = vpop.f32.mrf.mxu0
  %v985 = vadd.f32 %v753, %v984
  %v986 = vpop.f32.mrf.mxu0
  %v987 = vpop.f32.mrf.mxu0
  %v988 = vadd.f32 %v756, %v987
  %v989 = vpop.f32.mrf.mxu0
  %990 = vmatprep.mubr.bf16.mxu0 0
  %991 = vmatmul.mubr.bf16.gmra.mxu0 %v642
  %v992 = vpop.f32.mrf.mxu0
  %v993 = vadd.f32 %v761, %v992
  %v994 = vpop.f32.mrf.mxu0
  %v995 = vpop.f32.mrf.mxu0
  %v996 = vadd.f32 %v764, %v995
  %v997 = vpop.f32.mrf.mxu0
  %998 = vmatprep.mubr.bf16.mxu0 0
  %999 = vmatmul.mubr.bf16.gmra.mxu0 %v645
  %v1000 = vpop.f32.mrf.mxu0
  %v1001 = vadd.f32 %v769, %v1000
  %v1002 = vpop.f32.mrf.mxu0
  %v1003 = vpop.f32.mrf.mxu0
  %v1004 = vadd.f32 %v772, %v1003
  %v1005 = vpop.f32.mrf.mxu0
  %1006 = vmatprep.mubr.bf16.mxu0 0
  %1007 = vmatmul.mubr.bf16.gmra.mxu0 %v648
  %v1008 = vpop.f32.mrf.mxu0
  %v1009 = vadd.f32 %v777, %v1008
  %v1010 = vpop.f32.mrf.mxu0
  %v1011 = vpop.f32.mrf.mxu0
  %v1012 = vadd.f32 %v780, %v1011
  %v1013 = vpop.f32.mrf.mxu0
  %1014 = vmatprep.mubr.bf16.mxu0 0
  %1015 = vmatmul.mubr.bf16.gmra.mxu0 %v651
  %v1016 = vpop.f32.mrf.mxu0
  %v1017 = vadd.f32 %v785, %v1016
  %v1018 = vpop.f32.mrf.mxu0
  %v1019 = vpop.f32.mrf.mxu0
  %v1020 = vadd.f32 %v788, %v1019
  %v1021 = vpop.f32.mrf.mxu0
  %1022 = vmatprep.mubr.bf16.mxu0 0
  %1023 = vmatmul.mubr.bf16.gmra.mxu0 %v654
  %v1024 = vpop.f32.mrf.mxu0
  %v1025 = vadd.f32 %v793, %v1024
  %v1026 = vpop.f32.mrf.mxu0
  %v1027 = vpop.f32.mrf.mxu0
  %v1028 = vadd.f32 %v796, %v1027
  %v1029 = vpop.f32.mrf.mxu0
  %1030 = vmatprep.mubr.bf16.mxu0 0
  %1031 = vmatmul.mubr.bf16.gmra.mxu0 %v657
  %v1032 = vpop.f32.mrf.mxu0
  %v1033 = vadd.f32 %v801, %v1032
  %v1034 = vpop.f32.mrf.mxu0
  %v1035 = vpop.f32.mrf.mxu0
  %v1036 = vadd.f32 %v804, %v1035
  %v1037 = vpop.f32.mrf.mxu0
  %1038 = vmatprep.mubr.bf16.mxu0 0
  %1039 = vmatmul.mubr.bf16.gmra.mxu0 %v660
  %v1040 = vpop.f32.mrf.mxu0
  %v1041 = vadd.f32 %v809, %v1040
  %v1042 = vpop.f32.mrf.mxu0
  %v1043 = vpop.f32.mrf.mxu0
  %v1044 = vadd.f32 %v812, %v1043
  %v1045 = vpop.f32.mrf.mxu0
  %1046 = vmatprep.mubr.bf16.mxu0 0
  %1047 = vmatmul.mubr.bf16.gmra.mxu0 %v663
  %v1048 = vpop.f32.mrf.mxu0
  %v1049 = vadd.f32 %v817, %v1048
  %v1050 = vpop.f32.mrf.mxu0
  %v1051 = vpop.f32.mrf.mxu0
  %v1052 = vadd.f32 %v820, %v1051
  %v1053 = vpop.f32.mrf.mxu0
  %1054 = vmatprep.mubr.bf16.mxu0 0
  %1055 = vmatmul.mubr.bf16.gmra.mxu0 %v666
  %v1056 = vpop.f32.mrf.mxu0
  %v1057 = vadd.f32 %v825, %v1056
  %v1058 = vpop.f32.mrf.mxu0
  %v1059 = vpop.f32.mrf.mxu0
  %v1060 = vadd.f32 %v828, %v1059
  %v1061 = vpop.f32.mrf.mxu0
  %1062 = vmatprep.mubr.bf16.mxu0 0
  %1063 = vmatmul.mubr.bf16.gmra.mxu0 %v669
  %v1064 = vpop.f32.mrf.mxu0
  %v1065 = vadd.f32 %v833, %v1064
  %v1066 = vpop.f32.mrf.mxu0
  %v1067 = vpop.f32.mrf.mxu0
  %v1068 = vadd.f32 %v836, %v1067
  %v1069 = vpop.f32.mrf.mxu0
  %1070 = vmatprep.mubr.bf16.mxu0 0
  %1071 = vmatmul.mubr.bf16.gmra.mxu0 %v672
  %v1072 = vpop.f32.mrf.mxu0
  %v1073 = vadd.f32 %v841, %v1072
  %v1074 = vpop.f32.mrf.mxu0
  %v1075 = vpop.f32.mrf.mxu0
  %v1076 = vadd.f32 %v844, %v1075
  %v1077 = vpop.f32.mrf.mxu0
  %1078 = vmatprep.mubr.bf16.mxu0 0
  %1079 = vmatmul.mubr.bf16.gmra.mxu0 %v675
  %v1080 = vpop.f32.mrf.mxu0
  %v1081 = vadd.f32 %v849, %v1080
  %v1082 = vpop.f32.mrf.mxu0
  %v1083 = vpop.f32.mrf.mxu0
  %v1084 = vadd.f32 %v852, %v1083
  %v1085 = vpop.f32.mrf.mxu0
  %1086 = vmatprep.mubr.bf16.mxu0 0
  %1087 = vmatmul.mubr.bf16.gmra.mxu0 %v678
  %v1088 = vpop.f32.mrf.mxu0
  %v1089 = vadd.f32 %v857, %v1088
  %v1090 = vpop.f32.mrf.mxu0
  %v1091 = vpop.f32.mrf.mxu0
  %v1092 = vadd.f32 %v860, %v1091
  %v1093 = vpop.f32.mrf.mxu0
  %1094 = vmatprep.mubr.bf16.mxu0 0
  %1095 = vmatmul.mubr.bf16.gmra.mxu0 %v681
  %v1096 = vpop.f32.mrf.mxu0
  %v1097 = vadd.f32 %v865, %v1096
  %v1098 = vpop.f32.mrf.mxu0
  %v1099 = vpop.f32.mrf.mxu0
  %v1100 = vadd.f32 %v868, %v1099
  %v1101 = vpop.f32.mrf.mxu0
  %1102 = vmatprep.mubr.bf16.mxu0 0
  %1103 = vmatmul.mubr.bf16.gmra.mxu0 %v684
  %v1104 = vpop.f32.mrf.mxu0
  %v1105 = vadd.f32 %v873, %v1104
  %v1106 = vpop.f32.mrf.mxu0
  %v1107 = vpop.f32.mrf.mxu0
  %v1108 = vadd.f32 %v876, %v1107
  %v1109 = vpop.f32.mrf.mxu0
  %1110 = vmatprep.mubr.bf16.mxu0 0
  %1111 = vmatmul.mubr.bf16.gmra.mxu0 %v687
  %v1112 = vpop.f32.mrf.mxu0
  %v1113 = vadd.f32 %v881, %v1112
  %v1114 = vpop.f32.mrf.mxu0
  %v1115 = vpop.f32.mrf.mxu0
  %v1116 = vadd.f32 %v884, %v1115
  %v1117 = vpop.f32.mrf.mxu0
  %1118 = vmatprep.mubr.bf16.mxu0 0
  %1119 = vmatmul.mubr.bf16.gmra.mxu0 %v690
  %v1120 = vpop.f32.mrf.mxu0
  %v1121 = vadd.f32 %v889, %v1120
  %v1122 = vpop.f32.mrf.mxu0
  %v1123 = vpop.f32.mrf.mxu0
  %v1124 = vadd.f32 %v892, %v1123
  %v1125 = vpop.f32.mrf.mxu0
  %1126 = vmatprep.mubr.bf16.mxu0 0
  %1127 = vmatmul.mubr.bf16.gmra.mxu0 %v693
  %v1128 = vpop.f32.mrf.mxu0
  %v1129 = vadd.f32 %v897, %v1128
  %v1130 = vpop.f32.mrf.mxu0
  %v1131 = vpop.f32.mrf.mxu0
  %v1132 = vadd.f32 %v900, %v1131
  %v1133 = vpop.f32.mrf.mxu0
  %1134 = vmatprep.mubr.bf16.mxu0 0
  %1135 = vmatmul.mubr.bf16.gmra.mxu0 %v696
  %v1136 = vpop.f32.mrf.mxu0
  %v1137 = vadd.f32 %v905, %v1136
  %v1138 = vpop.f32.mrf.mxu0
  %v1139 = vpop.f32.mrf.mxu0
  %v1140 = vadd.f32 %v908, %v1139
  %v1141 = vpop.f32.mrf.mxu0
  %1142 = vmatprep.mubr.bf16.mxu0 0
  %1143 = vmatmul.mubr.bf16.gmra.mxu0 %v699
  %v1144 = vpop.f32.mrf.mxu0
  %v1145 = vadd.f32 %v913, %v1144
  %v1146 = vpop.f32.mrf.mxu0
  %v1147 = vpop.f32.mrf.mxu0
  %v1148 = vadd.f32 %v916, %v1147
  %v1149 = vpop.f32.mrf.mxu0
  %1150 = vmatprep.mubr.bf16.mxu0 0
  %1151 = vmatmul.mubr.bf16.gmra.mxu0 %v702
  %v1152 = vpop.f32.mrf.mxu0
  %v1153 = vadd.f32 %v921, %v1152
  %v1154 = vpop.f32.mrf.mxu0
  %v1155 = vpop.f32.mrf.mxu0
  %v1156 = vadd.f32 %v924, %v1155
  %v1157 = vpop.f32.mrf.mxu0
  %1158 = vmatprep.mubr.bf16.mxu0 0
  %1159 = vmatmul.mubr.bf16.gmra.mxu0 %v705
  %v1160 = vpop.f32.mrf.mxu0
  %v1161 = vadd.f32 %v929, %v1160
  %v1162 = vpop.f32.mrf.mxu0
  %v1163 = vpop.f32.mrf.mxu0
  %v1164 = vadd.f32 %v932, %v1163
  %v1165 = vpop.f32.mrf.mxu0
  %1166 = vmatprep.mubr.bf16.mxu0 0
  %1167 = vmatmul.mubr.bf16.gmra.mxu0 %v708
  %v1168 = vpop.f32.mrf.mxu0
  %v1169 = vadd.f32 %v937, %v1168
  %v1170 = vpop.f32.mrf.mxu0
  %v1171 = vpop.f32.mrf.mxu0
  %v1172 = vpop.f32.mrf.mxu0
  %1173 = vdwg.mxu0
  %v1174 = vmax.f32 %v977, 0.0
  %v1175 = vmax.f32 %v980, 0.0
  %v1176 = vmax.f32 %v985, 0.0
  %v1177 = vmax.f32 %v988, 0.0
  %v1178 = vmax.f32 %v993, 0.0
  %v1179 = vmax.f32 %v996, 0.0
  %v1180 = vmax.f32 %v1001, 0.0
  %v1181 = vmax.f32 %v1004, 0.0
  %v1182 = vmax.f32 %v1009, 0.0
  %v1183 = vmax.f32 %v1012, 0.0
  %v1184 = vmax.f32 %v1017, 0.0
  %v1185 = vmax.f32 %v1020, 0.0
  %v1186 = vmax.f32 %v1025, 0.0
  %v1187 = vmax.f32 %v1028, 0.0
  %v1188 = vmax.f32 %v1033, 0.0
  %v1189 = vmax.f32 %v1036, 0.0
  %v1190 = vmax.f32 %v1041, 0.0
  %v1191 = vmax.f32 %v1044, 0.0
  %v1192 = vmax.f32 %v1049, 0.0
  %v1193 = vmax.f32 %v1052, 0.0
  %v1194 = vmax.f32 %v1057, 0.0
  %v1195 = vmax.f32 %v1060, 0.0
  %v1196 = vmax.f32 %v1065, 0.0
  %v1197 = vmax.f32 %v1068, 0.0
  %v1198 = vmax.f32 %v1073, 0.0
  %v1199 = vmax.f32 %v1076, 0.0
  %v1200 = vmax.f32 %v1081, 0.0
  %v1201 = vmax.f32 %v1084, 0.0
  %v1202 = vmax.f32 %v1089, 0.0
  %v1203 = vmax.f32 %v1092, 0.0
  %v1204 = vmax.f32 %v1097, 0.0
  %v1205 = vmax.f32 %v1100, 0.0
  %v1206 = vmax.f32 %v1105, 0.0
  %v1207 = vmax.f32 %v1108, 0.0
  %v1208 = vmax.f32 %v1113, 0.0
  %v1209 = vmax.f32 %v1116, 0.0
  %v1210 = vmax.f32 %v1121, 0.0
  %v1211 = vmax.f32 %v1124, 0.0
  %v1212 = vmax.f32 %v1129, 0.0
  %v1213 = vmax.f32 %v1132, 0.0
  %v1214 = vmax.f32 %v1137, 0.0
  %v1215 = vmax.f32 %v1140, 0.0
  %v1216 = vmax.f32 %v1145, 0.0
  %v1217 = vmax.f32 %v1148, 0.0
  %v1218 = vmax.f32 %v1153, 0.0
  %v1219 = vmax.f32 %v1156, 0.0
  %v1220 = vmax.f32 %v1161, 0.0
  %v1221 = vmax.f32 %v1164, 0.0
  %v1222 = vmax.f32 %v1169, 0.0
  %v1223 = vpack.c.bf16 %v1175, %v1174
  %v1224 = vpack.c.bf16 %v1177, %v1176
  %v1225 = vpack.c.bf16 %v1179, %v1178
  %v1226 = vpack.c.bf16 %v1181, %v1180
  %v1227 = vpack.c.bf16 %v1183, %v1182
  %v1228 = vpack.c.bf16 %v1185, %v1184
  %v1229 = vpack.c.bf16 %v1187, %v1186
  %v1230 = vpack.c.bf16 %v1189, %v1188
  %v1231 = vpack.c.bf16 %v1191, %v1190
  %v1232 = vpack.c.bf16 %v1193, %v1192
  %v1233 = vpack.c.bf16 %v1195, %v1194
  %v1234 = vpack.c.bf16 %v1197, %v1196
  %v1235 = vpack.c.bf16 %v1199, %v1198
  %v1236 = vpack.c.bf16 %v1201, %v1200
  %v1237 = vpack.c.bf16 %v1203, %v1202
  %v1238 = vpack.c.bf16 %v1205, %v1204
  %v1239 = vpack.c.bf16 %v1207, %v1206
  %v1240 = vpack.c.bf16 %v1209, %v1208
  %v1241 = vpack.c.bf16 %v1211, %v1210
  %v1242 = vpack.c.bf16 %v1213, %v1212
  %v1243 = vpack.c.bf16 %v1215, %v1214
  %v1244 = vpack.c.bf16 %v1217, %v1216
  %v1245 = vpack.c.bf16 %v1219, %v1218
  %v1246 = vpack.c.bf16 %v1221, %v1220
  %v1247 = vpack.c.bf16 %v1222, %v1222
  %v1273 = vunpack.c.l.b16 %v1223
  %v1274 = vunpack.c.h.b16 %v1223
  %v1275 = vunpack.c.l.b16 %v1224
  %v1276 = vunpack.c.h.b16 %v1224
  %v1277 = vunpack.c.l.b16 %v1225
  %v1278 = vunpack.c.h.b16 %v1225
  %v1279 = vunpack.c.l.b16 %v1226
  %v1280 = vunpack.c.h.b16 %v1226
  %v1281 = vunpack.c.l.b16 %v1227
  %v1282 = vunpack.c.h.b16 %v1227
  %v1283 = vunpack.c.l.b16 %v1228
  %v1284 = vunpack.c.h.b16 %v1228
  %v1285 = vunpack.c.l.b16 %v1229
  %v1286 = vunpack.c.h.b16 %v1229
  %v1287 = vunpack.c.l.b16 %v1230
  %v1288 = vunpack.c.h.b16 %v1230
  %v1289 = vunpack.c.l.b16 %v1231
  %v1290 = vunpack.c.h.b16 %v1231
  %v1291 = vunpack.c.l.b16 %v1232
  %v1292 = vunpack.c.h.b16 %v1232
  %v1293 = vunpack.c.l.b16 %v1233
  %v1294 = vunpack.c.h.b16 %v1233
  %v1295 = vunpack.c.l.b16 %v1234
  %v1296 = vunpack.c.h.b16 %v1234
  %v1297 = vunpack.c.l.b16 %v1235
  %v1298 = vunpack.c.h.b16 %v1235
  %v1299 = vunpack.c.l.b16 %v1236
  %v1300 = vunpack.c.h.b16 %v1236
  %v1301 = vunpack.c.l.b16 %v1237
  %v1302 = vunpack.c.h.b16 %v1237
  %v1303 = vunpack.c.l.b16 %v1238
  %v1304 = vunpack.c.h.b16 %v1238
  %v1305 = vunpack.c.l.b16 %v1239
  %v1306 = vunpack.c.h.b16 %v1239
  %v1307 = vunpack.c.l.b16 %v1240
  %v1308 = vunpack.c.h.b16 %v1240
  %v1309 = vunpack.c.l.b16 %v1241
  %v1310 = vunpack.c.h.b16 %v1241
  %v1311 = vunpack.c.l.b16 %v1242
  %v1312 = vunpack.c.h.b16 %v1242
  %v1313 = vunpack.c.l.b16 %v1243
  %v1314 = vunpack.c.h.b16 %v1243
  %v1315 = vunpack.c.l.b16 %v1244
  %v1316 = vunpack.c.h.b16 %v1244
  %v1317 = vunpack.c.l.b16 %v1245
  %v1318 = vunpack.c.h.b16 %v1245
  %v1319 = vunpack.c.l.b16 %v1246
  %v1320 = vunpack.c.h.b16 %v1246
  %v1321 = vunpack.c.l.b16 %v1247
  %v1322 = vpack.c.b16 %v1273, %v1273
  %v1323 = vpack.c.b16 %v1274, %v1274
  %v1324 = vpack.c.b16 %v1275, %v1275
  %v1325 = vpack.c.b16 %v1276, %v1276
  %v1326 = vpack.c.b16 %v1277, %v1277
  %v1327 = vpack.c.b16 %v1278, %v1278
  %v1328 = vpack.c.b16 %v1279, %v1279
  %v1329 = vpack.c.b16 %v1280, %v1280
  %v1330 = vpack.c.b16 %v1281, %v1281
  %v1331 = vpack.c.b16 %v1282, %v1282
  %v1332 = vpack.c.b16 %v1283, %v1283
  %v1333 = vpack.c.b16 %v1284, %v1284
  %v1334 = vpack.c.b16 %v1285, %v1285
  %v1335 = vpack.c.b16 %v1286, %v1286
  %v1336 = vpack.c.b16 %v1287, %v1287
  %v1337 = vpack.c.b16 %v1288, %v1288
  %v1338 = vpack.c.b16 %v1289, %v1289
  %v1339 = vpack.c.b16 %v1290, %v1290
  %v1340 = vpack.c.b16 %v1291, %v1291
  %v1341 = vpack.c.b16 %v1292, %v1292
  %v1342 = vpack.c.b16 %v1293, %v1293
  %v1343 = vpack.c.b16 %v1294, %v1294
  %v1344 = vpack.c.b16 %v1295, %v1295
  %v1345 = vpack.c.b16 %v1296, %v1296
  %v1346 = vpack.c.b16 %v1297, %v1297
  %v1347 = vpack.c.b16 %v1298, %v1298
  %v1348 = vpack.c.b16 %v1299, %v1299
  %v1349 = vpack.c.b16 %v1300, %v1300
  %v1350 = vpack.c.b16 %v1301, %v1301
  %v1351 = vpack.c.b16 %v1302, %v1302
  %v1352 = vpack.c.b16 %v1303, %v1303
  %v1353 = vpack.c.b16 %v1304, %v1304
  %v1354 = vpack.c.b16 %v1305, %v1305
  %v1355 = vpack.c.b16 %v1306, %v1306
  %v1356 = vpack.c.b16 %v1307, %v1307
  %v1357 = vpack.c.b16 %v1308, %v1308
  %v1358 = vpack.c.b16 %v1309, %v1309
  %v1359 = vpack.c.b16 %v1310, %v1310
  %v1360 = vpack.c.b16 %v1311, %v1311
  %v1361 = vpack.c.b16 %v1312, %v1312
  %v1362 = vpack.c.b16 %v1313, %v1313
  %v1363 = vpack.c.b16 %v1314, %v1314
  %v1364 = vpack.c.b16 %v1315, %v1315
  %v1365 = vpack.c.b16 %v1316, %v1316
  %v1366 = vpack.c.b16 %v1317, %v1317
  %v1367 = vpack.c.b16 %v1318, %v1318
  %v1368 = vpack.c.b16 %v1319, %v1319
  %v1369 = vpack.c.b16 %v1320, %v1320
  %v1370 = vpack.c.b16 %v1321, %v1321
  %vm1420 = vcmask 125952
  %1421 = vst.msk [vmem:[%s3] sm:$0xf] %vm1420, %v1322
  %1422 = vst.msk [vmem:[%s3 + $0x4] sm:$0xf] %vm1420, %v1323
  %1423 = vst.msk [vmem:[%s3 + $0x8] sm:$0xf] %vm1420, %v1324
  %1424 = vst.msk [vmem:[%s3 + $0xc] sm:$0xf] %vm1420, %v1325
  %1425 = vst.msk [vmem:[%s3 + $0x10] sm:$0xf] %vm1420, %v1326
  %1426 = vst.msk [vmem:[%s3 + $0x14] sm:$0xf] %vm1420, %v1327
  %1427 = vst.msk [vmem:[%s3 + $0x18] sm:$0xf] %vm1420, %v1328
  %1428 = vst.msk [vmem:[%s3 + $0x1c] sm:$0xf] %vm1420, %v1329
  %1429 = vst.msk [vmem:[%s3 + $0x20] sm:$0xf] %vm1420, %v1330
  %1430 = vst.msk [vmem:[%s3 + $0x24] sm:$0xf] %vm1420, %v1331
  %1431 = vst.msk [vmem:[%s3 + $0x28] sm:$0xf] %vm1420, %v1332
  %1432 = vst.msk [vmem:[%s3 + $0x2c] sm:$0xf] %vm1420, %v1333
  %1433 = vst.msk [vmem:[%s3 + $0x30] sm:$0xf] %vm1420, %v1334
  %1434 = vst.msk [vmem:[%s3 + $0x34] sm:$0xf] %vm1420, %v1335
  %1435 = vst.msk [vmem:[%s3 + $0x38] sm:$0xf] %vm1420, %v1336
  %1436 = vst.msk [vmem:[%s3 + $0x3c] sm:$0xf] %vm1420, %v1337
  %1437 = vst.msk [vmem:[%s3 + $0x40] sm:$0xf] %vm1420, %v1338
  %1438 = vst.msk [vmem:[%s3 + $0x44] sm:$0xf] %vm1420, %v1339
  %1439 = vst.msk [vmem:[%s3 + $0x48] sm:$0xf] %vm1420, %v1340
  %1440 = vst.msk [vmem:[%s3 + $0x4c] sm:$0xf] %vm1420, %v1341
  %1441 = vst.msk [vmem:[%s3 + $0x50] sm:$0xf] %vm1420, %v1342
  %1442 = vst.msk [vmem:[%s3 + $0x54] sm:$0xf] %vm1420, %v1343
  %1443 = vst.msk [vmem:[%s3 + $0x58] sm:$0xf] %vm1420, %v1344
  %1444 = vst.msk [vmem:[%s3 + $0x5c] sm:$0xf] %vm1420, %v1345
  %1445 = vst.msk [vmem:[%s3 + $0x60] sm:$0xf] %vm1420, %v1346
  %1446 = vst.msk [vmem:[%s3 + $0x64] sm:$0xf] %vm1420, %v1347
  %1447 = vst.msk [vmem:[%s3 + $0x68] sm:$0xf] %vm1420, %v1348
  %1448 = vst.msk [vmem:[%s3 + $0x6c] sm:$0xf] %vm1420, %v1349
  %1449 = vst.msk [vmem:[%s3 + $0x70] sm:$0xf] %vm1420, %v1350
  %1450 = vst.msk [vmem:[%s3 + $0x74] sm:$0xf] %vm1420, %v1351
  %1451 = vst.msk [vmem:[%s3 + $0x78] sm:$0xf] %vm1420, %v1352
  %1452 = vst.msk [vmem:[%s3 + $0x7c] sm:$0xf] %vm1420, %v1353
  %1453 = vst.msk [vmem:[%s3 + $0x80] sm:$0xf] %vm1420, %v1354
  %1454 = vst.msk [vmem:[%s3 + $0x84] sm:$0xf] %vm1420, %v1355
  %1455 = vst.msk [vmem:[%s3 + $0x88] sm:$0xf] %vm1420, %v1356
  %1456 = vst.msk [vmem:[%s3 + $0x8c] sm:$0xf] %vm1420, %v1357
  %1457 = vst.msk [vmem:[%s3 + $0x90] sm:$0xf] %vm1420, %v1358
  %1458 = vst.msk [vmem:[%s3 + $0x94] sm:$0xf] %vm1420, %v1359
  %1459 = vst.msk [vmem:[%s3 + $0x98] sm:$0xf] %vm1420, %v1360
  %1460 = vst.msk [vmem:[%s3 + $0x9c] sm:$0xf] %vm1420, %v1361
  %1461 = vst.msk [vmem:[%s3 + $0xa0] sm:$0xf] %vm1420, %v1362
  %1462 = vst.msk [vmem:[%s3 + $0xa4] sm:$0xf] %vm1420, %v1363
  %1463 = vst.msk [vmem:[%s3 + $0xa8] sm:$0xf] %vm1420, %v1364
  %1464 = vst.msk [vmem:[%s3 + $0xac] sm:$0xf] %vm1420, %v1365
  %1465 = vst.msk [vmem:[%s3 + $0xb0] sm:$0xf] %vm1420, %v1366
  %1466 = vst.msk [vmem:[%s3 + $0xb4] sm:$0xf] %vm1420, %v1367
  %1467 = vst.msk [vmem:[%s3 + $0xb8] sm:$0xf] %vm1420, %v1368
  %1468 = vst.msk [vmem:[%s3 + $0xbc] sm:$0xf] %vm1420, %v1369
  %1469 = vst.msk [vmem:[%s3 + $0xc0] sm:$0xf] %vm1420, %v1370
  // Predicated region
  $region14: #{autoencoder_forward.6} parent=0 // pred_check
    _
  $region15: #{autoencoder_forward.6} parent=0 // pred_check_branch
    %1471 = sbr.rel (0) target = $region17
  $region16: #{autoencoder_forward.6} parent=0 // pred_region
    _
  $region17: #{autoencoder_forward.6} parent=0 // pred_fallthru
    _
  // Predicated region
  $region18: #{autoencoder_forward.6} parent=0 // pred_check
    _
  $region19: #{autoencoder_forward.6} parent=0 // pred_check_branch
    %1473 = sbr.rel (0) target = $region21
  $region20: #{autoencoder_forward.6} parent=0 // pred_region
    _
  $region21: #{autoencoder_forward.6} parent=0 // pred_fallthru
    _

// kernel: autoencoder_forward.7
$region0: #{autoencoder_forward.7}
  #allocation0 [shape = 'u32[]', space=smem, size = 0x4, offset = 0x4, fixed_abs, tag = 'smem constant byte address 0x4 - core index']
  #allocation1 [shape = 'u32[144,128]{1,0:T(1,128)}', space=vmem, size = 0x12000, scoped, tag = 'internal scratch']
  #allocation2 [shape = 'f32[1,1]{1,0:T(1,128)S(1)}', space=vmem, size = 0x200, scoped, tag = 'scoped memory for autoencoder_forward.7']
  %s0 = inlined_call_operand.vmem [shape: bf16[144,1568], index: 0, kind: input, shape index: {}]
  %s1 = inlined_call_operand.vmem [shape: bf16[1,144], index: 1, kind: input, shape index: {}]
  %s2 = inlined_call_operand.<no memory space> [shape: f32[1,1], index: 2, kind: input, shape index: {}]
  %s3 = inlined_call_operand.vmem [shape: f32[1,1568], index: 3, kind: output, shape index: {}]
  %s4 = sld [smem:[#allocation0]]
  $region22: #{autoencoder_forward.7} parent=0
    _
  %s6 = ssub.s32 1, %s4
  %s7 = scalar_select 0, %s6, %s4
  %v8 = vstv %s2
  %9 = vst [vmem:[#allocation2] sm:$0x1] %v8
  // Predicated region
  $region2: #{autoencoder_forward.7} parent=0 // pred_check
    _
  $region3: #{autoencoder_forward.7} parent=0 // pred_check_branch
    %11 = sbr.rel (0) target = $region5
  $region4: #{autoencoder_forward.7} parent=0 // pred_region
    _
  $region5: #{autoencoder_forward.7} parent=0 // pred_fallthru
    _
  // Predicated region
  $region6: #{autoencoder_forward.7} parent=0 // pred_check
    _
  $region7: #{autoencoder_forward.7} parent=0 // pred_check_branch
    %13 = sbr.rel (0) target = $region9
  $region8: #{autoencoder_forward.7} parent=0 // pred_region
    _
  $region9: #{autoencoder_forward.7} parent=0 // pred_fallthru
    _
  // Predicated region
  $region10: #{autoencoder_forward.7} parent=0 // pred_check
    _
  $region11: #{autoencoder_forward.7} parent=0 // pred_check_branch
    %15 = sbr.rel (0) target = $region13
  $region12: #{autoencoder_forward.7} parent=0 // pred_region
    _
  $region13: #{autoencoder_forward.7} parent=0 // pred_fallthru
    _
  %v17 = vld [vmem:[%s1] sm:$0x3]
  %v18 = vld [vmem:[%s0] sm:$0xff]
  %v19 = vld [vmem:[%s0 + $0x8] sm:$0xff]
  %v20 = vld [vmem:[%s0 + $0x10] sm:$0xff]
  %v21 = vld [vmem:[%s0 + $0x18] sm:$0xff]
  %v22 = vld [vmem:[%s0 + $0x20] sm:$0xff]
  %v23 = vld [vmem:[%s0 + $0x28] sm:$0xff]
  %v24 = vld [vmem:[%s0 + $0x30] sm:$0xf]
  %v25 = vld [vmem:[%s0 + $0x34] sm:$0xff]
  %v26 = vld [vmem:[%s0 + $0x3c] sm:$0xff]
  %v27 = vld [vmem:[%s0 + $0x44] sm:$0xff]
  %v28 = vld [vmem:[%s0 + $0x4c] sm:$0xff]
  %v29 = vld [vmem:[%s0 + $0x54] sm:$0xff]
  %v30 = vld [vmem:[%s0 + $0x5c] sm:$0xff]
  %v31 = vld [vmem:[%s0 + $0x64] sm:$0xf]
  %v32 = vld [vmem:[%s0 + $0x68] sm:$0xff]
  %v33 = vld [vmem:[%s0 + $0x70] sm:$0xff]
  %v34 = vld [vmem:[%s0 + $0x78] sm:$0xff]
  %v35 = vld [vmem:[%s0 + $0x80] sm:$0xff]
  %v36 = vld [vmem:[%s0 + $0x88] sm:$0xff]
  %v37 = vld [vmem:[%s0 + $0x90] sm:$0xff]
  %v38 = vld [vmem:[%s0 + $0x98] sm:$0xf]
  %v39 = vld [vmem:[%s0 + $0x9c] sm:$0xff]
  %v40 = vld [vmem:[%s0 + $0xa4] sm:$0xff]
  %v41 = vld [vmem:[%s0 + $0xac] sm:$0xff]
  %v42 = vld [vmem:[%s0 + $0xb4] sm:$0xff]
  %v43 = vld [vmem:[%s0 + $0xbc] sm:$0xff]
  %v44 = vld [vmem:[%s0 + $0xc4] sm:$0xff]
  %v45 = vld [vmem:[%s0 + $0xcc] sm:$0xf]
  %v46 = vld [vmem:[%s0 + $0xd0] sm:$0xff]
  %v47 = vld [vmem:[%s0 + $0xd8] sm:$0xff]
  %v48 = vld [vmem:[%s0 + $0xe0] sm:$0xff]
  %v49 = vld [vmem:[%s0 + $0xe8] sm:$0xff]
  %v50 = vld [vmem:[%s0 + $0xf0] sm:$0xff]
  %v51 = vld [vmem:[%s0 + $0xf8] sm:$0xff]
  %v52 = vld [vmem:[%s0 + $0x100] sm:$0xf]
  %v53 = vld [vmem:[%s0 + $0x104] sm:$0xff]
  %v54 = vld [vmem:[%s0 + $0x10c] sm:$0xff]
  %v55 = vld [vmem:[%s0 + $0x114] sm:$0xff]
  %v56 = vld [vmem:[%s0 + $0x11c] sm:$0xff]
  %v57 = vld [vmem:[%s0 + $0x124] sm:$0xff]
  %v58 = vld [vmem:[%s0 + $0x12c] sm:$0xff]
  %v59 = vld [vmem:[%s0 + $0x134] sm:$0xf]
  %v60 = vld [vmem:[%s0 + $0x138] sm:$0xff]
  %v61 = vld [vmem:[%s0 + $0x140] sm:$0xff]
  %v62 = vld [vmem:[%s0 + $0x148] sm:$0xff]
  %v63 = vld [vmem:[%s0 + $0x150] sm:$0xff]
  %v64 = vld [vmem:[%s0 + $0x158] sm:$0xff]
  %v65 = vld [vmem:[%s0 + $0x160] sm:$0xff]
  %v66 = vld [vmem:[%s0 + $0x168] sm:$0xf]
  %v67 = vld [vmem:[%s0 + $0x16c] sm:$0xff]
  %v68 = vld [vmem:[%s0 + $0x174] sm:$0xff]
  %v69 = vld [vmem:[%s0 + $0x17c] sm:$0xff]
  %v70 = vld [vmem:[%s0 + $0x184] sm:$0xff]
  %v71 = vld [vmem:[%s0 + $0x18c] sm:$0xff]
  %v72 = vld [vmem:[%s0 + $0x194] sm:$0xff]
  %v73 = vld [vmem:[%s0 + $0x19c] sm:$0xf]
  %v74 = vld [vmem:[%s0 + $0x1a0] sm:$0xff]
  %v75 = vld [vmem:[%s0 + $0x1a8] sm:$0xff]
  %v76 = vld [vmem:[%s0 + $0x1b0] sm:$0xff]
  %v77 = vld [vmem:[%s0 + $0x1b8] sm:$0xff]
  %v78 = vld [vmem:[%s0 + $0x1c0] sm:$0xff]
  %v79 = vld [vmem:[%s0 + $0x1c8] sm:$0xff]
  %v80 = vld [vmem:[%s0 + $0x1d0] sm:$0xf]
  %v81 = vld [vmem:[%s0 + $0x1d4] sm:$0xff]
  %v82 = vld [vmem:[%s0 + $0x1dc] sm:$0xff]
  %v83 = vld [vmem:[%s0 + $0x1e4] sm:$0xff]
  %v84 = vld [vmem:[%s0 + $0x1ec] sm:$0xff]
  %v85 = vld [vmem:[%s0 + $0x1f4] sm:$0xff]
  %v86 = vld [vmem:[%s0 + $0x1fc] sm:$0xff]
  %v87 = vld [vmem:[%s0 + $0x204] sm:$0xf]
  %v88 = vld [vmem:[%s0 + $0x208] sm:$0xff]
  %v89 = vld [vmem:[%s0 + $0x210] sm:$0xff]
  %v90 = vld [vmem:[%s0 + $0x218] sm:$0xff]
  %v91 = vld [vmem:[%s0 + $0x220] sm:$0xff]
  %v92 = vld [vmem:[%s0 + $0x228] sm:$0xff]
  %v93 = vld [vmem:[%s0 + $0x230] sm:$0xff]
  %v94 = vld [vmem:[%s0 + $0x238] sm:$0xf]
  %v95 = vld [vmem:[%s0 + $0x23c] sm:$0xff]
  %v96 = vld [vmem:[%s0 + $0x244] sm:$0xff]
  %v97 = vld [vmem:[%s0 + $0x24c] sm:$0xff]
  %v98 = vld [vmem:[%s0 + $0x254] sm:$0xff]
  %v99 = vld [vmem:[%s0 + $0x25c] sm:$0xff]
  %v100 = vld [vmem:[%s0 + $0x264] sm:$0xff]
  %v101 = vld [vmem:[%s0 + $0x26c] sm:$0xf]
  %v102 = vld [vmem:[%s0 + $0x270] sm:$0xff]
  %v103 = vld [vmem:[%s0 + $0x278] sm:$0xff]
  %v104 = vld [vmem:[%s0 + $0x280] sm:$0xff]
  %v105 = vld [vmem:[%s0 + $0x288] sm:$0xff]
  %v106 = vld [vmem:[%s0 + $0x290] sm:$0xff]
  %v107 = vld [vmem:[%s0 + $0x298] sm:$0xff]
  %v108 = vld [vmem:[%s0 + $0x2a0] sm:$0xf]
  %v109 = vld [vmem:[%s0 + $0x2a4] sm:$0xff]
  %v110 = vld [vmem:[%s0 + $0x2ac] sm:$0xff]
  %v111 = vld [vmem:[%s0 + $0x2b4] sm:$0xff]
  %v112 = vld [vmem:[%s0 + $0x2bc] sm:$0xff]
  %v113 = vld [vmem:[%s0 + $0x2c4] sm:$0xff]
  %v114 = vld [vmem:[%s0 + $0x2cc] sm:$0xff]
  %v115 = vld [vmem:[%s0 + $0x2d4] sm:$0xf]
  %v116 = vld [vmem:[%s0 + $0x2d8] sm:$0xff]
  %v117 = vld [vmem:[%s0 + $0x2e0] sm:$0xff]
  %v118 = vld [vmem:[%s0 + $0x2e8] sm:$0xff]
  %v119 = vld [vmem:[%s0 + $0x2f0] sm:$0xff]
  %v120 = vld [vmem:[%s0 + $0x2f8] sm:$0xff]
  %v121 = vld [vmem:[%s0 + $0x300] sm:$0xff]
  %v122 = vld [vmem:[%s0 + $0x308] sm:$0xf]
  %v123 = vld [vmem:[%s0 + $0x30c] sm:$0xff]
  %v124 = vld [vmem:[%s0 + $0x314] sm:$0xff]
  %v125 = vld [vmem:[%s0 + $0x31c] sm:$0xff]
  %v126 = vld [vmem:[%s0 + $0x324] sm:$0xff]
  %v127 = vld [vmem:[%s0 + $0x32c] sm:$0xff]
  %v128 = vld [vmem:[%s0 + $0x334] sm:$0xff]
  %v129 = vld [vmem:[%s0 + $0x33c] sm:$0xf]
  %v130 = vld [vmem:[%s0 + $0x340] sm:$0xff]
  %v131 = vld [vmem:[%s0 + $0x348] sm:$0xff]
  %v132 = vld [vmem:[%s0 + $0x350] sm:$0xff]
  %v133 = vld [vmem:[%s0 + $0x358] sm:$0xff]
  %v134 = vld [vmem:[%s0 + $0x360] sm:$0xff]
  %v135 = vld [vmem:[%s0 + $0x368] sm:$0xff]
  %v136 = vld [vmem:[%s0 + $0x370] sm:$0xf]
  %v137 = vld [vmem:[%s0 + $0x374] sm:$0xff]
  %v138 = vld [vmem:[%s0 + $0x37c] sm:$0xff]
  %v139 = vld [vmem:[%s0 + $0x384] sm:$0xff]
  %v140 = vld [vmem:[%s0 + $0x38c] sm:$0xff]
  %v141 = vld [vmem:[%s0 + $0x394] sm:$0xff]
  %v142 = vld [vmem:[%s0 + $0x39c] sm:$0xff]
  %v143 = vld [vmem:[%s0 + $0x3a4] sm:$0xf]
  %v144 = vld [vmem:[#allocation2] sm:$0x1]
  %146 = vset.pattern.permute.xlu0 0
  %147 = vperm.xlu0 %146, %v144
  %v148 = vpop.permute.xlu0 %147
  %v150 = vlaneseq
  %v151 = vshrl.u32 %v150, 7
  %v152 = vsub.s32 0, %v151
  %v153 = vrot.slane %v148, %v152
  %v156 = vunpack.c.l.s4 1966171168
  %v157 = vunpack.c.0.s8 %v156
  %v158 = vlaneseq
  %v159 = vshrl.u32 %v158, 7
  %v160 = vsub.s32 %v157, %v159
  %v161 = vrot.slane %v17, %v160
  %v162 = vcombine.high %v161, %v161
  %v164 = vunpack.c.l.s4 1966171168
  %v165 = vunpack.c.0.s8 %v164
  %v166 = vlaneseq
  %v167 = vshrl.u32 %v166, 7
  %v168 = vsub.s32 %v165, %v167
  %v169 = vrot.slane %v161, %v168
  %v171 = vunpack.c.l.s4 1966171168
  %v172 = vunpack.c.0.s8 %v171
  %v173 = vlaneseq
  %v174 = vshrl.u32 %v173, 7
  %v175 = vsub.s32 %v172, %v174
  %v176 = vrot.slane %v162, %v175
  %v304 = vunpack.c.l.b16 %v18
  %v305 = vunpack.c.h.b16 %v18
  %v306 = vunpack.c.l.b16 %v19
  %v307 = vunpack.c.h.b16 %v19
  %v308 = vunpack.c.l.b16 %v20
  %v309 = vunpack.c.h.b16 %v20
  %v310 = vunpack.c.l.b16 %v21
  %v311 = vunpack.c.h.b16 %v21
  %v312 = vunpack.c.l.b16 %v22
  %v313 = vunpack.c.h.b16 %v22
  %v314 = vunpack.c.l.b16 %v23
  %v315 = vunpack.c.h.b16 %v23
  %v316 = vunpack.c.l.b16 %v24
  %v317 = vunpack.c.l.b16 %v25
  %v318 = vunpack.c.h.b16 %v25
  %v319 = vunpack.c.l.b16 %v26
  %v320 = vunpack.c.h.b16 %v26
  %v321 = vunpack.c.l.b16 %v27
  %v322 = vunpack.c.h.b16 %v27
  %v323 = vunpack.c.l.b16 %v28
  %v324 = vunpack.c.h.b16 %v28
  %v325 = vunpack.c.l.b16 %v29
  %v326 = vunpack.c.h.b16 %v29
  %v327 = vunpack.c.l.b16 %v30
  %v328 = vunpack.c.h.b16 %v30
  %v329 = vunpack.c.l.b16 %v31
  %v330 = vunpack.c.l.b16 %v32
  %v331 = vunpack.c.h.b16 %v32
  %v332 = vunpack.c.l.b16 %v33
  %v333 = vunpack.c.h.b16 %v33
  %v334 = vunpack.c.l.b16 %v34
  %v335 = vunpack.c.h.b16 %v34
  %v336 = vunpack.c.l.b16 %v35
  %v337 = vunpack.c.h.b16 %v35
  %v338 = vunpack.c.l.b16 %v36
  %v339 = vunpack.c.h.b16 %v36
  %v340 = vunpack.c.l.b16 %v37
  %v341 = vunpack.c.h.b16 %v37
  %v342 = vunpack.c.l.b16 %v38
  %v343 = vunpack.c.l.b16 %v39
  %v344 = vunpack.c.h.b16 %v39
  %v345 = vunpack.c.l.b16 %v40
  %v346 = vunpack.c.h.b16 %v40
  %v347 = vunpack.c.l.b16 %v41
  %v348 = vunpack.c.h.b16 %v41
  %v349 = vunpack.c.l.b16 %v42
  %v350 = vunpack.c.h.b16 %v42
  %v351 = vunpack.c.l.b16 %v43
  %v352 = vunpack.c.h.b16 %v43
  %v353 = vunpack.c.l.b16 %v44
  %v354 = vunpack.c.h.b16 %v44
  %v355 = vunpack.c.l.b16 %v45
  %v356 = vunpack.c.l.b16 %v46
  %v357 = vunpack.c.h.b16 %v46
  %v358 = vunpack.c.l.b16 %v47
  %v359 = vunpack.c.h.b16 %v47
  %v360 = vunpack.c.l.b16 %v48
  %v361 = vunpack.c.h.b16 %v48
  %v362 = vunpack.c.l.b16 %v49
  %v363 = vunpack.c.h.b16 %v49
  %v364 = vunpack.c.l.b16 %v50
  %v365 = vunpack.c.h.b16 %v50
  %v366 = vunpack.c.l.b16 %v51
  %v367 = vunpack.c.h.b16 %v51
  %v368 = vunpack.c.l.b16 %v52
  %v369 = vunpack.c.l.b16 %v53
  %v370 = vunpack.c.h.b16 %v53
  %v371 = vunpack.c.l.b16 %v54
  %v372 = vunpack.c.h.b16 %v54
  %v373 = vunpack.c.l.b16 %v55
  %v374 = vunpack.c.h.b16 %v55
  %v375 = vunpack.c.l.b16 %v56
  %v376 = vunpack.c.h.b16 %v56
  %v377 = vunpack.c.l.b16 %v57
  %v378 = vunpack.c.h.b16 %v57
  %v379 = vunpack.c.l.b16 %v58
  %v380 = vunpack.c.h.b16 %v58
  %v381 = vunpack.c.l.b16 %v59
  %v382 = vunpack.c.l.b16 %v60
  %v383 = vunpack.c.h.b16 %v60
  %v384 = vunpack.c.l.b16 %v61
  %v385 = vunpack.c.h.b16 %v61
  %v386 = vunpack.c.l.b16 %v62
  %v387 = vunpack.c.h.b16 %v62
  %v388 = vunpack.c.l.b16 %v63
  %v389 = vunpack.c.h.b16 %v63
  %v390 = vunpack.c.l.b16 %v64
  %v391 = vunpack.c.h.b16 %v64
  %v392 = vunpack.c.l.b16 %v65
  %v393 = vunpack.c.h.b16 %v65
  %v394 = vunpack.c.l.b16 %v66
  %v395 = vunpack.c.l.b16 %v67
  %v396 = vunpack.c.h.b16 %v67
  %v397 = vunpack.c.l.b16 %v68
  %v398 = vunpack.c.h.b16 %v68
  %v399 = vunpack.c.l.b16 %v69
  %v400 = vunpack.c.h.b16 %v69
  %v401 = vunpack.c.l.b16 %v70
  %v402 = vunpack.c.h.b16 %v70
  %v403 = vunpack.c.l.b16 %v71
  %v404 = vunpack.c.h.b16 %v71
  %v405 = vunpack.c.l.b16 %v72
  %v406 = vunpack.c.h.b16 %v72
  %v407 = vunpack.c.l.b16 %v73
  %v408 = vunpack.c.l.b16 %v74
  %v409 = vunpack.c.h.b16 %v74
  %v410 = vunpack.c.l.b16 %v75
  %v411 = vunpack.c.h.b16 %v75
  %v412 = vunpack.c.l.b16 %v76
  %v413 = vunpack.c.h.b16 %v76
  %v414 = vunpack.c.l.b16 %v77
  %v415 = vunpack.c.h.b16 %v77
  %v416 = vunpack.c.l.b16 %v78
  %v417 = vunpack.c.h.b16 %v78
  %v418 = vunpack.c.l.b16 %v79
  %v419 = vunpack.c.h.b16 %v79
  %v420 = vunpack.c.l.b16 %v80
  %v421 = vunpack.c.l.b16 %v81
  %v422 = vunpack.c.h.b16 %v81
  %v423 = vunpack.c.l.b16 %v82
  %v424 = vunpack.c.h.b16 %v82
  %v425 = vunpack.c.l.b16 %v83
  %v426 = vunpack.c.h.b16 %v83
  %v427 = vunpack.c.l.b16 %v84
  %v428 = vunpack.c.h.b16 %v84
  %v429 = vunpack.c.l.b16 %v85
  %v430 = vunpack.c.h.b16 %v85
  %v431 = vunpack.c.l.b16 %v86
  %v432 = vunpack.c.h.b16 %v86
  %v433 = vunpack.c.l.b16 %v87
  %v434 = vunpack.c.l.b16 %v88
  %v435 = vunpack.c.h.b16 %v88
  %v436 = vunpack.c.l.b16 %v89
  %v437 = vunpack.c.h.b16 %v89
  %v438 = vunpack.c.l.b16 %v90
  %v439 = vunpack.c.h.b16 %v90
  %v440 = vunpack.c.l.b16 %v91
  %v441 = vunpack.c.h.b16 %v91
  %v442 = vunpack.c.l.b16 %v92
  %v443 = vunpack.c.h.b16 %v92
  %v444 = vunpack.c.l.b16 %v93
  %v445 = vunpack.c.h.b16 %v93
  %v446 = vunpack.c.l.b16 %v94
  %v447 = vunpack.c.l.b16 %v95
  %v448 = vunpack.c.h.b16 %v95
  %v449 = vunpack.c.l.b16 %v96
  %v450 = vunpack.c.h.b16 %v96
  %v451 = vunpack.c.l.b16 %v97
  %v452 = vunpack.c.h.b16 %v97
  %v453 = vunpack.c.l.b16 %v98
  %v454 = vunpack.c.h.b16 %v98
  %v455 = vunpack.c.l.b16 %v99
  %v456 = vunpack.c.h.b16 %v99
  %v457 = vunpack.c.l.b16 %v100
  %v458 = vunpack.c.h.b16 %v100
  %v459 = vunpack.c.l.b16 %v101
  %v460 = vunpack.c.l.b16 %v102
  %v461 = vunpack.c.h.b16 %v102
  %v462 = vunpack.c.l.b16 %v103
  %v463 = vunpack.c.h.b16 %v103
  %v464 = vunpack.c.l.b16 %v104
  %v465 = vunpack.c.h.b16 %v104
  %v466 = vunpack.c.l.b16 %v105
  %v467 = vunpack.c.h.b16 %v105
  %v468 = vunpack.c.l.b16 %v106
  %v469 = vunpack.c.h.b16 %v106
  %v470 = vunpack.c.l.b16 %v107
  %v471 = vunpack.c.h.b16 %v107
  %v472 = vunpack.c.l.b16 %v108
  %v473 = vunpack.c.l.b16 %v109
  %v474 = vunpack.c.h.b16 %v109
  %v475 = vunpack.c.l.b16 %v110
  %v476 = vunpack.c.h.b16 %v110
  %v477 = vunpack.c.l.b16 %v111
  %v478 = vunpack.c.h.b16 %v111
  %v479 = vunpack.c.l.b16 %v112
  %v480 = vunpack.c.h.b16 %v112
  %v481 = vunpack.c.l.b16 %v113
  %v482 = vunpack.c.h.b16 %v113
  %v483 = vunpack.c.l.b16 %v114
  %v484 = vunpack.c.h.b16 %v114
  %v485 = vunpack.c.l.b16 %v115
  %v486 = vunpack.c.l.b16 %v116
  %v487 = vunpack.c.h.b16 %v116
  %v488 = vunpack.c.l.b16 %v117
  %v489 = vunpack.c.h.b16 %v117
  %v490 = vunpack.c.l.b16 %v118
  %v491 = vunpack.c.h.b16 %v118
  %v492 = vunpack.c.l.b16 %v119
  %v493 = vunpack.c.h.b16 %v119
  %v494 = vunpack.c.l.b16 %v120
  %v495 = vunpack.c.h.b16 %v120
  %v496 = vunpack.c.l.b16 %v121
  %v497 = vunpack.c.h.b16 %v121
  %v498 = vunpack.c.l.b16 %v122
  %v499 = vunpack.c.l.b16 %v123
  %v500 = vunpack.c.h.b16 %v123
  %v501 = vunpack.c.l.b16 %v124
  %v502 = vunpack.c.h.b16 %v124
  %v503 = vunpack.c.l.b16 %v125
  %v504 = vunpack.c.h.b16 %v125
  %v505 = vunpack.c.l.b16 %v126
  %v506 = vunpack.c.h.b16 %v126
  %v507 = vunpack.c.l.b16 %v127
  %v508 = vunpack.c.h.b16 %v127
  %v509 = vunpack.c.l.b16 %v128
  %v510 = vunpack.c.h.b16 %v128
  %v511 = vunpack.c.l.b16 %v129
  %v512 = vunpack.c.l.b16 %v130
  %v513 = vunpack.c.h.b16 %v130
  %v514 = vunpack.c.l.b16 %v131
  %v515 = vunpack.c.h.b16 %v131
  %v516 = vunpack.c.l.b16 %v132
  %v517 = vunpack.c.h.b16 %v132
  %v518 = vunpack.c.l.b16 %v133
  %v519 = vunpack.c.h.b16 %v133
  %v520 = vunpack.c.l.b16 %v134
  %v521 = vunpack.c.h.b16 %v134
  %v522 = vunpack.c.l.b16 %v135
  %v523 = vunpack.c.h.b16 %v135
  %v524 = vunpack.c.l.b16 %v136
  %v525 = vunpack.c.l.b16 %v137
  %v526 = vunpack.c.h.b16 %v137
  %v527 = vunpack.c.l.b16 %v138
  %v528 = vunpack.c.h.b16 %v138
  %v529 = vunpack.c.l.b16 %v139
  %v530 = vunpack.c.h.b16 %v139
  %v531 = vunpack.c.l.b16 %v140
  %v532 = vunpack.c.h.b16 %v140
  %v533 = vunpack.c.l.b16 %v141
  %v534 = vunpack.c.h.b16 %v141
  %v535 = vunpack.c.l.b16 %v142
  %v536 = vunpack.c.h.b16 %v142
  %v537 = vunpack.c.l.b16 %v143
  %v538 = vpack.c.b16 %v317, %v304
  %v539 = vpack.c.b16 %v318, %v305
  %v540 = vpack.c.b16 %v319, %v306
  %v541 = vpack.c.b16 %v320, %v307
  %v542 = vpack.c.b16 %v321, %v308
  %v543 = vpack.c.b16 %v322, %v309
  %v544 = vpack.c.b16 %v323, %v310
  %v545 = vpack.c.b16 %v324, %v311
  %v546 = vpack.c.b16 %v325, %v312
  %v547 = vpack.c.b16 %v326, %v313
  %v548 = vpack.c.b16 %v327, %v314
  %v549 = vpack.c.b16 %v328, %v315
  %v550 = vpack.c.b16 %v329, %v316
  %v551 = vpack.c.b16 %v343, %v330
  %v552 = vpack.c.b16 %v344, %v331
  %v553 = vpack.c.b16 %v345, %v332
  %v554 = vpack.c.b16 %v346, %v333
  %v555 = vpack.c.b16 %v347, %v334
  %v556 = vpack.c.b16 %v348, %v335
  %v557 = vpack.c.b16 %v349, %v336
  %v558 = vpack.c.b16 %v350, %v337
  %v559 = vpack.c.b16 %v351, %v338
  %v560 = vpack.c.b16 %v352, %v339
  %v561 = vpack.c.b16 %v353, %v340
  %v562 = vpack.c.b16 %v354, %v341
  %v563 = vpack.c.b16 %v355, %v342
  %v564 = vpack.c.b16 %v369, %v356
  %v565 = vpack.c.b16 %v370, %v357
  %v566 = vpack.c.b16 %v371, %v358
  %v567 = vpack.c.b16 %v372, %v359
  %v568 = vpack.c.b16 %v373, %v360
  %v569 = vpack.c.b16 %v374, %v361
  %v570 = vpack.c.b16 %v375, %v362
  %v571 = vpack.c.b16 %v376, %v363
  %v572 = vpack.c.b16 %v377, %v364
  %v573 = vpack.c.b16 %v378, %v365
  %v574 = vpack.c.b16 %v379, %v366
  %v575 = vpack.c.b16 %v380, %v367
  %v576 = vpack.c.b16 %v381, %v368
  %v577 = vpack.c.b16 %v395, %v382
  %v578 = vpack.c.b16 %v396, %v383
  %v579 = vpack.c.b16 %v397, %v384
  %v580 = vpack.c.b16 %v398, %v385
  %v581 = vpack.c.b16 %v399, %v386
  %v582 = vpack.c.b16 %v400, %v387
  %v583 = vpack.c.b16 %v401, %v388
  %v584 = vpack.c.b16 %v402, %v389
  %v585 = vpack.c.b16 %v403, %v390
  %v586 = vpack.c.b16 %v404, %v391
  %v587 = vpack.c.b16 %v405, %v392
  %v588 = vpack.c.b16 %v406, %v393
  %v589 = vpack.c.b16 %v407, %v394
  %v590 = vpack.c.b16 %v421, %v408
  %v591 = vpack.c.b16 %v422, %v409
  %v592 = vpack.c.b16 %v423, %v410
  %v593 = vpack.c.b16 %v424, %v411
  %v594 = vpack.c.b16 %v425, %v412
  %v595 = vpack.c.b16 %v426, %v413
  %v596 = vpack.c.b16 %v427, %v414
  %v597 = vpack.c.b16 %v428, %v415
  %v598 = vpack.c.b16 %v429, %v416
  %v599 = vpack.c.b16 %v430, %v417
  %v600 = vpack.c.b16 %v431, %v418
  %v601 = vpack.c.b16 %v432, %v419
  %v602 = vpack.c.b16 %v433, %v420
  %v603 = vpack.c.b16 %v447, %v434
  %v604 = vpack.c.b16 %v448, %v435
  %v605 = vpack.c.b16 %v449, %v436
  %v606 = vpack.c.b16 %v450, %v437
  %v607 = vpack.c.b16 %v451, %v438
  %v608 = vpack.c.b16 %v452, %v439
  %v609 = vpack.c.b16 %v453, %v440
  %v610 = vpack.c.b16 %v454, %v441
  %v611 = vpack.c.b16 %v455, %v442
  %v612 = vpack.c.b16 %v456, %v443
  %v613 = vpack.c.b16 %v457, %v444
  %v614 = vpack.c.b16 %v458, %v445
  %v615 = vpack.c.b16 %v459, %v446
  %v616 = vpack.c.b16 %v473, %v460
  %v617 = vpack.c.b16 %v474, %v461
  %v618 = vpack.c.b16 %v475, %v462
  %v619 = vpack.c.b16 %v476, %v463
  %v620 = vpack.c.b16 %v477, %v464
  %v621 = vpack.c.b16 %v478, %v465
  %v622 = vpack.c.b16 %v479, %v466
  %v623 = vpack.c.b16 %v480, %v467
  %v624 = vpack.c.b16 %v481, %v468
  %v625 = vpack.c.b16 %v482, %v469
  %v626 = vpack.c.b16 %v483, %v470
  %v627 = vpack.c.b16 %v484, %v471
  %v628 = vpack.c.b16 %v485, %v472
  %v629 = vpack.c.b16 %v499, %v486
  %v630 = vpack.c.b16 %v500, %v487
  %v631 = vpack.c.b16 %v501, %v488
  %v632 = vpack.c.b16 %v502, %v489
  %v633 = vpack.c.b16 %v503, %v490
  %v634 = vpack.c.b16 %v504, %v491
  %v635 = vpack.c.b16 %v505, %v492
  %v636 = vpack.c.b16 %v506, %v493
  %v637 = vpack.c.b16 %v507, %v494
  %v638 = vpack.c.b16 %v508, %v495
  %v639 = vpack.c.b16 %v509, %v496
  %v640 = vpack.c.b16 %v510, %v497
  %v641 = vpack.c.b16 %v511, %v498
  %v642 = vpack.c.b16 %v525, %v512
  %v643 = vpack.c.b16 %v526, %v513
  %v644 = vpack.c.b16 %v527, %v514
  %v645 = vpack.c.b16 %v528, %v515
  %v646 = vpack.c.b16 %v529, %v516
  %v647 = vpack.c.b16 %v530, %v517
  %v648 = vpack.c.b16 %v531, %v518
  %v649 = vpack.c.b16 %v532, %v519
  %v650 = vpack.c.b16 %v533, %v520
  %v651 = vpack.c.b16 %v534, %v521
  %v652 = vpack.c.b16 %v535, %v522
  %v653 = vpack.c.b16 %v536, %v523
  %v654 = vpack.c.b16 %v537, %v524
  %vm772 = vcmask 130048
  %v774 = vsel %vm772, %v176, 0
  %776 = vmatprep.subr.bf16.mxu0 %v630
  %777 = vmatpush1.bf16.msra.mxu0 %v629
  %778 = vmatprep.subr.bf16.mxu0 %v617
  %779 = vmatpush1.bf16.msra.mxu0 %v616
  %780 = vmatprep.subr.bf16.mxu0 %v604
  %781 = vmatpush1.bf16.msra.mxu0 %v603
  %782 = vmatprep.subr.bf16.mxu0 %v591
  %783 = vmatpush1.bf16.msra.mxu0 %v590
  %784 = vmatprep.subr.bf16.mxu0 %v578
  %785 = vmatpush1.bf16.msra.mxu0 %v577
  %786 = vmatprep.subr.bf16.mxu0 %v565
  %787 = vmatpush1.bf16.msra.mxu0 %v564
  %788 = vmatprep.subr.bf16.mxu0 %v552
  %789 = vmatpush1.bf16.msra.mxu0 %v551
  %790 = vmatprep.subr.bf16.mxu0 %v539
  %791 = vmatpush1.bf16.msra.mxu0 %v538
  %792 = vmatprep.subr.bf16.mxu0 0
  %793 = vmatpush2.bf16.msra.mxu0 0
  %794 = vmatprep.subr.bf16.mxu0 0
  %795 = vmatpush2.bf16.msra.mxu0 0
  %796 = vmatprep.subr.bf16.mxu0 0
  %797 = vmatpush2.bf16.msra.mxu0 0
  %798 = vmatprep.subr.bf16.mxu0 0
  %799 = vmatpush2.bf16.msra.mxu0 0
  %800 = vmatprep.subr.bf16.mxu0 0
  %801 = vmatpush2.bf16.msra.mxu0 0
  %802 = vmatprep.subr.bf16.mxu0 0
  %803 = vmatpush2.bf16.msra.mxu0 0
  %804 = vmatprep.subr.bf16.mxu0 0
  %805 = vmatpush2.bf16.msra.mxu0 0
  %806 = vmatprep.subr.bf16.mxu0 %v643
  %807 = vmatpush2.bf16.msra.mxu0 %v642
  %808 = vmatprep.mubr.bf16.mxu0 %v774
  %809 = vmatmul.mubr.bf16.gmra.mxu0 %v169
  %v810 = vpop.f32.mrf.mxu0
  %v811 = vadd.f32 %v153, %v810
  %v812 = vpop.f32.mrf.mxu0
  %v813 = vadd.f32 %v153, %v812
  %v814 = vpop.f32.mrf.mxu0
  %v815 = vpop.f32.mrf.mxu0
  %816 = vdwg.mxu0
  %817 = vmatprep.subr.bf16.mxu0 %v632
  %818 = vmatpush1.bf16.msra.mxu0 %v631
  %819 = vmatprep.subr.bf16.mxu0 %v619
  %820 = vmatpush1.bf16.msra.mxu0 %v618
  %821 = vmatprep.subr.bf16.mxu0 %v606
  %822 = vmatpush1.bf16.msra.mxu0 %v605
  %823 = vmatprep.subr.bf16.mxu0 %v593
  %824 = vmatpush1.bf16.msra.mxu0 %v592
  %825 = vmatprep.subr.bf16.mxu0 %v580
  %826 = vmatpush1.bf16.msra.mxu0 %v579
  %827 = vmatprep.subr.bf16.mxu0 %v567
  %828 = vmatpush1.bf16.msra.mxu0 %v566
  %829 = vmatprep.subr.bf16.mxu0 %v554
  %830 = vmatpush1.bf16.msra.mxu0 %v553
  %831 = vmatprep.subr.bf16.mxu0 %v541
  %832 = vmatpush1.bf16.msra.mxu0 %v540
  %833 = vmatprep.subr.bf16.mxu0 0
  %834 = vmatpush2.bf16.msra.mxu0 0
  %835 = vmatprep.subr.bf16.mxu0 0
  %836 = vmatpush2.bf16.msra.mxu0 0
  %837 = vmatprep.subr.bf16.mxu0 0
  %838 = vmatpush2.bf16.msra.mxu0 0
  %839 = vmatprep.subr.bf16.mxu0 0
  %840 = vmatpush2.bf16.msra.mxu0 0
  %841 = vmatprep.subr.bf16.mxu0 0
  %842 = vmatpush2.bf16.msra.mxu0 0
  %843 = vmatprep.subr.bf16.mxu0 0
  %844 = vmatpush2.bf16.msra.mxu0 0
  %845 = vmatprep.subr.bf16.mxu0 0
  %846 = vmatpush2.bf16.msra.mxu0 0
  %847 = vmatprep.subr.bf16.mxu0 %v645
  %848 = vmatpush2.bf16.msra.mxu0 %v644
  %849 = vmatprep.mubr.bf16.mxu0 %v774
  %850 = vmatmul.mubr.bf16.gmra.mxu0 %v169
  %v851 = vpop.f32.mrf.mxu0
  %v852 = vadd.f32 %v153, %v851
  %v853 = vpop.f32.mrf.mxu0
  %v854 = vadd.f32 %v153, %v853
  %v855 = vpop.f32.mrf.mxu0
  %v856 = vpop.f32.mrf.mxu0
  %857 = vdwg.mxu0
  %858 = vmatprep.subr.bf16.mxu0 %v634
  %859 = vmatpush1.bf16.msra.mxu0 %v633
  %860 = vmatprep.subr.bf16.mxu0 %v621
  %861 = vmatpush1.bf16.msra.mxu0 %v620
  %862 = vmatprep.subr.bf16.mxu0 %v608
  %863 = vmatpush1.bf16.msra.mxu0 %v607
  %864 = vmatprep.subr.bf16.mxu0 %v595
  %865 = vmatpush1.bf16.msra.mxu0 %v594
  %866 = vmatprep.subr.bf16.mxu0 %v582
  %867 = vmatpush1.bf16.msra.mxu0 %v581
  %868 = vmatprep.subr.bf16.mxu0 %v569
  %869 = vmatpush1.bf16.msra.mxu0 %v568
  %870 = vmatprep.subr.bf16.mxu0 %v556
  %871 = vmatpush1.bf16.msra.mxu0 %v555
  %872 = vmatprep.subr.bf16.mxu0 %v543
  %873 = vmatpush1.bf16.msra.mxu0 %v542
  %874 = vmatprep.subr.bf16.mxu0 0
  %875 = vmatpush2.bf16.msra.mxu0 0
  %876 = vmatprep.subr.bf16.mxu0 0
  %877 = vmatpush2.bf16.msra.mxu0 0
  %878 = vmatprep.subr.bf16.mxu0 0
  %879 = vmatpush2.bf16.msra.mxu0 0
  %880 = vmatprep.subr.bf16.mxu0 0
  %881 = vmatpush2.bf16.msra.mxu0 0
  %882 = vmatprep.subr.bf16.mxu0 0
  %883 = vmatpush2.bf16.msra.mxu0 0
  %884 = vmatprep.subr.bf16.mxu0 0
  %885 = vmatpush2.bf16.msra.mxu0 0
  %886 = vmatprep.subr.bf16.mxu0 0
  %887 = vmatpush2.bf16.msra.mxu0 0
  %888 = vmatprep.subr.bf16.mxu0 %v647
  %889 = vmatpush2.bf16.msra.mxu0 %v646
  %890 = vmatprep.mubr.bf16.mxu0 %v774
  %891 = vmatmul.mubr.bf16.gmra.mxu0 %v169
  %v892 = vpop.f32.mrf.mxu0
  %v893 = vadd.f32 %v153, %v892
  %v894 = vpop.f32.mrf.mxu0
  %v895 = vadd.f32 %v153, %v894
  %v896 = vpop.f32.mrf.mxu0
  %v897 = vpop.f32.mrf.mxu0
  %898 = vdwg.mxu0
  %899 = vmatprep.subr.bf16.mxu0 %v636
  %900 = vmatpush1.bf16.msra.mxu0 %v635
  %901 = vmatprep.subr.bf16.mxu0 %v623
  %902 = vmatpush1.bf16.msra.mxu0 %v622
  %903 = vmatprep.subr.bf16.mxu0 %v610
  %904 = vmatpush1.bf16.msra.mxu0 %v609
  %905 = vmatprep.subr.bf16.mxu0 %v597
  %906 = vmatpush1.bf16.msra.mxu0 %v596
  %907 = vmatprep.subr.bf16.mxu0 %v584
  %908 = vmatpush1.bf16.msra.mxu0 %v583
  %909 = vmatprep.subr.bf16.mxu0 %v571
  %910 = vmatpush1.bf16.msra.mxu0 %v570
  %911 = vmatprep.subr.bf16.mxu0 %v558
  %912 = vmatpush1.bf16.msra.mxu0 %v557
  %913 = vmatprep.subr.bf16.mxu0 %v545
  %914 = vmatpush1.bf16.msra.mxu0 %v544
  %915 = vmatprep.subr.bf16.mxu0 0
  %916 = vmatpush2.bf16.msra.mxu0 0
  %917 = vmatprep.subr.bf16.mxu0 0
  %918 = vmatpush2.bf16.msra.mxu0 0
  %919 = vmatprep.subr.bf16.mxu0 0
  %920 = vmatpush2.bf16.msra.mxu0 0
  %921 = vmatprep.subr.bf16.mxu0 0
  %922 = vmatpush2.bf16.msra.mxu0 0
  %923 = vmatprep.subr.bf16.mxu0 0
  %924 = vmatpush2.bf16.msra.mxu0 0
  %925 = vmatprep.subr.bf16.mxu0 0
  %926 = vmatpush2.bf16.msra.mxu0 0
  %927 = vmatprep.subr.bf16.mxu0 0
  %928 = vmatpush2.bf16.msra.mxu0 0
  %929 = vmatprep.subr.bf16.mxu0 %v649
  %930 = vmatpush2.bf16.msra.mxu0 %v648
  %931 = vmatprep.mubr.bf16.mxu0 %v774
  %932 = vmatmul.mubr.bf16.gmra.mxu0 %v169
  %v933 = vpop.f32.mrf.mxu0
  %v934 = vadd.f32 %v153, %v933
  %v935 = vpop.f32.mrf.mxu0
  %v936 = vadd.f32 %v153, %v935
  %v937 = vpop.f32.mrf.mxu0
  %v938 = vpop.f32.mrf.mxu0
  %939 = vdwg.mxu0
  %940 = vmatprep.subr.bf16.mxu0 %v638
  %941 = vmatpush1.bf16.msra.mxu0 %v637
  %942 = vmatprep.subr.bf16.mxu0 %v625
  %943 = vmatpush1.bf16.msra.mxu0 %v624
  %944 = vmatprep.subr.bf16.mxu0 %v612
  %945 = vmatpush1.bf16.msra.mxu0 %v611
  %946 = vmatprep.subr.bf16.mxu0 %v599
  %947 = vmatpush1.bf16.msra.mxu0 %v598
  %948 = vmatprep.subr.bf16.mxu0 %v586
  %949 = vmatpush1.bf16.msra.mxu0 %v585
  %950 = vmatprep.subr.bf16.mxu0 %v573
  %951 = vmatpush1.bf16.msra.mxu0 %v572
  %952 = vmatprep.subr.bf16.mxu0 %v560
  %953 = vmatpush1.bf16.msra.mxu0 %v559
  %954 = vmatprep.subr.bf16.mxu0 %v547
  %955 = vmatpush1.bf16.msra.mxu0 %v546
  %956 = vmatprep.subr.bf16.mxu0 0
  %957 = vmatpush2.bf16.msra.mxu0 0
  %958 = vmatprep.subr.bf16.mxu0 0
  %959 = vmatpush2.bf16.msra.mxu0 0
  %960 = vmatprep.subr.bf16.mxu0 0
  %961 = vmatpush2.bf16.msra.mxu0 0
  %962 = vmatprep.subr.bf16.mxu0 0
  %963 = vmatpush2.bf16.msra.mxu0 0
  %964 = vmatprep.subr.bf16.mxu0 0
  %965 = vmatpush2.bf16.msra.mxu0 0
  %966 = vmatprep.subr.bf16.mxu0 0
  %967 = vmatpush2.bf16.msra.mxu0 0
  %968 = vmatprep.subr.bf16.mxu0 0
  %969 = vmatpush2.bf16.msra.mxu0 0
  %970 = vmatprep.subr.bf16.mxu0 %v651
  %971 = vmatpush2.bf16.msra.mxu0 %v650
  %972 = vmatprep.mubr.bf16.mxu0 %v774
  %973 = vmatmul.mubr.bf16.gmra.mxu0 %v169
  %v974 = vpop.f32.mrf.mxu0
  %v975 = vadd.f32 %v153, %v974
  %v976 = vpop.f32.mrf.mxu0
  %v977 = vadd.f32 %v153, %v976
  %v978 = vpop.f32.mrf.mxu0
  %v979 = vpop.f32.mrf.mxu0
  %980 = vdwg.mxu0
  %981 = vmatprep.subr.bf16.mxu0 %v640
  %982 = vmatpush1.bf16.msra.mxu0 %v639
  %983 = vmatprep.subr.bf16.mxu0 %v627
  %984 = vmatpush1.bf16.msra.mxu0 %v626
  %985 = vmatprep.subr.bf16.mxu0 %v614
  %986 = vmatpush1.bf16.msra.mxu0 %v613
  %987 = vmatprep.subr.bf16.mxu0 %v601
  %988 = vmatpush1.bf16.msra.mxu0 %v600
  %989 = vmatprep.subr.bf16.mxu0 %v588
  %990 = vmatpush1.bf16.msra.mxu0 %v587
  %991 = vmatprep.subr.bf16.mxu0 %v575
  %992 = vmatpush1.bf16.msra.mxu0 %v574
  %993 = vmatprep.subr.bf16.mxu0 %v562
  %994 = vmatpush1.bf16.msra.mxu0 %v561
  %995 = vmatprep.subr.bf16.mxu0 %v549
  %996 = vmatpush1.bf16.msra.mxu0 %v548
  %997 = vmatprep.subr.bf16.mxu0 0
  %998 = vmatpush2.bf16.msra.mxu0 0
  %999 = vmatprep.subr.bf16.mxu0 0
  %1000 = vmatpush2.bf16.msra.mxu0 0
  %1001 = vmatprep.subr.bf16.mxu0 0
  %1002 = vmatpush2.bf16.msra.mxu0 0
  %1003 = vmatprep.subr.bf16.mxu0 0
  %1004 = vmatpush2.bf16.msra.mxu0 0
  %1005 = vmatprep.subr.bf16.mxu0 0
  %1006 = vmatpush2.bf16.msra.mxu0 0
  %1007 = vmatprep.subr.bf16.mxu0 0
  %1008 = vmatpush2.bf16.msra.mxu0 0
  %1009 = vmatprep.subr.bf16.mxu0 0
  %1010 = vmatpush2.bf16.msra.mxu0 0
  %1011 = vmatprep.subr.bf16.mxu0 %v653
  %1012 = vmatpush2.bf16.msra.mxu0 %v652
  %1013 = vmatprep.mubr.bf16.mxu0 %v774
  %1014 = vmatmul.mubr.bf16.gmra.mxu0 %v169
  %v1015 = vpop.f32.mrf.mxu0
  %v1016 = vadd.f32 %v153, %v1015
  %v1017 = vpop.f32.mrf.mxu0
  %v1018 = vadd.f32 %v153, %v1017
  %v1019 = vpop.f32.mrf.mxu0
  %v1020 = vpop.f32.mrf.mxu0
  %1021 = vdwg.mxu0
  %1022 = vmatprep.subr.bf16.mxu0 0
  %1023 = vmatpush1.bf16.msra.mxu0 %v641
  %1024 = vmatprep.subr.bf16.mxu0 0
  %1025 = vmatpush1.bf16.msra.mxu0 %v628
  %1026 = vmatprep.subr.bf16.mxu0 0
  %1027 = vmatpush1.bf16.msra.mxu0 %v615
  %1028 = vmatprep.subr.bf16.mxu0 0
  %1029 = vmatpush1.bf16.msra.mxu0 %v602
  %1030 = vmatprep.subr.bf16.mxu0 0
  %1031 = vmatpush1.bf16.msra.mxu0 %v589
  %1032 = vmatprep.subr.bf16.mxu0 0
  %1033 = vmatpush1.bf16.msra.mxu0 %v576
  %1034 = vmatprep.subr.bf16.mxu0 0
  %1035 = vmatpush1.bf16.msra.mxu0 %v563
  %1036 = vmatprep.subr.bf16.mxu0 0
  %1037 = vmatpush1.bf16.msra.mxu0 %v550
  %1038 = vmatprep.subr.bf16.mxu0 0
  %1039 = vmatpush2.bf16.msra.mxu0 0
  %1040 = vmatprep.subr.bf16.mxu0 0
  %1041 = vmatpush2.bf16.msra.mxu0 0
  %1042 = vmatprep.subr.bf16.mxu0 0
  %1043 = vmatpush2.bf16.msra.mxu0 0
  %1044 = vmatprep.subr.bf16.mxu0 0
  %1045 = vmatpush2.bf16.msra.mxu0 0
  %1046 = vmatprep.subr.bf16.mxu0 0
  %1047 = vmatpush2.bf16.msra.mxu0 0
  %1048 = vmatprep.subr.bf16.mxu0 0
  %1049 = vmatpush2.bf16.msra.mxu0 0
  %1050 = vmatprep.subr.bf16.mxu0 0
  %1051 = vmatpush2.bf16.msra.mxu0 0
  %1052 = vmatprep.subr.bf16.mxu0 0
  %1053 = vmatpush2.bf16.msra.mxu0 %v654
  %1054 = vmatprep.mubr.bf16.mxu0 %v774
  %1055 = vmatmul.mubr.bf16.gmra.mxu0 %v169
  %v1056 = vpop.f32.mrf.mxu0
  %v1057 = vadd.f32 %v153, %v1056
  %v1058 = vpop.f32.mrf.mxu0
  %v1059 = vpop.f32.mrf.mxu0
  %v1060 = vpop.f32.mrf.mxu0
  %1061 = vdwg.mxu0
  %v1062 = vsub.f32 0.0, %v811
  %v1063 = vsub.f32 0.0, %v813
  %v1064 = vsub.f32 0.0, %v852
  %v1065 = vsub.f32 0.0, %v854
  %v1066 = vsub.f32 0.0, %v893
  %v1067 = vsub.f32 0.0, %v895
  %v1068 = vsub.f32 0.0, %v934
  %v1069 = vsub.f32 0.0, %v936
  %v1070 = vsub.f32 0.0, %v975
  %v1071 = vsub.f32 0.0, %v977
  %v1072 = vsub.f32 0.0, %v1016
  %v1073 = vsub.f32 0.0, %v1018
  %v1074 = vsub.f32 0.0, %v1057
  %v1075 = vmul.f32 %v1062, 1.442695
  %v1076 = vpow.pop %v1075
  %v1077 = vmul.f32 %v1063, 1.442695
  %v1078 = vpow.pop %v1077
  %v1079 = vmul.f32 %v1064, 1.442695
  %v1080 = vpow.pop %v1079
  %v1081 = vmul.f32 %v1065, 1.442695
  %v1082 = vpow.pop %v1081
  %v1083 = vmul.f32 %v1066, 1.442695
  %v1084 = vpow.pop %v1083
  %v1085 = vmul.f32 %v1067, 1.442695
  %v1086 = vpow.pop %v1085
  %v1087 = vmul.f32 %v1068, 1.442695
  %v1088 = vpow.pop %v1087
  %v1089 = vmul.f32 %v1069, 1.442695
  %v1090 = vpow.pop %v1089
  %v1091 = vmul.f32 %v1070, 1.442695
  %v1092 = vpow.pop %v1091
  %v1093 = vmul.f32 %v1071, 1.442695
  %v1094 = vpow.pop %v1093
  %v1095 = vmul.f32 %v1072, 1.442695
  %v1096 = vpow.pop %v1095
  %v1097 = vmul.f32 %v1073, 1.442695
  %v1098 = vpow.pop %v1097
  %v1099 = vmul.f32 %v1074, 1.442695
  %v1100 = vpow.pop %v1099
  %v1101 = vadd.f32 %v1076, 1.0
  %v1102 = vadd.f32 %v1078, 1.0
  %v1103 = vadd.f32 %v1080, 1.0
  %v1104 = vadd.f32 %v1082, 1.0
  %v1105 = vadd.f32 %v1084, 1.0
  %v1106 = vadd.f32 %v1086, 1.0
  %v1107 = vadd.f32 %v1088, 1.0
  %v1108 = vadd.f32 %v1090, 1.0
  %v1109 = vadd.f32 %v1092, 1.0
  %v1110 = vadd.f32 %v1094, 1.0
  %v1111 = vadd.f32 %v1096, 1.0
  %v1112 = vadd.f32 %v1098, 1.0
  %v1113 = vadd.f32 %v1100, 1.0
  %v1114 = vrcp.pop %v1101
  %v1115 = vrcp.pop %v1102
  %v1116 = vrcp.pop %v1103
  %v1117 = vrcp.pop %v1104
  %v1118 = vrcp.pop %v1105
  %v1119 = vrcp.pop %v1106
  %v1120 = vrcp.pop %v1107
  %v1121 = vrcp.pop %v1108
  %v1122 = vrcp.pop %v1109
  %v1123 = vrcp.pop %v1110
  %v1124 = vrcp.pop %v1111
  %v1125 = vrcp.pop %v1112
  %v1126 = vrcp.pop %v1113
  %v1127 = vmax.f32 %v1114, 0.0
  %v1128 = vmax.f32 %v1115, 0.0
  %v1129 = vmax.f32 %v1116, 0.0
  %v1130 = vmax.f32 %v1117, 0.0
  %v1131 = vmax.f32 %v1118, 0.0
  %v1132 = vmax.f32 %v1119, 0.0
  %v1133 = vmax.f32 %v1120, 0.0
  %v1134 = vmax.f32 %v1121, 0.0
  %v1135 = vmax.f32 %v1122, 0.0
  %v1136 = vmax.f32 %v1123, 0.0
  %v1137 = vmax.f32 %v1124, 0.0
  %v1138 = vmax.f32 %v1125, 0.0
  %v1139 = vmax.f32 %v1126, 0.0
  %v1140 = vmin.f32 %v1127, 1.0
  %v1141 = vmin.f32 %v1128, 1.0
  %v1142 = vmin.f32 %v1129, 1.0
  %v1143 = vmin.f32 %v1130, 1.0
  %v1144 = vmin.f32 %v1131, 1.0
  %v1145 = vmin.f32 %v1132, 1.0
  %v1146 = vmin.f32 %v1133, 1.0
  %v1147 = vmin.f32 %v1134, 1.0
  %v1148 = vmin.f32 %v1135, 1.0
  %v1149 = vmin.f32 %v1136, 1.0
  %v1150 = vmin.f32 %v1137, 1.0
  %v1151 = vmin.f32 %v1138, 1.0
  %v1152 = vmin.f32 %v1139, 1.0
  %v1166 = vcombine.low %v1140, %v1141
  %v1167 = vcombine.low %v1142, %v1143
  %v1168 = vcombine.low %v1144, %v1145
  %v1169 = vcombine.low %v1146, %v1147
  %v1171 = vunpack.c.l.s4 1966171168
  %v1172 = vunpack.c.0.s8 %v1171
  %v1173 = vlaneseq
  %v1174 = vshrl.u32 %v1173, 7
  %v1175 = vsub.s32 %v1172, %v1174
  %v1176 = vrot.slane %v1166, %v1175
  %v1178 = vunpack.c.l.s4 1966171168
  %v1179 = vunpack.c.0.s8 %v1178
  %v1180 = vlaneseq
  %v1181 = vshrl.u32 %v1180, 7
  %v1182 = vsub.s32 %v1179, %v1181
  %v1183 = vrot.slane %v1167, %v1182
  %v1185 = vunpack.c.l.s4 1966171168
  %v1186 = vunpack.c.0.s8 %v1185
  %v1187 = vlaneseq
  %v1188 = vshrl.u32 %v1187, 7
  %v1189 = vsub.s32 %v1186, %v1188
  %v1190 = vrot.slane %v1168, %v1189
  %v1192 = vunpack.c.l.s4 1966171168
  %v1193 = vunpack.c.0.s8 %v1192
  %v1194 = vlaneseq
  %v1195 = vshrl.u32 %v1194, 7
  %v1196 = vsub.s32 %v1193, %v1195
  %v1197 = vrot.slane %v1169, %v1196
  %v1198 = vcombine.low %v1176, %v1183
  %v1199 = vcombine.low %v1190, %v1197
  %v1201 = vunpack.c.l.s4 1966171168
  %v1202 = vunpack.c.0.s8 %v1201
  %v1203 = vlaneseq
  %v1204 = vshrl.u32 %v1203, 7
  %v1205 = vsub.s32 %v1202, %v1204
  %v1206 = vrot.slane %v1198, %v1205
  %v1208 = vunpack.c.l.s4 1966171168
  %v1209 = vunpack.c.0.s8 %v1208
  %v1210 = vlaneseq
  %v1211 = vshrl.u32 %v1210, 7
  %v1212 = vsub.s32 %v1209, %v1211
  %v1213 = vrot.slane %v1199, %v1212
  %v1214 = vcombine.low %v1206, %v1213
  %v1215 = vcombine.low %v1148, %v1149
  %v1216 = vcombine.low %v1150, %v1151
  %v1218 = vunpack.c.l.s4 1966171168
  %v1219 = vunpack.c.0.s8 %v1218
  %v1220 = vlaneseq
  %v1221 = vshrl.u32 %v1220, 7
  %v1222 = vsub.s32 %v1219, %v1221
  %v1223 = vrot.slane %v1215, %v1222
  %v1225 = vunpack.c.l.s4 1966171168
  %v1226 = vunpack.c.0.s8 %v1225
  %v1227 = vlaneseq
  %v1228 = vshrl.u32 %v1227, 7
  %v1229 = vsub.s32 %v1226, %v1228
  %v1230 = vrot.slane %v1216, %v1229
  %v1232 = vunpack.c.l.s4 1966171168
  %v1233 = vunpack.c.0.s8 %v1232
  %v1234 = vlaneseq
  %v1235 = vshrl.u32 %v1234, 7
  %v1236 = vsub.s32 %v1233, %v1235
  %v1237 = vrot.slane %v1152, %v1236
  %v1238 = vcombine.low %v1223, %v1230
  %v1240 = vunpack.c.l.s4 1966171168
  %v1241 = vunpack.c.0.s8 %v1240
  %v1242 = vlaneseq
  %v1243 = vshrl.u32 %v1242, 7
  %v1244 = vsub.s32 %v1241, %v1243
  %v1245 = vrot.slane %v1238, %v1244
  %v1247 = vunpack.c.l.s4 1966171168
  %v1248 = vunpack.c.0.s8 %v1247
  %v1249 = vlaneseq
  %v1250 = vshrl.u32 %v1249, 7
  %v1251 = vsub.s32 %v1248, %v1250
  %v1252 = vrot.slane %v1237, %v1251
  %v1253 = vcombine.low %v1245, %v1252
  %1256 = vst [vmem:[%s3] sm:$0xff] %v1214
  %v1257 = vlaneseq
  %vm1258 = vcmp.ge.s32.totalorder %v1257, 0
  %vm1259 = vcmp.lt.s32.totalorder %v1257, 544
  %vm1260 = vmand %vm1258, %vm1259
  %1261 = vst.msk [vmem:[%s3 + $0x8] sm:$0x1f] %vm1260, %v1253
  // Predicated region
  $region14: #{autoencoder_forward.7} parent=0 // pred_check
    _
  $region15: #{autoencoder_forward.7} parent=0 // pred_check_branch
    %1263 = sbr.rel (0) target = $region17
  $region16: #{autoencoder_forward.7} parent=0 // pred_region
    _
  $region17: #{autoencoder_forward.7} parent=0 // pred_fallthru
    _
  // Predicated region
  $region18: #{autoencoder_forward.7} parent=0 // pred_check
    _
  $region19: #{autoencoder_forward.7} parent=0 // pred_check_branch
    %1265 = sbr.rel (0) target = $region21
  $region20: #{autoencoder_forward.7} parent=0 // pred_region
    _
  $region21: #{autoencoder_forward.7} parent=0 // pred_fallthru
    _

</llo_original>
